<compile_context>
chip_gen: v5e
topology: v5e:2x2
jax: 0.10.0
libtpu: 0.0.40
codegen_flags: <defaults>
</compile_context>

<pallas_src>
import numpy as np

import jax
import jax.numpy as jnp
from jax.experimental import pallas as pl
from jax.experimental.pallas import tpu as pltpu


_ACCUM_MIN_CIN = 32   # cin_p below this -> materialize im2col patches (wide contraction)


def _rup(n, m):
    return ((n + m - 1) // m) * m


def _make_rcn_kernel(layer_dims, offsets, sp_pad, interior_off,
                     cin_x, cat_c, use_patch, has_patch):
    """layer_dims: list of (cin_p, cout_p, pre_tanh) per conv layer."""
    num_layers = len(layer_dims)
    k3 = len(offsets)

    def kernel(*refs):
        x_ref, last_ref, mask_ref = refs[0], refs[1], refs[2]
        wb = refs[3:3 + 2 * num_layers]                 # per-layer (w, bias)
        out_ref = refs[3 + 2 * num_layers]              # (c_out, sp_pad)
        buf_ref = refs[3 + 2 * num_layers + 1]          # (c_max_p, buf_w)
        patch_ref = refs[3 + 2 * num_layers + 2] if has_patch else None

        io = interior_off
        c_max_p = buf_ref.shape[0]
        buf_w = buf_ref.shape[1]

        # Zero ONLY the halo strips (never written otherwise; keeps everything
        # a shifted read can touch finite).  Interior rows are fully re-staged
        # every layer, so no full-buffer memset.
        buf_ref[:, 0:io] = jnp.zeros((c_max_p, io), jnp.float32)
        buf_ref[:, io + sp_pad:] = jnp.zeros((c_max_p, buf_w - io - sp_pad),
                                             jnp.float32)

        cin0_p = layer_dims[0][0]

        # Stage the (implicitly concatenated) inputs channels-first into the
        # interior of the padded staging buffer; pad-channel rows are zeroed
        # as part of the same aligned store.
        pieces = [x_ref[...], last_ref[...]]
        if cin0_p > cat_c:
            pieces.append(jnp.zeros((cin0_p - cat_c, sp_pad), jnp.float32))
        buf_ref[0:cin0_p, io:io + sp_pad] = jnp.concatenate(pieces, axis=0)

        act = None
        for li, (cin_p, cout_p, pre_tanh) in enumerate(layer_dims):
            w_ref = wb[2 * li]
            b_ref = wb[2 * li + 1]                       # (cout_p, 1)

            if li > 0:
                a = jnp.tanh(act) if pre_tanh else act
                # Pad columns hold garbage after the previous conv: re-zero
                # them with ONE masked multiply (not K^3 of them).
                a = a * mask_ref[...]
                buf_ref[0:cin_p, io:io + sp_pad] = a

            if use_patch[li]:
                # im2col patch (pure copies, no masks) + one wide-contraction
                # MXU matmul.  Used only for tiny cin.
                for k_idx, off in enumerate(offsets):
                    patch_ref[k_idx * cin_p:(k_idx + 1) * cin_p, :] = (
                        buf_ref[0:cin_p, io + off: io + off + sp_pad])
                act = (jnp.dot(w_ref[...], patch_ref[0:k3 * cin_p, :],
                               preferred_element_type=jnp.float32)
                       + b_ref[...])
            else:
                # Accumulate-over-offsets: read each shifted slab directly
                # from the staging buffer; no patch scratch, no im2col stores.
                acc = jnp.zeros((cout_p, sp_pad), jnp.float32)
                for k_idx, off in enumerate(offsets):
                    acc = acc + jnp.dot(
                        w_ref[k_idx],
                        buf_ref[0:cin_p, io + off: io + off + sp_pad],
                        preferred_element_type=jnp.float32)
                act = acc + b_ref[...]

        out_ref[...] = act[0:out_ref.shape[0], :].astype(out_ref.dtype)

    return kernel


def rcn_block_forward(x, last, params):
    """Fused equivalent of RcnBlock.forward (layer_num > 2 branch).

    x:    (N, in_channel,  D, H, W)  f32   (channels-first, like nn.Conv3d)
    last: (N, out_channel, D, H, W)  f32
    returns (N, out_channel, D, H, W)
    """
    N, cin_x, D, H, W = x.shape
    c_out = last.shape[1]
    K = params["w_in"].shape[0]
    p = K // 2
    K3 = K ** 3
    Dp, Hp, Wp = D + 2 * p, H + 2 * p, W + 2 * p
    Sp = Dp * Hp * Wp
    Sp_pad = _rup(Sp, 128)                       # lane-dense flat padded volume

    # ---- layer list in (w, b, pre_tanh) order -------------------------------
    layers = [(params["w_in"], params["b_in"], False)]
    layers += [(w, b, True) for (w, b) in params["mid"]]
    layers += [(params["w_out"], params["b_out"], False)]

    cat_c = cin_x + c_out
    assert layers[0][0].shape[3] == cat_c

    # ---- pack weights / biases, choose per-layer conv path ------------------
    packed, layer_dims, use_patch = [], [], []
    for (w, b, pre_tanh) in layers:
        cin, cout = w.shape[3], w.shape[4]
        cin_p, cout_p = _rup(cin, 8), _rup(cout, 8)
        w_p = jnp.zeros((K, K, K, cin_p, cout_p), jnp.float32)
        w_p = w_p.at[:, :, :, :cin, :cout].set(w.astype(jnp.float32))
        patch_path = cin_p < _ACCUM_MIN_CIN
        if patch_path:
            w_k = w_p.reshape(K3 * cin_p, cout_p).T              # (cout_p, K3*cin_p)
        else:
            w_k = jnp.transpose(w_p.reshape(K3, cin_p, cout_p), (0, 2, 1))  # (K3, cout_p, cin_p)
        b_p = jnp.zeros((cout_p, 1), jnp.float32).at[:cout, 0].set(b)
        packed.append((w_k, b_p))
        layer_dims.append((cin_p, cout_p, pre_tanh))
        use_patch.append(patch_path)

    for li in range(1, len(layer_dims)):
        assert layer_dims[li][0] == layer_dims[li - 1][1]
    c_max_p = max(d[0] for d in layer_dims)

    max_shift = p * (Hp * Wp + Wp + 1)
    interior_off = _rup(max_shift, 128)                # 128-aligned interior start
    buf_w = interior_off + Sp_pad + _rup(max_shift, 128)

    # ---- wrapper glue: only the spatial zero-pad (no concat / transpose) ----
    def prep(a):
        a = jnp.pad(a.astype(jnp.float32),
                    ((0, 0), (0, 0), (p, p), (p, p), (p, p)))    # (N,C,Dp,Hp,Wp)
        a = a.reshape(a.shape[0], a.shape[1], Sp)
        return jnp.pad(a, ((0, 0), (0, 0), (0, Sp_pad - Sp)))    # (N,C,Sp_pad)
    x_p = prep(x)
    last_p = prep(last)

    # interior-validity mask over the padded flat volume (single row)
    m = np.zeros((Dp, Hp, Wp), np.float32)
    m[p:p + D, p:p + H, p:p + W] = 1.0
    mask = np.zeros((1, Sp_pad), np.float32)
    mask[0, :Sp] = m.reshape(-1)
    mask = jnp.asarray(mask)

    # static flat offsets in the padded layout (never wrap rows/planes)
    offsets = []
    for kd in range(K):
        for kh in range(K):
            for kw in range(K):
                offsets.append((kd - p) * Hp * Wp + (kh - p) * Wp + (kw - p))

    has_patch = any(use_patch)
    patch_rows = max((K3 * layer_dims[i][0] for i in range(len(layers))
                      if use_patch[i]), default=0)

    kernel = _make_rcn_kernel(layer_dims, offsets, Sp_pad, interior_off,
                              cin_x, cat_c, use_patch, has_patch)

    in_specs = [
        pl.BlockSpec((None, cin_x, Sp_pad), lambda n: (n, 0, 0)),   # x
        pl.BlockSpec((None, c_out, Sp_pad), lambda n: (n, 0, 0)),   # last
        pl.BlockSpec((1, Sp_pad), lambda n: (0, 0)),                # pad mask
    ]
    args = [x_p, last_p, mask]
    for (w_k, b_p) in packed:
        if w_k.ndim == 3:
            in_specs.append(pl.BlockSpec(w_k.shape, lambda n: (0, 0, 0)))
        else:
            in_specs.append(pl.BlockSpec(w_k.shape, lambda n: (0, 0)))
        in_specs.append(pl.BlockSpec(b_p.shape, lambda n: (0, 0)))
        args.extend([w_k, b_p])

    scratch = [pltpu.VMEM((c_max_p, buf_w), jnp.float32)]           # padded staging slab
    if has_patch:
        scratch.append(pltpu.VMEM((patch_rows, Sp_pad), jnp.float32))  # im2col patches

    # ---- cost estimate + explicit VMEM limit ---------------------------------
    flops, trans = 0, 0
    for (w, b, pre_tanh) in layers:
        cin, cout = w.shape[3], w.shape[4]
        flops += 2 * K3 * cin * cout * N * D * H * W
        if pre_tanh:
            trans += cin * N * D * H * W
    weight_bytes = 4 * sum(int(wk.size) + int(bp.size) for wk, bp in packed)
    bytes_accessed = 4 * (int(x_p.size) + int(last_p.size)
                          + N * c_out * Sp_pad + int(mask.size)) + weight_bytes

    vmem_est = (4 * (c_max_p * buf_w + patch_rows * Sp_pad)
                + 2 * 4 * (cin_x + c_out + c_out) * Sp_pad
                + weight_bytes + 4 * Sp_pad)
    vmem_limit = int(min(64 * 2 ** 20, max(32 * 2 ** 20, 2 * vmem_est)))

    out_p = pl.pallas_call(
        kernel,
        out_shape=jax.ShapeDtypeStruct((N, c_out, Sp_pad), jnp.float32),
        grid=(N,),
        in_specs=in_specs,
        out_specs=pl.BlockSpec((None, c_out, Sp_pad), lambda n: (n, 0, 0)),
        scratch_shapes=scratch,
        compiler_params=pltpu.CompilerParams(
            dimension_semantics=("parallel",),
            vmem_limit_bytes=vmem_limit),
        cost_estimate=pl.CostEstimate(flops=int(flops),
                                      transcendentals=int(trans),
                                      bytes_accessed=int(bytes_accessed)),
    )(*args)

    out = out_p[:, :, :Sp].reshape(N, c_out, Dp, Hp, Wp)
    return out[:, :, p:p + D, p:p + H, p:p + W]


def init_rcn_params(key, layer_num, ker_size, in_channel, out_channel):
    """Deterministic synthetic parameters (shapes match the nn.Conv3d layers)."""
    # TODO(synk): the layer_num <= 2 branch of the reference module is broken
    # (it appends the nn.Identity class, not an instance); only layer_num > 2
    # is implemented here.
    assert layer_num > 2
    cat_c = in_channel + out_channel
    hid_c = 2 * cat_c
    K = ker_size

    def conv_init(k, cin, cout):
        kw, kb = jax.random.split(k)
        fan_in = cin * K * K * K
        scale = 1.0 / jnp.sqrt(fan_in)
        w = jax.random.uniform(kw, (K, K, K, cin, cout), jnp.float32,
                               minval=-scale, maxval=scale)
        b = jax.random.uniform(kb, (cout,), jnp.float32,
                               minval=-scale, maxval=scale)
        return w, b

    keys = jax.random.split(key, layer_num)
    w_in, b_in = conv_init(keys[0], cat_c, hid_c)
    mid = [conv_init(keys[1 + i], hid_c, hid_c) for i in range(layer_num - 2)]
    w_out, b_out = conv_init(keys[-1], hid_c, out_channel)
    return dict(w_in=w_in, b_in=b_in, mid=mid, w_out=w_out, b_out=b_out)


# ---------------------------- XLA reference ----------------------------------
def _conv3d_ref(x, w, b):
    dn = jax.lax.conv_dimension_numbers(x.shape, w.shape,
                                        ("NCDHW", "DHWIO", "NCDHW"))
    y = jax.lax.conv_general_dilated(x, w, window_strides=(1, 1, 1),
                                     padding="SAME", dimension_numbers=dn)
    return y + b.reshape(1, -1, 1, 1, 1)


def _rcn_ref(x, last, params):
    inp = jnp.concatenate([x, last], axis=1)
    inner = _conv3d_ref(inp, params["w_in"], params["b_in"])
    for (w, b) in params["mid"]:
        inner = _conv3d_ref(jnp.tanh(inner), w, b)
    return _conv3d_ref(inner, params["w_out"], params["b_out"])


if __name__ == "__main__":
    key = jax.random.PRNGKey(0)

    def run_case(layer_num, ker_size, in_channel, out_channel, N, D, H, W,
                 case_key, tol):
        kx, klast, kp = jax.random.split(case_key, 3)
        x = jax.random.normal(kx, (N, in_channel, D, H, W), jnp.float32)
        last = jax.random.normal(klast, (N, out_channel, D, H, W), jnp.float32)
        params = init_rcn_params(kp, layer_num, ker_size, in_channel, out_channel)

        out = jax.block_until_ready(rcn_block_forward(x, last, params))
        ref = jax.block_until_ready(_rcn_ref(x, last, params))
        assert out.shape == (N, out_channel, D, H, W)
        assert jnp.allclose(out, ref, atol=tol, rtol=tol), "mismatch vs XLA reference"

    # Small-channel config (exercises the im2col / wide-contraction path).
    run_case(layer_num=3, ker_size=3, in_channel=2, out_channel=2,
             N=2, D=8, H=8, W=8, case_key=jax.random.fold_in(key, 0), tol=1e-4)
    # Wider-channel config (exercises the accumulate-over-offsets path).
    run_case(layer_num=3, ker_size=3, in_channel=16, out_channel=16,
             N=1, D=8, H=8, W=8, case_key=jax.random.fold_in(key, 1), tol=1e-4)

    print("KERNEL_OK")
</pallas_src>

<mosaic_0001>
module attributes {stable_mosaic.version = 11 : i64} {
  func.func @kernel(%arg0: i32, %arg1: memref<1x2x1024xf32, #tpu.memory_space<vmem>>, %arg2: memref<1x2x1024xf32, #tpu.memory_space<vmem>>, %arg3: memref<1x1024xf32, #tpu.memory_space<vmem>>, %arg4: memref<8x216xf32, #tpu.memory_space<vmem>>, %arg5: memref<8x1xf32, #tpu.memory_space<vmem>>, %arg6: memref<8x216xf32, #tpu.memory_space<vmem>>, %arg7: memref<8x1xf32, #tpu.memory_space<vmem>>, %arg8: memref<8x216xf32, #tpu.memory_space<vmem>>, %arg9: memref<8x1xf32, #tpu.memory_space<vmem>>, %arg10: memref<1x2x1024xf32, #tpu.memory_space<vmem>>, %arg11: memref<8x1280xf32, #tpu.memory_space<vmem>>, %arg12: memref<216x1024xf32, #tpu.memory_space<vmem>>) attributes {dimension_semantics = [#tpu.dimension_semantics<parallel>], iteration_bounds = array<i64: 2>, scalar_prefetch = 0 : i64, scratch_operands = 2 : i64, tpu.core_type = #tpu.core_type<tc>, window_params = [{transform_indices = @transform_0, window_bounds = array<i64: 1, 2, 1024>}, {transform_indices = @transform_1, window_bounds = array<i64: 1, 2, 1024>}, {pipeline_mode = #tpu.pipeline_mode<synchronous>, transform_indices = @transform_2, window_bounds = array<i64: 1, 1024>}, {pipeline_mode = #tpu.pipeline_mode<synchronous>, transform_indices = @transform_3, window_bounds = array<i64: 8, 216>}, {pipeline_mode = #tpu.pipeline_mode<synchronous>, transform_indices = @transform_4, window_bounds = array<i64: 8, 1>}, {pipeline_mode = #tpu.pipeline_mode<synchronous>, transform_indices = @transform_5, window_bounds = array<i64: 8, 216>}, {pipeline_mode = #tpu.pipeline_mode<synchronous>, transform_indices = @transform_6, window_bounds = array<i64: 8, 1>}, {pipeline_mode = #tpu.pipeline_mode<synchronous>, transform_indices = @transform_7, window_bounds = array<i64: 8, 216>}, {pipeline_mode = #tpu.pipeline_mode<synchronous>, transform_indices = @transform_8, window_bounds = array<i64: 8, 1>}, {transform_indices = @transform_9, window_bounds = array<i64: 1, 2, 1024>}]} {
    %cst = arith.constant 0.000000e+00 : f32
    %0 = vector.broadcast %cst : f32 to vector<8x128xf32>
    %c0 = arith.constant 0 : index
    %c0_0 = arith.constant 0 : index
    %1 = vector.load %arg11[%c0, %c0_0] : memref<8x1280xf32, #tpu.memory_space<vmem>>, vector<8x128xf32>
    tpu.vector_store %arg11[%c0, %c0_0], %0 {strides = array<i32>} : memref<8x1280xf32, #tpu.memory_space<vmem>>, vector<8x128xf32>,
    %cst_1 = arith.constant 0.000000e+00 : f32
    %2 = vector.broadcast %cst_1 : f32 to vector<8x128xf32>
    %c0_2 = arith.constant 0 : index
    %c1152 = arith.constant 1152 : index
    %3 = vector.load %arg11[%c0_2, %c1152] : memref<8x1280xf32, #tpu.memory_space<vmem>>, vector<8x128xf32>
    tpu.vector_store %arg11[%c0_2, %c1152], %2 {strides = array<i32>} : memref<8x1280xf32, #tpu.memory_space<vmem>>, vector<8x128xf32>,
    %c0_3 = arith.constant 0 : index
    %c0_4 = arith.constant 0 : index
    %c0_5 = arith.constant 0 : index
    %4 = vector.load %arg1[%c0_3, %c0_4, %c0_5] : memref<1x2x1024xf32, #tpu.memory_space<vmem>>, vector<1x2x1024xf32>
    %5 = vector.shape_cast %4 : vector<1x2x1024xf32> to vector<2x1024xf32>
    %c0_6 = arith.constant 0 : index
    %c0_7 = arith.constant 0 : index
    %c0_8 = arith.constant 0 : index
    %6 = vector.load %arg2[%c0_6, %c0_7, %c0_8] : memref<1x2x1024xf32, #tpu.memory_space<vmem>>, vector<1x2x1024xf32>
    %7 = vector.shape_cast %6 : vector<1x2x1024xf32> to vector<2x1024xf32>
    %cst_9 = arith.constant 0.000000e+00 : f32
    %8 = vector.broadcast %cst_9 : f32 to vector<4x1024xf32>
    %9 = tpu.concatenate %5, %7, %8 in 0 : vector<2x1024xf32>, vector<2x1024xf32>, vector<4x1024xf32> -> vector<8x1024xf32>
    %c0_10 = arith.constant 0 : index
    %c128 = arith.constant 128 : index
    %10 = vector.load %arg11[%c0_10, %c128] : memref<8x1280xf32, #tpu.memory_space<vmem>>, vector<8x1024xf32>
    tpu.vector_store %arg11[%c0_10, %c128], %9 {strides = array<i32>} : memref<8x1280xf32, #tpu.memory_space<vmem>>, vector<8x1024xf32>,
    %c0_11 = arith.constant 0 : index
    %c17 = arith.constant 17 : index
    %11 = vector.load %arg11[%c0_11, %c17] : memref<8x1280xf32, #tpu.memory_space<vmem>>, vector<8x1024xf32>
    %c0_12 = arith.constant 0 : index
    %c0_13 = arith.constant 0 : index
    %12 = vector.load %arg12[%c0_12, %c0_13] : memref<216x1024xf32, #tpu.memory_space<vmem>>, vector<8x1024xf32>
    tpu.vector_store %arg12[%c0_12, %c0_13], %11 {strides = array<i32>} : memref<216x1024xf32, #tpu.memory_space<vmem>>, vector<8x1024xf32>,
    %c0_14 = arith.constant 0 : index
    %c18 = arith.constant 18 : index
    %13 = vector.load %arg11[%c0_14, %c18] : memref<8x1280xf32, #tpu.memory_space<vmem>>, vector<8x1024xf32>
    %c8 = arith.constant 8 : index
    %c0_15 = arith.constant 0 : index
    %14 = vector.load %arg12[%c8, %c0_15] : memref<216x1024xf32, #tpu.memory_space<vmem>>, vector<8x1024xf32>
    tpu.vector_store %arg12[%c8, %c0_15], %13 {strides = array<i32>} : memref<216x1024xf32, #tpu.memory_space<vmem>>, vector<8x1024xf32>,
    %c0_16 = arith.constant 0 : index
    %c19 = arith.constant 19 : index
    %15 = vector.load %arg11[%c0_16, %c19] : memref<8x1280xf32, #tpu.memory_space<vmem>>, vector<8x1024xf32>
    %c16 = arith.constant 16 : index
    %c0_17 = arith.constant 0 : index
    %16 = vector.load %arg12[%c16, %c0_17] : memref<216x1024xf32, #tpu.memory_space<vmem>>, vector<8x1024xf32>
    tpu.vector_store %arg12[%c16, %c0_17], %15 {strides = array<i32>} : memref<216x1024xf32, #tpu.memory_space<vmem>>, vector<8x1024xf32>,
    %c0_18 = arith.constant 0 : index
    %c27 = arith.constant 27 : index
    %17 = vector.load %arg11[%c0_18, %c27] : memref<8x1280xf32, #tpu.memory_space<vmem>>, vector<8x1024xf32>
    %c24 = arith.constant 24 : index
    %c0_19 = arith.constant 0 : index
    %18 = vector.load %arg12[%c24, %c0_19] : memref<216x1024xf32, #tpu.memory_space<vmem>>, vector<8x1024xf32>
    tpu.vector_store %arg12[%c24, %c0_19], %17 {strides = array<i32>} : memref<216x1024xf32, #tpu.memory_space<vmem>>, vector<8x1024xf32>,
    %c0_20 = arith.constant 0 : index
    %c28 = arith.constant 28 : index
    %19 = vector.load %arg11[%c0_20, %c28] : memref<8x1280xf32, #tpu.memory_space<vmem>>, vector<8x1024xf32>
    %c32 = arith.constant 32 : index
    %c0_21 = arith.constant 0 : index
    %20 = vector.load %arg12[%c32, %c0_21] : memref<216x1024xf32, #tpu.memory_space<vmem>>, vector<8x1024xf32>
    tpu.vector_store %arg12[%c32, %c0_21], %19 {strides = array<i32>} : memref<216x1024xf32, #tpu.memory_space<vmem>>, vector<8x1024xf32>,
    %c0_22 = arith.constant 0 : index
    %c29 = arith.constant 29 : index
    %21 = vector.load %arg11[%c0_22, %c29] : memref<8x1280xf32, #tpu.memory_space<vmem>>, vector<8x1024xf32>
    %c40 = arith.constant 40 : index
    %c0_23 = arith.constant 0 : index
    %22 = vector.load %arg12[%c40, %c0_23] : memref<216x1024xf32, #tpu.memory_space<vmem>>, vector<8x1024xf32>
    tpu.vector_store %arg12[%c40, %c0_23], %21 {strides = array<i32>} : memref<216x1024xf32, #tpu.memory_space<vmem>>, vector<8x1024xf32>,
    %c0_24 = arith.constant 0 : index
    %c37 = arith.constant 37 : index
    %23 = vector.load %arg11[%c0_24, %c37] : memref<8x1280xf32, #tpu.memory_space<vmem>>, vector<8x1024xf32>
    %c48 = arith.constant 48 : index
    %c0_25 = arith.constant 0 : index
    %24 = vector.load %arg12[%c48, %c0_25] : memref<216x1024xf32, #tpu.memory_space<vmem>>, vector<8x1024xf32>
    tpu.vector_store %arg12[%c48, %c0_25], %23 {strides = array<i32>} : memref<216x1024xf32, #tpu.memory_space<vmem>>, vector<8x1024xf32>,
    %c0_26 = arith.constant 0 : index
    %c38 = arith.constant 38 : index
    %25 = vector.load %arg11[%c0_26, %c38] : memref<8x1280xf32, #tpu.memory_space<vmem>>, vector<8x1024xf32>
    %c56 = arith.constant 56 : index
    %c0_27 = arith.constant 0 : index
    %26 = vector.load %arg12[%c56, %c0_27] : memref<216x1024xf32, #tpu.memory_space<vmem>>, vector<8x1024xf32>
    tpu.vector_store %arg12[%c56, %c0_27], %25 {strides = array<i32>} : memref<216x1024xf32, #tpu.memory_space<vmem>>, vector<8x1024xf32>,
    %c0_28 = arith.constant 0 : index
    %c39 = arith.constant 39 : index
    %27 = vector.load %arg11[%c0_28, %c39] : memref<8x1280xf32, #tpu.memory_space<vmem>>, vector<8x1024xf32>
    %c64 = arith.constant 64 : index
    %c0_29 = arith.constant 0 : index
    %28 = vector.load %arg12[%c64, %c0_29] : memref<216x1024xf32, #tpu.memory_space<vmem>>, vector<8x1024xf32>
    tpu.vector_store %arg12[%c64, %c0_29], %27 {strides = array<i32>} : memref<216x1024xf32, #tpu.memory_space<vmem>>, vector<8x1024xf32>,
    %c0_30 = arith.constant 0 : index
    %c117 = arith.constant 117 : index
    %29 = vector.load %arg11[%c0_30, %c117] : memref<8x1280xf32, #tpu.memory_space<vmem>>, vector<8x1024xf32>
    %c72 = arith.constant 72 : index
    %c0_31 = arith.constant 0 : index
    %30 = vector.load %arg12[%c72, %c0_31] : memref<216x1024xf32, #tpu.memory_space<vmem>>, vector<8x1024xf32>
    tpu.vector_store %arg12[%c72, %c0_31], %29 {strides = array<i32>} : memref<216x1024xf32, #tpu.memory_space<vmem>>, vector<8x1024xf32>,
    %c0_32 = arith.constant 0 : index
    %c118 = arith.constant 118 : index
    %31 = vector.load %arg11[%c0_32, %c118] : memref<8x1280xf32, #tpu.memory_space<vmem>>, vector<8x1024xf32>
    %c80 = arith.constant 80 : index
    %c0_33 = arith.constant 0 : index
    %32 = vector.load %arg12[%c80, %c0_33] : memref<216x1024xf32, #tpu.memory_space<vmem>>, vector<8x1024xf32>
    tpu.vector_store %arg12[%c80, %c0_33], %31 {strides = array<i32>} : memref<216x1024xf32, #tpu.memory_space<vmem>>, vector<8x1024xf32>,
    %c0_34 = arith.constant 0 : index
    %c119 = arith.constant 119 : index
    %33 = vector.load %arg11[%c0_34, %c119] : memref<8x1280xf32, #tpu.memory_space<vmem>>, vector<8x1024xf32>
    %c88 = arith.constant 88 : index
    %c0_35 = arith.constant 0 : index
    %34 = vector.load %arg12[%c88, %c0_35] : memref<216x1024xf32, #tpu.memory_space<vmem>>, vector<8x1024xf32>
    tpu.vector_store %arg12[%c88, %c0_35], %33 {strides = array<i32>} : memref<216x1024xf32, #tpu.memory_space<vmem>>, vector<8x1024xf32>,
    %c0_36 = arith.constant 0 : index
    %c127 = arith.constant 127 : index
    %35 = vector.load %arg11[%c0_36, %c127] : memref<8x1280xf32, #tpu.memory_space<vmem>>, vector<8x1024xf32>
    %c96 = arith.constant 96 : index
    %c0_37 = arith.constant 0 : index
    %36 = vector.load %arg12[%c96, %c0_37] : memref<216x1024xf32, #tpu.memory_space<vmem>>, vector<8x1024xf32>
    tpu.vector_store %arg12[%c96, %c0_37], %35 {strides = array<i32>} : memref<216x1024xf32, #tpu.memory_space<vmem>>, vector<8x1024xf32>,
    %c0_38 = arith.constant 0 : index
    %c128_39 = arith.constant 128 : index
    %37 = vector.load %arg11[%c0_38, %c128_39] : memref<8x1280xf32, #tpu.memory_space<vmem>>, vector<8x1024xf32>
    %c104 = arith.constant 104 : index
    %c0_40 = arith.constant 0 : index
    %38 = vector.load %arg12[%c104, %c0_40] : memref<216x1024xf32, #tpu.memory_space<vmem>>, vector<8x1024xf32>
    tpu.vector_store %arg12[%c104, %c0_40], %37 {strides = array<i32>} : memref<216x1024xf32, #tpu.memory_space<vmem>>, vector<8x1024xf32>,
    %c0_41 = arith.constant 0 : index
    %c129 = arith.constant 129 : index
    %39 = vector.load %arg11[%c0_41, %c129] : memref<8x1280xf32, #tpu.memory_space<vmem>>, vector<8x1024xf32>
    %c112 = arith.constant 112 : index
    %c0_42 = arith.constant 0 : index
    %40 = vector.load %arg12[%c112, %c0_42] : memref<216x1024xf32, #tpu.memory_space<vmem>>, vector<8x1024xf32>
    tpu.vector_store %arg12[%c112, %c0_42], %39 {strides = array<i32>} : memref<216x1024xf32, #tpu.memory_space<vmem>>, vector<8x1024xf32>,
    %c0_43 = arith.constant 0 : index
    %c137 = arith.constant 137 : index
    %41 = vector.load %arg11[%c0_43, %c137] : memref<8x1280xf32, #tpu.memory_space<vmem>>, vector<8x1024xf32>
    %c120 = arith.constant 120 : index
    %c0_44 = arith.constant 0 : index
    %42 = vector.load %arg12[%c120, %c0_44] : memref<216x1024xf32, #tpu.memory_space<vmem>>, vector<8x1024xf32>
    tpu.vector_store %arg12[%c120, %c0_44], %41 {strides = array<i32>} : memref<216x1024xf32, #tpu.memory_space<vmem>>, vector<8x1024xf32>,
    %c0_45 = arith.constant 0 : index
    %c138 = arith.constant 138 : index
    %43 = vector.load %arg11[%c0_45, %c138] : memref<8x1280xf32, #tpu.memory_space<vmem>>, vector<8x1024xf32>
    %c128_46 = arith.constant 128 : index
    %c0_47 = arith.constant 0 : index
    %44 = vector.load %arg12[%c128_46, %c0_47] : memref<216x1024xf32, #tpu.memory_space<vmem>>, vector<8x1024xf32>
    tpu.vector_store %arg12[%c128_46, %c0_47], %43 {strides = array<i32>} : memref<216x1024xf32, #tpu.memory_space<vmem>>, vector<8x1024xf32>,
    %c0_48 = arith.constant 0 : index
    %c139 = arith.constant 139 : index
    %45 = vector.load %arg11[%c0_48, %c139] : memref<8x1280xf32, #tpu.memory_space<vmem>>, vector<8x1024xf32>
    %c136 = arith.constant 136 : index
    %c0_49 = arith.constant 0 : index
    %46 = vector.load %arg12[%c136, %c0_49] : memref<216x1024xf32, #tpu.memory_space<vmem>>, vector<8x1024xf32>
    tpu.vector_store %arg12[%c136, %c0_49], %45 {strides = array<i32>} : memref<216x1024xf32, #tpu.memory_space<vmem>>, vector<8x1024xf32>,
    %c0_50 = arith.constant 0 : index
    %c217 = arith.constant 217 : index
    %47 = vector.load %arg11[%c0_50, %c217] : memref<8x1280xf32, #tpu.memory_space<vmem>>, vector<8x1024xf32>
    %c144 = arith.constant 144 : index
    %c0_51 = arith.constant 0 : index
    %48 = vector.load %arg12[%c144, %c0_51] : memref<216x1024xf32, #tpu.memory_space<vmem>>, vector<8x1024xf32>
    tpu.vector_store %arg12[%c144, %c0_51], %47 {strides = array<i32>} : memref<216x1024xf32, #tpu.memory_space<vmem>>, vector<8x1024xf32>,
    %c0_52 = arith.constant 0 : index
    %c218 = arith.constant 218 : index
    %49 = vector.load %arg11[%c0_52, %c218] : memref<8x1280xf32, #tpu.memory_space<vmem>>, vector<8x1024xf32>
    %c152 = arith.constant 152 : index
    %c0_53 = arith.constant 0 : index
    %50 = vector.load %arg12[%c152, %c0_53] : memref<216x1024xf32, #tpu.memory_space<vmem>>, vector<8x1024xf32>
    tpu.vector_store %arg12[%c152, %c0_53], %49 {strides = array<i32>} : memref<216x1024xf32, #tpu.memory_space<vmem>>, vector<8x1024xf32>,
    %c0_54 = arith.constant 0 : index
    %c219 = arith.constant 219 : index
    %51 = vector.load %arg11[%c0_54, %c219] : memref<8x1280xf32, #tpu.memory_space<vmem>>, vector<8x1024xf32>
    %c160 = arith.constant 160 : index
    %c0_55 = arith.constant 0 : index
    %52 = vector.load %arg12[%c160, %c0_55] : memref<216x1024xf32, #tpu.memory_space<vmem>>, vector<8x1024xf32>
    tpu.vector_store %arg12[%c160, %c0_55], %51 {strides = array<i32>} : memref<216x1024xf32, #tpu.memory_space<vmem>>, vector<8x1024xf32>,
    %c0_56 = arith.constant 0 : index
    %c227 = arith.constant 227 : index
    %53 = vector.load %arg11[%c0_56, %c227] : memref<8x1280xf32, #tpu.memory_space<vmem>>, vector<8x1024xf32>
    %c168 = arith.constant 168 : index
    %c0_57 = arith.constant 0 : index
    %54 = vector.load %arg12[%c168, %c0_57] : memref<216x1024xf32, #tpu.memory_space<vmem>>, vector<8x1024xf32>
    tpu.vector_store %arg12[%c168, %c0_57], %53 {strides = array<i32>} : memref<216x1024xf32, #tpu.memory_space<vmem>>, vector<8x1024xf32>,
    %c0_58 = arith.constant 0 : index
    %c228 = arith.constant 228 : index
    %55 = vector.load %arg11[%c0_58, %c228] : memref<8x1280xf32, #tpu.memory_space<vmem>>, vector<8x1024xf32>
    %c176 = arith.constant 176 : index
    %c0_59 = arith.constant 0 : index
    %56 = vector.load %arg12[%c176, %c0_59] : memref<216x1024xf32, #tpu.memory_space<vmem>>, vector<8x1024xf32>
    tpu.vector_store %arg12[%c176, %c0_59], %55 {strides = array<i32>} : memref<216x1024xf32, #tpu.memory_space<vmem>>, vector<8x1024xf32>,
    %c0_60 = arith.constant 0 : index
    %c229 = arith.constant 229 : index
    %57 = vector.load %arg11[%c0_60, %c229] : memref<8x1280xf32, #tpu.memory_space<vmem>>, vector<8x1024xf32>
    %c184 = arith.constant 184 : index
    %c0_61 = arith.constant 0 : index
    %58 = vector.load %arg12[%c184, %c0_61] : memref<216x1024xf32, #tpu.memory_space<vmem>>, vector<8x1024xf32>
    tpu.vector_store %arg12[%c184, %c0_61], %57 {strides = array<i32>} : memref<216x1024xf32, #tpu.memory_space<vmem>>, vector<8x1024xf32>,
    %c0_62 = arith.constant 0 : index
    %c237 = arith.constant 237 : index
    %59 = vector.load %arg11[%c0_62, %c237] : memref<8x1280xf32, #tpu.memory_space<vmem>>, vector<8x1024xf32>
    %c192 = arith.constant 192 : index
    %c0_63 = arith.constant 0 : index
    %60 = vector.load %arg12[%c192, %c0_63] : memref<216x1024xf32, #tpu.memory_space<vmem>>, vector<8x1024xf32>
    tpu.vector_store %arg12[%c192, %c0_63], %59 {strides = array<i32>} : memref<216x1024xf32, #tpu.memory_space<vmem>>, vector<8x1024xf32>,
    %c0_64 = arith.constant 0 : index
    %c238 = arith.constant 238 : index
    %61 = vector.load %arg11[%c0_64, %c238] : memref<8x1280xf32, #tpu.memory_space<vmem>>, vector<8x1024xf32>
    %c200 = arith.constant 200 : index
    %c0_65 = arith.constant 0 : index
    %62 = vector.load %arg12[%c200, %c0_65] : memref<216x1024xf32, #tpu.memory_space<vmem>>, vector<8x1024xf32>
    tpu.vector_store %arg12[%c200, %c0_65], %61 {strides = array<i32>} : memref<216x1024xf32, #tpu.memory_space<vmem>>, vector<8x1024xf32>,
    %c0_66 = arith.constant 0 : index
    %c239 = arith.constant 239 : index
    %63 = vector.load %arg11[%c0_66, %c239] : memref<8x1280xf32, #tpu.memory_space<vmem>>, vector<8x1024xf32>
    %c208 = arith.constant 208 : index
    %c0_67 = arith.constant 0 : index
    %64 = vector.load %arg12[%c208, %c0_67] : memref<216x1024xf32, #tpu.memory_space<vmem>>, vector<8x1024xf32>
    tpu.vector_store %arg12[%c208, %c0_67], %63 {strides = array<i32>} : memref<216x1024xf32, #tpu.memory_space<vmem>>, vector<8x1024xf32>,
    %c0_68 = arith.constant 0 : index
    %c0_69 = arith.constant 0 : index
    %65 = vector.load %arg4[%c0_68, %c0_69] : memref<8x216xf32, #tpu.memory_space<vmem>>, vector<8x216xf32>
    %c0_70 = arith.constant 0 : index
    %c0_71 = arith.constant 0 : index
    %66 = vector.load %arg12[%c0_70, %c0_71] : memref<216x1024xf32, #tpu.memory_space<vmem>>, vector<216x1024xf32>
    %cst_72 = arith.constant dense<0.000000e+00> : vector<8x1024xf32>
    %67 = tpu.matmul %65, %66, %cst_72 {dimension_numbers = #tpu.dot_dimension_numbers<[1], [0], [0], [1], [0, 0, 1, 1], [], []>} : vector<8x216xf32>, vector<216x1024xf32>, vector<8x1024xf32> -> vector<8x1024xf32>
    %c0_73 = arith.constant 0 : index
    %c0_74 = arith.constant 0 : index
    %68 = vector.load %arg5[%c0_73, %c0_74] : memref<8x1xf32, #tpu.memory_space<vmem>>, vector<8x1xf32>
    %69 = vector.broadcast %68 : vector<8x1xf32> to vector<8x1024xf32>
    %70 = arith.addf %67, %69 : vector<8x1024xf32>
    %71 = math.tanh %70 : vector<8x1024xf32>
    %c0_75 = arith.constant 0 : index
    %c0_76 = arith.constant 0 : index
    %72 = vector.load %arg3[%c0_75, %c0_76] : memref<1x1024xf32, #tpu.memory_space<vmem>>, vector<1x1024xf32>
    %73 = vector.broadcast %72 : vector<1x1024xf32> to vector<8x1024xf32>
    %74 = arith.mulf %71, %73 : vector<8x1024xf32>
    %c0_77 = arith.constant 0 : index
    %c128_78 = arith.constant 128 : index
    %75 = vector.load %arg11[%c0_77, %c128_78] : memref<8x1280xf32, #tpu.memory_space<vmem>>, vector<8x1024xf32>
    tpu.vector_store %arg11[%c0_77, %c128_78], %74 {strides = array<i32>} : memref<8x1280xf32, #tpu.memory_space<vmem>>, vector<8x1024xf32>,
    %c0_79 = arith.constant 0 : index
    %c17_80 = arith.constant 17 : index
    %76 = vector.load %arg11[%c0_79, %c17_80] : memref<8x1280xf32, #tpu.memory_space<vmem>>, vector<8x1024xf32>
    %c0_81 = arith.constant 0 : index
    %c0_82 = arith.constant 0 : index
    %77 = vector.load %arg12[%c0_81, %c0_82] : memref<216x1024xf32, #tpu.memory_space<vmem>>, vector<8x1024xf32>
    tpu.vector_store %arg12[%c0_81, %c0_82], %76 {strides = array<i32>} : memref<216x1024xf32, #tpu.memory_space<vmem>>, vector<8x1024xf32>,
    %c0_83 = arith.constant 0 : index
    %c18_84 = arith.constant 18 : index
    %78 = vector.load %arg11[%c0_83, %c18_84] : memref<8x1280xf32, #tpu.memory_space<vmem>>, vector<8x1024xf32>
    %c8_85 = arith.constant 8 : index
    %c0_86 = arith.constant 0 : index
    %79 = vector.load %arg12[%c8_85, %c0_86] : memref<216x1024xf32, #tpu.memory_space<vmem>>, vector<8x1024xf32>
    tpu.vector_store %arg12[%c8_85, %c0_86], %78 {strides = array<i32>} : memref<216x1024xf32, #tpu.memory_space<vmem>>, vector<8x1024xf32>,
    %c0_87 = arith.constant 0 : index
    %c19_88 = arith.constant 19 : index
    %80 = vector.load %arg11[%c0_87, %c19_88] : memref<8x1280xf32, #tpu.memory_space<vmem>>, vector<8x1024xf32>
    %c16_89 = arith.constant 16 : index
    %c0_90 = arith.constant 0 : index
    %81 = vector.load %arg12[%c16_89, %c0_90] : memref<216x1024xf32, #tpu.memory_space<vmem>>, vector<8x1024xf32>
    tpu.vector_store %arg12[%c16_89, %c0_90], %80 {strides = array<i32>} : memref<216x1024xf32, #tpu.memory_space<vmem>>, vector<8x1024xf32>,
    %c0_91 = arith.constant 0 : index
    %c27_92 = arith.constant 27 : index
    %82 = vector.load %arg11[%c0_91, %c27_92] : memref<8x1280xf32, #tpu.memory_space<vmem>>, vector<8x1024xf32>
    %c24_93 = arith.constant 24 : index
    %c0_94 = arith.constant 0 : index
    %83 = vector.load %arg12[%c24_93, %c0_94] : memref<216x1024xf32, #tpu.memory_space<vmem>>, vector<8x1024xf32>
    tpu.vector_store %arg12[%c24_93, %c0_94], %82 {strides = array<i32>} : memref<216x1024xf32, #tpu.memory_space<vmem>>, vector<8x1024xf32>,
    %c0_95 = arith.constant 0 : index
    %c28_96 = arith.constant 28 : index
    %84 = vector.load %arg11[%c0_95, %c28_96] : memref<8x1280xf32, #tpu.memory_space<vmem>>, vector<8x1024xf32>
    %c32_97 = arith.constant 32 : index
    %c0_98 = arith.constant 0 : index
    %85 = vector.load %arg12[%c32_97, %c0_98] : memref<216x1024xf32, #tpu.memory_space<vmem>>, vector<8x1024xf32>
    tpu.vector_store %arg12[%c32_97, %c0_98], %84 {strides = array<i32>} : memref<216x1024xf32, #tpu.memory_space<vmem>>, vector<8x1024xf32>,
    %c0_99 = arith.constant 0 : index
    %c29_100 = arith.constant 29 : index
    %86 = vector.load %arg11[%c0_99, %c29_100] : memref<8x1280xf32, #tpu.memory_space<vmem>>, vector<8x1024xf32>
    %c40_101 = arith.constant 40 : index
    %c0_102 = arith.constant 0 : index
    %87 = vector.load %arg12[%c40_101, %c0_102] : memref<216x1024xf32, #tpu.memory_space<vmem>>, vector<8x1024xf32>
    tpu.vector_store %arg12[%c40_101, %c0_102], %86 {strides = array<i32>} : memref<216x1024xf32, #tpu.memory_space<vmem>>, vector<8x1024xf32>,
    %c0_103 = arith.constant 0 : index
    %c37_104 = arith.constant 37 : index
    %88 = vector.load %arg11[%c0_103, %c37_104] : memref<8x1280xf32, #tpu.memory_space<vmem>>, vector<8x1024xf32>
    %c48_105 = arith.constant 48 : index
    %c0_106 = arith.constant 0 : index
    %89 = vector.load %arg12[%c48_105, %c0_106] : memref<216x1024xf32, #tpu.memory_space<vmem>>, vector<8x1024xf32>
    tpu.vector_store %arg12[%c48_105, %c0_106], %88 {strides = array<i32>} : memref<216x1024xf32, #tpu.memory_space<vmem>>, vector<8x1024xf32>,
    %c0_107 = arith.constant 0 : index
    %c38_108 = arith.constant 38 : index
    %90 = vector.load %arg11[%c0_107, %c38_108] : memref<8x1280xf32, #tpu.memory_space<vmem>>, vector<8x1024xf32>
    %c56_109 = arith.constant 56 : index
    %c0_110 = arith.constant 0 : index
    %91 = vector.load %arg12[%c56_109, %c0_110] : memref<216x1024xf32, #tpu.memory_space<vmem>>, vector<8x1024xf32>
    tpu.vector_store %arg12[%c56_109, %c0_110], %90 {strides = array<i32>} : memref<216x1024xf32, #tpu.memory_space<vmem>>, vector<8x1024xf32>,
    %c0_111 = arith.constant 0 : index
    %c39_112 = arith.constant 39 : index
    %92 = vector.load %arg11[%c0_111, %c39_112] : memref<8x1280xf32, #tpu.memory_space<vmem>>, vector<8x1024xf32>
    %c64_113 = arith.constant 64 : index
    %c0_114 = arith.constant 0 : index
    %93 = vector.load %arg12[%c64_113, %c0_114] : memref<216x1024xf32, #tpu.memory_space<vmem>>, vector<8x1024xf32>
    tpu.vector_store %arg12[%c64_113, %c0_114], %92 {strides = array<i32>} : memref<216x1024xf32, #tpu.memory_space<vmem>>, vector<8x1024xf32>,
    %c0_115 = arith.constant 0 : index
    %c117_116 = arith.constant 117 : index
    %94 = vector.load %arg11[%c0_115, %c117_116] : memref<8x1280xf32, #tpu.memory_space<vmem>>, vector<8x1024xf32>
    %c72_117 = arith.constant 72 : index
    %c0_118 = arith.constant 0 : index
    %95 = vector.load %arg12[%c72_117, %c0_118] : memref<216x1024xf32, #tpu.memory_space<vmem>>, vector<8x1024xf32>
    tpu.vector_store %arg12[%c72_117, %c0_118], %94 {strides = array<i32>} : memref<216x1024xf32, #tpu.memory_space<vmem>>, vector<8x1024xf32>,
    %c0_119 = arith.constant 0 : index
    %c118_120 = arith.constant 118 : index
    %96 = vector.load %arg11[%c0_119, %c118_120] : memref<8x1280xf32, #tpu.memory_space<vmem>>, vector<8x1024xf32>
    %c80_121 = arith.constant 80 : index
    %c0_122 = arith.constant 0 : index
    %97 = vector.load %arg12[%c80_121, %c0_122] : memref<216x1024xf32, #tpu.memory_space<vmem>>, vector<8x1024xf32>
    tpu.vector_store %arg12[%c80_121, %c0_122], %96 {strides = array<i32>} : memref<216x1024xf32, #tpu.memory_space<vmem>>, vector<8x1024xf32>,
    %c0_123 = arith.constant 0 : index
    %c119_124 = arith.constant 119 : index
    %98 = vector.load %arg11[%c0_123, %c119_124] : memref<8x1280xf32, #tpu.memory_space<vmem>>, vector<8x1024xf32>
    %c88_125 = arith.constant 88 : index
    %c0_126 = arith.constant 0 : index
    %99 = vector.load %arg12[%c88_125, %c0_126] : memref<216x1024xf32, #tpu.memory_space<vmem>>, vector<8x1024xf32>
    tpu.vector_store %arg12[%c88_125, %c0_126], %98 {strides = array<i32>} : memref<216x1024xf32, #tpu.memory_space<vmem>>, vector<8x1024xf32>,
    %c0_127 = arith.constant 0 : index
    %c127_128 = arith.constant 127 : index
    %100 = vector.load %arg11[%c0_127, %c127_128] : memref<8x1280xf32, #tpu.memory_space<vmem>>, vector<8x1024xf32>
    %c96_129 = arith.constant 96 : index
    %c0_130 = arith.constant 0 : index
    %101 = vector.load %arg12[%c96_129, %c0_130] : memref<216x1024xf32, #tpu.memory_space<vmem>>, vector<8x1024xf32>
    tpu.vector_store %arg12[%c96_129, %c0_130], %100 {strides = array<i32>} : memref<216x1024xf32, #tpu.memory_space<vmem>>, vector<8x1024xf32>,
    %c0_131 = arith.constant 0 : index
    %c128_132 = arith.constant 128 : index
    %102 = vector.load %arg11[%c0_131, %c128_132] : memref<8x1280xf32, #tpu.memory_space<vmem>>, vector<8x1024xf32>
    %c104_133 = arith.constant 104 : index
    %c0_134 = arith.constant 0 : index
    %103 = vector.load %arg12[%c104_133, %c0_134] : memref<216x1024xf32, #tpu.memory_space<vmem>>, vector<8x1024xf32>
    tpu.vector_store %arg12[%c104_133, %c0_134], %102 {strides = array<i32>} : memref<216x1024xf32, #tpu.memory_space<vmem>>, vector<8x1024xf32>,
    %c0_135 = arith.constant 0 : index
    %c129_136 = arith.constant 129 : index
    %104 = vector.load %arg11[%c0_135, %c129_136] : memref<8x1280xf32, #tpu.memory_space<vmem>>, vector<8x1024xf32>
    %c112_137 = arith.constant 112 : index
    %c0_138 = arith.constant 0 : index
    %105 = vector.load %arg12[%c112_137, %c0_138] : memref<216x1024xf32, #tpu.memory_space<vmem>>, vector<8x1024xf32>
    tpu.vector_store %arg12[%c112_137, %c0_138], %104 {strides = array<i32>} : memref<216x1024xf32, #tpu.memory_space<vmem>>, vector<8x1024xf32>,
    %c0_139 = arith.constant 0 : index
    %c137_140 = arith.constant 137 : index
    %106 = vector.load %arg11[%c0_139, %c137_140] : memref<8x1280xf32, #tpu.memory_space<vmem>>, vector<8x1024xf32>
    %c120_141 = arith.constant 120 : index
    %c0_142 = arith.constant 0 : index
    %107 = vector.load %arg12[%c120_141, %c0_142] : memref<216x1024xf32, #tpu.memory_space<vmem>>, vector<8x1024xf32>
    tpu.vector_store %arg12[%c120_141, %c0_142], %106 {strides = array<i32>} : memref<216x1024xf32, #tpu.memory_space<vmem>>, vector<8x1024xf32>,
    %c0_143 = arith.constant 0 : index
    %c138_144 = arith.constant 138 : index
    %108 = vector.load %arg11[%c0_143, %c138_144] : memref<8x1280xf32, #tpu.memory_space<vmem>>, vector<8x1024xf32>
    %c128_145 = arith.constant 128 : index
    %c0_146 = arith.constant 0 : index
    %109 = vector.load %arg12[%c128_145, %c0_146] : memref<216x1024xf32, #tpu.memory_space<vmem>>, vector<8x1024xf32>
    tpu.vector_store %arg12[%c128_145, %c0_146], %108 {strides = array<i32>} : memref<216x1024xf32, #tpu.memory_space<vmem>>, vector<8x1024xf32>,
    %c0_147 = arith.constant 0 : index
    %c139_148 = arith.constant 139 : index
    %110 = vector.load %arg11[%c0_147, %c139_148] : memref<8x1280xf32, #tpu.memory_space<vmem>>, vector<8x1024xf32>
    %c136_149 = arith.constant 136 : index
    %c0_150 = arith.constant 0 : index
    %111 = vector.load %arg12[%c136_149, %c0_150] : memref<216x1024xf32, #tpu.memory_space<vmem>>, vector<8x1024xf32>
    tpu.vector_store %arg12[%c136_149, %c0_150], %110 {strides = array<i32>} : memref<216x1024xf32, #tpu.memory_space<vmem>>, vector<8x1024xf32>,
    %c0_151 = arith.constant 0 : index
    %c217_152 = arith.constant 217 : index
    %112 = vector.load %arg11[%c0_151, %c217_152] : memref<8x1280xf32, #tpu.memory_space<vmem>>, vector<8x1024xf32>
    %c144_153 = arith.constant 144 : index
    %c0_154 = arith.constant 0 : index
    %113 = vector.load %arg12[%c144_153, %c0_154] : memref<216x1024xf32, #tpu.memory_space<vmem>>, vector<8x1024xf32>
    tpu.vector_store %arg12[%c144_153, %c0_154], %112 {strides = array<i32>} : memref<216x1024xf32, #tpu.memory_space<vmem>>, vector<8x1024xf32>,
    %c0_155 = arith.constant 0 : index
    %c218_156 = arith.constant 218 : index
    %114 = vector.load %arg11[%c0_155, %c218_156] : memref<8x1280xf32, #tpu.memory_space<vmem>>, vector<8x1024xf32>
    %c152_157 = arith.constant 152 : index
    %c0_158 = arith.constant 0 : index
    %115 = vector.load %arg12[%c152_157, %c0_158] : memref<216x1024xf32, #tpu.memory_space<vmem>>, vector<8x1024xf32>
    tpu.vector_store %arg12[%c152_157, %c0_158], %114 {strides = array<i32>} : memref<216x1024xf32, #tpu.memory_space<vmem>>, vector<8x1024xf32>,
    %c0_159 = arith.constant 0 : index
    %c219_160 = arith.constant 219 : index
    %116 = vector.load %arg11[%c0_159, %c219_160] : memref<8x1280xf32, #tpu.memory_space<vmem>>, vector<8x1024xf32>
    %c160_161 = arith.constant 160 : index
    %c0_162 = arith.constant 0 : index
    %117 = vector.load %arg12[%c160_161, %c0_162] : memref<216x1024xf32, #tpu.memory_space<vmem>>, vector<8x1024xf32>
    tpu.vector_store %arg12[%c160_161, %c0_162], %116 {strides = array<i32>} : memref<216x1024xf32, #tpu.memory_space<vmem>>, vector<8x1024xf32>,
    %c0_163 = arith.constant 0 : index
    %c227_164 = arith.constant 227 : index
    %118 = vector.load %arg11[%c0_163, %c227_164] : memref<8x1280xf32, #tpu.memory_space<vmem>>, vector<8x1024xf32>
    %c168_165 = arith.constant 168 : index
    %c0_166 = arith.constant 0 : index
    %119 = vector.load %arg12[%c168_165, %c0_166] : memref<216x1024xf32, #tpu.memory_space<vmem>>, vector<8x1024xf32>
    tpu.vector_store %arg12[%c168_165, %c0_166], %118 {strides = array<i32>} : memref<216x1024xf32, #tpu.memory_space<vmem>>, vector<8x1024xf32>,
    %c0_167 = arith.constant 0 : index
    %c228_168 = arith.constant 228 : index
    %120 = vector.load %arg11[%c0_167, %c228_168] : memref<8x1280xf32, #tpu.memory_space<vmem>>, vector<8x1024xf32>
    %c176_169 = arith.constant 176 : index
    %c0_170 = arith.constant 0 : index
    %121 = vector.load %arg12[%c176_169, %c0_170] : memref<216x1024xf32, #tpu.memory_space<vmem>>, vector<8x1024xf32>
    tpu.vector_store %arg12[%c176_169, %c0_170], %120 {strides = array<i32>} : memref<216x1024xf32, #tpu.memory_space<vmem>>, vector<8x1024xf32>,
    %c0_171 = arith.constant 0 : index
    %c229_172 = arith.constant 229 : index
    %122 = vector.load %arg11[%c0_171, %c229_172] : memref<8x1280xf32, #tpu.memory_space<vmem>>, vector<8x1024xf32>
    %c184_173 = arith.constant 184 : index
    %c0_174 = arith.constant 0 : index
    %123 = vector.load %arg12[%c184_173, %c0_174] : memref<216x1024xf32, #tpu.memory_space<vmem>>, vector<8x1024xf32>
    tpu.vector_store %arg12[%c184_173, %c0_174], %122 {strides = array<i32>} : memref<216x1024xf32, #tpu.memory_space<vmem>>, vector<8x1024xf32>,
    %c0_175 = arith.constant 0 : index
    %c237_176 = arith.constant 237 : index
    %124 = vector.load %arg11[%c0_175, %c237_176] : memref<8x1280xf32, #tpu.memory_space<vmem>>, vector<8x1024xf32>
    %c192_177 = arith.constant 192 : index
    %c0_178 = arith.constant 0 : index
    %125 = vector.load %arg12[%c192_177, %c0_178] : memref<216x1024xf32, #tpu.memory_space<vmem>>, vector<8x1024xf32>
    tpu.vector_store %arg12[%c192_177, %c0_178], %124 {strides = array<i32>} : memref<216x1024xf32, #tpu.memory_space<vmem>>, vector<8x1024xf32>,
    %c0_179 = arith.constant 0 : index
    %c238_180 = arith.constant 238 : index
    %126 = vector.load %arg11[%c0_179, %c238_180] : memref<8x1280xf32, #tpu.memory_space<vmem>>, vector<8x1024xf32>
    %c200_181 = arith.constant 200 : index
    %c0_182 = arith.constant 0 : index
    %127 = vector.load %arg12[%c200_181, %c0_182] : memref<216x1024xf32, #tpu.memory_space<vmem>>, vector<8x1024xf32>
    tpu.vector_store %arg12[%c200_181, %c0_182], %126 {strides = array<i32>} : memref<216x1024xf32, #tpu.memory_space<vmem>>, vector<8x1024xf32>,
    %c0_183 = arith.constant 0 : index
    %c239_184 = arith.constant 239 : index
    %128 = vector.load %arg11[%c0_183, %c239_184] : memref<8x1280xf32, #tpu.memory_space<vmem>>, vector<8x1024xf32>
    %c208_185 = arith.constant 208 : index
    %c0_186 = arith.constant 0 : index
    %129 = vector.load %arg12[%c208_185, %c0_186] : memref<216x1024xf32, #tpu.memory_space<vmem>>, vector<8x1024xf32>
    tpu.vector_store %arg12[%c208_185, %c0_186], %128 {strides = array<i32>} : memref<216x1024xf32, #tpu.memory_space<vmem>>, vector<8x1024xf32>,
    %c0_187 = arith.constant 0 : index
    %c0_188 = arith.constant 0 : index
    %130 = vector.load %arg6[%c0_187, %c0_188] : memref<8x216xf32, #tpu.memory_space<vmem>>, vector<8x216xf32>
    %c0_189 = arith.constant 0 : index
    %c0_190 = arith.constant 0 : index
    %131 = vector.load %arg12[%c0_189, %c0_190] : memref<216x1024xf32, #tpu.memory_space<vmem>>, vector<216x1024xf32>
    %cst_191 = arith.constant dense<0.000000e+00> : vector<8x1024xf32>
    %132 = tpu.matmul %130, %131, %cst_191 {dimension_numbers = #tpu.dot_dimension_numbers<[1], [0], [0], [1], [0, 0, 1, 1], [], []>} : vector<8x216xf32>, vector<216x1024xf32>, vector<8x1024xf32> -> vector<8x1024xf32>
    %c0_192 = arith.constant 0 : index
    %c0_193 = arith.constant 0 : index
    %133 = vector.load %arg7[%c0_192, %c0_193] : memref<8x1xf32, #tpu.memory_space<vmem>>, vector<8x1xf32>
    %134 = vector.broadcast %133 : vector<8x1xf32> to vector<8x1024xf32>
    %135 = arith.addf %132, %134 : vector<8x1024xf32>
    %c0_194 = arith.constant 0 : index
    %c0_195 = arith.constant 0 : index
    %136 = vector.load %arg3[%c0_194, %c0_195] : memref<1x1024xf32, #tpu.memory_space<vmem>>, vector<1x1024xf32>
    %137 = vector.broadcast %136 : vector<1x1024xf32> to vector<8x1024xf32>
    %138 = arith.mulf %135, %137 : vector<8x1024xf32>
    %c0_196 = arith.constant 0 : index
    %c128_197 = arith.constant 128 : index
    %139 = vector.load %arg11[%c0_196, %c128_197] : memref<8x1280xf32, #tpu.memory_space<vmem>>, vector<8x1024xf32>
    tpu.vector_store %arg11[%c0_196, %c128_197], %138 {strides = array<i32>} : memref<8x1280xf32, #tpu.memory_space<vmem>>, vector<8x1024xf32>,
    %c0_198 = arith.constant 0 : index
    %c17_199 = arith.constant 17 : index
    %140 = vector.load %arg11[%c0_198, %c17_199] : memref<8x1280xf32, #tpu.memory_space<vmem>>, vector<8x1024xf32>
    %c0_200 = arith.constant 0 : index
    %c0_201 = arith.constant 0 : index
    %141 = vector.load %arg12[%c0_200, %c0_201] : memref<216x1024xf32, #tpu.memory_space<vmem>>, vector<8x1024xf32>
    tpu.vector_store %arg12[%c0_200, %c0_201], %140 {strides = array<i32>} : memref<216x1024xf32, #tpu.memory_space<vmem>>, vector<8x1024xf32>,
    %c0_202 = arith.constant 0 : index
    %c18_203 = arith.constant 18 : index
    %142 = vector.load %arg11[%c0_202, %c18_203] : memref<8x1280xf32, #tpu.memory_space<vmem>>, vector<8x1024xf32>
    %c8_204 = arith.constant 8 : index
    %c0_205 = arith.constant 0 : index
    %143 = vector.load %arg12[%c8_204, %c0_205] : memref<216x1024xf32, #tpu.memory_space<vmem>>, vector<8x1024xf32>
    tpu.vector_store %arg12[%c8_204, %c0_205], %142 {strides = array<i32>} : memref<216x1024xf32, #tpu.memory_space<vmem>>, vector<8x1024xf32>,
    %c0_206 = arith.constant 0 : index
    %c19_207 = arith.constant 19 : index
    %144 = vector.load %arg11[%c0_206, %c19_207] : memref<8x1280xf32, #tpu.memory_space<vmem>>, vector<8x1024xf32>
    %c16_208 = arith.constant 16 : index
    %c0_209 = arith.constant 0 : index
    %145 = vector.load %arg12[%c16_208, %c0_209] : memref<216x1024xf32, #tpu.memory_space<vmem>>, vector<8x1024xf32>
    tpu.vector_store %arg12[%c16_208, %c0_209], %144 {strides = array<i32>} : memref<216x1024xf32, #tpu.memory_space<vmem>>, vector<8x1024xf32>,
    %c0_210 = arith.constant 0 : index
    %c27_211 = arith.constant 27 : index
    %146 = vector.load %arg11[%c0_210, %c27_211] : memref<8x1280xf32, #tpu.memory_space<vmem>>, vector<8x1024xf32>
    %c24_212 = arith.constant 24 : index
    %c0_213 = arith.constant 0 : index
    %147 = vector.load %arg12[%c24_212, %c0_213] : memref<216x1024xf32, #tpu.memory_space<vmem>>, vector<8x1024xf32>
    tpu.vector_store %arg12[%c24_212, %c0_213], %146 {strides = array<i32>} : memref<216x1024xf32, #tpu.memory_space<vmem>>, vector<8x1024xf32>,
    %c0_214 = arith.constant 0 : index
    %c28_215 = arith.constant 28 : index
    %148 = vector.load %arg11[%c0_214, %c28_215] : memref<8x1280xf32, #tpu.memory_space<vmem>>, vector<8x1024xf32>
    %c32_216 = arith.constant 32 : index
    %c0_217 = arith.constant 0 : index
    %149 = vector.load %arg12[%c32_216, %c0_217] : memref<216x1024xf32, #tpu.memory_space<vmem>>, vector<8x1024xf32>
    tpu.vector_store %arg12[%c32_216, %c0_217], %148 {strides = array<i32>} : memref<216x1024xf32, #tpu.memory_space<vmem>>, vector<8x1024xf32>,
    %c0_218 = arith.constant 0 : index
    %c29_219 = arith.constant 29 : index
    %150 = vector.load %arg11[%c0_218, %c29_219] : memref<8x1280xf32, #tpu.memory_space<vmem>>, vector<8x1024xf32>
    %c40_220 = arith.constant 40 : index
    %c0_221 = arith.constant 0 : index
    %151 = vector.load %arg12[%c40_220, %c0_221] : memref<216x1024xf32, #tpu.memory_space<vmem>>, vector<8x1024xf32>
    tpu.vector_store %arg12[%c40_220, %c0_221], %150 {strides = array<i32>} : memref<216x1024xf32, #tpu.memory_space<vmem>>, vector<8x1024xf32>,
    %c0_222 = arith.constant 0 : index
    %c37_223 = arith.constant 37 : index
    %152 = vector.load %arg11[%c0_222, %c37_223] : memref<8x1280xf32, #tpu.memory_space<vmem>>, vector<8x1024xf32>
    %c48_224 = arith.constant 48 : index
    %c0_225 = arith.constant 0 : index
    %153 = vector.load %arg12[%c48_224, %c0_225] : memref<216x1024xf32, #tpu.memory_space<vmem>>, vector<8x1024xf32>
    tpu.vector_store %arg12[%c48_224, %c0_225], %152 {strides = array<i32>} : memref<216x1024xf32, #tpu.memory_space<vmem>>, vector<8x1024xf32>,
    %c0_226 = arith.constant 0 : index
    %c38_227 = arith.constant 38 : index
    %154 = vector.load %arg11[%c0_226, %c38_227] : memref<8x1280xf32, #tpu.memory_space<vmem>>, vector<8x1024xf32>
    %c56_228 = arith.constant 56 : index
    %c0_229 = arith.constant 0 : index
    %155 = vector.load %arg12[%c56_228, %c0_229] : memref<216x1024xf32, #tpu.memory_space<vmem>>, vector<8x1024xf32>
    tpu.vector_store %arg12[%c56_228, %c0_229], %154 {strides = array<i32>} : memref<216x1024xf32, #tpu.memory_space<vmem>>, vector<8x1024xf32>,
    %c0_230 = arith.constant 0 : index
    %c39_231 = arith.constant 39 : index
    %156 = vector.load %arg11[%c0_230, %c39_231] : memref<8x1280xf32, #tpu.memory_space<vmem>>, vector<8x1024xf32>
    %c64_232 = arith.constant 64 : index
    %c0_233 = arith.constant 0 : index
    %157 = vector.load %arg12[%c64_232, %c0_233] : memref<216x1024xf32, #tpu.memory_space<vmem>>, vector<8x1024xf32>
    tpu.vector_store %arg12[%c64_232, %c0_233], %156 {strides = array<i32>} : memref<216x1024xf32, #tpu.memory_space<vmem>>, vector<8x1024xf32>,
    %c0_234 = arith.constant 0 : index
    %c117_235 = arith.constant 117 : index
    %158 = vector.load %arg11[%c0_234, %c117_235] : memref<8x1280xf32, #tpu.memory_space<vmem>>, vector<8x1024xf32>
    %c72_236 = arith.constant 72 : index
    %c0_237 = arith.constant 0 : index
    %159 = vector.load %arg12[%c72_236, %c0_237] : memref<216x1024xf32, #tpu.memory_space<vmem>>, vector<8x1024xf32>
    tpu.vector_store %arg12[%c72_236, %c0_237], %158 {strides = array<i32>} : memref<216x1024xf32, #tpu.memory_space<vmem>>, vector<8x1024xf32>,
    %c0_238 = arith.constant 0 : index
    %c118_239 = arith.constant 118 : index
    %160 = vector.load %arg11[%c0_238, %c118_239] : memref<8x1280xf32, #tpu.memory_space<vmem>>, vector<8x1024xf32>
    %c80_240 = arith.constant 80 : index
    %c0_241 = arith.constant 0 : index
    %161 = vector.load %arg12[%c80_240, %c0_241] : memref<216x1024xf32, #tpu.memory_space<vmem>>, vector<8x1024xf32>
    tpu.vector_store %arg12[%c80_240, %c0_241], %160 {strides = array<i32>} : memref<216x1024xf32, #tpu.memory_space<vmem>>, vector<8x1024xf32>,
    %c0_242 = arith.constant 0 : index
    %c119_243 = arith.constant 119 : index
    %162 = vector.load %arg11[%c0_242, %c119_243] : memref<8x1280xf32, #tpu.memory_space<vmem>>, vector<8x1024xf32>
    %c88_244 = arith.constant 88 : index
    %c0_245 = arith.constant 0 : index
    %163 = vector.load %arg12[%c88_244, %c0_245] : memref<216x1024xf32, #tpu.memory_space<vmem>>, vector<8x1024xf32>
    tpu.vector_store %arg12[%c88_244, %c0_245], %162 {strides = array<i32>} : memref<216x1024xf32, #tpu.memory_space<vmem>>, vector<8x1024xf32>,
    %c0_246 = arith.constant 0 : index
    %c127_247 = arith.constant 127 : index
    %164 = vector.load %arg11[%c0_246, %c127_247] : memref<8x1280xf32, #tpu.memory_space<vmem>>, vector<8x1024xf32>
    %c96_248 = arith.constant 96 : index
    %c0_249 = arith.constant 0 : index
    %165 = vector.load %arg12[%c96_248, %c0_249] : memref<216x1024xf32, #tpu.memory_space<vmem>>, vector<8x1024xf32>
    tpu.vector_store %arg12[%c96_248, %c0_249], %164 {strides = array<i32>} : memref<216x1024xf32, #tpu.memory_space<vmem>>, vector<8x1024xf32>,
    %c0_250 = arith.constant 0 : index
    %c128_251 = arith.constant 128 : index
    %166 = vector.load %arg11[%c0_250, %c128_251] : memref<8x1280xf32, #tpu.memory_space<vmem>>, vector<8x1024xf32>
    %c104_252 = arith.constant 104 : index
    %c0_253 = arith.constant 0 : index
    %167 = vector.load %arg12[%c104_252, %c0_253] : memref<216x1024xf32, #tpu.memory_space<vmem>>, vector<8x1024xf32>
    tpu.vector_store %arg12[%c104_252, %c0_253], %166 {strides = array<i32>} : memref<216x1024xf32, #tpu.memory_space<vmem>>, vector<8x1024xf32>,
    %c0_254 = arith.constant 0 : index
    %c129_255 = arith.constant 129 : index
    %168 = vector.load %arg11[%c0_254, %c129_255] : memref<8x1280xf32, #tpu.memory_space<vmem>>, vector<8x1024xf32>
    %c112_256 = arith.constant 112 : index
    %c0_257 = arith.constant 0 : index
    %169 = vector.load %arg12[%c112_256, %c0_257] : memref<216x1024xf32, #tpu.memory_space<vmem>>, vector<8x1024xf32>
    tpu.vector_store %arg12[%c112_256, %c0_257], %168 {strides = array<i32>} : memref<216x1024xf32, #tpu.memory_space<vmem>>, vector<8x1024xf32>,
    %c0_258 = arith.constant 0 : index
    %c137_259 = arith.constant 137 : index
    %170 = vector.load %arg11[%c0_258, %c137_259] : memref<8x1280xf32, #tpu.memory_space<vmem>>, vector<8x1024xf32>
    %c120_260 = arith.constant 120 : index
    %c0_261 = arith.constant 0 : index
    %171 = vector.load %arg12[%c120_260, %c0_261] : memref<216x1024xf32, #tpu.memory_space<vmem>>, vector<8x1024xf32>
    tpu.vector_store %arg12[%c120_260, %c0_261], %170 {strides = array<i32>} : memref<216x1024xf32, #tpu.memory_space<vmem>>, vector<8x1024xf32>,
    %c0_262 = arith.constant 0 : index
    %c138_263 = arith.constant 138 : index
    %172 = vector.load %arg11[%c0_262, %c138_263] : memref<8x1280xf32, #tpu.memory_space<vmem>>, vector<8x1024xf32>
    %c128_264 = arith.constant 128 : index
    %c0_265 = arith.constant 0 : index
    %173 = vector.load %arg12[%c128_264, %c0_265] : memref<216x1024xf32, #tpu.memory_space<vmem>>, vector<8x1024xf32>
    tpu.vector_store %arg12[%c128_264, %c0_265], %172 {strides = array<i32>} : memref<216x1024xf32, #tpu.memory_space<vmem>>, vector<8x1024xf32>,
    %c0_266 = arith.constant 0 : index
    %c139_267 = arith.constant 139 : index
    %174 = vector.load %arg11[%c0_266, %c139_267] : memref<8x1280xf32, #tpu.memory_space<vmem>>, vector<8x1024xf32>
    %c136_268 = arith.constant 136 : index
    %c0_269 = arith.constant 0 : index
    %175 = vector.load %arg12[%c136_268, %c0_269] : memref<216x1024xf32, #tpu.memory_space<vmem>>, vector<8x1024xf32>
    tpu.vector_store %arg12[%c136_268, %c0_269], %174 {strides = array<i32>} : memref<216x1024xf32, #tpu.memory_space<vmem>>, vector<8x1024xf32>,
    %c0_270 = arith.constant 0 : index
    %c217_271 = arith.constant 217 : index
    %176 = vector.load %arg11[%c0_270, %c217_271] : memref<8x1280xf32, #tpu.memory_space<vmem>>, vector<8x1024xf32>
    %c144_272 = arith.constant 144 : index
    %c0_273 = arith.constant 0 : index
    %177 = vector.load %arg12[%c144_272, %c0_273] : memref<216x1024xf32, #tpu.memory_space<vmem>>, vector<8x1024xf32>
    tpu.vector_store %arg12[%c144_272, %c0_273], %176 {strides = array<i32>} : memref<216x1024xf32, #tpu.memory_space<vmem>>, vector<8x1024xf32>,
    %c0_274 = arith.constant 0 : index
    %c218_275 = arith.constant 218 : index
    %178 = vector.load %arg11[%c0_274, %c218_275] : memref<8x1280xf32, #tpu.memory_space<vmem>>, vector<8x1024xf32>
    %c152_276 = arith.constant 152 : index
    %c0_277 = arith.constant 0 : index
    %179 = vector.load %arg12[%c152_276, %c0_277] : memref<216x1024xf32, #tpu.memory_space<vmem>>, vector<8x1024xf32>
    tpu.vector_store %arg12[%c152_276, %c0_277], %178 {strides = array<i32>} : memref<216x1024xf32, #tpu.memory_space<vmem>>, vector<8x1024xf32>,
    %c0_278 = arith.constant 0 : index
    %c219_279 = arith.constant 219 : index
    %180 = vector.load %arg11[%c0_278, %c219_279] : memref<8x1280xf32, #tpu.memory_space<vmem>>, vector<8x1024xf32>
    %c160_280 = arith.constant 160 : index
    %c0_281 = arith.constant 0 : index
    %181 = vector.load %arg12[%c160_280, %c0_281] : memref<216x1024xf32, #tpu.memory_space<vmem>>, vector<8x1024xf32>
    tpu.vector_store %arg12[%c160_280, %c0_281], %180 {strides = array<i32>} : memref<216x1024xf32, #tpu.memory_space<vmem>>, vector<8x1024xf32>,
    %c0_282 = arith.constant 0 : index
    %c227_283 = arith.constant 227 : index
    %182 = vector.load %arg11[%c0_282, %c227_283] : memref<8x1280xf32, #tpu.memory_space<vmem>>, vector<8x1024xf32>
    %c168_284 = arith.constant 168 : index
    %c0_285 = arith.constant 0 : index
    %183 = vector.load %arg12[%c168_284, %c0_285] : memref<216x1024xf32, #tpu.memory_space<vmem>>, vector<8x1024xf32>
    tpu.vector_store %arg12[%c168_284, %c0_285], %182 {strides = array<i32>} : memref<216x1024xf32, #tpu.memory_space<vmem>>, vector<8x1024xf32>,
    %c0_286 = arith.constant 0 : index
    %c228_287 = arith.constant 228 : index
    %184 = vector.load %arg11[%c0_286, %c228_287] : memref<8x1280xf32, #tpu.memory_space<vmem>>, vector<8x1024xf32>
    %c176_288 = arith.constant 176 : index
    %c0_289 = arith.constant 0 : index
    %185 = vector.load %arg12[%c176_288, %c0_289] : memref<216x1024xf32, #tpu.memory_space<vmem>>, vector<8x1024xf32>
    tpu.vector_store %arg12[%c176_288, %c0_289], %184 {strides = array<i32>} : memref<216x1024xf32, #tpu.memory_space<vmem>>, vector<8x1024xf32>,
    %c0_290 = arith.constant 0 : index
    %c229_291 = arith.constant 229 : index
    %186 = vector.load %arg11[%c0_290, %c229_291] : memref<8x1280xf32, #tpu.memory_space<vmem>>, vector<8x1024xf32>
    %c184_292 = arith.constant 184 : index
    %c0_293 = arith.constant 0 : index
    %187 = vector.load %arg12[%c184_292, %c0_293] : memref<216x1024xf32, #tpu.memory_space<vmem>>, vector<8x1024xf32>
    tpu.vector_store %arg12[%c184_292, %c0_293], %186 {strides = array<i32>} : memref<216x1024xf32, #tpu.memory_space<vmem>>, vector<8x1024xf32>,
    %c0_294 = arith.constant 0 : index
    %c237_295 = arith.constant 237 : index
    %188 = vector.load %arg11[%c0_294, %c237_295] : memref<8x1280xf32, #tpu.memory_space<vmem>>, vector<8x1024xf32>
    %c192_296 = arith.constant 192 : index
    %c0_297 = arith.constant 0 : index
    %189 = vector.load %arg12[%c192_296, %c0_297] : memref<216x1024xf32, #tpu.memory_space<vmem>>, vector<8x1024xf32>
    tpu.vector_store %arg12[%c192_296, %c0_297], %188 {strides = array<i32>} : memref<216x1024xf32, #tpu.memory_space<vmem>>, vector<8x1024xf32>,
    %c0_298 = arith.constant 0 : index
    %c238_299 = arith.constant 238 : index
    %190 = vector.load %arg11[%c0_298, %c238_299] : memref<8x1280xf32, #tpu.memory_space<vmem>>, vector<8x1024xf32>
    %c200_300 = arith.constant 200 : index
    %c0_301 = arith.constant 0 : index
    %191 = vector.load %arg12[%c200_300, %c0_301] : memref<216x1024xf32, #tpu.memory_space<vmem>>, vector<8x1024xf32>
    tpu.vector_store %arg12[%c200_300, %c0_301], %190 {strides = array<i32>} : memref<216x1024xf32, #tpu.memory_space<vmem>>, vector<8x1024xf32>,
    %c0_302 = arith.constant 0 : index
    %c239_303 = arith.constant 239 : index
    %192 = vector.load %arg11[%c0_302, %c239_303] : memref<8x1280xf32, #tpu.memory_space<vmem>>, vector<8x1024xf32>
    %c208_304 = arith.constant 208 : index
    %c0_305 = arith.constant 0 : index
    %193 = vector.load %arg12[%c208_304, %c0_305] : memref<216x1024xf32, #tpu.memory_space<vmem>>, vector<8x1024xf32>
    tpu.vector_store %arg12[%c208_304, %c0_305], %192 {strides = array<i32>} : memref<216x1024xf32, #tpu.memory_space<vmem>>, vector<8x1024xf32>,
    %c0_306 = arith.constant 0 : index
    %c0_307 = arith.constant 0 : index
    %194 = vector.load %arg8[%c0_306, %c0_307] : memref<8x216xf32, #tpu.memory_space<vmem>>, vector<8x216xf32>
    %c0_308 = arith.constant 0 : index
    %c0_309 = arith.constant 0 : index
    %195 = vector.load %arg12[%c0_308, %c0_309] : memref<216x1024xf32, #tpu.memory_space<vmem>>, vector<216x1024xf32>
    %cst_310 = arith.constant dense<0.000000e+00> : vector<8x1024xf32>
    %196 = tpu.matmul %194, %195, %cst_310 {dimension_numbers = #tpu.dot_dimension_numbers<[1], [0], [0], [1], [0, 0, 1, 1], [], []>} : vector<8x216xf32>, vector<216x1024xf32>, vector<8x1024xf32> -> vector<8x1024xf32>
    %c0_311 = arith.constant 0 : index
    %c0_312 = arith.constant 0 : index
    %197 = vector.load %arg9[%c0_311, %c0_312] : memref<8x1xf32, #tpu.memory_space<vmem>>, vector<8x1xf32>
    %198 = vector.broadcast %197 : vector<8x1xf32> to vector<8x1024xf32>
    %199 = arith.addf %196, %198 : vector<8x1024xf32>
    %200 = vector.extract_strided_slice %199 {offsets = [0, 0], sizes = [2, 1024], strides = [1, 1]} : vector<8x1024xf32> to vector<2x1024xf32>
    %c0_313 = arith.constant 0 : index
    %c0_314 = arith.constant 0 : index
    %c0_315 = arith.constant 0 : index
    %201 = vector.load %arg10[%c0_313, %c0_314, %c0_315] : memref<1x2x1024xf32, #tpu.memory_space<vmem>>, vector<1x2x1024xf32>
    %202 = vector.shape_cast %201 : vector<1x2x1024xf32> to vector<2x1024xf32>
    %203 = vector.shape_cast %200 : vector<2x1024xf32> to vector<1x2x1024xf32>
    tpu.vector_store %arg10[%c0_313, %c0_314, %c0_315], %203 {strides = array<i32>} : memref<1x2x1024xf32, #tpu.memory_space<vmem>>, vector<1x2x1024xf32>,
    return
  }
  func.func @transform_0(%arg0: i32) -> (i32, i32, i32) {
    %c0_i32 = arith.constant 0 : i32
    %c0_i32_0 = arith.constant 0 : i32
    %c0_i32_1 = arith.constant 0 : i32
    return %arg0, %c0_i32, %c0_i32_0 : i32, i32, i32
  }
  func.func @transform_1(%arg0: i32) -> (i32, i32, i32) {
    %c0_i32 = arith.constant 0 : i32
    %c0_i32_0 = arith.constant 0 : i32
    %c0_i32_1 = arith.constant 0 : i32
    return %arg0, %c0_i32, %c0_i32_0 : i32, i32, i32
  }
  func.func @transform_2(%arg0: i32) -> (i32, i32) {
    %c0_i32 = arith.constant 0 : i32
    %c0_i32_0 = arith.constant 0 : i32
    %c0_i32_1 = arith.constant 0 : i32
    return %c0_i32, %c0_i32_0 : i32, i32
  }
  func.func @transform_3(%arg0: i32) -> (i32, i32) {
    %c0_i32 = arith.constant 0 : i32
    %c0_i32_0 = arith.constant 0 : i32
    %c0_i32_1 = arith.constant 0 : i32
    return %c0_i32, %c0_i32_0 : i32, i32
  }
  func.func @transform_4(%arg0: i32) -> (i32, i32) {
    %c0_i32 = arith.constant 0 : i32
    %c0_i32_0 = arith.constant 0 : i32
    %c0_i32_1 = arith.constant 0 : i32
    return %c0_i32, %c0_i32_0 : i32, i32
  }
  func.func @transform_5(%arg0: i32) -> (i32, i32) {
    %c0_i32 = arith.constant 0 : i32
    %c0_i32_0 = arith.constant 0 : i32
    %c0_i32_1 = arith.constant 0 : i32
    return %c0_i32, %c0_i32_0 : i32, i32
  }
  func.func @transform_6(%arg0: i32) -> (i32, i32) {
    %c0_i32 = arith.constant 0 : i32
    %c0_i32_0 = arith.constant 0 : i32
    %c0_i32_1 = arith.constant 0 : i32
    return %c0_i32, %c0_i32_0 : i32, i32
  }
  func.func @transform_7(%arg0: i32) -> (i32, i32) {
    %c0_i32 = arith.constant 0 : i32
    %c0_i32_0 = arith.constant 0 : i32
    %c0_i32_1 = arith.constant 0 : i32
    return %c0_i32, %c0_i32_0 : i32, i32
  }
  func.func @transform_8(%arg0: i32) -> (i32, i32) {
    %c0_i32 = arith.constant 0 : i32
    %c0_i32_0 = arith.constant 0 : i32
    %c0_i32_1 = arith.constant 0 : i32
    return %c0_i32, %c0_i32_0 : i32, i32
  }
  func.func @transform_9(%arg0: i32) -> (i32, i32, i32) {
    %c0_i32 = arith.constant 0 : i32
    %c0_i32_0 = arith.constant 0 : i32
    %c0_i32_1 = arith.constant 0 : i32
    return %arg0, %c0_i32, %c0_i32_0 : i32, i32, i32
  }
}

</mosaic_0001>

<llo_original>
// kernel: tpu_custom_call.1
$region0: #{tpu_custom_call.1}
  #allocation0 [shape = 'u32[]', space=smem, size = 0x4, offset = 0x4, fixed_abs, tag = 'smem constant byte address 0x4 - core index']
  #allocation1 [shape = 'u32[72,128]{1,0:T(1,128)}', space=vmem, size = 0x9000, scoped, tag = 'internal scratch']
  #allocation2 [shape = 'f32[8,1280]{1,0:T(8,128)}', space=vmem, size = 0xa000, scoped, tag = 'scratch operand']
  #allocation3 [shape = 'f32[216,1024]{1,0:T(8,128)}', space=vmem, size = 0xd8000, scoped, tag = 'scratch operand']
  %s0 = inlined_call_operand.hbm [shape: f32[2,2,1024], index: 0, kind: input, shape index: {}]
  %s1 = inlined_call_operand.hbm [shape: f32[2,2,1024], index: 1, kind: input, shape index: {}]
  %s2 = inlined_call_operand.hbm [shape: f32[1,1024], index: 2, kind: input, shape index: {}]
  %s3 = inlined_call_operand.vmem [shape: f32[8,216], index: 3, kind: input, shape index: {}]
  %s4 = inlined_call_operand.vmem [shape: f32[8,1], index: 4, kind: input, shape index: {}]
  %s5 = inlined_call_operand.hbm [shape: f32[8,216], index: 5, kind: input, shape index: {}]
  %s6 = inlined_call_operand.vmem [shape: f32[8,1], index: 6, kind: input, shape index: {}]
  %s7 = inlined_call_operand.vmem [shape: f32[8,216], index: 7, kind: input, shape index: {}]
  %s8 = inlined_call_operand.vmem [shape: f32[8,1], index: 8, kind: input, shape index: {}]
  %s9 = inlined_call_operand.hbm [shape: f32[2,2,1024], index: 9, kind: output, shape index: {}]
  %s10 = sld [smem:[#allocation0]]
  $region85: #{tpu_custom_call.1} parent=0
    _
  %s12 = ssub.s32 1, %s10
  %s13 = scalar_select 0, %s12, %s10
  $region1: #{tpu_custom_call.1} parent=0
    #allocation4 [shape = 'u8[16384]{0}', space=vmem, size = 0x4000, scoped, tag = 'input window, operand 0']
    #allocation5 [shape = 's32[2]{0}', space=sflag, size = 0x8, scoped, tag = 'scoped memory for tpu_custom_call.1']
    #allocation6 [shape = 's32[2]{0}', space=sflag, size = 0x8, scoped, tag = 'scoped memory for tpu_custom_call.1']
    #allocation7 [shape = 'u8[16384]{0}', space=vmem, size = 0x4000, scoped, tag = 'input window, operand 1']
    #allocation8 [shape = 's32[2]{0}', space=sflag, size = 0x8, scoped, tag = 'scoped memory for tpu_custom_call.1']
    #allocation9 [shape = 'u8[4096]{0}', space=vmem, size = 0x1000, scoped, tag = 'input window, operand 2, single buffered']
    #allocation10 [shape = 'u8[8192]{0}', space=vmem, size = 0x2000, scoped, tag = 'input window, operand 5, single buffered']
    #allocation11 [shape = 's32[1]{0}', space=sflag, size = 0x4, scoped, tag = 'scoped memory for tpu_custom_call.1']
    #allocation12 [shape = 'u8[16384]{0}', space=vmem, size = 0x4000, scoped, tag = 'output window, operand 0']
    %14 = vsyncpa [#allocation5], 0
    %s15 = scalar_lea.sflag [#allocation5], 1
    %16 = vsyncpa %s15, 0
    %17 = vsyncpa [#allocation8], 0
    %s18 = scalar_lea.sflag [#allocation8], 1
    %19 = vsyncpa %s18, 0
    %20 = vsyncpa [#allocation11], 0
    %21 = vsyncpa [#allocation6], 0
    %s22 = scalar_lea.sflag [#allocation6], 1
    %23 = vsyncpa %s22, 0
    loop: start=0, step=1, limit=4
    $region2: #{tpu_custom_call.1} parent=1 // loop_pre_header
      _
    $region3: #{tpu_custom_call.1} parent=1 // loop_header
      %s25 = sphi 0, %s29
      %p26 = scmp.ge.s32.totalorder %s25, 4
      %s35 = sphi 0, %s37
      %s38 = sphi 0, %s35
      %s39 = sphi 0, %s38
      %s55 = sphi 0, %s39
      %s61 = sphi 0, %s63
      %s64 = sphi 0, %s61
      %s65 = sphi 0, %s64
      %s81 = sphi 0, %s65
      %s85 = sphi 0, %s85
      %s87 = sphi 0, %s85
      %s88 = sphi 0, %s87
      %s102 = sphi 0, %s88
      %s106 = sphi 0, %s106
      %s108 = sphi 0, %s106
      %s109 = sphi 0, %s108
      %s123 = sphi 0, %s109
      %s127 = sphi 0, %s127
      %s129 = sphi 0, %s127
      %s130 = sphi 0, %s129
      %s144 = sphi 0, %s130
      %s148 = sphi 0, %s148
      %s150 = sphi 0, %s148
      %s151 = sphi 0, %s150
      %s165 = sphi 0, %s151
      %s169 = sphi 0, %s169
      %s171 = sphi 0, %s169
      %s172 = sphi 0, %s171
      %s186 = sphi 0, %s172
      %s190 = sphi 0, %s190
      %s192 = sphi 0, %s190
      %s193 = sphi 0, %s192
      %s207 = sphi 0, %s193
      %s211 = sphi 0, %s211
      %s213 = sphi 0, %s211
      %s214 = sphi 0, %s213
      %s228 = sphi 0, %s214
      %s234 = sphi 0, %s236
      %s237 = sphi 0, %s234
      %s238 = sphi 0, %s237
      %s254 = sphi 0, %s238
    $region4: #{tpu_custom_call.1} parent=1 // loop_header_branch
      %28 = sbr.rel (%p26) target = $region8
    $region5: #{tpu_custom_call.1} parent=1 // loop_body
      %s30 = ssub.s32 %s25, 1
      %s31 = ssub.s32 %s25, 2
      %s32 = sadd.s32 %s25, 1
      %s33 = ssub.s32 %s25, %s32
      %p34 = scmp.eq.s32.totalorder %s33, 0
      %s36 = sadd.s32 %s35, 1
      %s37 = scalar_select %p34, %s35, %s36
      %p40 = pneg %p34
      %p41 = scmp.eq.s32.totalorder %s25, 1
      %p42 = por %p40, %p41
      %p43 = scmp.ne.s32.totalorder %s35, %s38
      %p44 = scmp.eq.s32.totalorder %s25, 0
      %p45 = por %p43, %p44
      %p46 = scmp.ne.s32.totalorder %s35, %s38
      %p47 = scmp.eq.s32.totalorder %s30, 1
      %p48 = por %p46, %p47
      %p49 = scmp.ne.s32.totalorder %s38, %s39
      %p50 = scmp.eq.s32.totalorder %s30, 0
      %p51 = por %p49, %p50
      %p52 = scmp.ne.s32.totalorder %s38, %s39
      %p53 = scmp.eq.s32.totalorder %s31, 1
      %p54 = por %p52, %p53
      %p56 = scmp.ne.s32.totalorder %s39, %s55
      %p57 = scmp.eq.s32.totalorder %s31, 0
      %p58 = por %p56, %p57
      %s59 = ssub.s32 %s25, %s32
      %p60 = scmp.eq.s32.totalorder %s59, 0
      %s62 = sadd.s32 %s61, 1
      %s63 = scalar_select %p60, %s61, %s62
      %p66 = pneg %p60
      %p67 = scmp.eq.s32.totalorder %s25, 1
      %p68 = por %p66, %p67
      %p69 = scmp.ne.s32.totalorder %s61, %s64
      %p70 = scmp.eq.s32.totalorder %s25, 0
      %p71 = por %p69, %p70
      %p72 = scmp.ne.s32.totalorder %s61, %s64
      %p73 = scmp.eq.s32.totalorder %s30, 1
      %p74 = por %p72, %p73
      %p75 = scmp.ne.s32.totalorder %s64, %s65
      %p76 = scmp.eq.s32.totalorder %s30, 0
      %p77 = por %p75, %p76
      %p78 = scmp.ne.s32.totalorder %s64, %s65
      %p79 = scmp.eq.s32.totalorder %s31, 1
      %p80 = por %p78, %p79
      %p82 = scmp.ne.s32.totalorder %s65, %s81
      %p83 = scmp.eq.s32.totalorder %s31, 0
      %p84 = por %p82, %p83
      %s86 = sadd.s32 %s85, 1
      %p89 = scmp.eq.s32.totalorder %s25, 1
      %p90 = scmp.ne.s32.totalorder %s85, %s87
      %p91 = scmp.eq.s32.totalorder %s25, 0
      %p92 = por %p90, %p91
      %p93 = scmp.ne.s32.totalorder %s85, %s87
      %p94 = scmp.eq.s32.totalorder %s30, 1
      %p95 = por %p93, %p94
      %p96 = scmp.ne.s32.totalorder %s87, %s88
      %p97 = scmp.eq.s32.totalorder %s30, 0
      %p98 = por %p96, %p97
      %p99 = scmp.ne.s32.totalorder %s87, %s88
      %p100 = scmp.eq.s32.totalorder %s31, 1
      %p101 = por %p99, %p100
      %p103 = scmp.ne.s32.totalorder %s88, %s102
      %p104 = scmp.eq.s32.totalorder %s31, 0
      %p105 = por %p103, %p104
      %s107 = sadd.s32 %s106, 1
      %p110 = scmp.eq.s32.totalorder %s25, 1
      %p111 = scmp.ne.s32.totalorder %s106, %s108
      %p112 = scmp.eq.s32.totalorder %s25, 0
      %p113 = por %p111, %p112
      %p114 = scmp.ne.s32.totalorder %s106, %s108
      %p115 = scmp.eq.s32.totalorder %s30, 1
      %p116 = por %p114, %p115
      %p117 = scmp.ne.s32.totalorder %s108, %s109
      %p118 = scmp.eq.s32.totalorder %s30, 0
      %p119 = por %p117, %p118
      %p120 = scmp.ne.s32.totalorder %s108, %s109
      %p121 = scmp.eq.s32.totalorder %s31, 1
      %p122 = por %p120, %p121
      %p124 = scmp.ne.s32.totalorder %s109, %s123
      %p125 = scmp.eq.s32.totalorder %s31, 0
      %p126 = por %p124, %p125
      %s128 = sadd.s32 %s127, 1
      %p131 = scmp.eq.s32.totalorder %s25, 1
      %p132 = scmp.ne.s32.totalorder %s127, %s129
      %p133 = scmp.eq.s32.totalorder %s25, 0
      %p134 = por %p132, %p133
      %p135 = scmp.ne.s32.totalorder %s127, %s129
      %p136 = scmp.eq.s32.totalorder %s30, 1
      %p137 = por %p135, %p136
      %p138 = scmp.ne.s32.totalorder %s129, %s130
      %p139 = scmp.eq.s32.totalorder %s30, 0
      %p140 = por %p138, %p139
      %p141 = scmp.ne.s32.totalorder %s129, %s130
      %p142 = scmp.eq.s32.totalorder %s31, 1
      %p143 = por %p141, %p142
      %p145 = scmp.ne.s32.totalorder %s130, %s144
      %p146 = scmp.eq.s32.totalorder %s31, 0
      %p147 = por %p145, %p146
      %s149 = sadd.s32 %s148, 1
      %p152 = scmp.eq.s32.totalorder %s25, 1
      %p153 = scmp.ne.s32.totalorder %s148, %s150
      %p154 = scmp.eq.s32.totalorder %s25, 0
      %p155 = por %p153, %p154
      %p156 = scmp.ne.s32.totalorder %s148, %s150
      %p157 = scmp.eq.s32.totalorder %s30, 1
      %p158 = por %p156, %p157
      %p159 = scmp.ne.s32.totalorder %s150, %s151
      %p160 = scmp.eq.s32.totalorder %s30, 0
      %p161 = por %p159, %p160
      %p162 = scmp.ne.s32.totalorder %s150, %s151
      %p163 = scmp.eq.s32.totalorder %s31, 1
      %p164 = por %p162, %p163
      %p166 = scmp.ne.s32.totalorder %s151, %s165
      %p167 = scmp.eq.s32.totalorder %s31, 0
      %p168 = por %p166, %p167
      %s170 = sadd.s32 %s169, 1
      %p173 = scmp.eq.s32.totalorder %s25, 1
      %p174 = scmp.ne.s32.totalorder %s169, %s171
      %p175 = scmp.eq.s32.totalorder %s25, 0
      %p176 = por %p174, %p175
      %p177 = scmp.ne.s32.totalorder %s169, %s171
      %p178 = scmp.eq.s32.totalorder %s30, 1
      %p179 = por %p177, %p178
      %p180 = scmp.ne.s32.totalorder %s171, %s172
      %p181 = scmp.eq.s32.totalorder %s30, 0
      %p182 = por %p180, %p181
      %p183 = scmp.ne.s32.totalorder %s171, %s172
      %p184 = scmp.eq.s32.totalorder %s31, 1
      %p185 = por %p183, %p184
      %p187 = scmp.ne.s32.totalorder %s172, %s186
      %p188 = scmp.eq.s32.totalorder %s31, 0
      %p189 = por %p187, %p188
      %s191 = sadd.s32 %s190, 1
      %p194 = scmp.eq.s32.totalorder %s25, 1
      %p195 = scmp.ne.s32.totalorder %s190, %s192
      %p196 = scmp.eq.s32.totalorder %s25, 0
      %p197 = por %p195, %p196
      %p198 = scmp.ne.s32.totalorder %s190, %s192
      %p199 = scmp.eq.s32.totalorder %s30, 1
      %p200 = por %p198, %p199
      %p201 = scmp.ne.s32.totalorder %s192, %s193
      %p202 = scmp.eq.s32.totalorder %s30, 0
      %p203 = por %p201, %p202
      %p204 = scmp.ne.s32.totalorder %s192, %s193
      %p205 = scmp.eq.s32.totalorder %s31, 1
      %p206 = por %p204, %p205
      %p208 = scmp.ne.s32.totalorder %s193, %s207
      %p209 = scmp.eq.s32.totalorder %s31, 0
      %p210 = por %p208, %p209
      %s212 = sadd.s32 %s211, 1
      %p215 = scmp.eq.s32.totalorder %s25, 1
      %p216 = scmp.ne.s32.totalorder %s211, %s213
      %p217 = scmp.eq.s32.totalorder %s25, 0
      %p218 = por %p216, %p217
      %p219 = scmp.ne.s32.totalorder %s211, %s213
      %p220 = scmp.eq.s32.totalorder %s30, 1
      %p221 = por %p219, %p220
      %p222 = scmp.ne.s32.totalorder %s213, %s214
      %p223 = scmp.eq.s32.totalorder %s30, 0
      %p224 = por %p222, %p223
      %p225 = scmp.ne.s32.totalorder %s213, %s214
      %p226 = scmp.eq.s32.totalorder %s31, 1
      %p227 = por %p225, %p226
      %p229 = scmp.ne.s32.totalorder %s214, %s228
      %p230 = scmp.eq.s32.totalorder %s31, 0
      %p231 = por %p229, %p230
      %s232 = ssub.s32 %s25, %s32
      %p233 = scmp.eq.s32.totalorder %s232, 0
      %s235 = sadd.s32 %s234, 1
      %s236 = scalar_select %p233, %s234, %s235
      %p239 = pneg %p233
      %p240 = scmp.eq.s32.totalorder %s25, 1
      %p241 = por %p239, %p240
      %p242 = scmp.ne.s32.totalorder %s234, %s237
      %p243 = scmp.eq.s32.totalorder %s25, 0
      %p244 = por %p242, %p243
      %p245 = scmp.ne.s32.totalorder %s234, %s237
      %p246 = scmp.eq.s32.totalorder %s30, 1
      %p247 = por %p245, %p246
      %p248 = scmp.ne.s32.totalorder %s237, %s238
      %p249 = scmp.eq.s32.totalorder %s30, 0
      %p250 = por %p248, %p249
      %p251 = scmp.ne.s32.totalorder %s237, %s238
      %p252 = scmp.eq.s32.totalorder %s31, 1
      %p253 = por %p251, %p252
      %p255 = scmp.ne.s32.totalorder %s238, %s254
      %p256 = scmp.eq.s32.totalorder %s31, 0
      %p257 = por %p255, %p256
      %p258 = scmp.le.s32.totalorder 1, %s25
      %p259 = scmp.lt.s32.totalorder %s25, 3
      %p260 = pnand %p258, %p259
      %p261 = pneg %p260
      // Predicated region
      $region9: #{tpu_custom_call.1} parent=5 // pred_check
        _
      $region10: #{tpu_custom_call.1} parent=5 // pred_check_branch
        %263 = sbr.rel (%p260) target = $region12
      $region11: #{tpu_custom_call.1} parent=5 // pred_region
        %s264 = ssub.s32 %s25, 1
        // Predicated region
        $region13: #{tpu_custom_call.1} parent=11 // pred_check
          %p265 = pneg %p98
        $region14: #{tpu_custom_call.1} parent=11 // pred_check_branch
          %267 = sbr.rel (%p265) target = $region16
        $region15: #{tpu_custom_call.1} parent=11 // pred_region
          %269 = vsyncadd [#allocation8], 0
          %s271 = sshll.u32 %s2, 4
          %s272 = int_to_ptr.hbm [resolvable:$true] %s271
          %s273 = sshll.u32 [#allocation9], 4
          %s274 = int_to_ptr.vmem [resolvable:$true] %s273
          %276 = dma.hbm_to_vmem [thread:$0]  %s272, 128, %s274, [#allocation8]
        $region16: #{tpu_custom_call.1} parent=11 // pred_fallthru
          _
        // Predicated region
        $region17: #{tpu_custom_call.1} parent=11 // pred_check
          %p277 = pneg %p119
        $region18: #{tpu_custom_call.1} parent=11 // pred_check_branch
          %279 = sbr.rel (%p277) target = $region20
        $region19: #{tpu_custom_call.1} parent=11 // pred_region
          _
        $region20: #{tpu_custom_call.1} parent=11 // pred_fallthru
          _
        // Predicated region
        $region21: #{tpu_custom_call.1} parent=11 // pred_check
          %p280 = pneg %p140
        $region22: #{tpu_custom_call.1} parent=11 // pred_check_branch
          %282 = sbr.rel (%p280) target = $region24
        $region23: #{tpu_custom_call.1} parent=11 // pred_region
          _
        $region24: #{tpu_custom_call.1} parent=11 // pred_fallthru
          _
        // Predicated region
        $region25: #{tpu_custom_call.1} parent=11 // pred_check
          %p283 = pneg %p161
        $region26: #{tpu_custom_call.1} parent=11 // pred_check_branch
          %285 = sbr.rel (%p283) target = $region28
        $region27: #{tpu_custom_call.1} parent=11 // pred_region
          %287 = vsyncadd [#allocation11], 0
          %s289 = sshll.u32 %s5, 4
          %s290 = int_to_ptr.hbm [resolvable:$true] %s289
          %s291 = sshll.u32 [#allocation10], 4
          %s292 = int_to_ptr.vmem [resolvable:$true] %s291
          %294 = dma.hbm_to_vmem [thread:$0]  %s290, 256, %s292, [#allocation11]
        $region28: #{tpu_custom_call.1} parent=11 // pred_fallthru
          _
        // Predicated region
        $region29: #{tpu_custom_call.1} parent=11 // pred_check
          %p295 = pneg %p182
        $region30: #{tpu_custom_call.1} parent=11 // pred_check_branch
          %297 = sbr.rel (%p295) target = $region32
        $region31: #{tpu_custom_call.1} parent=11 // pred_region
          _
        $region32: #{tpu_custom_call.1} parent=11 // pred_fallthru
          _
        // Predicated region
        $region33: #{tpu_custom_call.1} parent=11 // pred_check
          %p298 = pneg %p203
        $region34: #{tpu_custom_call.1} parent=11 // pred_check_branch
          %300 = sbr.rel (%p298) target = $region36
        $region35: #{tpu_custom_call.1} parent=11 // pred_region
          _
        $region36: #{tpu_custom_call.1} parent=11 // pred_fallthru
          _
        // Predicated region
        $region37: #{tpu_custom_call.1} parent=11 // pred_check
          %p301 = pneg %p224
        $region38: #{tpu_custom_call.1} parent=11 // pred_check_branch
          %303 = sbr.rel (%p301) target = $region40
        $region39: #{tpu_custom_call.1} parent=11 // pred_region
          _
        $region40: #{tpu_custom_call.1} parent=11 // pred_fallthru
          _
      $region12: #{tpu_custom_call.1} parent=5 // pred_fallthru
        _
      %p304 = scmp.lt.s32.totalorder %s25, 2
      // Predicated region
      $region41: #{tpu_custom_call.1} parent=5 // pred_check
        %p305 = pneg %p304
      $region42: #{tpu_custom_call.1} parent=5 // pred_check_branch
        %307 = sbr.rel (%p305) target = $region44
      $region43: #{tpu_custom_call.1} parent=5 // pred_region
        // Predicated region
        $region45: #{tpu_custom_call.1} parent=43 // pred_check
          %p308 = pneg %p45
        $region46: #{tpu_custom_call.1} parent=43 // pred_check_branch
          %310 = sbr.rel (%p308) target = $region48
        $region47: #{tpu_custom_call.1} parent=43 // pred_region
          %s311 = sand.u32 %s35, 1
          %s312 = scalar_lea.sflag [#allocation5], %s311
          %s313 = sand.u32 %s35, 1
          %s314 = smul.addr %s313, 16
          %s315 = scalar_lea.vmem [#allocation4], %s314
          %317 = vsyncadd %s312, 0
          %s318 = smul.addr %s25, 8
          %s319 = smul.addr %s318, 2
          %s320 = scalar_lea.hbm %s0, %s319
          %s322 = sshll.u32 %s320, 4
          %s323 = int_to_ptr.hbm [resolvable:$true] %s322
          %s324 = sshll.u32 %s315, 4
          %s325 = int_to_ptr.vmem [resolvable:$true] %s324
          %327 = dma.hbm_to_vmem [thread:$0]  %s323, 256, %s325, %s312
        $region48: #{tpu_custom_call.1} parent=43 // pred_fallthru
          _
        // Predicated region
        $region49: #{tpu_custom_call.1} parent=43 // pred_check
          %p328 = pneg %p71
        $region50: #{tpu_custom_call.1} parent=43 // pred_check_branch
          %330 = sbr.rel (%p328) target = $region52
        $region51: #{tpu_custom_call.1} parent=43 // pred_region
          %s331 = sand.u32 %s25, 1
          %s332 = scalar_lea.sflag [#allocation8], %s331
          %s333 = sand.u32 %s61, 1
          %s334 = smul.addr %s333, 16
          %s335 = scalar_lea.vmem [#allocation7], %s334
          %337 = vsyncadd %s332, 0
          %s338 = smul.addr %s25, 8
          %s339 = smul.addr %s338, 2
          %s340 = scalar_lea.hbm %s1, %s339
          %s342 = sshll.u32 %s340, 4
          %s343 = int_to_ptr.hbm [resolvable:$true] %s342
          %s344 = sshll.u32 %s335, 4
          %s345 = int_to_ptr.vmem [resolvable:$true] %s344
          %347 = dma.hbm_to_vmem [thread:$0]  %s343, 256, %s345, %s332
        $region52: #{tpu_custom_call.1} parent=43 // pred_fallthru
          _
      $region44: #{tpu_custom_call.1} parent=5 // pred_fallthru
        _
      %p348 = scmp.le.s32.totalorder 1, %s25
      %p349 = scmp.lt.s32.totalorder %s25, 3
      %p350 = pnand %p348, %p349
      %p351 = pneg %p350
      // Predicated region
      $region53: #{tpu_custom_call.1} parent=5 // pred_check
        _
      $region54: #{tpu_custom_call.1} parent=5 // pred_check_branch
        %353 = sbr.rel (%p350) target = $region56
      $region55: #{tpu_custom_call.1} parent=5 // pred_region
        %s354 = ssub.s32 %s25, 1
        %s355 = sand.u32 %s38, 1
        %s356 = scalar_lea.sflag [#allocation5], %s355
        %s357 = sand.u32 %s38, 1
        %s358 = smul.addr %s357, 16
        %s359 = scalar_lea.vmem [#allocation4], %s358
        // Predicated region
        $region57: #{tpu_custom_call.1} parent=55 // pred_check
          %p360 = pneg %p51
        $region58: #{tpu_custom_call.1} parent=55 // pred_check_branch
          %362 = sbr.rel (%p360) target = $region60
        $region59: #{tpu_custom_call.1} parent=55 // pred_region
          %364 = dma.done %s356, 256
        $region60: #{tpu_custom_call.1} parent=55 // pred_fallthru
          _
        %s365 = sand.u32 %s30, 1
        %s366 = scalar_lea.sflag [#allocation8], %s365
        %s367 = sand.u32 %s64, 1
        %s368 = smul.addr %s367, 16
        %s369 = scalar_lea.vmem [#allocation7], %s368
        // Predicated region
        $region61: #{tpu_custom_call.1} parent=55 // pred_check
          %p370 = pneg %p77
        $region62: #{tpu_custom_call.1} parent=55 // pred_check_branch
          %372 = sbr.rel (%p370) target = $region64
        $region63: #{tpu_custom_call.1} parent=55 // pred_region
          %374 = dma.done %s366, 256
        $region64: #{tpu_custom_call.1} parent=55 // pred_fallthru
          _
        // Predicated region
        $region65: #{tpu_custom_call.1} parent=55 // pred_check
          %p375 = pneg %p98
        $region66: #{tpu_custom_call.1} parent=55 // pred_check_branch
          %377 = sbr.rel (%p375) target = $region68
        $region67: #{tpu_custom_call.1} parent=55 // pred_region
          %379 = dma.done [#allocation8], 128
        $region68: #{tpu_custom_call.1} parent=55 // pred_fallthru
          _
        // Predicated region
        $region69: #{tpu_custom_call.1} parent=55 // pred_check
          %p380 = pneg %p161
        $region70: #{tpu_custom_call.1} parent=55 // pred_check_branch
          %382 = sbr.rel (%p380) target = $region72
        $region71: #{tpu_custom_call.1} parent=55 // pred_region
          %384 = dma.done [#allocation11], 256
        $region72: #{tpu_custom_call.1} parent=55 // pred_fallthru
          _
        %s385 = sand.u32 %s38, 1
        %s386 = scalar_lea.sflag [#allocation5], %s385
        %s387 = sand.u32 %s38, 1
        %s388 = smul.addr %s387, 16
        %s389 = scalar_lea.vmem [#allocation4], %s388
        %p390 = pneg %p51
        %p391 = pneg %p48
        %s392 = sand.u32 %s30, 1
        %s393 = scalar_lea.sflag [#allocation8], %s392
        %s394 = sand.u32 %s64, 1
        %s395 = smul.addr %s394, 16
        %s396 = scalar_lea.vmem [#allocation7], %s395
        %p397 = pneg %p77
        %p398 = pneg %p74
        %p399 = pneg %p98
        %p400 = pneg %p95
        %p401 = pneg %p119
        %p402 = pneg %p116
        %p403 = pneg %p140
        %p404 = pneg %p137
        %p405 = pneg %p161
        %p406 = pneg %p158
        %p407 = pneg %p182
        %p408 = pneg %p179
        %p409 = pneg %p203
        %p410 = pneg %p200
        %p411 = pneg %p224
        %p412 = pneg %p221
        %p413 = pneg %p250
        %p414 = pneg %p247
        %s415 = sand.u32 %s237, 1
        %s416 = scalar_lea.sflag [#allocation6], %s415
        %s417 = sand.u32 %s237, 1
        %s418 = smul.addr %s417, 16
        %s419 = scalar_lea.vmem [#allocation12], %s418
        %420 = vst [vmem:[#allocation2] sm:$0xff] 0.0
        %421 = vst [vmem:[#allocation2 + $0x48] sm:$0xff] 0.0
        %v422 = vld [vmem:[%s359] sm:$0xff]
        %v423 = vld [vmem:[%s359 + $0x8] sm:$0xff]
        %v424 = vld [vmem:[%s369] sm:$0xff]
        %v425 = vld [vmem:[%s369 + $0x8] sm:$0xff]
        %428 = vst [vmem:[#allocation1] ss:$4 sm:$0xff] %v422
        %s429 = scalar_lea.vmem [#allocation1], 32
        %430 = vst [vmem:[%s429] ss:$4 sm:$0xff] %v423
        %v431 = vld.sshfl [vmem:[#allocation1] sm:$0xff pattern:$0x73625140]
        %v432 = vld.sshfl [vmem:[#allocation1 + $0x8] sm:$0xff pattern:$0x73625140]
        %v433 = vld.sshfl [vmem:[#allocation1 + $0x10] sm:$0xff pattern:$0x73625140]
        %v434 = vld.sshfl [vmem:[#allocation1 + $0x18] sm:$0xff pattern:$0x73625140]
        %v435 = vld.sshfl [vmem:[#allocation1 + $0x20] sm:$0xff pattern:$0x73625140]
        %v436 = vld.sshfl [vmem:[#allocation1 + $0x28] sm:$0xff pattern:$0x73625140]
        %v437 = vld.sshfl [vmem:[#allocation1 + $0x30] sm:$0xff pattern:$0x73625140]
        %v438 = vld.sshfl [vmem:[#allocation1 + $0x38] sm:$0xff pattern:$0x73625140]
        %s449 = scalar_lea.vmem [#allocation1], 1
        %450 = vst [vmem:[%s449] ss:$4 sm:$0xff] %v424
        %s451 = scalar_lea.vmem [#allocation1], 33
        %452 = vst [vmem:[%s451] ss:$4 sm:$0xff] %v425
        %v453 = vld.sshfl [vmem:[#allocation1] sm:$0xff pattern:$0x73625140]
        %v454 = vld.sshfl [vmem:[#allocation1 + $0x8] sm:$0xff pattern:$0x73625140]
        %v455 = vld.sshfl [vmem:[#allocation1 + $0x10] sm:$0xff pattern:$0x73625140]
        %v456 = vld.sshfl [vmem:[#allocation1 + $0x18] sm:$0xff pattern:$0x73625140]
        %v457 = vld.sshfl [vmem:[#allocation1 + $0x20] sm:$0xff pattern:$0x73625140]
        %v458 = vld.sshfl [vmem:[#allocation1 + $0x28] sm:$0xff pattern:$0x73625140]
        %v459 = vld.sshfl [vmem:[#allocation1 + $0x30] sm:$0xff pattern:$0x73625140]
        %v460 = vld.sshfl [vmem:[#allocation1 + $0x38] sm:$0xff pattern:$0x73625140]
        %vm469 = vcmask 1041408
        %v470 = vsel %vm469, %v431, %v453
        %v471 = vsel %vm469, %v432, %v454
        %v472 = vsel %vm469, %v433, %v455
        %v473 = vsel %vm469, %v434, %v456
        %v474 = vsel %vm469, %v435, %v457
        %v475 = vsel %vm469, %v436, %v458
        %v476 = vsel %vm469, %v437, %v459
        %v477 = vsel %vm469, %v438, %v460
        %vm478 = vcmask 1043456
        %v479 = vsel %vm478, %v470, 0.0
        %v480 = vsel %vm478, %v471, 0.0
        %v481 = vsel %vm478, %v472, 0.0
        %v482 = vsel %vm478, %v473, 0.0
        %v483 = vsel %vm478, %v474, 0.0
        %v484 = vsel %vm478, %v475, 0.0
        %v485 = vsel %vm478, %v476, 0.0
        %v486 = vsel %vm478, %v477, 0.0
        %487 = vst [vmem:[#allocation2 + $0x8] sm:$0xff] %v479
        %488 = vst [vmem:[#allocation2 + $0x10] sm:$0xff] %v480
        %489 = vst [vmem:[#allocation2 + $0x18] sm:$0xff] %v481
        %490 = vst [vmem:[#allocation2 + $0x20] sm:$0xff] %v482
        %491 = vst [vmem:[#allocation2 + $0x28] sm:$0xff] %v483
        %492 = vst [vmem:[#allocation2 + $0x30] sm:$0xff] %v484
        %493 = vst [vmem:[#allocation2 + $0x38] sm:$0xff] %v485
        %494 = vst [vmem:[#allocation2 + $0x40] sm:$0xff] %v486
        %v495 = vld [vmem:[#allocation2] sm:$0xff]
        %v496 = vld [vmem:[#allocation2 + $0x8] sm:$0xff]
        %v497 = vld [vmem:[#allocation2 + $0x10] sm:$0xff]
        %v498 = vld [vmem:[#allocation2 + $0x18] sm:$0xff]
        %v499 = vld [vmem:[#allocation2 + $0x20] sm:$0xff]
        %v500 = vld [vmem:[#allocation2 + $0x28] sm:$0xff]
        %v501 = vld [vmem:[#allocation2 + $0x30] sm:$0xff]
        %v502 = vld [vmem:[#allocation2 + $0x38] sm:$0xff]
        %v503 = vld [vmem:[#allocation2 + $0x40] sm:$0xff]
        %513 = vrot.lane.b32.xlu0 %v495, 111
        %v514 = vpop.permute.xlu0 %513
        %515 = vrot.lane.b32.xlu0 %v496, 111
        %v516 = vpop.permute.xlu0 %515
        %517 = vrot.lane.b32.xlu0 %v497, 111
        %v518 = vpop.permute.xlu0 %517
        %519 = vrot.lane.b32.xlu0 %v498, 111
        %v520 = vpop.permute.xlu0 %519
        %521 = vrot.lane.b32.xlu0 %v499, 111
        %v522 = vpop.permute.xlu0 %521
        %523 = vrot.lane.b32.xlu0 %v500, 111
        %v524 = vpop.permute.xlu0 %523
        %525 = vrot.lane.b32.xlu0 %v501, 111
        %v526 = vpop.permute.xlu0 %525
        %527 = vrot.lane.b32.xlu0 %v502, 111
        %v528 = vpop.permute.xlu0 %527
        %529 = vrot.lane.b32.xlu0 %v503, 111
        %v530 = vpop.permute.xlu0 %529
        %vm531 = vcmask 908288
        %v532 = vsel %vm531, %v514, %v516
        %v533 = vsel %vm531, %v516, %v518
        %v534 = vsel %vm531, %v518, %v520
        %v535 = vsel %vm531, %v520, %v522
        %v536 = vsel %vm531, %v522, %v524
        %v537 = vsel %vm531, %v524, %v526
        %v538 = vsel %vm531, %v526, %v528
        %v539 = vsel %vm531, %v528, %v530
        %548 = vst [vmem:[#allocation3] sm:$0xff] %v532
        %549 = vst [vmem:[#allocation3 + $0x8] sm:$0xff] %v533
        %550 = vst [vmem:[#allocation3 + $0x10] sm:$0xff] %v534
        %551 = vst [vmem:[#allocation3 + $0x18] sm:$0xff] %v535
        %552 = vst [vmem:[#allocation3 + $0x20] sm:$0xff] %v536
        %553 = vst [vmem:[#allocation3 + $0x28] sm:$0xff] %v537
        %554 = vst [vmem:[#allocation3 + $0x30] sm:$0xff] %v538
        %555 = vst [vmem:[#allocation3 + $0x38] sm:$0xff] %v539
        %v556 = vld [vmem:[#allocation2] sm:$0xff]
        %v557 = vld [vmem:[#allocation2 + $0x8] sm:$0xff]
        %v558 = vld [vmem:[#allocation2 + $0x10] sm:$0xff]
        %v559 = vld [vmem:[#allocation2 + $0x18] sm:$0xff]
        %v560 = vld [vmem:[#allocation2 + $0x20] sm:$0xff]
        %v561 = vld [vmem:[#allocation2 + $0x28] sm:$0xff]
        %v562 = vld [vmem:[#allocation2 + $0x30] sm:$0xff]
        %v563 = vld [vmem:[#allocation2 + $0x38] sm:$0xff]
        %v564 = vld [vmem:[#allocation2 + $0x40] sm:$0xff]
        %574 = vrot.lane.b32.xlu0 %v556, 110
        %v575 = vpop.permute.xlu0 %574
        %576 = vrot.lane.b32.xlu0 %v557, 110
        %v577 = vpop.permute.xlu0 %576
        %578 = vrot.lane.b32.xlu0 %v558, 110
        %v579 = vpop.permute.xlu0 %578
        %580 = vrot.lane.b32.xlu0 %v559, 110
        %v581 = vpop.permute.xlu0 %580
        %582 = vrot.lane.b32.xlu0 %v560, 110
        %v583 = vpop.permute.xlu0 %582
        %584 = vrot.lane.b32.xlu0 %v561, 110
        %v585 = vpop.permute.xlu0 %584
        %586 = vrot.lane.b32.xlu0 %v562, 110
        %v587 = vpop.permute.xlu0 %586
        %588 = vrot.lane.b32.xlu0 %v563, 110
        %v589 = vpop.permute.xlu0 %588
        %590 = vrot.lane.b32.xlu0 %v564, 110
        %v591 = vpop.permute.xlu0 %590
        %vm592 = vcmask 900096
        %v593 = vsel %vm592, %v575, %v577
        %v594 = vsel %vm592, %v577, %v579
        %v595 = vsel %vm592, %v579, %v581
        %v596 = vsel %vm592, %v581, %v583
        %v597 = vsel %vm592, %v583, %v585
        %v598 = vsel %vm592, %v585, %v587
        %v599 = vsel %vm592, %v587, %v589
        %v600 = vsel %vm592, %v589, %v591
        %609 = vst [vmem:[#allocation3 + $0x40] sm:$0xff] %v593
        %610 = vst [vmem:[#allocation3 + $0x48] sm:$0xff] %v594
        %611 = vst [vmem:[#allocation3 + $0x50] sm:$0xff] %v595
        %612 = vst [vmem:[#allocation3 + $0x58] sm:$0xff] %v596
        %613 = vst [vmem:[#allocation3 + $0x60] sm:$0xff] %v597
        %614 = vst [vmem:[#allocation3 + $0x68] sm:$0xff] %v598
        %615 = vst [vmem:[#allocation3 + $0x70] sm:$0xff] %v599
        %616 = vst [vmem:[#allocation3 + $0x78] sm:$0xff] %v600
        %v617 = vld [vmem:[#allocation2] sm:$0xff]
        %v618 = vld [vmem:[#allocation2 + $0x8] sm:$0xff]
        %v619 = vld [vmem:[#allocation2 + $0x10] sm:$0xff]
        %v620 = vld [vmem:[#allocation2 + $0x18] sm:$0xff]
        %v621 = vld [vmem:[#allocation2 + $0x20] sm:$0xff]
        %v622 = vld [vmem:[#allocation2 + $0x28] sm:$0xff]
        %v623 = vld [vmem:[#allocation2 + $0x30] sm:$0xff]
        %v624 = vld [vmem:[#allocation2 + $0x38] sm:$0xff]
        %v625 = vld [vmem:[#allocation2 + $0x40] sm:$0xff]
        %635 = vrot.lane.b32.xlu0 %v617, 109
        %v636 = vpop.permute.xlu0 %635
        %637 = vrot.lane.b32.xlu0 %v618, 109
        %v638 = vpop.permute.xlu0 %637
        %639 = vrot.lane.b32.xlu0 %v619, 109
        %v640 = vpop.permute.xlu0 %639
        %641 = vrot.lane.b32.xlu0 %v620, 109
        %v642 = vpop.permute.xlu0 %641
        %643 = vrot.lane.b32.xlu0 %v621, 109
        %v644 = vpop.permute.xlu0 %643
        %645 = vrot.lane.b32.xlu0 %v622, 109
        %v646 = vpop.permute.xlu0 %645
        %647 = vrot.lane.b32.xlu0 %v623, 109
        %v648 = vpop.permute.xlu0 %647
        %649 = vrot.lane.b32.xlu0 %v624, 109
        %v650 = vpop.permute.xlu0 %649
        %651 = vrot.lane.b32.xlu0 %v625, 109
        %v652 = vpop.permute.xlu0 %651
        %vm653 = vcmask 891904
        %v654 = vsel %vm653, %v636, %v638
        %v655 = vsel %vm653, %v638, %v640
        %v656 = vsel %vm653, %v640, %v642
        %v657 = vsel %vm653, %v642, %v644
        %v658 = vsel %vm653, %v644, %v646
        %v659 = vsel %vm653, %v646, %v648
        %v660 = vsel %vm653, %v648, %v650
        %v661 = vsel %vm653, %v650, %v652
        %670 = vst [vmem:[#allocation3 + $0x80] sm:$0xff] %v654
        %671 = vst [vmem:[#allocation3 + $0x88] sm:$0xff] %v655
        %672 = vst [vmem:[#allocation3 + $0x90] sm:$0xff] %v656
        %673 = vst [vmem:[#allocation3 + $0x98] sm:$0xff] %v657
        %674 = vst [vmem:[#allocation3 + $0xa0] sm:$0xff] %v658
        %675 = vst [vmem:[#allocation3 + $0xa8] sm:$0xff] %v659
        %676 = vst [vmem:[#allocation3 + $0xb0] sm:$0xff] %v660
        %677 = vst [vmem:[#allocation3 + $0xb8] sm:$0xff] %v661
        %v678 = vld [vmem:[#allocation2] sm:$0xff]
        %v679 = vld [vmem:[#allocation2 + $0x8] sm:$0xff]
        %v680 = vld [vmem:[#allocation2 + $0x10] sm:$0xff]
        %v681 = vld [vmem:[#allocation2 + $0x18] sm:$0xff]
        %v682 = vld [vmem:[#allocation2 + $0x20] sm:$0xff]
        %v683 = vld [vmem:[#allocation2 + $0x28] sm:$0xff]
        %v684 = vld [vmem:[#allocation2 + $0x30] sm:$0xff]
        %v685 = vld [vmem:[#allocation2 + $0x38] sm:$0xff]
        %v686 = vld [vmem:[#allocation2 + $0x40] sm:$0xff]
        %696 = vrot.lane.b32.xlu0 %v678, 101
        %v697 = vpop.permute.xlu0 %696
        %698 = vrot.lane.b32.xlu0 %v679, 101
        %v699 = vpop.permute.xlu0 %698
        %700 = vrot.lane.b32.xlu0 %v680, 101
        %v701 = vpop.permute.xlu0 %700
        %702 = vrot.lane.b32.xlu0 %v681, 101
        %v703 = vpop.permute.xlu0 %702
        %704 = vrot.lane.b32.xlu0 %v682, 101
        %v705 = vpop.permute.xlu0 %704
        %706 = vrot.lane.b32.xlu0 %v683, 101
        %v707 = vpop.permute.xlu0 %706
        %708 = vrot.lane.b32.xlu0 %v684, 101
        %v709 = vpop.permute.xlu0 %708
        %710 = vrot.lane.b32.xlu0 %v685, 101
        %v711 = vpop.permute.xlu0 %710
        %712 = vrot.lane.b32.xlu0 %v686, 101
        %v713 = vpop.permute.xlu0 %712
        %vm714 = vcmask 826368
        %v715 = vsel %vm714, %v697, %v699
        %v716 = vsel %vm714, %v699, %v701
        %v717 = vsel %vm714, %v701, %v703
        %v718 = vsel %vm714, %v703, %v705
        %v719 = vsel %vm714, %v705, %v707
        %v720 = vsel %vm714, %v707, %v709
        %v721 = vsel %vm714, %v709, %v711
        %v722 = vsel %vm714, %v711, %v713
        %731 = vst [vmem:[#allocation3 + $0xc0] sm:$0xff] %v715
        %732 = vst [vmem:[#allocation3 + $0xc8] sm:$0xff] %v716
        %733 = vst [vmem:[#allocation3 + $0xd0] sm:$0xff] %v717
        %734 = vst [vmem:[#allocation3 + $0xd8] sm:$0xff] %v718
        %735 = vst [vmem:[#allocation3 + $0xe0] sm:$0xff] %v719
        %736 = vst [vmem:[#allocation3 + $0xe8] sm:$0xff] %v720
        %737 = vst [vmem:[#allocation3 + $0xf0] sm:$0xff] %v721
        %738 = vst [vmem:[#allocation3 + $0xf8] sm:$0xff] %v722
        %v739 = vld [vmem:[#allocation2] sm:$0xff]
        %v740 = vld [vmem:[#allocation2 + $0x8] sm:$0xff]
        %v741 = vld [vmem:[#allocation2 + $0x10] sm:$0xff]
        %v742 = vld [vmem:[#allocation2 + $0x18] sm:$0xff]
        %v743 = vld [vmem:[#allocation2 + $0x20] sm:$0xff]
        %v744 = vld [vmem:[#allocation2 + $0x28] sm:$0xff]
        %v745 = vld [vmem:[#allocation2 + $0x30] sm:$0xff]
        %v746 = vld [vmem:[#allocation2 + $0x38] sm:$0xff]
        %v747 = vld [vmem:[#allocation2 + $0x40] sm:$0xff]
        %757 = vrot.lane.b32.xlu0 %v739, 100
        %v758 = vpop.permute.xlu0 %757
        %759 = vrot.lane.b32.xlu0 %v740, 100
        %v760 = vpop.permute.xlu0 %759
        %761 = vrot.lane.b32.xlu0 %v741, 100
        %v762 = vpop.permute.xlu0 %761
        %763 = vrot.lane.b32.xlu0 %v742, 100
        %v764 = vpop.permute.xlu0 %763
        %765 = vrot.lane.b32.xlu0 %v743, 100
        %v766 = vpop.permute.xlu0 %765
        %767 = vrot.lane.b32.xlu0 %v744, 100
        %v768 = vpop.permute.xlu0 %767
        %769 = vrot.lane.b32.xlu0 %v745, 100
        %v770 = vpop.permute.xlu0 %769
        %771 = vrot.lane.b32.xlu0 %v746, 100
        %v772 = vpop.permute.xlu0 %771
        %773 = vrot.lane.b32.xlu0 %v747, 100
        %v774 = vpop.permute.xlu0 %773
        %vm775 = vcmask 818176
        %v776 = vsel %vm775, %v758, %v760
        %v777 = vsel %vm775, %v760, %v762
        %v778 = vsel %vm775, %v762, %v764
        %v779 = vsel %vm775, %v764, %v766
        %v780 = vsel %vm775, %v766, %v768
        %v781 = vsel %vm775, %v768, %v770
        %v782 = vsel %vm775, %v770, %v772
        %v783 = vsel %vm775, %v772, %v774
        %792 = vst [vmem:[#allocation3 + $0x100] sm:$0xff] %v776
        %793 = vst [vmem:[#allocation3 + $0x108] sm:$0xff] %v777
        %794 = vst [vmem:[#allocation3 + $0x110] sm:$0xff] %v778
        %795 = vst [vmem:[#allocation3 + $0x118] sm:$0xff] %v779
        %796 = vst [vmem:[#allocation3 + $0x120] sm:$0xff] %v780
        %797 = vst [vmem:[#allocation3 + $0x128] sm:$0xff] %v781
        %798 = vst [vmem:[#allocation3 + $0x130] sm:$0xff] %v782
        %799 = vst [vmem:[#allocation3 + $0x138] sm:$0xff] %v783
        %v800 = vld [vmem:[#allocation2] sm:$0xff]
        %v801 = vld [vmem:[#allocation2 + $0x8] sm:$0xff]
        %v802 = vld [vmem:[#allocation2 + $0x10] sm:$0xff]
        %v803 = vld [vmem:[#allocation2 + $0x18] sm:$0xff]
        %v804 = vld [vmem:[#allocation2 + $0x20] sm:$0xff]
        %v805 = vld [vmem:[#allocation2 + $0x28] sm:$0xff]
        %v806 = vld [vmem:[#allocation2 + $0x30] sm:$0xff]
        %v807 = vld [vmem:[#allocation2 + $0x38] sm:$0xff]
        %v808 = vld [vmem:[#allocation2 + $0x40] sm:$0xff]
        %818 = vrot.lane.b32.xlu0 %v800, 99
        %v819 = vpop.permute.xlu0 %818
        %820 = vrot.lane.b32.xlu0 %v801, 99
        %v821 = vpop.permute.xlu0 %820
        %822 = vrot.lane.b32.xlu0 %v802, 99
        %v823 = vpop.permute.xlu0 %822
        %824 = vrot.lane.b32.xlu0 %v803, 99
        %v825 = vpop.permute.xlu0 %824
        %826 = vrot.lane.b32.xlu0 %v804, 99
        %v827 = vpop.permute.xlu0 %826
        %828 = vrot.lane.b32.xlu0 %v805, 99
        %v829 = vpop.permute.xlu0 %828
        %830 = vrot.lane.b32.xlu0 %v806, 99
        %v831 = vpop.permute.xlu0 %830
        %832 = vrot.lane.b32.xlu0 %v807, 99
        %v833 = vpop.permute.xlu0 %832
        %834 = vrot.lane.b32.xlu0 %v808, 99
        %v835 = vpop.permute.xlu0 %834
        %vm836 = vcmask 809984
        %v837 = vsel %vm836, %v819, %v821
        %v838 = vsel %vm836, %v821, %v823
        %v839 = vsel %vm836, %v823, %v825
        %v840 = vsel %vm836, %v825, %v827
        %v841 = vsel %vm836, %v827, %v829
        %v842 = vsel %vm836, %v829, %v831
        %v843 = vsel %vm836, %v831, %v833
        %v844 = vsel %vm836, %v833, %v835
        %853 = vst [vmem:[#allocation3 + $0x140] sm:$0xff] %v837
        %854 = vst [vmem:[#allocation3 + $0x148] sm:$0xff] %v838
        %855 = vst [vmem:[#allocation3 + $0x150] sm:$0xff] %v839
        %856 = vst [vmem:[#allocation3 + $0x158] sm:$0xff] %v840
        %857 = vst [vmem:[#allocation3 + $0x160] sm:$0xff] %v841
        %858 = vst [vmem:[#allocation3 + $0x168] sm:$0xff] %v842
        %859 = vst [vmem:[#allocation3 + $0x170] sm:$0xff] %v843
        %860 = vst [vmem:[#allocation3 + $0x178] sm:$0xff] %v844
        %v861 = vld [vmem:[#allocation2] sm:$0xff]
        %v862 = vld [vmem:[#allocation2 + $0x8] sm:$0xff]
        %v863 = vld [vmem:[#allocation2 + $0x10] sm:$0xff]
        %v864 = vld [vmem:[#allocation2 + $0x18] sm:$0xff]
        %v865 = vld [vmem:[#allocation2 + $0x20] sm:$0xff]
        %v866 = vld [vmem:[#allocation2 + $0x28] sm:$0xff]
        %v867 = vld [vmem:[#allocation2 + $0x30] sm:$0xff]
        %v868 = vld [vmem:[#allocation2 + $0x38] sm:$0xff]
        %v869 = vld [vmem:[#allocation2 + $0x40] sm:$0xff]
        %879 = vrot.lane.b32.xlu0 %v861, 91
        %v880 = vpop.permute.xlu0 %879
        %881 = vrot.lane.b32.xlu0 %v862, 91
        %v882 = vpop.permute.xlu0 %881
        %883 = vrot.lane.b32.xlu0 %v863, 91
        %v884 = vpop.permute.xlu0 %883
        %885 = vrot.lane.b32.xlu0 %v864, 91
        %v886 = vpop.permute.xlu0 %885
        %887 = vrot.lane.b32.xlu0 %v865, 91
        %v888 = vpop.permute.xlu0 %887
        %889 = vrot.lane.b32.xlu0 %v866, 91
        %v890 = vpop.permute.xlu0 %889
        %891 = vrot.lane.b32.xlu0 %v867, 91
        %v892 = vpop.permute.xlu0 %891
        %893 = vrot.lane.b32.xlu0 %v868, 91
        %v894 = vpop.permute.xlu0 %893
        %895 = vrot.lane.b32.xlu0 %v869, 91
        %v896 = vpop.permute.xlu0 %895
        %vm897 = vcmask 744448
        %v898 = vsel %vm897, %v880, %v882
        %v899 = vsel %vm897, %v882, %v884
        %v900 = vsel %vm897, %v884, %v886
        %v901 = vsel %vm897, %v886, %v888
        %v902 = vsel %vm897, %v888, %v890
        %v903 = vsel %vm897, %v890, %v892
        %v904 = vsel %vm897, %v892, %v894
        %v905 = vsel %vm897, %v894, %v896
        %914 = vst [vmem:[#allocation3 + $0x180] sm:$0xff] %v898
        %915 = vst [vmem:[#allocation3 + $0x188] sm:$0xff] %v899
        %916 = vst [vmem:[#allocation3 + $0x190] sm:$0xff] %v900
        %917 = vst [vmem:[#allocation3 + $0x198] sm:$0xff] %v901
        %918 = vst [vmem:[#allocation3 + $0x1a0] sm:$0xff] %v902
        %919 = vst [vmem:[#allocation3 + $0x1a8] sm:$0xff] %v903
        %920 = vst [vmem:[#allocation3 + $0x1b0] sm:$0xff] %v904
        %921 = vst [vmem:[#allocation3 + $0x1b8] sm:$0xff] %v905
        %v922 = vld [vmem:[#allocation2] sm:$0xff]
        %v923 = vld [vmem:[#allocation2 + $0x8] sm:$0xff]
        %v924 = vld [vmem:[#allocation2 + $0x10] sm:$0xff]
        %v925 = vld [vmem:[#allocation2 + $0x18] sm:$0xff]
        %v926 = vld [vmem:[#allocation2 + $0x20] sm:$0xff]
        %v927 = vld [vmem:[#allocation2 + $0x28] sm:$0xff]
        %v928 = vld [vmem:[#allocation2 + $0x30] sm:$0xff]
        %v929 = vld [vmem:[#allocation2 + $0x38] sm:$0xff]
        %v930 = vld [vmem:[#allocation2 + $0x40] sm:$0xff]
        %940 = vrot.lane.b32.xlu0 %v922, 90
        %v941 = vpop.permute.xlu0 %940
        %942 = vrot.lane.b32.xlu0 %v923, 90
        %v943 = vpop.permute.xlu0 %942
        %944 = vrot.lane.b32.xlu0 %v924, 90
        %v945 = vpop.permute.xlu0 %944
        %946 = vrot.lane.b32.xlu0 %v925, 90
        %v947 = vpop.permute.xlu0 %946
        %948 = vrot.lane.b32.xlu0 %v926, 90
        %v949 = vpop.permute.xlu0 %948
        %950 = vrot.lane.b32.xlu0 %v927, 90
        %v951 = vpop.permute.xlu0 %950
        %952 = vrot.lane.b32.xlu0 %v928, 90
        %v953 = vpop.permute.xlu0 %952
        %954 = vrot.lane.b32.xlu0 %v929, 90
        %v955 = vpop.permute.xlu0 %954
        %956 = vrot.lane.b32.xlu0 %v930, 90
        %v957 = vpop.permute.xlu0 %956
        %vm958 = vcmask 736256
        %v959 = vsel %vm958, %v941, %v943
        %v960 = vsel %vm958, %v943, %v945
        %v961 = vsel %vm958, %v945, %v947
        %v962 = vsel %vm958, %v947, %v949
        %v963 = vsel %vm958, %v949, %v951
        %v964 = vsel %vm958, %v951, %v953
        %v965 = vsel %vm958, %v953, %v955
        %v966 = vsel %vm958, %v955, %v957
        %975 = vst [vmem:[#allocation3 + $0x1c0] sm:$0xff] %v959
        %976 = vst [vmem:[#allocation3 + $0x1c8] sm:$0xff] %v960
        %977 = vst [vmem:[#allocation3 + $0x1d0] sm:$0xff] %v961
        %978 = vst [vmem:[#allocation3 + $0x1d8] sm:$0xff] %v962
        %979 = vst [vmem:[#allocation3 + $0x1e0] sm:$0xff] %v963
        %980 = vst [vmem:[#allocation3 + $0x1e8] sm:$0xff] %v964
        %981 = vst [vmem:[#allocation3 + $0x1f0] sm:$0xff] %v965
        %982 = vst [vmem:[#allocation3 + $0x1f8] sm:$0xff] %v966
        %v983 = vld [vmem:[#allocation2] sm:$0xff]
        %v984 = vld [vmem:[#allocation2 + $0x8] sm:$0xff]
        %v985 = vld [vmem:[#allocation2 + $0x10] sm:$0xff]
        %v986 = vld [vmem:[#allocation2 + $0x18] sm:$0xff]
        %v987 = vld [vmem:[#allocation2 + $0x20] sm:$0xff]
        %v988 = vld [vmem:[#allocation2 + $0x28] sm:$0xff]
        %v989 = vld [vmem:[#allocation2 + $0x30] sm:$0xff]
        %v990 = vld [vmem:[#allocation2 + $0x38] sm:$0xff]
        %v991 = vld [vmem:[#allocation2 + $0x40] sm:$0xff]
        %1001 = vrot.lane.b32.xlu0 %v983, 89
        %v1002 = vpop.permute.xlu0 %1001
        %1003 = vrot.lane.b32.xlu0 %v984, 89
        %v1004 = vpop.permute.xlu0 %1003
        %1005 = vrot.lane.b32.xlu0 %v985, 89
        %v1006 = vpop.permute.xlu0 %1005
        %1007 = vrot.lane.b32.xlu0 %v986, 89
        %v1008 = vpop.permute.xlu0 %1007
        %1009 = vrot.lane.b32.xlu0 %v987, 89
        %v1010 = vpop.permute.xlu0 %1009
        %1011 = vrot.lane.b32.xlu0 %v988, 89
        %v1012 = vpop.permute.xlu0 %1011
        %1013 = vrot.lane.b32.xlu0 %v989, 89
        %v1014 = vpop.permute.xlu0 %1013
        %1015 = vrot.lane.b32.xlu0 %v990, 89
        %v1016 = vpop.permute.xlu0 %1015
        %1017 = vrot.lane.b32.xlu0 %v991, 89
        %v1018 = vpop.permute.xlu0 %1017
        %vm1019 = vcmask 728064
        %v1020 = vsel %vm1019, %v1002, %v1004
        %v1021 = vsel %vm1019, %v1004, %v1006
        %v1022 = vsel %vm1019, %v1006, %v1008
        %v1023 = vsel %vm1019, %v1008, %v1010
        %v1024 = vsel %vm1019, %v1010, %v1012
        %v1025 = vsel %vm1019, %v1012, %v1014
        %v1026 = vsel %vm1019, %v1014, %v1016
        %v1027 = vsel %vm1019, %v1016, %v1018
        %1036 = vst [vmem:[#allocation3 + $0x200] sm:$0xff] %v1020
        %1037 = vst [vmem:[#allocation3 + $0x208] sm:$0xff] %v1021
        %1038 = vst [vmem:[#allocation3 + $0x210] sm:$0xff] %v1022
        %1039 = vst [vmem:[#allocation3 + $0x218] sm:$0xff] %v1023
        %1040 = vst [vmem:[#allocation3 + $0x220] sm:$0xff] %v1024
        %1041 = vst [vmem:[#allocation3 + $0x228] sm:$0xff] %v1025
        %1042 = vst [vmem:[#allocation3 + $0x230] sm:$0xff] %v1026
        %1043 = vst [vmem:[#allocation3 + $0x238] sm:$0xff] %v1027
        %v1044 = vld [vmem:[#allocation2] sm:$0xff]
        %v1045 = vld [vmem:[#allocation2 + $0x8] sm:$0xff]
        %v1046 = vld [vmem:[#allocation2 + $0x10] sm:$0xff]
        %v1047 = vld [vmem:[#allocation2 + $0x18] sm:$0xff]
        %v1048 = vld [vmem:[#allocation2 + $0x20] sm:$0xff]
        %v1049 = vld [vmem:[#allocation2 + $0x28] sm:$0xff]
        %v1050 = vld [vmem:[#allocation2 + $0x30] sm:$0xff]
        %v1051 = vld [vmem:[#allocation2 + $0x38] sm:$0xff]
        %v1052 = vld [vmem:[#allocation2 + $0x40] sm:$0xff]
        %1062 = vrot.lane.b32.xlu0 %v1044, 11
        %v1063 = vpop.permute.xlu0 %1062
        %1064 = vrot.lane.b32.xlu0 %v1045, 11
        %v1065 = vpop.permute.xlu0 %1064
        %1066 = vrot.lane.b32.xlu0 %v1046, 11
        %v1067 = vpop.permute.xlu0 %1066
        %1068 = vrot.lane.b32.xlu0 %v1047, 11
        %v1069 = vpop.permute.xlu0 %1068
        %1070 = vrot.lane.b32.xlu0 %v1048, 11
        %v1071 = vpop.permute.xlu0 %1070
        %1072 = vrot.lane.b32.xlu0 %v1049, 11
        %v1073 = vpop.permute.xlu0 %1072
        %1074 = vrot.lane.b32.xlu0 %v1050, 11
        %v1075 = vpop.permute.xlu0 %1074
        %1076 = vrot.lane.b32.xlu0 %v1051, 11
        %v1077 = vpop.permute.xlu0 %1076
        %1078 = vrot.lane.b32.xlu0 %v1052, 11
        %v1079 = vpop.permute.xlu0 %1078
        %vm1080 = vcmask 89088
        %v1081 = vsel %vm1080, %v1063, %v1065
        %v1082 = vsel %vm1080, %v1065, %v1067
        %v1083 = vsel %vm1080, %v1067, %v1069
        %v1084 = vsel %vm1080, %v1069, %v1071
        %v1085 = vsel %vm1080, %v1071, %v1073
        %v1086 = vsel %vm1080, %v1073, %v1075
        %v1087 = vsel %vm1080, %v1075, %v1077
        %v1088 = vsel %vm1080, %v1077, %v1079
        %1097 = vst [vmem:[#allocation3 + $0x240] sm:$0xff] %v1081
        %1098 = vst [vmem:[#allocation3 + $0x248] sm:$0xff] %v1082
        %1099 = vst [vmem:[#allocation3 + $0x250] sm:$0xff] %v1083
        %1100 = vst [vmem:[#allocation3 + $0x258] sm:$0xff] %v1084
        %1101 = vst [vmem:[#allocation3 + $0x260] sm:$0xff] %v1085
        %1102 = vst [vmem:[#allocation3 + $0x268] sm:$0xff] %v1086
        %1103 = vst [vmem:[#allocation3 + $0x270] sm:$0xff] %v1087
        %1104 = vst [vmem:[#allocation3 + $0x278] sm:$0xff] %v1088
        %v1105 = vld [vmem:[#allocation2] sm:$0xff]
        %v1106 = vld [vmem:[#allocation2 + $0x8] sm:$0xff]
        %v1107 = vld [vmem:[#allocation2 + $0x10] sm:$0xff]
        %v1108 = vld [vmem:[#allocation2 + $0x18] sm:$0xff]
        %v1109 = vld [vmem:[#allocation2 + $0x20] sm:$0xff]
        %v1110 = vld [vmem:[#allocation2 + $0x28] sm:$0xff]
        %v1111 = vld [vmem:[#allocation2 + $0x30] sm:$0xff]
        %v1112 = vld [vmem:[#allocation2 + $0x38] sm:$0xff]
        %v1113 = vld [vmem:[#allocation2 + $0x40] sm:$0xff]
        %1123 = vrot.lane.b32.xlu0 %v1105, 10
        %v1124 = vpop.permute.xlu0 %1123
        %1125 = vrot.lane.b32.xlu0 %v1106, 10
        %v1126 = vpop.permute.xlu0 %1125
        %1127 = vrot.lane.b32.xlu0 %v1107, 10
        %v1128 = vpop.permute.xlu0 %1127
        %1129 = vrot.lane.b32.xlu0 %v1108, 10
        %v1130 = vpop.permute.xlu0 %1129
        %1131 = vrot.lane.b32.xlu0 %v1109, 10
        %v1132 = vpop.permute.xlu0 %1131
        %1133 = vrot.lane.b32.xlu0 %v1110, 10
        %v1134 = vpop.permute.xlu0 %1133
        %1135 = vrot.lane.b32.xlu0 %v1111, 10
        %v1136 = vpop.permute.xlu0 %1135
        %1137 = vrot.lane.b32.xlu0 %v1112, 10
        %v1138 = vpop.permute.xlu0 %1137
        %1139 = vrot.lane.b32.xlu0 %v1113, 10
        %v1140 = vpop.permute.xlu0 %1139
        %vm1141 = vcmask 80896
        %v1142 = vsel %vm1141, %v1124, %v1126
        %v1143 = vsel %vm1141, %v1126, %v1128
        %v1144 = vsel %vm1141, %v1128, %v1130
        %v1145 = vsel %vm1141, %v1130, %v1132
        %v1146 = vsel %vm1141, %v1132, %v1134
        %v1147 = vsel %vm1141, %v1134, %v1136
        %v1148 = vsel %vm1141, %v1136, %v1138
        %v1149 = vsel %vm1141, %v1138, %v1140
        %1158 = vst [vmem:[#allocation3 + $0x280] sm:$0xff] %v1142
        %1159 = vst [vmem:[#allocation3 + $0x288] sm:$0xff] %v1143
        %1160 = vst [vmem:[#allocation3 + $0x290] sm:$0xff] %v1144
        %1161 = vst [vmem:[#allocation3 + $0x298] sm:$0xff] %v1145
        %1162 = vst [vmem:[#allocation3 + $0x2a0] sm:$0xff] %v1146
        %1163 = vst [vmem:[#allocation3 + $0x2a8] sm:$0xff] %v1147
        %1164 = vst [vmem:[#allocation3 + $0x2b0] sm:$0xff] %v1148
        %1165 = vst [vmem:[#allocation3 + $0x2b8] sm:$0xff] %v1149
        %v1166 = vld [vmem:[#allocation2] sm:$0xff]
        %v1167 = vld [vmem:[#allocation2 + $0x8] sm:$0xff]
        %v1168 = vld [vmem:[#allocation2 + $0x10] sm:$0xff]
        %v1169 = vld [vmem:[#allocation2 + $0x18] sm:$0xff]
        %v1170 = vld [vmem:[#allocation2 + $0x20] sm:$0xff]
        %v1171 = vld [vmem:[#allocation2 + $0x28] sm:$0xff]
        %v1172 = vld [vmem:[#allocation2 + $0x30] sm:$0xff]
        %v1173 = vld [vmem:[#allocation2 + $0x38] sm:$0xff]
        %v1174 = vld [vmem:[#allocation2 + $0x40] sm:$0xff]
        %1184 = vrot.lane.b32.xlu0 %v1166, 9
        %v1185 = vpop.permute.xlu0 %1184
        %1186 = vrot.lane.b32.xlu0 %v1167, 9
        %v1187 = vpop.permute.xlu0 %1186
        %1188 = vrot.lane.b32.xlu0 %v1168, 9
        %v1189 = vpop.permute.xlu0 %1188
        %1190 = vrot.lane.b32.xlu0 %v1169, 9
        %v1191 = vpop.permute.xlu0 %1190
        %1192 = vrot.lane.b32.xlu0 %v1170, 9
        %v1193 = vpop.permute.xlu0 %1192
        %1194 = vrot.lane.b32.xlu0 %v1171, 9
        %v1195 = vpop.permute.xlu0 %1194
        %1196 = vrot.lane.b32.xlu0 %v1172, 9
        %v1197 = vpop.permute.xlu0 %1196
        %1198 = vrot.lane.b32.xlu0 %v1173, 9
        %v1199 = vpop.permute.xlu0 %1198
        %1200 = vrot.lane.b32.xlu0 %v1174, 9
        %v1201 = vpop.permute.xlu0 %1200
        %vm1202 = vcmask 72704
        %v1203 = vsel %vm1202, %v1185, %v1187
        %v1204 = vsel %vm1202, %v1187, %v1189
        %v1205 = vsel %vm1202, %v1189, %v1191
        %v1206 = vsel %vm1202, %v1191, %v1193
        %v1207 = vsel %vm1202, %v1193, %v1195
        %v1208 = vsel %vm1202, %v1195, %v1197
        %v1209 = vsel %vm1202, %v1197, %v1199
        %v1210 = vsel %vm1202, %v1199, %v1201
        %1219 = vst [vmem:[#allocation3 + $0x2c0] sm:$0xff] %v1203
        %1220 = vst [vmem:[#allocation3 + $0x2c8] sm:$0xff] %v1204
        %1221 = vst [vmem:[#allocation3 + $0x2d0] sm:$0xff] %v1205
        %1222 = vst [vmem:[#allocation3 + $0x2d8] sm:$0xff] %v1206
        %1223 = vst [vmem:[#allocation3 + $0x2e0] sm:$0xff] %v1207
        %1224 = vst [vmem:[#allocation3 + $0x2e8] sm:$0xff] %v1208
        %1225 = vst [vmem:[#allocation3 + $0x2f0] sm:$0xff] %v1209
        %1226 = vst [vmem:[#allocation3 + $0x2f8] sm:$0xff] %v1210
        %v1227 = vld [vmem:[#allocation2] sm:$0xff]
        %v1228 = vld [vmem:[#allocation2 + $0x8] sm:$0xff]
        %v1229 = vld [vmem:[#allocation2 + $0x10] sm:$0xff]
        %v1230 = vld [vmem:[#allocation2 + $0x18] sm:$0xff]
        %v1231 = vld [vmem:[#allocation2 + $0x20] sm:$0xff]
        %v1232 = vld [vmem:[#allocation2 + $0x28] sm:$0xff]
        %v1233 = vld [vmem:[#allocation2 + $0x30] sm:$0xff]
        %v1234 = vld [vmem:[#allocation2 + $0x38] sm:$0xff]
        %v1235 = vld [vmem:[#allocation2 + $0x40] sm:$0xff]
        %1245 = vrot.lane.b32.xlu0 %v1227, 1
        %v1246 = vpop.permute.xlu0 %1245
        %1247 = vrot.lane.b32.xlu0 %v1228, 1
        %v1248 = vpop.permute.xlu0 %1247
        %1249 = vrot.lane.b32.xlu0 %v1229, 1
        %v1250 = vpop.permute.xlu0 %1249
        %1251 = vrot.lane.b32.xlu0 %v1230, 1
        %v1252 = vpop.permute.xlu0 %1251
        %1253 = vrot.lane.b32.xlu0 %v1231, 1
        %v1254 = vpop.permute.xlu0 %1253
        %1255 = vrot.lane.b32.xlu0 %v1232, 1
        %v1256 = vpop.permute.xlu0 %1255
        %1257 = vrot.lane.b32.xlu0 %v1233, 1
        %v1258 = vpop.permute.xlu0 %1257
        %1259 = vrot.lane.b32.xlu0 %v1234, 1
        %v1260 = vpop.permute.xlu0 %1259
        %1261 = vrot.lane.b32.xlu0 %v1235, 1
        %v1262 = vpop.permute.xlu0 %1261
        %vm1263 = vcmask 7168
        %v1264 = vsel %vm1263, %v1246, %v1248
        %v1265 = vsel %vm1263, %v1248, %v1250
        %v1266 = vsel %vm1263, %v1250, %v1252
        %v1267 = vsel %vm1263, %v1252, %v1254
        %v1268 = vsel %vm1263, %v1254, %v1256
        %v1269 = vsel %vm1263, %v1256, %v1258
        %v1270 = vsel %vm1263, %v1258, %v1260
        %v1271 = vsel %vm1263, %v1260, %v1262
        %1280 = vst [vmem:[#allocation3 + $0x300] sm:$0xff] %v1264
        %1281 = vst [vmem:[#allocation3 + $0x308] sm:$0xff] %v1265
        %1282 = vst [vmem:[#allocation3 + $0x310] sm:$0xff] %v1266
        %1283 = vst [vmem:[#allocation3 + $0x318] sm:$0xff] %v1267
        %1284 = vst [vmem:[#allocation3 + $0x320] sm:$0xff] %v1268
        %1285 = vst [vmem:[#allocation3 + $0x328] sm:$0xff] %v1269
        %1286 = vst [vmem:[#allocation3 + $0x330] sm:$0xff] %v1270
        %1287 = vst [vmem:[#allocation3 + $0x338] sm:$0xff] %v1271
        %v1288 = vld [vmem:[#allocation2 + $0x8] sm:$0xff]
        %v1289 = vld [vmem:[#allocation2 + $0x10] sm:$0xff]
        %v1290 = vld [vmem:[#allocation2 + $0x18] sm:$0xff]
        %v1291 = vld [vmem:[#allocation2 + $0x20] sm:$0xff]
        %v1292 = vld [vmem:[#allocation2 + $0x28] sm:$0xff]
        %v1293 = vld [vmem:[#allocation2 + $0x30] sm:$0xff]
        %v1294 = vld [vmem:[#allocation2 + $0x38] sm:$0xff]
        %v1295 = vld [vmem:[#allocation2 + $0x40] sm:$0xff]
        %1296 = vst [vmem:[#allocation3 + $0x340] sm:$0xff] %v1288
        %1297 = vst [vmem:[#allocation3 + $0x348] sm:$0xff] %v1289
        %1298 = vst [vmem:[#allocation3 + $0x350] sm:$0xff] %v1290
        %1299 = vst [vmem:[#allocation3 + $0x358] sm:$0xff] %v1291
        %1300 = vst [vmem:[#allocation3 + $0x360] sm:$0xff] %v1292
        %1301 = vst [vmem:[#allocation3 + $0x368] sm:$0xff] %v1293
        %1302 = vst [vmem:[#allocation3 + $0x370] sm:$0xff] %v1294
        %1303 = vst [vmem:[#allocation3 + $0x378] sm:$0xff] %v1295
        %v1304 = vld [vmem:[#allocation2 + $0x8] sm:$0xff]
        %v1305 = vld [vmem:[#allocation2 + $0x10] sm:$0xff]
        %v1306 = vld [vmem:[#allocation2 + $0x18] sm:$0xff]
        %v1307 = vld [vmem:[#allocation2 + $0x20] sm:$0xff]
        %v1308 = vld [vmem:[#allocation2 + $0x28] sm:$0xff]
        %v1309 = vld [vmem:[#allocation2 + $0x30] sm:$0xff]
        %v1310 = vld [vmem:[#allocation2 + $0x38] sm:$0xff]
        %v1311 = vld [vmem:[#allocation2 + $0x40] sm:$0xff]
        %v1312 = vld [vmem:[#allocation2 + $0x48] sm:$0xff]
        %1322 = vrot.lane.b32.xlu0 %v1304, 127
        %v1323 = vpop.permute.xlu0 %1322
        %1324 = vrot.lane.b32.xlu0 %v1305, 127
        %v1325 = vpop.permute.xlu0 %1324
        %1326 = vrot.lane.b32.xlu0 %v1306, 127
        %v1327 = vpop.permute.xlu0 %1326
        %1328 = vrot.lane.b32.xlu0 %v1307, 127
        %v1329 = vpop.permute.xlu0 %1328
        %1330 = vrot.lane.b32.xlu0 %v1308, 127
        %v1331 = vpop.permute.xlu0 %1330
        %1332 = vrot.lane.b32.xlu0 %v1309, 127
        %v1333 = vpop.permute.xlu0 %1332
        %1334 = vrot.lane.b32.xlu0 %v1310, 127
        %v1335 = vpop.permute.xlu0 %1334
        %1336 = vrot.lane.b32.xlu0 %v1311, 127
        %v1337 = vpop.permute.xlu0 %1336
        %1338 = vrot.lane.b32.xlu0 %v1312, 127
        %v1339 = vpop.permute.xlu0 %1338
        %vm1340 = vcmask 1039360
        %v1341 = vsel %vm1340, %v1323, %v1325
        %v1342 = vsel %vm1340, %v1325, %v1327
        %v1343 = vsel %vm1340, %v1327, %v1329
        %v1344 = vsel %vm1340, %v1329, %v1331
        %v1345 = vsel %vm1340, %v1331, %v1333
        %v1346 = vsel %vm1340, %v1333, %v1335
        %v1347 = vsel %vm1340, %v1335, %v1337
        %v1348 = vsel %vm1340, %v1337, %v1339
        %1357 = vst [vmem:[#allocation3 + $0x380] sm:$0xff] %v1341
        %1358 = vst [vmem:[#allocation3 + $0x388] sm:$0xff] %v1342
        %1359 = vst [vmem:[#allocation3 + $0x390] sm:$0xff] %v1343
        %1360 = vst [vmem:[#allocation3 + $0x398] sm:$0xff] %v1344
        %1361 = vst [vmem:[#allocation3 + $0x3a0] sm:$0xff] %v1345
        %1362 = vst [vmem:[#allocation3 + $0x3a8] sm:$0xff] %v1346
        %1363 = vst [vmem:[#allocation3 + $0x3b0] sm:$0xff] %v1347
        %1364 = vst [vmem:[#allocation3 + $0x3b8] sm:$0xff] %v1348
        %v1365 = vld [vmem:[#allocation2 + $0x8] sm:$0xff]
        %v1366 = vld [vmem:[#allocation2 + $0x10] sm:$0xff]
        %v1367 = vld [vmem:[#allocation2 + $0x18] sm:$0xff]
        %v1368 = vld [vmem:[#allocation2 + $0x20] sm:$0xff]
        %v1369 = vld [vmem:[#allocation2 + $0x28] sm:$0xff]
        %v1370 = vld [vmem:[#allocation2 + $0x30] sm:$0xff]
        %v1371 = vld [vmem:[#allocation2 + $0x38] sm:$0xff]
        %v1372 = vld [vmem:[#allocation2 + $0x40] sm:$0xff]
        %v1373 = vld [vmem:[#allocation2 + $0x48] sm:$0xff]
        %1383 = vrot.lane.b32.xlu0 %v1365, 119
        %v1384 = vpop.permute.xlu0 %1383
        %1385 = vrot.lane.b32.xlu0 %v1366, 119
        %v1386 = vpop.permute.xlu0 %1385
        %1387 = vrot.lane.b32.xlu0 %v1367, 119
        %v1388 = vpop.permute.xlu0 %1387
        %1389 = vrot.lane.b32.xlu0 %v1368, 119
        %v1390 = vpop.permute.xlu0 %1389
        %1391 = vrot.lane.b32.xlu0 %v1369, 119
        %v1392 = vpop.permute.xlu0 %1391
        %1393 = vrot.lane.b32.xlu0 %v1370, 119
        %v1394 = vpop.permute.xlu0 %1393
        %1395 = vrot.lane.b32.xlu0 %v1371, 119
        %v1396 = vpop.permute.xlu0 %1395
        %1397 = vrot.lane.b32.xlu0 %v1372, 119
        %v1398 = vpop.permute.xlu0 %1397
        %1399 = vrot.lane.b32.xlu0 %v1373, 119
        %v1400 = vpop.permute.xlu0 %1399
        %vm1401 = vcmask 973824
        %v1402 = vsel %vm1401, %v1384, %v1386
        %v1403 = vsel %vm1401, %v1386, %v1388
        %v1404 = vsel %vm1401, %v1388, %v1390
        %v1405 = vsel %vm1401, %v1390, %v1392
        %v1406 = vsel %vm1401, %v1392, %v1394
        %v1407 = vsel %vm1401, %v1394, %v1396
        %v1408 = vsel %vm1401, %v1396, %v1398
        %v1409 = vsel %vm1401, %v1398, %v1400
        %1418 = vst [vmem:[#allocation3 + $0x3c0] sm:$0xff] %v1402
        %1419 = vst [vmem:[#allocation3 + $0x3c8] sm:$0xff] %v1403
        %1420 = vst [vmem:[#allocation3 + $0x3d0] sm:$0xff] %v1404
        %1421 = vst [vmem:[#allocation3 + $0x3d8] sm:$0xff] %v1405
        %1422 = vst [vmem:[#allocation3 + $0x3e0] sm:$0xff] %v1406
        %1423 = vst [vmem:[#allocation3 + $0x3e8] sm:$0xff] %v1407
        %1424 = vst [vmem:[#allocation3 + $0x3f0] sm:$0xff] %v1408
        %1425 = vst [vmem:[#allocation3 + $0x3f8] sm:$0xff] %v1409
        %v1426 = vld [vmem:[#allocation2 + $0x8] sm:$0xff]
        %v1427 = vld [vmem:[#allocation2 + $0x10] sm:$0xff]
        %v1428 = vld [vmem:[#allocation2 + $0x18] sm:$0xff]
        %v1429 = vld [vmem:[#allocation2 + $0x20] sm:$0xff]
        %v1430 = vld [vmem:[#allocation2 + $0x28] sm:$0xff]
        %v1431 = vld [vmem:[#allocation2 + $0x30] sm:$0xff]
        %v1432 = vld [vmem:[#allocation2 + $0x38] sm:$0xff]
        %v1433 = vld [vmem:[#allocation2 + $0x40] sm:$0xff]
        %v1434 = vld [vmem:[#allocation2 + $0x48] sm:$0xff]
        %1444 = vrot.lane.b32.xlu0 %v1426, 118
        %v1445 = vpop.permute.xlu0 %1444
        %1446 = vrot.lane.b32.xlu0 %v1427, 118
        %v1447 = vpop.permute.xlu0 %1446
        %1448 = vrot.lane.b32.xlu0 %v1428, 118
        %v1449 = vpop.permute.xlu0 %1448
        %1450 = vrot.lane.b32.xlu0 %v1429, 118
        %v1451 = vpop.permute.xlu0 %1450
        %1452 = vrot.lane.b32.xlu0 %v1430, 118
        %v1453 = vpop.permute.xlu0 %1452
        %1454 = vrot.lane.b32.xlu0 %v1431, 118
        %v1455 = vpop.permute.xlu0 %1454
        %1456 = vrot.lane.b32.xlu0 %v1432, 118
        %v1457 = vpop.permute.xlu0 %1456
        %1458 = vrot.lane.b32.xlu0 %v1433, 118
        %v1459 = vpop.permute.xlu0 %1458
        %1460 = vrot.lane.b32.xlu0 %v1434, 118
        %v1461 = vpop.permute.xlu0 %1460
        %vm1462 = vcmask 965632
        %v1463 = vsel %vm1462, %v1445, %v1447
        %v1464 = vsel %vm1462, %v1447, %v1449
        %v1465 = vsel %vm1462, %v1449, %v1451
        %v1466 = vsel %vm1462, %v1451, %v1453
        %v1467 = vsel %vm1462, %v1453, %v1455
        %v1468 = vsel %vm1462, %v1455, %v1457
        %v1469 = vsel %vm1462, %v1457, %v1459
        %v1470 = vsel %vm1462, %v1459, %v1461
        %1479 = vst [vmem:[#allocation3 + $0x400] sm:$0xff] %v1463
        %1480 = vst [vmem:[#allocation3 + $0x408] sm:$0xff] %v1464
        %1481 = vst [vmem:[#allocation3 + $0x410] sm:$0xff] %v1465
        %1482 = vst [vmem:[#allocation3 + $0x418] sm:$0xff] %v1466
        %1483 = vst [vmem:[#allocation3 + $0x420] sm:$0xff] %v1467
        %1484 = vst [vmem:[#allocation3 + $0x428] sm:$0xff] %v1468
        %1485 = vst [vmem:[#allocation3 + $0x430] sm:$0xff] %v1469
        %1486 = vst [vmem:[#allocation3 + $0x438] sm:$0xff] %v1470
        %v1487 = vld [vmem:[#allocation2 + $0x8] sm:$0xff]
        %v1488 = vld [vmem:[#allocation2 + $0x10] sm:$0xff]
        %v1489 = vld [vmem:[#allocation2 + $0x18] sm:$0xff]
        %v1490 = vld [vmem:[#allocation2 + $0x20] sm:$0xff]
        %v1491 = vld [vmem:[#allocation2 + $0x28] sm:$0xff]
        %v1492 = vld [vmem:[#allocation2 + $0x30] sm:$0xff]
        %v1493 = vld [vmem:[#allocation2 + $0x38] sm:$0xff]
        %v1494 = vld [vmem:[#allocation2 + $0x40] sm:$0xff]
        %v1495 = vld [vmem:[#allocation2 + $0x48] sm:$0xff]
        %1505 = vrot.lane.b32.xlu0 %v1487, 117
        %v1506 = vpop.permute.xlu0 %1505
        %1507 = vrot.lane.b32.xlu0 %v1488, 117
        %v1508 = vpop.permute.xlu0 %1507
        %1509 = vrot.lane.b32.xlu0 %v1489, 117
        %v1510 = vpop.permute.xlu0 %1509
        %1511 = vrot.lane.b32.xlu0 %v1490, 117
        %v1512 = vpop.permute.xlu0 %1511
        %1513 = vrot.lane.b32.xlu0 %v1491, 117
        %v1514 = vpop.permute.xlu0 %1513
        %1515 = vrot.lane.b32.xlu0 %v1492, 117
        %v1516 = vpop.permute.xlu0 %1515
        %1517 = vrot.lane.b32.xlu0 %v1493, 117
        %v1518 = vpop.permute.xlu0 %1517
        %1519 = vrot.lane.b32.xlu0 %v1494, 117
        %v1520 = vpop.permute.xlu0 %1519
        %1521 = vrot.lane.b32.xlu0 %v1495, 117
        %v1522 = vpop.permute.xlu0 %1521
        %vm1523 = vcmask 957440
        %v1524 = vsel %vm1523, %v1506, %v1508
        %v1525 = vsel %vm1523, %v1508, %v1510
        %v1526 = vsel %vm1523, %v1510, %v1512
        %v1527 = vsel %vm1523, %v1512, %v1514
        %v1528 = vsel %vm1523, %v1514, %v1516
        %v1529 = vsel %vm1523, %v1516, %v1518
        %v1530 = vsel %vm1523, %v1518, %v1520
        %v1531 = vsel %vm1523, %v1520, %v1522
        %1540 = vst [vmem:[#allocation3 + $0x440] sm:$0xff] %v1524
        %1541 = vst [vmem:[#allocation3 + $0x448] sm:$0xff] %v1525
        %1542 = vst [vmem:[#allocation3 + $0x450] sm:$0xff] %v1526
        %1543 = vst [vmem:[#allocation3 + $0x458] sm:$0xff] %v1527
        %1544 = vst [vmem:[#allocation3 + $0x460] sm:$0xff] %v1528
        %1545 = vst [vmem:[#allocation3 + $0x468] sm:$0xff] %v1529
        %1546 = vst [vmem:[#allocation3 + $0x470] sm:$0xff] %v1530
        %1547 = vst [vmem:[#allocation3 + $0x478] sm:$0xff] %v1531
        %v1548 = vld [vmem:[#allocation2 + $0x8] sm:$0xff]
        %v1549 = vld [vmem:[#allocation2 + $0x10] sm:$0xff]
        %v1550 = vld [vmem:[#allocation2 + $0x18] sm:$0xff]
        %v1551 = vld [vmem:[#allocation2 + $0x20] sm:$0xff]
        %v1552 = vld [vmem:[#allocation2 + $0x28] sm:$0xff]
        %v1553 = vld [vmem:[#allocation2 + $0x30] sm:$0xff]
        %v1554 = vld [vmem:[#allocation2 + $0x38] sm:$0xff]
        %v1555 = vld [vmem:[#allocation2 + $0x40] sm:$0xff]
        %v1556 = vld [vmem:[#allocation2 + $0x48] sm:$0xff]
        %1566 = vrot.lane.b32.xlu0 %v1548, 39
        %v1567 = vpop.permute.xlu0 %1566
        %1568 = vrot.lane.b32.xlu0 %v1549, 39
        %v1569 = vpop.permute.xlu0 %1568
        %1570 = vrot.lane.b32.xlu0 %v1550, 39
        %v1571 = vpop.permute.xlu0 %1570
        %1572 = vrot.lane.b32.xlu0 %v1551, 39
        %v1573 = vpop.permute.xlu0 %1572
        %1574 = vrot.lane.b32.xlu0 %v1552, 39
        %v1575 = vpop.permute.xlu0 %1574
        %1576 = vrot.lane.b32.xlu0 %v1553, 39
        %v1577 = vpop.permute.xlu0 %1576
        %1578 = vrot.lane.b32.xlu0 %v1554, 39
        %v1579 = vpop.permute.xlu0 %1578
        %1580 = vrot.lane.b32.xlu0 %v1555, 39
        %v1581 = vpop.permute.xlu0 %1580
        %1582 = vrot.lane.b32.xlu0 %v1556, 39
        %v1583 = vpop.permute.xlu0 %1582
        %vm1584 = vcmask 318464
        %v1585 = vsel %vm1584, %v1567, %v1569
        %v1586 = vsel %vm1584, %v1569, %v1571
        %v1587 = vsel %vm1584, %v1571, %v1573
        %v1588 = vsel %vm1584, %v1573, %v1575
        %v1589 = vsel %vm1584, %v1575, %v1577
        %v1590 = vsel %vm1584, %v1577, %v1579
        %v1591 = vsel %vm1584, %v1579, %v1581
        %v1592 = vsel %vm1584, %v1581, %v1583
        %1601 = vst [vmem:[#allocation3 + $0x480] sm:$0xff] %v1585
        %1602 = vst [vmem:[#allocation3 + $0x488] sm:$0xff] %v1586
        %1603 = vst [vmem:[#allocation3 + $0x490] sm:$0xff] %v1587
        %1604 = vst [vmem:[#allocation3 + $0x498] sm:$0xff] %v1588
        %1605 = vst [vmem:[#allocation3 + $0x4a0] sm:$0xff] %v1589
        %1606 = vst [vmem:[#allocation3 + $0x4a8] sm:$0xff] %v1590
        %1607 = vst [vmem:[#allocation3 + $0x4b0] sm:$0xff] %v1591
        %1608 = vst [vmem:[#allocation3 + $0x4b8] sm:$0xff] %v1592
        %v1609 = vld [vmem:[#allocation2 + $0x8] sm:$0xff]
        %v1610 = vld [vmem:[#allocation2 + $0x10] sm:$0xff]
        %v1611 = vld [vmem:[#allocation2 + $0x18] sm:$0xff]
        %v1612 = vld [vmem:[#allocation2 + $0x20] sm:$0xff]
        %v1613 = vld [vmem:[#allocation2 + $0x28] sm:$0xff]
        %v1614 = vld [vmem:[#allocation2 + $0x30] sm:$0xff]
        %v1615 = vld [vmem:[#allocation2 + $0x38] sm:$0xff]
        %v1616 = vld [vmem:[#allocation2 + $0x40] sm:$0xff]
        %v1617 = vld [vmem:[#allocation2 + $0x48] sm:$0xff]
        %1627 = vrot.lane.b32.xlu0 %v1609, 38
        %v1628 = vpop.permute.xlu0 %1627
        %1629 = vrot.lane.b32.xlu0 %v1610, 38
        %v1630 = vpop.permute.xlu0 %1629
        %1631 = vrot.lane.b32.xlu0 %v1611, 38
        %v1632 = vpop.permute.xlu0 %1631
        %1633 = vrot.lane.b32.xlu0 %v1612, 38
        %v1634 = vpop.permute.xlu0 %1633
        %1635 = vrot.lane.b32.xlu0 %v1613, 38
        %v1636 = vpop.permute.xlu0 %1635
        %1637 = vrot.lane.b32.xlu0 %v1614, 38
        %v1638 = vpop.permute.xlu0 %1637
        %1639 = vrot.lane.b32.xlu0 %v1615, 38
        %v1640 = vpop.permute.xlu0 %1639
        %1641 = vrot.lane.b32.xlu0 %v1616, 38
        %v1642 = vpop.permute.xlu0 %1641
        %1643 = vrot.lane.b32.xlu0 %v1617, 38
        %v1644 = vpop.permute.xlu0 %1643
        %vm1645 = vcmask 310272
        %v1646 = vsel %vm1645, %v1628, %v1630
        %v1647 = vsel %vm1645, %v1630, %v1632
        %v1648 = vsel %vm1645, %v1632, %v1634
        %v1649 = vsel %vm1645, %v1634, %v1636
        %v1650 = vsel %vm1645, %v1636, %v1638
        %v1651 = vsel %vm1645, %v1638, %v1640
        %v1652 = vsel %vm1645, %v1640, %v1642
        %v1653 = vsel %vm1645, %v1642, %v1644
        %1662 = vst [vmem:[#allocation3 + $0x4c0] sm:$0xff] %v1646
        %1663 = vst [vmem:[#allocation3 + $0x4c8] sm:$0xff] %v1647
        %1664 = vst [vmem:[#allocation3 + $0x4d0] sm:$0xff] %v1648
        %1665 = vst [vmem:[#allocation3 + $0x4d8] sm:$0xff] %v1649
        %1666 = vst [vmem:[#allocation3 + $0x4e0] sm:$0xff] %v1650
        %1667 = vst [vmem:[#allocation3 + $0x4e8] sm:$0xff] %v1651
        %1668 = vst [vmem:[#allocation3 + $0x4f0] sm:$0xff] %v1652
        %1669 = vst [vmem:[#allocation3 + $0x4f8] sm:$0xff] %v1653
        %v1670 = vld [vmem:[#allocation2 + $0x8] sm:$0xff]
        %v1671 = vld [vmem:[#allocation2 + $0x10] sm:$0xff]
        %v1672 = vld [vmem:[#allocation2 + $0x18] sm:$0xff]
        %v1673 = vld [vmem:[#allocation2 + $0x20] sm:$0xff]
        %v1674 = vld [vmem:[#allocation2 + $0x28] sm:$0xff]
        %v1675 = vld [vmem:[#allocation2 + $0x30] sm:$0xff]
        %v1676 = vld [vmem:[#allocation2 + $0x38] sm:$0xff]
        %v1677 = vld [vmem:[#allocation2 + $0x40] sm:$0xff]
        %v1678 = vld [vmem:[#allocation2 + $0x48] sm:$0xff]
        %1688 = vrot.lane.b32.xlu0 %v1670, 37
        %v1689 = vpop.permute.xlu0 %1688
        %1690 = vrot.lane.b32.xlu0 %v1671, 37
        %v1691 = vpop.permute.xlu0 %1690
        %1692 = vrot.lane.b32.xlu0 %v1672, 37
        %v1693 = vpop.permute.xlu0 %1692
        %1694 = vrot.lane.b32.xlu0 %v1673, 37
        %v1695 = vpop.permute.xlu0 %1694
        %1696 = vrot.lane.b32.xlu0 %v1674, 37
        %v1697 = vpop.permute.xlu0 %1696
        %1698 = vrot.lane.b32.xlu0 %v1675, 37
        %v1699 = vpop.permute.xlu0 %1698
        %1700 = vrot.lane.b32.xlu0 %v1676, 37
        %v1701 = vpop.permute.xlu0 %1700
        %1702 = vrot.lane.b32.xlu0 %v1677, 37
        %v1703 = vpop.permute.xlu0 %1702
        %1704 = vrot.lane.b32.xlu0 %v1678, 37
        %v1705 = vpop.permute.xlu0 %1704
        %vm1706 = vcmask 302080
        %v1707 = vsel %vm1706, %v1689, %v1691
        %v1708 = vsel %vm1706, %v1691, %v1693
        %v1709 = vsel %vm1706, %v1693, %v1695
        %v1710 = vsel %vm1706, %v1695, %v1697
        %v1711 = vsel %vm1706, %v1697, %v1699
        %v1712 = vsel %vm1706, %v1699, %v1701
        %v1713 = vsel %vm1706, %v1701, %v1703
        %v1714 = vsel %vm1706, %v1703, %v1705
        %1723 = vst [vmem:[#allocation3 + $0x500] sm:$0xff] %v1707
        %1724 = vst [vmem:[#allocation3 + $0x508] sm:$0xff] %v1708
        %1725 = vst [vmem:[#allocation3 + $0x510] sm:$0xff] %v1709
        %1726 = vst [vmem:[#allocation3 + $0x518] sm:$0xff] %v1710
        %1727 = vst [vmem:[#allocation3 + $0x520] sm:$0xff] %v1711
        %1728 = vst [vmem:[#allocation3 + $0x528] sm:$0xff] %v1712
        %1729 = vst [vmem:[#allocation3 + $0x530] sm:$0xff] %v1713
        %1730 = vst [vmem:[#allocation3 + $0x538] sm:$0xff] %v1714
        %v1731 = vld [vmem:[#allocation2 + $0x8] sm:$0xff]
        %v1732 = vld [vmem:[#allocation2 + $0x10] sm:$0xff]
        %v1733 = vld [vmem:[#allocation2 + $0x18] sm:$0xff]
        %v1734 = vld [vmem:[#allocation2 + $0x20] sm:$0xff]
        %v1735 = vld [vmem:[#allocation2 + $0x28] sm:$0xff]
        %v1736 = vld [vmem:[#allocation2 + $0x30] sm:$0xff]
        %v1737 = vld [vmem:[#allocation2 + $0x38] sm:$0xff]
        %v1738 = vld [vmem:[#allocation2 + $0x40] sm:$0xff]
        %v1739 = vld [vmem:[#allocation2 + $0x48] sm:$0xff]
        %1749 = vrot.lane.b32.xlu0 %v1731, 29
        %v1750 = vpop.permute.xlu0 %1749
        %1751 = vrot.lane.b32.xlu0 %v1732, 29
        %v1752 = vpop.permute.xlu0 %1751
        %1753 = vrot.lane.b32.xlu0 %v1733, 29
        %v1754 = vpop.permute.xlu0 %1753
        %1755 = vrot.lane.b32.xlu0 %v1734, 29
        %v1756 = vpop.permute.xlu0 %1755
        %1757 = vrot.lane.b32.xlu0 %v1735, 29
        %v1758 = vpop.permute.xlu0 %1757
        %1759 = vrot.lane.b32.xlu0 %v1736, 29
        %v1760 = vpop.permute.xlu0 %1759
        %1761 = vrot.lane.b32.xlu0 %v1737, 29
        %v1762 = vpop.permute.xlu0 %1761
        %1763 = vrot.lane.b32.xlu0 %v1738, 29
        %v1764 = vpop.permute.xlu0 %1763
        %1765 = vrot.lane.b32.xlu0 %v1739, 29
        %v1766 = vpop.permute.xlu0 %1765
        %vm1767 = vcmask 236544
        %v1768 = vsel %vm1767, %v1750, %v1752
        %v1769 = vsel %vm1767, %v1752, %v1754
        %v1770 = vsel %vm1767, %v1754, %v1756
        %v1771 = vsel %vm1767, %v1756, %v1758
        %v1772 = vsel %vm1767, %v1758, %v1760
        %v1773 = vsel %vm1767, %v1760, %v1762
        %v1774 = vsel %vm1767, %v1762, %v1764
        %v1775 = vsel %vm1767, %v1764, %v1766
        %1784 = vst [vmem:[#allocation3 + $0x540] sm:$0xff] %v1768
        %1785 = vst [vmem:[#allocation3 + $0x548] sm:$0xff] %v1769
        %1786 = vst [vmem:[#allocation3 + $0x550] sm:$0xff] %v1770
        %1787 = vst [vmem:[#allocation3 + $0x558] sm:$0xff] %v1771
        %1788 = vst [vmem:[#allocation3 + $0x560] sm:$0xff] %v1772
        %1789 = vst [vmem:[#allocation3 + $0x568] sm:$0xff] %v1773
        %1790 = vst [vmem:[#allocation3 + $0x570] sm:$0xff] %v1774
        %1791 = vst [vmem:[#allocation3 + $0x578] sm:$0xff] %v1775
        %v1792 = vld [vmem:[#allocation2 + $0x8] sm:$0xff]
        %v1793 = vld [vmem:[#allocation2 + $0x10] sm:$0xff]
        %v1794 = vld [vmem:[#allocation2 + $0x18] sm:$0xff]
        %v1795 = vld [vmem:[#allocation2 + $0x20] sm:$0xff]
        %v1796 = vld [vmem:[#allocation2 + $0x28] sm:$0xff]
        %v1797 = vld [vmem:[#allocation2 + $0x30] sm:$0xff]
        %v1798 = vld [vmem:[#allocation2 + $0x38] sm:$0xff]
        %v1799 = vld [vmem:[#allocation2 + $0x40] sm:$0xff]
        %v1800 = vld [vmem:[#allocation2 + $0x48] sm:$0xff]
        %1810 = vrot.lane.b32.xlu0 %v1792, 28
        %v1811 = vpop.permute.xlu0 %1810
        %1812 = vrot.lane.b32.xlu0 %v1793, 28
        %v1813 = vpop.permute.xlu0 %1812
        %1814 = vrot.lane.b32.xlu0 %v1794, 28
        %v1815 = vpop.permute.xlu0 %1814
        %1816 = vrot.lane.b32.xlu0 %v1795, 28
        %v1817 = vpop.permute.xlu0 %1816
        %1818 = vrot.lane.b32.xlu0 %v1796, 28
        %v1819 = vpop.permute.xlu0 %1818
        %1820 = vrot.lane.b32.xlu0 %v1797, 28
        %v1821 = vpop.permute.xlu0 %1820
        %1822 = vrot.lane.b32.xlu0 %v1798, 28
        %v1823 = vpop.permute.xlu0 %1822
        %1824 = vrot.lane.b32.xlu0 %v1799, 28
        %v1825 = vpop.permute.xlu0 %1824
        %1826 = vrot.lane.b32.xlu0 %v1800, 28
        %v1827 = vpop.permute.xlu0 %1826
        %vm1828 = vcmask 228352
        %v1829 = vsel %vm1828, %v1811, %v1813
        %v1830 = vsel %vm1828, %v1813, %v1815
        %v1831 = vsel %vm1828, %v1815, %v1817
        %v1832 = vsel %vm1828, %v1817, %v1819
        %v1833 = vsel %vm1828, %v1819, %v1821
        %v1834 = vsel %vm1828, %v1821, %v1823
        %v1835 = vsel %vm1828, %v1823, %v1825
        %v1836 = vsel %vm1828, %v1825, %v1827
        %1845 = vst [vmem:[#allocation3 + $0x580] sm:$0xff] %v1829
        %1846 = vst [vmem:[#allocation3 + $0x588] sm:$0xff] %v1830
        %1847 = vst [vmem:[#allocation3 + $0x590] sm:$0xff] %v1831
        %1848 = vst [vmem:[#allocation3 + $0x598] sm:$0xff] %v1832
        %1849 = vst [vmem:[#allocation3 + $0x5a0] sm:$0xff] %v1833
        %1850 = vst [vmem:[#allocation3 + $0x5a8] sm:$0xff] %v1834
        %1851 = vst [vmem:[#allocation3 + $0x5b0] sm:$0xff] %v1835
        %1852 = vst [vmem:[#allocation3 + $0x5b8] sm:$0xff] %v1836
        %v1853 = vld [vmem:[#allocation2 + $0x8] sm:$0xff]
        %v1854 = vld [vmem:[#allocation2 + $0x10] sm:$0xff]
        %v1855 = vld [vmem:[#allocation2 + $0x18] sm:$0xff]
        %v1856 = vld [vmem:[#allocation2 + $0x20] sm:$0xff]
        %v1857 = vld [vmem:[#allocation2 + $0x28] sm:$0xff]
        %v1858 = vld [vmem:[#allocation2 + $0x30] sm:$0xff]
        %v1859 = vld [vmem:[#allocation2 + $0x38] sm:$0xff]
        %v1860 = vld [vmem:[#allocation2 + $0x40] sm:$0xff]
        %v1861 = vld [vmem:[#allocation2 + $0x48] sm:$0xff]
        %1871 = vrot.lane.b32.xlu0 %v1853, 27
        %v1872 = vpop.permute.xlu0 %1871
        %1873 = vrot.lane.b32.xlu0 %v1854, 27
        %v1874 = vpop.permute.xlu0 %1873
        %1875 = vrot.lane.b32.xlu0 %v1855, 27
        %v1876 = vpop.permute.xlu0 %1875
        %1877 = vrot.lane.b32.xlu0 %v1856, 27
        %v1878 = vpop.permute.xlu0 %1877
        %1879 = vrot.lane.b32.xlu0 %v1857, 27
        %v1880 = vpop.permute.xlu0 %1879
        %1881 = vrot.lane.b32.xlu0 %v1858, 27
        %v1882 = vpop.permute.xlu0 %1881
        %1883 = vrot.lane.b32.xlu0 %v1859, 27
        %v1884 = vpop.permute.xlu0 %1883
        %1885 = vrot.lane.b32.xlu0 %v1860, 27
        %v1886 = vpop.permute.xlu0 %1885
        %1887 = vrot.lane.b32.xlu0 %v1861, 27
        %v1888 = vpop.permute.xlu0 %1887
        %vm1889 = vcmask 220160
        %v1890 = vsel %vm1889, %v1872, %v1874
        %v1891 = vsel %vm1889, %v1874, %v1876
        %v1892 = vsel %vm1889, %v1876, %v1878
        %v1893 = vsel %vm1889, %v1878, %v1880
        %v1894 = vsel %vm1889, %v1880, %v1882
        %v1895 = vsel %vm1889, %v1882, %v1884
        %v1896 = vsel %vm1889, %v1884, %v1886
        %v1897 = vsel %vm1889, %v1886, %v1888
        %1906 = vst [vmem:[#allocation3 + $0x5c0] sm:$0xff] %v1890
        %1907 = vst [vmem:[#allocation3 + $0x5c8] sm:$0xff] %v1891
        %1908 = vst [vmem:[#allocation3 + $0x5d0] sm:$0xff] %v1892
        %1909 = vst [vmem:[#allocation3 + $0x5d8] sm:$0xff] %v1893
        %1910 = vst [vmem:[#allocation3 + $0x5e0] sm:$0xff] %v1894
        %1911 = vst [vmem:[#allocation3 + $0x5e8] sm:$0xff] %v1895
        %1912 = vst [vmem:[#allocation3 + $0x5f0] sm:$0xff] %v1896
        %1913 = vst [vmem:[#allocation3 + $0x5f8] sm:$0xff] %v1897
        %v1914 = vld [vmem:[#allocation2 + $0x8] sm:$0xff]
        %v1915 = vld [vmem:[#allocation2 + $0x10] sm:$0xff]
        %v1916 = vld [vmem:[#allocation2 + $0x18] sm:$0xff]
        %v1917 = vld [vmem:[#allocation2 + $0x20] sm:$0xff]
        %v1918 = vld [vmem:[#allocation2 + $0x28] sm:$0xff]
        %v1919 = vld [vmem:[#allocation2 + $0x30] sm:$0xff]
        %v1920 = vld [vmem:[#allocation2 + $0x38] sm:$0xff]
        %v1921 = vld [vmem:[#allocation2 + $0x40] sm:$0xff]
        %v1922 = vld [vmem:[#allocation2 + $0x48] sm:$0xff]
        %1932 = vrot.lane.b32.xlu0 %v1914, 19
        %v1933 = vpop.permute.xlu0 %1932
        %1934 = vrot.lane.b32.xlu0 %v1915, 19
        %v1935 = vpop.permute.xlu0 %1934
        %1936 = vrot.lane.b32.xlu0 %v1916, 19
        %v1937 = vpop.permute.xlu0 %1936
        %1938 = vrot.lane.b32.xlu0 %v1917, 19
        %v1939 = vpop.permute.xlu0 %1938
        %1940 = vrot.lane.b32.xlu0 %v1918, 19
        %v1941 = vpop.permute.xlu0 %1940
        %1942 = vrot.lane.b32.xlu0 %v1919, 19
        %v1943 = vpop.permute.xlu0 %1942
        %1944 = vrot.lane.b32.xlu0 %v1920, 19
        %v1945 = vpop.permute.xlu0 %1944
        %1946 = vrot.lane.b32.xlu0 %v1921, 19
        %v1947 = vpop.permute.xlu0 %1946
        %1948 = vrot.lane.b32.xlu0 %v1922, 19
        %v1949 = vpop.permute.xlu0 %1948
        %vm1950 = vcmask 154624
        %v1951 = vsel %vm1950, %v1933, %v1935
        %v1952 = vsel %vm1950, %v1935, %v1937
        %v1953 = vsel %vm1950, %v1937, %v1939
        %v1954 = vsel %vm1950, %v1939, %v1941
        %v1955 = vsel %vm1950, %v1941, %v1943
        %v1956 = vsel %vm1950, %v1943, %v1945
        %v1957 = vsel %vm1950, %v1945, %v1947
        %v1958 = vsel %vm1950, %v1947, %v1949
        %1967 = vst [vmem:[#allocation3 + $0x600] sm:$0xff] %v1951
        %1968 = vst [vmem:[#allocation3 + $0x608] sm:$0xff] %v1952
        %1969 = vst [vmem:[#allocation3 + $0x610] sm:$0xff] %v1953
        %1970 = vst [vmem:[#allocation3 + $0x618] sm:$0xff] %v1954
        %1971 = vst [vmem:[#allocation3 + $0x620] sm:$0xff] %v1955
        %1972 = vst [vmem:[#allocation3 + $0x628] sm:$0xff] %v1956
        %1973 = vst [vmem:[#allocation3 + $0x630] sm:$0xff] %v1957
        %1974 = vst [vmem:[#allocation3 + $0x638] sm:$0xff] %v1958
        %v1975 = vld [vmem:[#allocation2 + $0x8] sm:$0xff]
        %v1976 = vld [vmem:[#allocation2 + $0x10] sm:$0xff]
        %v1977 = vld [vmem:[#allocation2 + $0x18] sm:$0xff]
        %v1978 = vld [vmem:[#allocation2 + $0x20] sm:$0xff]
        %v1979 = vld [vmem:[#allocation2 + $0x28] sm:$0xff]
        %v1980 = vld [vmem:[#allocation2 + $0x30] sm:$0xff]
        %v1981 = vld [vmem:[#allocation2 + $0x38] sm:$0xff]
        %v1982 = vld [vmem:[#allocation2 + $0x40] sm:$0xff]
        %v1983 = vld [vmem:[#allocation2 + $0x48] sm:$0xff]
        %1993 = vrot.lane.b32.xlu0 %v1975, 18
        %v1994 = vpop.permute.xlu0 %1993
        %1995 = vrot.lane.b32.xlu0 %v1976, 18
        %v1996 = vpop.permute.xlu0 %1995
        %1997 = vrot.lane.b32.xlu0 %v1977, 18
        %v1998 = vpop.permute.xlu0 %1997
        %1999 = vrot.lane.b32.xlu0 %v1978, 18
        %v2000 = vpop.permute.xlu0 %1999
        %2001 = vrot.lane.b32.xlu0 %v1979, 18
        %v2002 = vpop.permute.xlu0 %2001
        %2003 = vrot.lane.b32.xlu0 %v1980, 18
        %v2004 = vpop.permute.xlu0 %2003
        %2005 = vrot.lane.b32.xlu0 %v1981, 18
        %v2006 = vpop.permute.xlu0 %2005
        %2007 = vrot.lane.b32.xlu0 %v1982, 18
        %v2008 = vpop.permute.xlu0 %2007
        %2009 = vrot.lane.b32.xlu0 %v1983, 18
        %v2010 = vpop.permute.xlu0 %2009
        %vm2011 = vcmask 146432
        %v2012 = vsel %vm2011, %v1994, %v1996
        %v2013 = vsel %vm2011, %v1996, %v1998
        %v2014 = vsel %vm2011, %v1998, %v2000
        %v2015 = vsel %vm2011, %v2000, %v2002
        %v2016 = vsel %vm2011, %v2002, %v2004
        %v2017 = vsel %vm2011, %v2004, %v2006
        %v2018 = vsel %vm2011, %v2006, %v2008
        %v2019 = vsel %vm2011, %v2008, %v2010
        %2028 = vst [vmem:[#allocation3 + $0x640] sm:$0xff] %v2012
        %2029 = vst [vmem:[#allocation3 + $0x648] sm:$0xff] %v2013
        %2030 = vst [vmem:[#allocation3 + $0x650] sm:$0xff] %v2014
        %2031 = vst [vmem:[#allocation3 + $0x658] sm:$0xff] %v2015
        %2032 = vst [vmem:[#allocation3 + $0x660] sm:$0xff] %v2016
        %2033 = vst [vmem:[#allocation3 + $0x668] sm:$0xff] %v2017
        %2034 = vst [vmem:[#allocation3 + $0x670] sm:$0xff] %v2018
        %2035 = vst [vmem:[#allocation3 + $0x678] sm:$0xff] %v2019
        %v2036 = vld [vmem:[#allocation2 + $0x8] sm:$0xff]
        %v2037 = vld [vmem:[#allocation2 + $0x10] sm:$0xff]
        %v2038 = vld [vmem:[#allocation2 + $0x18] sm:$0xff]
        %v2039 = vld [vmem:[#allocation2 + $0x20] sm:$0xff]
        %v2040 = vld [vmem:[#allocation2 + $0x28] sm:$0xff]
        %v2041 = vld [vmem:[#allocation2 + $0x30] sm:$0xff]
        %v2042 = vld [vmem:[#allocation2 + $0x38] sm:$0xff]
        %v2043 = vld [vmem:[#allocation2 + $0x40] sm:$0xff]
        %v2044 = vld [vmem:[#allocation2 + $0x48] sm:$0xff]
        %2054 = vrot.lane.b32.xlu0 %v2036, 17
        %v2055 = vpop.permute.xlu0 %2054
        %2056 = vrot.lane.b32.xlu0 %v2037, 17
        %v2057 = vpop.permute.xlu0 %2056
        %2058 = vrot.lane.b32.xlu0 %v2038, 17
        %v2059 = vpop.permute.xlu0 %2058
        %2060 = vrot.lane.b32.xlu0 %v2039, 17
        %v2061 = vpop.permute.xlu0 %2060
        %2062 = vrot.lane.b32.xlu0 %v2040, 17
        %v2063 = vpop.permute.xlu0 %2062
        %2064 = vrot.lane.b32.xlu0 %v2041, 17
        %v2065 = vpop.permute.xlu0 %2064
        %2066 = vrot.lane.b32.xlu0 %v2042, 17
        %v2067 = vpop.permute.xlu0 %2066
        %2068 = vrot.lane.b32.xlu0 %v2043, 17
        %v2069 = vpop.permute.xlu0 %2068
        %2070 = vrot.lane.b32.xlu0 %v2044, 17
        %v2071 = vpop.permute.xlu0 %2070
        %vm2072 = vcmask 138240
        %v2073 = vsel %vm2072, %v2055, %v2057
        %v2074 = vsel %vm2072, %v2057, %v2059
        %v2075 = vsel %vm2072, %v2059, %v2061
        %v2076 = vsel %vm2072, %v2061, %v2063
        %v2077 = vsel %vm2072, %v2063, %v2065
        %v2078 = vsel %vm2072, %v2065, %v2067
        %v2079 = vsel %vm2072, %v2067, %v2069
        %v2080 = vsel %vm2072, %v2069, %v2071
        %2089 = vst [vmem:[#allocation3 + $0x680] sm:$0xff] %v2073
        %2090 = vst [vmem:[#allocation3 + $0x688] sm:$0xff] %v2074
        %2091 = vst [vmem:[#allocation3 + $0x690] sm:$0xff] %v2075
        %2092 = vst [vmem:[#allocation3 + $0x698] sm:$0xff] %v2076
        %2093 = vst [vmem:[#allocation3 + $0x6a0] sm:$0xff] %v2077
        %2094 = vst [vmem:[#allocation3 + $0x6a8] sm:$0xff] %v2078
        %2095 = vst [vmem:[#allocation3 + $0x6b0] sm:$0xff] %v2079
        %2096 = vst [vmem:[#allocation3 + $0x6b8] sm:$0xff] %v2080
        %v2097 = vld [vmem:[%s3] sm:$0xff]
        %v2098 = vld [vmem:[%s3 + $0x8] sm:$0xff]
        %v2099 = vld [vmem:[#allocation3] sm:$0xff]
        %v2100 = vld [vmem:[#allocation3 + $0x8] sm:$0xff]
        %v2101 = vld [vmem:[#allocation3 + $0x10] sm:$0xff]
        %v2102 = vld [vmem:[#allocation3 + $0x18] sm:$0xff]
        %v2103 = vld [vmem:[#allocation3 + $0x20] sm:$0xff]
        %v2104 = vld [vmem:[#allocation3 + $0x28] sm:$0xff]
        %v2105 = vld [vmem:[#allocation3 + $0x30] sm:$0xff]
        %v2106 = vld [vmem:[#allocation3 + $0x38] sm:$0xff]
        %v2107 = vld [vmem:[#allocation3 + $0x40] sm:$0xff]
        %v2108 = vld [vmem:[#allocation3 + $0x48] sm:$0xff]
        %v2109 = vld [vmem:[#allocation3 + $0x50] sm:$0xff]
        %v2110 = vld [vmem:[#allocation3 + $0x58] sm:$0xff]
        %v2111 = vld [vmem:[#allocation3 + $0x60] sm:$0xff]
        %v2112 = vld [vmem:[#allocation3 + $0x68] sm:$0xff]
        %v2113 = vld [vmem:[#allocation3 + $0x70] sm:$0xff]
        %v2114 = vld [vmem:[#allocation3 + $0x78] sm:$0xff]
        %v2115 = vld [vmem:[#allocation3 + $0x80] sm:$0xff]
        %v2116 = vld [vmem:[#allocation3 + $0x88] sm:$0xff]
        %v2117 = vld [vmem:[#allocation3 + $0x90] sm:$0xff]
        %v2118 = vld [vmem:[#allocation3 + $0x98] sm:$0xff]
        %v2119 = vld [vmem:[#allocation3 + $0xa0] sm:$0xff]
        %v2120 = vld [vmem:[#allocation3 + $0xa8] sm:$0xff]
        %v2121 = vld [vmem:[#allocation3 + $0xb0] sm:$0xff]
        %v2122 = vld [vmem:[#allocation3 + $0xb8] sm:$0xff]
        %v2123 = vld [vmem:[#allocation3 + $0xc0] sm:$0xff]
        %v2124 = vld [vmem:[#allocation3 + $0xc8] sm:$0xff]
        %v2125 = vld [vmem:[#allocation3 + $0xd0] sm:$0xff]
        %v2126 = vld [vmem:[#allocation3 + $0xd8] sm:$0xff]
        %v2127 = vld [vmem:[#allocation3 + $0xe0] sm:$0xff]
        %v2128 = vld [vmem:[#allocation3 + $0xe8] sm:$0xff]
        %v2129 = vld [vmem:[#allocation3 + $0xf0] sm:$0xff]
        %v2130 = vld [vmem:[#allocation3 + $0xf8] sm:$0xff]
        %v2131 = vld [vmem:[#allocation3 + $0x100] sm:$0xff]
        %v2132 = vld [vmem:[#allocation3 + $0x108] sm:$0xff]
        %v2133 = vld [vmem:[#allocation3 + $0x110] sm:$0xff]
        %v2134 = vld [vmem:[#allocation3 + $0x118] sm:$0xff]
        %v2135 = vld [vmem:[#allocation3 + $0x120] sm:$0xff]
        %v2136 = vld [vmem:[#allocation3 + $0x128] sm:$0xff]
        %v2137 = vld [vmem:[#allocation3 + $0x130] sm:$0xff]
        %v2138 = vld [vmem:[#allocation3 + $0x138] sm:$0xff]
        %v2139 = vld [vmem:[#allocation3 + $0x140] sm:$0xff]
        %v2140 = vld [vmem:[#allocation3 + $0x148] sm:$0xff]
        %v2141 = vld [vmem:[#allocation3 + $0x150] sm:$0xff]
        %v2142 = vld [vmem:[#allocation3 + $0x158] sm:$0xff]
        %v2143 = vld [vmem:[#allocation3 + $0x160] sm:$0xff]
        %v2144 = vld [vmem:[#allocation3 + $0x168] sm:$0xff]
        %v2145 = vld [vmem:[#allocation3 + $0x170] sm:$0xff]
        %v2146 = vld [vmem:[#allocation3 + $0x178] sm:$0xff]
        %v2147 = vld [vmem:[#allocation3 + $0x180] sm:$0xff]
        %v2148 = vld [vmem:[#allocation3 + $0x188] sm:$0xff]
        %v2149 = vld [vmem:[#allocation3 + $0x190] sm:$0xff]
        %v2150 = vld [vmem:[#allocation3 + $0x198] sm:$0xff]
        %v2151 = vld [vmem:[#allocation3 + $0x1a0] sm:$0xff]
        %v2152 = vld [vmem:[#allocation3 + $0x1a8] sm:$0xff]
        %v2153 = vld [vmem:[#allocation3 + $0x1b0] sm:$0xff]
        %v2154 = vld [vmem:[#allocation3 + $0x1b8] sm:$0xff]
        %v2155 = vld [vmem:[#allocation3 + $0x1c0] sm:$0xff]
        %v2156 = vld [vmem:[#allocation3 + $0x1c8] sm:$0xff]
        %v2157 = vld [vmem:[#allocation3 + $0x1d0] sm:$0xff]
        %v2158 = vld [vmem:[#allocation3 + $0x1d8] sm:$0xff]
        %v2159 = vld [vmem:[#allocation3 + $0x1e0] sm:$0xff]
        %v2160 = vld [vmem:[#allocation3 + $0x1e8] sm:$0xff]
        %v2161 = vld [vmem:[#allocation3 + $0x1f0] sm:$0xff]
        %v2162 = vld [vmem:[#allocation3 + $0x1f8] sm:$0xff]
        %v2163 = vld [vmem:[#allocation3 + $0x200] sm:$0xff]
        %v2164 = vld [vmem:[#allocation3 + $0x208] sm:$0xff]
        %v2165 = vld [vmem:[#allocation3 + $0x210] sm:$0xff]
        %v2166 = vld [vmem:[#allocation3 + $0x218] sm:$0xff]
        %v2167 = vld [vmem:[#allocation3 + $0x220] sm:$0xff]
        %v2168 = vld [vmem:[#allocation3 + $0x228] sm:$0xff]
        %v2169 = vld [vmem:[#allocation3 + $0x230] sm:$0xff]
        %v2170 = vld [vmem:[#allocation3 + $0x238] sm:$0xff]
        %v2171 = vld [vmem:[#allocation3 + $0x240] sm:$0xff]
        %v2172 = vld [vmem:[#allocation3 + $0x248] sm:$0xff]
        %v2173 = vld [vmem:[#allocation3 + $0x250] sm:$0xff]
        %v2174 = vld [vmem:[#allocation3 + $0x258] sm:$0xff]
        %v2175 = vld [vmem:[#allocation3 + $0x260] sm:$0xff]
        %v2176 = vld [vmem:[#allocation3 + $0x268] sm:$0xff]
        %v2177 = vld [vmem:[#allocation3 + $0x270] sm:$0xff]
        %v2178 = vld [vmem:[#allocation3 + $0x278] sm:$0xff]
        %v2179 = vld [vmem:[#allocation3 + $0x280] sm:$0xff]
        %v2180 = vld [vmem:[#allocation3 + $0x288] sm:$0xff]
        %v2181 = vld [vmem:[#allocation3 + $0x290] sm:$0xff]
        %v2182 = vld [vmem:[#allocation3 + $0x298] sm:$0xff]
        %v2183 = vld [vmem:[#allocation3 + $0x2a0] sm:$0xff]
        %v2184 = vld [vmem:[#allocation3 + $0x2a8] sm:$0xff]
        %v2185 = vld [vmem:[#allocation3 + $0x2b0] sm:$0xff]
        %v2186 = vld [vmem:[#allocation3 + $0x2b8] sm:$0xff]
        %v2187 = vld [vmem:[#allocation3 + $0x2c0] sm:$0xff]
        %v2188 = vld [vmem:[#allocation3 + $0x2c8] sm:$0xff]
        %v2189 = vld [vmem:[#allocation3 + $0x2d0] sm:$0xff]
        %v2190 = vld [vmem:[#allocation3 + $0x2d8] sm:$0xff]
        %v2191 = vld [vmem:[#allocation3 + $0x2e0] sm:$0xff]
        %v2192 = vld [vmem:[#allocation3 + $0x2e8] sm:$0xff]
        %v2193 = vld [vmem:[#allocation3 + $0x2f0] sm:$0xff]
        %v2194 = vld [vmem:[#allocation3 + $0x2f8] sm:$0xff]
        %v2195 = vld [vmem:[#allocation3 + $0x300] sm:$0xff]
        %v2196 = vld [vmem:[#allocation3 + $0x308] sm:$0xff]
        %v2197 = vld [vmem:[#allocation3 + $0x310] sm:$0xff]
        %v2198 = vld [vmem:[#allocation3 + $0x318] sm:$0xff]
        %v2199 = vld [vmem:[#allocation3 + $0x320] sm:$0xff]
        %v2200 = vld [vmem:[#allocation3 + $0x328] sm:$0xff]
        %v2201 = vld [vmem:[#allocation3 + $0x330] sm:$0xff]
        %v2202 = vld [vmem:[#allocation3 + $0x338] sm:$0xff]
        %v2203 = vld [vmem:[#allocation3 + $0x340] sm:$0xff]
        %v2204 = vld [vmem:[#allocation3 + $0x348] sm:$0xff]
        %v2205 = vld [vmem:[#allocation3 + $0x350] sm:$0xff]
        %v2206 = vld [vmem:[#allocation3 + $0x358] sm:$0xff]
        %v2207 = vld [vmem:[#allocation3 + $0x360] sm:$0xff]
        %v2208 = vld [vmem:[#allocation3 + $0x368] sm:$0xff]
        %v2209 = vld [vmem:[#allocation3 + $0x370] sm:$0xff]
        %v2210 = vld [vmem:[#allocation3 + $0x378] sm:$0xff]
        %v2211 = vld [vmem:[#allocation3 + $0x380] sm:$0xff]
        %v2212 = vld [vmem:[#allocation3 + $0x388] sm:$0xff]
        %v2213 = vld [vmem:[#allocation3 + $0x390] sm:$0xff]
        %v2214 = vld [vmem:[#allocation3 + $0x398] sm:$0xff]
        %v2215 = vld [vmem:[#allocation3 + $0x3a0] sm:$0xff]
        %v2216 = vld [vmem:[#allocation3 + $0x3a8] sm:$0xff]
        %v2217 = vld [vmem:[#allocation3 + $0x3b0] sm:$0xff]
        %v2218 = vld [vmem:[#allocation3 + $0x3b8] sm:$0xff]
        %v2219 = vld [vmem:[#allocation3 + $0x3c0] sm:$0xff]
        %v2220 = vld [vmem:[#allocation3 + $0x3c8] sm:$0xff]
        %v2221 = vld [vmem:[#allocation3 + $0x3d0] sm:$0xff]
        %v2222 = vld [vmem:[#allocation3 + $0x3d8] sm:$0xff]
        %v2223 = vld [vmem:[#allocation3 + $0x3e0] sm:$0xff]
        %v2224 = vld [vmem:[#allocation3 + $0x3e8] sm:$0xff]
        %v2225 = vld [vmem:[#allocation3 + $0x3f0] sm:$0xff]
        %v2226 = vld [vmem:[#allocation3 + $0x3f8] sm:$0xff]
        %v2227 = vld [vmem:[#allocation3 + $0x400] sm:$0xff]
        %v2228 = vld [vmem:[#allocation3 + $0x408] sm:$0xff]
        %v2229 = vld [vmem:[#allocation3 + $0x410] sm:$0xff]
        %v2230 = vld [vmem:[#allocation3 + $0x418] sm:$0xff]
        %v2231 = vld [vmem:[#allocation3 + $0x420] sm:$0xff]
        %v2232 = vld [vmem:[#allocation3 + $0x428] sm:$0xff]
        %v2233 = vld [vmem:[#allocation3 + $0x430] sm:$0xff]
        %v2234 = vld [vmem:[#allocation3 + $0x438] sm:$0xff]
        %v2235 = vld [vmem:[#allocation3 + $0x440] sm:$0xff]
        %v2236 = vld [vmem:[#allocation3 + $0x448] sm:$0xff]
        %v2237 = vld [vmem:[#allocation3 + $0x450] sm:$0xff]
        %v2238 = vld [vmem:[#allocation3 + $0x458] sm:$0xff]
        %v2239 = vld [vmem:[#allocation3 + $0x460] sm:$0xff]
        %v2240 = vld [vmem:[#allocation3 + $0x468] sm:$0xff]
        %v2241 = vld [vmem:[#allocation3 + $0x470] sm:$0xff]
        %v2242 = vld [vmem:[#allocation3 + $0x478] sm:$0xff]
        %v2243 = vld [vmem:[#allocation3 + $0x480] sm:$0xff]
        %v2244 = vld [vmem:[#allocation3 + $0x488] sm:$0xff]
        %v2245 = vld [vmem:[#allocation3 + $0x490] sm:$0xff]
        %v2246 = vld [vmem:[#allocation3 + $0x498] sm:$0xff]
        %v2247 = vld [vmem:[#allocation3 + $0x4a0] sm:$0xff]
        %v2248 = vld [vmem:[#allocation3 + $0x4a8] sm:$0xff]
        %v2249 = vld [vmem:[#allocation3 + $0x4b0] sm:$0xff]
        %v2250 = vld [vmem:[#allocation3 + $0x4b8] sm:$0xff]
        %v2251 = vld [vmem:[#allocation3 + $0x4c0] sm:$0xff]
        %v2252 = vld [vmem:[#allocation3 + $0x4c8] sm:$0xff]
        %v2253 = vld [vmem:[#allocation3 + $0x4d0] sm:$0xff]
        %v2254 = vld [vmem:[#allocation3 + $0x4d8] sm:$0xff]
        %v2255 = vld [vmem:[#allocation3 + $0x4e0] sm:$0xff]
        %v2256 = vld [vmem:[#allocation3 + $0x4e8] sm:$0xff]
        %v2257 = vld [vmem:[#allocation3 + $0x4f0] sm:$0xff]
        %v2258 = vld [vmem:[#allocation3 + $0x4f8] sm:$0xff]
        %v2259 = vld [vmem:[#allocation3 + $0x500] sm:$0xff]
        %v2260 = vld [vmem:[#allocation3 + $0x508] sm:$0xff]
        %v2261 = vld [vmem:[#allocation3 + $0x510] sm:$0xff]
        %v2262 = vld [vmem:[#allocation3 + $0x518] sm:$0xff]
        %v2263 = vld [vmem:[#allocation3 + $0x520] sm:$0xff]
        %v2264 = vld [vmem:[#allocation3 + $0x528] sm:$0xff]
        %v2265 = vld [vmem:[#allocation3 + $0x530] sm:$0xff]
        %v2266 = vld [vmem:[#allocation3 + $0x538] sm:$0xff]
        %v2267 = vld [vmem:[#allocation3 + $0x540] sm:$0xff]
        %v2268 = vld [vmem:[#allocation3 + $0x548] sm:$0xff]
        %v2269 = vld [vmem:[#allocation3 + $0x550] sm:$0xff]
        %v2270 = vld [vmem:[#allocation3 + $0x558] sm:$0xff]
        %v2271 = vld [vmem:[#allocation3 + $0x560] sm:$0xff]
        %v2272 = vld [vmem:[#allocation3 + $0x568] sm:$0xff]
        %v2273 = vld [vmem:[#allocation3 + $0x570] sm:$0xff]
        %v2274 = vld [vmem:[#allocation3 + $0x578] sm:$0xff]
        %v2275 = vld [vmem:[#allocation3 + $0x580] sm:$0xff]
        %v2276 = vld [vmem:[#allocation3 + $0x588] sm:$0xff]
        %v2277 = vld [vmem:[#allocation3 + $0x590] sm:$0xff]
        %v2278 = vld [vmem:[#allocation3 + $0x598] sm:$0xff]
        %v2279 = vld [vmem:[#allocation3 + $0x5a0] sm:$0xff]
        %v2280 = vld [vmem:[#allocation3 + $0x5a8] sm:$0xff]
        %v2281 = vld [vmem:[#allocation3 + $0x5b0] sm:$0xff]
        %v2282 = vld [vmem:[#allocation3 + $0x5b8] sm:$0xff]
        %v2283 = vld [vmem:[#allocation3 + $0x5c0] sm:$0xff]
        %v2284 = vld [vmem:[#allocation3 + $0x5c8] sm:$0xff]
        %v2285 = vld [vmem:[#allocation3 + $0x5d0] sm:$0xff]
        %v2286 = vld [vmem:[#allocation3 + $0x5d8] sm:$0xff]
        %v2287 = vld [vmem:[#allocation3 + $0x5e0] sm:$0xff]
        %v2288 = vld [vmem:[#allocation3 + $0x5e8] sm:$0xff]
        %v2289 = vld [vmem:[#allocation3 + $0x5f0] sm:$0xff]
        %v2290 = vld [vmem:[#allocation3 + $0x5f8] sm:$0xff]
        %v2291 = vld [vmem:[#allocation3 + $0x600] sm:$0xff]
        %v2292 = vld [vmem:[#allocation3 + $0x608] sm:$0xff]
        %v2293 = vld [vmem:[#allocation3 + $0x610] sm:$0xff]
        %v2294 = vld [vmem:[#allocation3 + $0x618] sm:$0xff]
        %v2295 = vld [vmem:[#allocation3 + $0x620] sm:$0xff]
        %v2296 = vld [vmem:[#allocation3 + $0x628] sm:$0xff]
        %v2297 = vld [vmem:[#allocation3 + $0x630] sm:$0xff]
        %v2298 = vld [vmem:[#allocation3 + $0x638] sm:$0xff]
        %v2299 = vld [vmem:[#allocation3 + $0x640] sm:$0xff]
        %v2300 = vld [vmem:[#allocation3 + $0x648] sm:$0xff]
        %v2301 = vld [vmem:[#allocation3 + $0x650] sm:$0xff]
        %v2302 = vld [vmem:[#allocation3 + $0x658] sm:$0xff]
        %v2303 = vld [vmem:[#allocation3 + $0x660] sm:$0xff]
        %v2304 = vld [vmem:[#allocation3 + $0x668] sm:$0xff]
        %v2305 = vld [vmem:[#allocation3 + $0x670] sm:$0xff]
        %v2306 = vld [vmem:[#allocation3 + $0x678] sm:$0xff]
        %v2307 = vld [vmem:[#allocation3 + $0x680] sm:$0xff]
        %v2308 = vld [vmem:[#allocation3 + $0x688] sm:$0xff]
        %v2309 = vld [vmem:[#allocation3 + $0x690] sm:$0xff]
        %v2310 = vld [vmem:[#allocation3 + $0x698] sm:$0xff]
        %v2311 = vld [vmem:[#allocation3 + $0x6a0] sm:$0xff]
        %v2312 = vld [vmem:[#allocation3 + $0x6a8] sm:$0xff]
        %v2313 = vld [vmem:[#allocation3 + $0x6b0] sm:$0xff]
        %v2314 = vld [vmem:[#allocation3 + $0x6b8] sm:$0xff]
        %v2315 = vld [vmem:[%s4] sm:$0xff]
        %2317 = vset.pattern.permute.xlu0 0
        %2318 = vperm.xlu0 %2317, %v2315
        %v2319 = vpop.permute.xlu0 %2318
        %vm2321 = vcmask 719872
        %v2323 = vsel %vm2321, %v2098, 0
        %2325 = vmatpush.msra.mxu0 %v2219
        %2326 = vmatpush.msra.mxu0 %v2211
        %2327 = vmatpush.msra.mxu0 %v2203
        %2328 = vmatpush.msra.mxu0 %v2195
        %2329 = vmatpush.msra.mxu0 %v2187
        %2330 = vmatpush.msra.mxu0 %v2179
        %2331 = vmatpush.msra.mxu0 %v2171
        %2332 = vmatpush.msra.mxu0 %v2163
        %2333 = vmatpush.msra.mxu0 %v2155
        %2334 = vmatpush.msra.mxu0 %v2147
        %2335 = vmatpush.msra.mxu0 %v2139
        %2336 = vmatpush.msra.mxu0 %v2131
        %2337 = vmatpush.msra.mxu0 %v2123
        %2338 = vmatpush.msra.mxu0 %v2115
        %2339 = vmatpush.msra.mxu0 %v2107
        %2340 = vmatpush.msra.mxu0 %v2099
        %2341 = vmatmul.f32.gmra.mxu0 %v2097
        %v2342 = vpop.f32.mrf.mxu0
        %v2343 = vadd.f32 %v2319, %v2342
        %2344 = vdwg.mxu0
        %2345 = vmatpush.msra.mxu0 0.0
        %2346 = vmatpush.msra.mxu0 0.0
        %2347 = vmatpush.msra.mxu0 0.0
        %2348 = vmatpush.msra.mxu0 0.0
        %2349 = vmatpush.msra.mxu0 0.0
        %2350 = vmatpush.msra.mxu0 %v2307
        %2351 = vmatpush.msra.mxu0 %v2299
        %2352 = vmatpush.msra.mxu0 %v2291
        %2353 = vmatpush.msra.mxu0 %v2283
        %2354 = vmatpush.msra.mxu0 %v2275
        %2355 = vmatpush.msra.mxu0 %v2267
        %2356 = vmatpush.msra.mxu0 %v2259
        %2357 = vmatpush.msra.mxu0 %v2251
        %2358 = vmatpush.msra.mxu0 %v2243
        %2359 = vmatpush.msra.mxu0 %v2235
        %2360 = vmatpush.msra.mxu0 %v2227
        %2361 = vmatmul.f32.gmra.mxu0 %v2323
        %v2362 = vpop.f32.mrf.mxu0
        %v2363 = vadd.f32 %v2343, %v2362
        %2364 = vdwg.mxu0
        %2365 = vmatpush.msra.mxu0 %v2220
        %2366 = vmatpush.msra.mxu0 %v2212
        %2367 = vmatpush.msra.mxu0 %v2204
        %2368 = vmatpush.msra.mxu0 %v2196
        %2369 = vmatpush.msra.mxu0 %v2188
        %2370 = vmatpush.msra.mxu0 %v2180
        %2371 = vmatpush.msra.mxu0 %v2172
        %2372 = vmatpush.msra.mxu0 %v2164
        %2373 = vmatpush.msra.mxu0 %v2156
        %2374 = vmatpush.msra.mxu0 %v2148
        %2375 = vmatpush.msra.mxu0 %v2140
        %2376 = vmatpush.msra.mxu0 %v2132
        %2377 = vmatpush.msra.mxu0 %v2124
        %2378 = vmatpush.msra.mxu0 %v2116
        %2379 = vmatpush.msra.mxu0 %v2108
        %2380 = vmatpush.msra.mxu0 %v2100
        %2381 = vmatmul.f32.gmra.mxu0 %v2097
        %v2382 = vpop.f32.mrf.mxu0
        %v2383 = vadd.f32 %v2319, %v2382
        %2384 = vdwg.mxu0
        %2385 = vmatpush.msra.mxu0 0.0
        %2386 = vmatpush.msra.mxu0 0.0
        %2387 = vmatpush.msra.mxu0 0.0
        %2388 = vmatpush.msra.mxu0 0.0
        %2389 = vmatpush.msra.mxu0 0.0
        %2390 = vmatpush.msra.mxu0 %v2308
        %2391 = vmatpush.msra.mxu0 %v2300
        %2392 = vmatpush.msra.mxu0 %v2292
        %2393 = vmatpush.msra.mxu0 %v2284
        %2394 = vmatpush.msra.mxu0 %v2276
        %2395 = vmatpush.msra.mxu0 %v2268
        %2396 = vmatpush.msra.mxu0 %v2260
        %2397 = vmatpush.msra.mxu0 %v2252
        %2398 = vmatpush.msra.mxu0 %v2244
        %2399 = vmatpush.msra.mxu0 %v2236
        %2400 = vmatpush.msra.mxu0 %v2228
        %2401 = vmatmul.f32.gmra.mxu0 %v2323
        %v2402 = vpop.f32.mrf.mxu0
        %v2403 = vadd.f32 %v2383, %v2402
        %2404 = vdwg.mxu0
        %2405 = vmatpush.msra.mxu0 %v2221
        %2406 = vmatpush.msra.mxu0 %v2213
        %2407 = vmatpush.msra.mxu0 %v2205
        %2408 = vmatpush.msra.mxu0 %v2197
        %2409 = vmatpush.msra.mxu0 %v2189
        %2410 = vmatpush.msra.mxu0 %v2181
        %2411 = vmatpush.msra.mxu0 %v2173
        %2412 = vmatpush.msra.mxu0 %v2165
        %2413 = vmatpush.msra.mxu0 %v2157
        %2414 = vmatpush.msra.mxu0 %v2149
        %2415 = vmatpush.msra.mxu0 %v2141
        %2416 = vmatpush.msra.mxu0 %v2133
        %2417 = vmatpush.msra.mxu0 %v2125
        %2418 = vmatpush.msra.mxu0 %v2117
        %2419 = vmatpush.msra.mxu0 %v2109
        %2420 = vmatpush.msra.mxu0 %v2101
        %2421 = vmatmul.f32.gmra.mxu0 %v2097
        %v2422 = vpop.f32.mrf.mxu0
        %v2423 = vadd.f32 %v2319, %v2422
        %2424 = vdwg.mxu0
        %2425 = vmatpush.msra.mxu0 0.0
        %2426 = vmatpush.msra.mxu0 0.0
        %2427 = vmatpush.msra.mxu0 0.0
        %2428 = vmatpush.msra.mxu0 0.0
        %2429 = vmatpush.msra.mxu0 0.0
        %2430 = vmatpush.msra.mxu0 %v2309
        %2431 = vmatpush.msra.mxu0 %v2301
        %2432 = vmatpush.msra.mxu0 %v2293
        %2433 = vmatpush.msra.mxu0 %v2285
        %2434 = vmatpush.msra.mxu0 %v2277
        %2435 = vmatpush.msra.mxu0 %v2269
        %2436 = vmatpush.msra.mxu0 %v2261
        %2437 = vmatpush.msra.mxu0 %v2253
        %2438 = vmatpush.msra.mxu0 %v2245
        %2439 = vmatpush.msra.mxu0 %v2237
        %2440 = vmatpush.msra.mxu0 %v2229
        %2441 = vmatmul.f32.gmra.mxu0 %v2323
        %v2442 = vpop.f32.mrf.mxu0
        %v2443 = vadd.f32 %v2423, %v2442
        %2444 = vdwg.mxu0
        %2445 = vmatpush.msra.mxu0 %v2222
        %2446 = vmatpush.msra.mxu0 %v2214
        %2447 = vmatpush.msra.mxu0 %v2206
        %2448 = vmatpush.msra.mxu0 %v2198
        %2449 = vmatpush.msra.mxu0 %v2190
        %2450 = vmatpush.msra.mxu0 %v2182
        %2451 = vmatpush.msra.mxu0 %v2174
        %2452 = vmatpush.msra.mxu0 %v2166
        %2453 = vmatpush.msra.mxu0 %v2158
        %2454 = vmatpush.msra.mxu0 %v2150
        %2455 = vmatpush.msra.mxu0 %v2142
        %2456 = vmatpush.msra.mxu0 %v2134
        %2457 = vmatpush.msra.mxu0 %v2126
        %2458 = vmatpush.msra.mxu0 %v2118
        %2459 = vmatpush.msra.mxu0 %v2110
        %2460 = vmatpush.msra.mxu0 %v2102
        %2461 = vmatmul.f32.gmra.mxu0 %v2097
        %v2462 = vpop.f32.mrf.mxu0
        %v2463 = vadd.f32 %v2319, %v2462
        %2464 = vdwg.mxu0
        %2465 = vmatpush.msra.mxu0 0.0
        %2466 = vmatpush.msra.mxu0 0.0
        %2467 = vmatpush.msra.mxu0 0.0
        %2468 = vmatpush.msra.mxu0 0.0
        %2469 = vmatpush.msra.mxu0 0.0
        %2470 = vmatpush.msra.mxu0 %v2310
        %2471 = vmatpush.msra.mxu0 %v2302
        %2472 = vmatpush.msra.mxu0 %v2294
        %2473 = vmatpush.msra.mxu0 %v2286
        %2474 = vmatpush.msra.mxu0 %v2278
        %2475 = vmatpush.msra.mxu0 %v2270
        %2476 = vmatpush.msra.mxu0 %v2262
        %2477 = vmatpush.msra.mxu0 %v2254
        %2478 = vmatpush.msra.mxu0 %v2246
        %2479 = vmatpush.msra.mxu0 %v2238
        %2480 = vmatpush.msra.mxu0 %v2230
        %2481 = vmatmul.f32.gmra.mxu0 %v2323
        %v2482 = vpop.f32.mrf.mxu0
        %v2483 = vadd.f32 %v2463, %v2482
        %2484 = vdwg.mxu0
        %2485 = vmatpush.msra.mxu0 %v2223
        %2486 = vmatpush.msra.mxu0 %v2215
        %2487 = vmatpush.msra.mxu0 %v2207
        %2488 = vmatpush.msra.mxu0 %v2199
        %2489 = vmatpush.msra.mxu0 %v2191
        %2490 = vmatpush.msra.mxu0 %v2183
        %2491 = vmatpush.msra.mxu0 %v2175
        %2492 = vmatpush.msra.mxu0 %v2167
        %2493 = vmatpush.msra.mxu0 %v2159
        %2494 = vmatpush.msra.mxu0 %v2151
        %2495 = vmatpush.msra.mxu0 %v2143
        %2496 = vmatpush.msra.mxu0 %v2135
        %2497 = vmatpush.msra.mxu0 %v2127
        %2498 = vmatpush.msra.mxu0 %v2119
        %2499 = vmatpush.msra.mxu0 %v2111
        %2500 = vmatpush.msra.mxu0 %v2103
        %2501 = vmatmul.f32.gmra.mxu0 %v2097
        %v2502 = vpop.f32.mrf.mxu0
        %v2503 = vadd.f32 %v2319, %v2502
        %2504 = vdwg.mxu0
        %2505 = vmatpush.msra.mxu0 0.0
        %2506 = vmatpush.msra.mxu0 0.0
        %2507 = vmatpush.msra.mxu0 0.0
        %2508 = vmatpush.msra.mxu0 0.0
        %2509 = vmatpush.msra.mxu0 0.0
        %2510 = vmatpush.msra.mxu0 %v2311
        %2511 = vmatpush.msra.mxu0 %v2303
        %2512 = vmatpush.msra.mxu0 %v2295
        %2513 = vmatpush.msra.mxu0 %v2287
        %2514 = vmatpush.msra.mxu0 %v2279
        %2515 = vmatpush.msra.mxu0 %v2271
        %2516 = vmatpush.msra.mxu0 %v2263
        %2517 = vmatpush.msra.mxu0 %v2255
        %2518 = vmatpush.msra.mxu0 %v2247
        %2519 = vmatpush.msra.mxu0 %v2239
        %2520 = vmatpush.msra.mxu0 %v2231
        %2521 = vmatmul.f32.gmra.mxu0 %v2323
        %v2522 = vpop.f32.mrf.mxu0
        %v2523 = vadd.f32 %v2503, %v2522
        %2524 = vdwg.mxu0
        %2525 = vmatpush.msra.mxu0 %v2224
        %2526 = vmatpush.msra.mxu0 %v2216
        %2527 = vmatpush.msra.mxu0 %v2208
        %2528 = vmatpush.msra.mxu0 %v2200
        %2529 = vmatpush.msra.mxu0 %v2192
        %2530 = vmatpush.msra.mxu0 %v2184
        %2531 = vmatpush.msra.mxu0 %v2176
        %2532 = vmatpush.msra.mxu0 %v2168
        %2533 = vmatpush.msra.mxu0 %v2160
        %2534 = vmatpush.msra.mxu0 %v2152
        %2535 = vmatpush.msra.mxu0 %v2144
        %2536 = vmatpush.msra.mxu0 %v2136
        %2537 = vmatpush.msra.mxu0 %v2128
        %2538 = vmatpush.msra.mxu0 %v2120
        %2539 = vmatpush.msra.mxu0 %v2112
        %2540 = vmatpush.msra.mxu0 %v2104
        %2541 = vmatmul.f32.gmra.mxu0 %v2097
        %v2542 = vpop.f32.mrf.mxu0
        %v2543 = vadd.f32 %v2319, %v2542
        %2544 = vdwg.mxu0
        %2545 = vmatpush.msra.mxu0 0.0
        %2546 = vmatpush.msra.mxu0 0.0
        %2547 = vmatpush.msra.mxu0 0.0
        %2548 = vmatpush.msra.mxu0 0.0
        %2549 = vmatpush.msra.mxu0 0.0
        %2550 = vmatpush.msra.mxu0 %v2312
        %2551 = vmatpush.msra.mxu0 %v2304
        %2552 = vmatpush.msra.mxu0 %v2296
        %2553 = vmatpush.msra.mxu0 %v2288
        %2554 = vmatpush.msra.mxu0 %v2280
        %2555 = vmatpush.msra.mxu0 %v2272
        %2556 = vmatpush.msra.mxu0 %v2264
        %2557 = vmatpush.msra.mxu0 %v2256
        %2558 = vmatpush.msra.mxu0 %v2248
        %2559 = vmatpush.msra.mxu0 %v2240
        %2560 = vmatpush.msra.mxu0 %v2232
        %2561 = vmatmul.f32.gmra.mxu0 %v2323
        %v2562 = vpop.f32.mrf.mxu0
        %v2563 = vadd.f32 %v2543, %v2562
        %2564 = vdwg.mxu0
        %2565 = vmatpush.msra.mxu0 %v2225
        %2566 = vmatpush.msra.mxu0 %v2217
        %2567 = vmatpush.msra.mxu0 %v2209
        %2568 = vmatpush.msra.mxu0 %v2201
        %2569 = vmatpush.msra.mxu0 %v2193
        %2570 = vmatpush.msra.mxu0 %v2185
        %2571 = vmatpush.msra.mxu0 %v2177
        %2572 = vmatpush.msra.mxu0 %v2169
        %2573 = vmatpush.msra.mxu0 %v2161
        %2574 = vmatpush.msra.mxu0 %v2153
        %2575 = vmatpush.msra.mxu0 %v2145
        %2576 = vmatpush.msra.mxu0 %v2137
        %2577 = vmatpush.msra.mxu0 %v2129
        %2578 = vmatpush.msra.mxu0 %v2121
        %2579 = vmatpush.msra.mxu0 %v2113
        %2580 = vmatpush.msra.mxu0 %v2105
        %2581 = vmatmul.f32.gmra.mxu0 %v2097
        %v2582 = vpop.f32.mrf.mxu0
        %v2583 = vadd.f32 %v2319, %v2582
        %2584 = vdwg.mxu0
        %2585 = vmatpush.msra.mxu0 0.0
        %2586 = vmatpush.msra.mxu0 0.0
        %2587 = vmatpush.msra.mxu0 0.0
        %2588 = vmatpush.msra.mxu0 0.0
        %2589 = vmatpush.msra.mxu0 0.0
        %2590 = vmatpush.msra.mxu0 %v2313
        %2591 = vmatpush.msra.mxu0 %v2305
        %2592 = vmatpush.msra.mxu0 %v2297
        %2593 = vmatpush.msra.mxu0 %v2289
        %2594 = vmatpush.msra.mxu0 %v2281
        %2595 = vmatpush.msra.mxu0 %v2273
        %2596 = vmatpush.msra.mxu0 %v2265
        %2597 = vmatpush.msra.mxu0 %v2257
        %2598 = vmatpush.msra.mxu0 %v2249
        %2599 = vmatpush.msra.mxu0 %v2241
        %2600 = vmatpush.msra.mxu0 %v2233
        %2601 = vmatmul.f32.gmra.mxu0 %v2323
        %v2602 = vpop.f32.mrf.mxu0
        %v2603 = vadd.f32 %v2583, %v2602
        %2604 = vdwg.mxu0
        %2605 = vmatpush.msra.mxu0 %v2226
        %2606 = vmatpush.msra.mxu0 %v2218
        %2607 = vmatpush.msra.mxu0 %v2210
        %2608 = vmatpush.msra.mxu0 %v2202
        %2609 = vmatpush.msra.mxu0 %v2194
        %2610 = vmatpush.msra.mxu0 %v2186
        %2611 = vmatpush.msra.mxu0 %v2178
        %2612 = vmatpush.msra.mxu0 %v2170
        %2613 = vmatpush.msra.mxu0 %v2162
        %2614 = vmatpush.msra.mxu0 %v2154
        %2615 = vmatpush.msra.mxu0 %v2146
        %2616 = vmatpush.msra.mxu0 %v2138
        %2617 = vmatpush.msra.mxu0 %v2130
        %2618 = vmatpush.msra.mxu0 %v2122
        %2619 = vmatpush.msra.mxu0 %v2114
        %2620 = vmatpush.msra.mxu0 %v2106
        %2621 = vmatmul.f32.gmra.mxu0 %v2097
        %v2622 = vpop.f32.mrf.mxu0
        %v2623 = vadd.f32 %v2319, %v2622
        %2624 = vdwg.mxu0
        %2625 = vmatpush.msra.mxu0 0.0
        %2626 = vmatpush.msra.mxu0 0.0
        %2627 = vmatpush.msra.mxu0 0.0
        %2628 = vmatpush.msra.mxu0 0.0
        %2629 = vmatpush.msra.mxu0 0.0
        %2630 = vmatpush.msra.mxu0 %v2314
        %2631 = vmatpush.msra.mxu0 %v2306
        %2632 = vmatpush.msra.mxu0 %v2298
        %2633 = vmatpush.msra.mxu0 %v2290
        %2634 = vmatpush.msra.mxu0 %v2282
        %2635 = vmatpush.msra.mxu0 %v2274
        %2636 = vmatpush.msra.mxu0 %v2266
        %2637 = vmatpush.msra.mxu0 %v2258
        %2638 = vmatpush.msra.mxu0 %v2250
        %2639 = vmatpush.msra.mxu0 %v2242
        %2640 = vmatpush.msra.mxu0 %v2234
        %2641 = vmatmul.f32.gmra.mxu0 %v2323
        %v2642 = vpop.f32.mrf.mxu0
        %v2643 = vadd.f32 %v2623, %v2642
        %2644 = vdwg.mxu0
        %v2645 = vtanh.pop %v2363
        %v2646 = vtanh.pop %v2403
        %v2647 = vtanh.pop %v2443
        %v2648 = vtanh.pop %v2483
        %v2649 = vtanh.pop %v2523
        %v2650 = vtanh.pop %v2563
        %v2651 = vtanh.pop %v2603
        %v2652 = vtanh.pop %v2643
        %v2653 = vld [vmem:[#allocation9] sm:$0xff]
        %v2655 = vperm.slane %v2653, 0
        %v2656 = vperm.slane %v2653, 1
        %v2657 = vperm.slane %v2653, 2
        %v2658 = vperm.slane %v2653, 3
        %v2659 = vperm.slane %v2653, 4
        %v2660 = vperm.slane %v2653, 5
        %v2661 = vperm.slane %v2653, 6
        %v2662 = vperm.slane %v2653, 7
        %v2671 = vmul.f32 %v2645, %v2655
        %v2672 = vmul.f32 %v2646, %v2656
        %v2673 = vmul.f32 %v2647, %v2657
        %v2674 = vmul.f32 %v2648, %v2658
        %v2675 = vmul.f32 %v2649, %v2659
        %v2676 = vmul.f32 %v2650, %v2660
        %v2677 = vmul.f32 %v2651, %v2661
        %v2678 = vmul.f32 %v2652, %v2662
        %2679 = vst [vmem:[#allocation2 + $0x8] sm:$0xff] %v2671
        %2680 = vst [vmem:[#allocation2 + $0x10] sm:$0xff] %v2672
        %2681 = vst [vmem:[#allocation2 + $0x18] sm:$0xff] %v2673
        %2682 = vst [vmem:[#allocation2 + $0x20] sm:$0xff] %v2674
        %2683 = vst [vmem:[#allocation2 + $0x28] sm:$0xff] %v2675
        %2684 = vst [vmem:[#allocation2 + $0x30] sm:$0xff] %v2676
        %2685 = vst [vmem:[#allocation2 + $0x38] sm:$0xff] %v2677
        %2686 = vst [vmem:[#allocation2 + $0x40] sm:$0xff] %v2678
        %v2687 = vld [vmem:[#allocation2] sm:$0xff]
        %v2688 = vld [vmem:[#allocation2 + $0x8] sm:$0xff]
        %v2689 = vld [vmem:[#allocation2 + $0x10] sm:$0xff]
        %v2690 = vld [vmem:[#allocation2 + $0x18] sm:$0xff]
        %v2691 = vld [vmem:[#allocation2 + $0x20] sm:$0xff]
        %v2692 = vld [vmem:[#allocation2 + $0x28] sm:$0xff]
        %v2693 = vld [vmem:[#allocation2 + $0x30] sm:$0xff]
        %v2694 = vld [vmem:[#allocation2 + $0x38] sm:$0xff]
        %v2695 = vld [vmem:[#allocation2 + $0x40] sm:$0xff]
        %2705 = vrot.lane.b32.xlu0 %v2687, 111
        %v2706 = vpop.permute.xlu0 %2705
        %2707 = vrot.lane.b32.xlu0 %v2688, 111
        %v2708 = vpop.permute.xlu0 %2707
        %2709 = vrot.lane.b32.xlu0 %v2689, 111
        %v2710 = vpop.permute.xlu0 %2709
        %2711 = vrot.lane.b32.xlu0 %v2690, 111
        %v2712 = vpop.permute.xlu0 %2711
        %2713 = vrot.lane.b32.xlu0 %v2691, 111
        %v2714 = vpop.permute.xlu0 %2713
        %2715 = vrot.lane.b32.xlu0 %v2692, 111
        %v2716 = vpop.permute.xlu0 %2715
        %2717 = vrot.lane.b32.xlu0 %v2693, 111
        %v2718 = vpop.permute.xlu0 %2717
        %2719 = vrot.lane.b32.xlu0 %v2694, 111
        %v2720 = vpop.permute.xlu0 %2719
        %2721 = vrot.lane.b32.xlu0 %v2695, 111
        %v2722 = vpop.permute.xlu0 %2721
        %v2723 = vsel %vm531, %v2706, %v2708
        %v2724 = vsel %vm531, %v2708, %v2710
        %v2725 = vsel %vm531, %v2710, %v2712
        %v2726 = vsel %vm531, %v2712, %v2714
        %v2727 = vsel %vm531, %v2714, %v2716
        %v2728 = vsel %vm531, %v2716, %v2718
        %v2729 = vsel %vm531, %v2718, %v2720
        %v2730 = vsel %vm531, %v2720, %v2722
        %2739 = vst [vmem:[#allocation3] sm:$0xff] %v2723
        %2740 = vst [vmem:[#allocation3 + $0x8] sm:$0xff] %v2724
        %2741 = vst [vmem:[#allocation3 + $0x10] sm:$0xff] %v2725
        %2742 = vst [vmem:[#allocation3 + $0x18] sm:$0xff] %v2726
        %2743 = vst [vmem:[#allocation3 + $0x20] sm:$0xff] %v2727
        %2744 = vst [vmem:[#allocation3 + $0x28] sm:$0xff] %v2728
        %2745 = vst [vmem:[#allocation3 + $0x30] sm:$0xff] %v2729
        %2746 = vst [vmem:[#allocation3 + $0x38] sm:$0xff] %v2730
        %v2747 = vld [vmem:[#allocation2] sm:$0xff]
        %v2748 = vld [vmem:[#allocation2 + $0x8] sm:$0xff]
        %v2749 = vld [vmem:[#allocation2 + $0x10] sm:$0xff]
        %v2750 = vld [vmem:[#allocation2 + $0x18] sm:$0xff]
        %v2751 = vld [vmem:[#allocation2 + $0x20] sm:$0xff]
        %v2752 = vld [vmem:[#allocation2 + $0x28] sm:$0xff]
        %v2753 = vld [vmem:[#allocation2 + $0x30] sm:$0xff]
        %v2754 = vld [vmem:[#allocation2 + $0x38] sm:$0xff]
        %v2755 = vld [vmem:[#allocation2 + $0x40] sm:$0xff]
        %2765 = vrot.lane.b32.xlu0 %v2747, 110
        %v2766 = vpop.permute.xlu0 %2765
        %2767 = vrot.lane.b32.xlu0 %v2748, 110
        %v2768 = vpop.permute.xlu0 %2767
        %2769 = vrot.lane.b32.xlu0 %v2749, 110
        %v2770 = vpop.permute.xlu0 %2769
        %2771 = vrot.lane.b32.xlu0 %v2750, 110
        %v2772 = vpop.permute.xlu0 %2771
        %2773 = vrot.lane.b32.xlu0 %v2751, 110
        %v2774 = vpop.permute.xlu0 %2773
        %2775 = vrot.lane.b32.xlu0 %v2752, 110
        %v2776 = vpop.permute.xlu0 %2775
        %2777 = vrot.lane.b32.xlu0 %v2753, 110
        %v2778 = vpop.permute.xlu0 %2777
        %2779 = vrot.lane.b32.xlu0 %v2754, 110
        %v2780 = vpop.permute.xlu0 %2779
        %2781 = vrot.lane.b32.xlu0 %v2755, 110
        %v2782 = vpop.permute.xlu0 %2781
        %v2783 = vsel %vm592, %v2766, %v2768
        %v2784 = vsel %vm592, %v2768, %v2770
        %v2785 = vsel %vm592, %v2770, %v2772
        %v2786 = vsel %vm592, %v2772, %v2774
        %v2787 = vsel %vm592, %v2774, %v2776
        %v2788 = vsel %vm592, %v2776, %v2778
        %v2789 = vsel %vm592, %v2778, %v2780
        %v2790 = vsel %vm592, %v2780, %v2782
        %2799 = vst [vmem:[#allocation3 + $0x40] sm:$0xff] %v2783
        %2800 = vst [vmem:[#allocation3 + $0x48] sm:$0xff] %v2784
        %2801 = vst [vmem:[#allocation3 + $0x50] sm:$0xff] %v2785
        %2802 = vst [vmem:[#allocation3 + $0x58] sm:$0xff] %v2786
        %2803 = vst [vmem:[#allocation3 + $0x60] sm:$0xff] %v2787
        %2804 = vst [vmem:[#allocation3 + $0x68] sm:$0xff] %v2788
        %2805 = vst [vmem:[#allocation3 + $0x70] sm:$0xff] %v2789
        %2806 = vst [vmem:[#allocation3 + $0x78] sm:$0xff] %v2790
        %v2807 = vld [vmem:[#allocation2] sm:$0xff]
        %v2808 = vld [vmem:[#allocation2 + $0x8] sm:$0xff]
        %v2809 = vld [vmem:[#allocation2 + $0x10] sm:$0xff]
        %v2810 = vld [vmem:[#allocation2 + $0x18] sm:$0xff]
        %v2811 = vld [vmem:[#allocation2 + $0x20] sm:$0xff]
        %v2812 = vld [vmem:[#allocation2 + $0x28] sm:$0xff]
        %v2813 = vld [vmem:[#allocation2 + $0x30] sm:$0xff]
        %v2814 = vld [vmem:[#allocation2 + $0x38] sm:$0xff]
        %v2815 = vld [vmem:[#allocation2 + $0x40] sm:$0xff]
        %2825 = vrot.lane.b32.xlu0 %v2807, 109
        %v2826 = vpop.permute.xlu0 %2825
        %2827 = vrot.lane.b32.xlu0 %v2808, 109
        %v2828 = vpop.permute.xlu0 %2827
        %2829 = vrot.lane.b32.xlu0 %v2809, 109
        %v2830 = vpop.permute.xlu0 %2829
        %2831 = vrot.lane.b32.xlu0 %v2810, 109
        %v2832 = vpop.permute.xlu0 %2831
        %2833 = vrot.lane.b32.xlu0 %v2811, 109
        %v2834 = vpop.permute.xlu0 %2833
        %2835 = vrot.lane.b32.xlu0 %v2812, 109
        %v2836 = vpop.permute.xlu0 %2835
        %2837 = vrot.lane.b32.xlu0 %v2813, 109
        %v2838 = vpop.permute.xlu0 %2837
        %2839 = vrot.lane.b32.xlu0 %v2814, 109
        %v2840 = vpop.permute.xlu0 %2839
        %2841 = vrot.lane.b32.xlu0 %v2815, 109
        %v2842 = vpop.permute.xlu0 %2841
        %v2843 = vsel %vm653, %v2826, %v2828
        %v2844 = vsel %vm653, %v2828, %v2830
        %v2845 = vsel %vm653, %v2830, %v2832
        %v2846 = vsel %vm653, %v2832, %v2834
        %v2847 = vsel %vm653, %v2834, %v2836
        %v2848 = vsel %vm653, %v2836, %v2838
        %v2849 = vsel %vm653, %v2838, %v2840
        %v2850 = vsel %vm653, %v2840, %v2842
        %2859 = vst [vmem:[#allocation3 + $0x80] sm:$0xff] %v2843
        %2860 = vst [vmem:[#allocation3 + $0x88] sm:$0xff] %v2844
        %2861 = vst [vmem:[#allocation3 + $0x90] sm:$0xff] %v2845
        %2862 = vst [vmem:[#allocation3 + $0x98] sm:$0xff] %v2846
        %2863 = vst [vmem:[#allocation3 + $0xa0] sm:$0xff] %v2847
        %2864 = vst [vmem:[#allocation3 + $0xa8] sm:$0xff] %v2848
        %2865 = vst [vmem:[#allocation3 + $0xb0] sm:$0xff] %v2849
        %2866 = vst [vmem:[#allocation3 + $0xb8] sm:$0xff] %v2850
        %v2867 = vld [vmem:[#allocation2] sm:$0xff]
        %v2868 = vld [vmem:[#allocation2 + $0x8] sm:$0xff]
        %v2869 = vld [vmem:[#allocation2 + $0x10] sm:$0xff]
        %v2870 = vld [vmem:[#allocation2 + $0x18] sm:$0xff]
        %v2871 = vld [vmem:[#allocation2 + $0x20] sm:$0xff]
        %v2872 = vld [vmem:[#allocation2 + $0x28] sm:$0xff]
        %v2873 = vld [vmem:[#allocation2 + $0x30] sm:$0xff]
        %v2874 = vld [vmem:[#allocation2 + $0x38] sm:$0xff]
        %v2875 = vld [vmem:[#allocation2 + $0x40] sm:$0xff]
        %2885 = vrot.lane.b32.xlu0 %v2867, 101
        %v2886 = vpop.permute.xlu0 %2885
        %2887 = vrot.lane.b32.xlu0 %v2868, 101
        %v2888 = vpop.permute.xlu0 %2887
        %2889 = vrot.lane.b32.xlu0 %v2869, 101
        %v2890 = vpop.permute.xlu0 %2889
        %2891 = vrot.lane.b32.xlu0 %v2870, 101
        %v2892 = vpop.permute.xlu0 %2891
        %2893 = vrot.lane.b32.xlu0 %v2871, 101
        %v2894 = vpop.permute.xlu0 %2893
        %2895 = vrot.lane.b32.xlu0 %v2872, 101
        %v2896 = vpop.permute.xlu0 %2895
        %2897 = vrot.lane.b32.xlu0 %v2873, 101
        %v2898 = vpop.permute.xlu0 %2897
        %2899 = vrot.lane.b32.xlu0 %v2874, 101
        %v2900 = vpop.permute.xlu0 %2899
        %2901 = vrot.lane.b32.xlu0 %v2875, 101
        %v2902 = vpop.permute.xlu0 %2901
        %v2903 = vsel %vm714, %v2886, %v2888
        %v2904 = vsel %vm714, %v2888, %v2890
        %v2905 = vsel %vm714, %v2890, %v2892
        %v2906 = vsel %vm714, %v2892, %v2894
        %v2907 = vsel %vm714, %v2894, %v2896
        %v2908 = vsel %vm714, %v2896, %v2898
        %v2909 = vsel %vm714, %v2898, %v2900
        %v2910 = vsel %vm714, %v2900, %v2902
        %2919 = vst [vmem:[#allocation3 + $0xc0] sm:$0xff] %v2903
        %2920 = vst [vmem:[#allocation3 + $0xc8] sm:$0xff] %v2904
        %2921 = vst [vmem:[#allocation3 + $0xd0] sm:$0xff] %v2905
        %2922 = vst [vmem:[#allocation3 + $0xd8] sm:$0xff] %v2906
        %2923 = vst [vmem:[#allocation3 + $0xe0] sm:$0xff] %v2907
        %2924 = vst [vmem:[#allocation3 + $0xe8] sm:$0xff] %v2908
        %2925 = vst [vmem:[#allocation3 + $0xf0] sm:$0xff] %v2909
        %2926 = vst [vmem:[#allocation3 + $0xf8] sm:$0xff] %v2910
        %v2927 = vld [vmem:[#allocation2] sm:$0xff]
        %v2928 = vld [vmem:[#allocation2 + $0x8] sm:$0xff]
        %v2929 = vld [vmem:[#allocation2 + $0x10] sm:$0xff]
        %v2930 = vld [vmem:[#allocation2 + $0x18] sm:$0xff]
        %v2931 = vld [vmem:[#allocation2 + $0x20] sm:$0xff]
        %v2932 = vld [vmem:[#allocation2 + $0x28] sm:$0xff]
        %v2933 = vld [vmem:[#allocation2 + $0x30] sm:$0xff]
        %v2934 = vld [vmem:[#allocation2 + $0x38] sm:$0xff]
        %v2935 = vld [vmem:[#allocation2 + $0x40] sm:$0xff]
        %2945 = vrot.lane.b32.xlu0 %v2927, 100
        %v2946 = vpop.permute.xlu0 %2945
        %2947 = vrot.lane.b32.xlu0 %v2928, 100
        %v2948 = vpop.permute.xlu0 %2947
        %2949 = vrot.lane.b32.xlu0 %v2929, 100
        %v2950 = vpop.permute.xlu0 %2949
        %2951 = vrot.lane.b32.xlu0 %v2930, 100
        %v2952 = vpop.permute.xlu0 %2951
        %2953 = vrot.lane.b32.xlu0 %v2931, 100
        %v2954 = vpop.permute.xlu0 %2953
        %2955 = vrot.lane.b32.xlu0 %v2932, 100
        %v2956 = vpop.permute.xlu0 %2955
        %2957 = vrot.lane.b32.xlu0 %v2933, 100
        %v2958 = vpop.permute.xlu0 %2957
        %2959 = vrot.lane.b32.xlu0 %v2934, 100
        %v2960 = vpop.permute.xlu0 %2959
        %2961 = vrot.lane.b32.xlu0 %v2935, 100
        %v2962 = vpop.permute.xlu0 %2961
        %v2963 = vsel %vm775, %v2946, %v2948
        %v2964 = vsel %vm775, %v2948, %v2950
        %v2965 = vsel %vm775, %v2950, %v2952
        %v2966 = vsel %vm775, %v2952, %v2954
        %v2967 = vsel %vm775, %v2954, %v2956
        %v2968 = vsel %vm775, %v2956, %v2958
        %v2969 = vsel %vm775, %v2958, %v2960
        %v2970 = vsel %vm775, %v2960, %v2962
        %2979 = vst [vmem:[#allocation3 + $0x100] sm:$0xff] %v2963
        %2980 = vst [vmem:[#allocation3 + $0x108] sm:$0xff] %v2964
        %2981 = vst [vmem:[#allocation3 + $0x110] sm:$0xff] %v2965
        %2982 = vst [vmem:[#allocation3 + $0x118] sm:$0xff] %v2966
        %2983 = vst [vmem:[#allocation3 + $0x120] sm:$0xff] %v2967
        %2984 = vst [vmem:[#allocation3 + $0x128] sm:$0xff] %v2968
        %2985 = vst [vmem:[#allocation3 + $0x130] sm:$0xff] %v2969
        %2986 = vst [vmem:[#allocation3 + $0x138] sm:$0xff] %v2970
        %v2987 = vld [vmem:[#allocation2] sm:$0xff]
        %v2988 = vld [vmem:[#allocation2 + $0x8] sm:$0xff]
        %v2989 = vld [vmem:[#allocation2 + $0x10] sm:$0xff]
        %v2990 = vld [vmem:[#allocation2 + $0x18] sm:$0xff]
        %v2991 = vld [vmem:[#allocation2 + $0x20] sm:$0xff]
        %v2992 = vld [vmem:[#allocation2 + $0x28] sm:$0xff]
        %v2993 = vld [vmem:[#allocation2 + $0x30] sm:$0xff]
        %v2994 = vld [vmem:[#allocation2 + $0x38] sm:$0xff]
        %v2995 = vld [vmem:[#allocation2 + $0x40] sm:$0xff]
        %3005 = vrot.lane.b32.xlu0 %v2987, 99
        %v3006 = vpop.permute.xlu0 %3005
        %3007 = vrot.lane.b32.xlu0 %v2988, 99
        %v3008 = vpop.permute.xlu0 %3007
        %3009 = vrot.lane.b32.xlu0 %v2989, 99
        %v3010 = vpop.permute.xlu0 %3009
        %3011 = vrot.lane.b32.xlu0 %v2990, 99
        %v3012 = vpop.permute.xlu0 %3011
        %3013 = vrot.lane.b32.xlu0 %v2991, 99
        %v3014 = vpop.permute.xlu0 %3013
        %3015 = vrot.lane.b32.xlu0 %v2992, 99
        %v3016 = vpop.permute.xlu0 %3015
        %3017 = vrot.lane.b32.xlu0 %v2993, 99
        %v3018 = vpop.permute.xlu0 %3017
        %3019 = vrot.lane.b32.xlu0 %v2994, 99
        %v3020 = vpop.permute.xlu0 %3019
        %3021 = vrot.lane.b32.xlu0 %v2995, 99
        %v3022 = vpop.permute.xlu0 %3021
        %v3023 = vsel %vm836, %v3006, %v3008
        %v3024 = vsel %vm836, %v3008, %v3010
        %v3025 = vsel %vm836, %v3010, %v3012
        %v3026 = vsel %vm836, %v3012, %v3014
        %v3027 = vsel %vm836, %v3014, %v3016
        %v3028 = vsel %vm836, %v3016, %v3018
        %v3029 = vsel %vm836, %v3018, %v3020
        %v3030 = vsel %vm836, %v3020, %v3022
        %3039 = vst [vmem:[#allocation3 + $0x140] sm:$0xff] %v3023
        %3040 = vst [vmem:[#allocation3 + $0x148] sm:$0xff] %v3024
        %3041 = vst [vmem:[#allocation3 + $0x150] sm:$0xff] %v3025
        %3042 = vst [vmem:[#allocation3 + $0x158] sm:$0xff] %v3026
        %3043 = vst [vmem:[#allocation3 + $0x160] sm:$0xff] %v3027
        %3044 = vst [vmem:[#allocation3 + $0x168] sm:$0xff] %v3028
        %3045 = vst [vmem:[#allocation3 + $0x170] sm:$0xff] %v3029
        %3046 = vst [vmem:[#allocation3 + $0x178] sm:$0xff] %v3030
        %v3047 = vld [vmem:[#allocation2] sm:$0xff]
        %v3048 = vld [vmem:[#allocation2 + $0x8] sm:$0xff]
        %v3049 = vld [vmem:[#allocation2 + $0x10] sm:$0xff]
        %v3050 = vld [vmem:[#allocation2 + $0x18] sm:$0xff]
        %v3051 = vld [vmem:[#allocation2 + $0x20] sm:$0xff]
        %v3052 = vld [vmem:[#allocation2 + $0x28] sm:$0xff]
        %v3053 = vld [vmem:[#allocation2 + $0x30] sm:$0xff]
        %v3054 = vld [vmem:[#allocation2 + $0x38] sm:$0xff]
        %v3055 = vld [vmem:[#allocation2 + $0x40] sm:$0xff]
        %3065 = vrot.lane.b32.xlu0 %v3047, 91
        %v3066 = vpop.permute.xlu0 %3065
        %3067 = vrot.lane.b32.xlu0 %v3048, 91
        %v3068 = vpop.permute.xlu0 %3067
        %3069 = vrot.lane.b32.xlu0 %v3049, 91
        %v3070 = vpop.permute.xlu0 %3069
        %3071 = vrot.lane.b32.xlu0 %v3050, 91
        %v3072 = vpop.permute.xlu0 %3071
        %3073 = vrot.lane.b32.xlu0 %v3051, 91
        %v3074 = vpop.permute.xlu0 %3073
        %3075 = vrot.lane.b32.xlu0 %v3052, 91
        %v3076 = vpop.permute.xlu0 %3075
        %3077 = vrot.lane.b32.xlu0 %v3053, 91
        %v3078 = vpop.permute.xlu0 %3077
        %3079 = vrot.lane.b32.xlu0 %v3054, 91
        %v3080 = vpop.permute.xlu0 %3079
        %3081 = vrot.lane.b32.xlu0 %v3055, 91
        %v3082 = vpop.permute.xlu0 %3081
        %v3083 = vsel %vm897, %v3066, %v3068
        %v3084 = vsel %vm897, %v3068, %v3070
        %v3085 = vsel %vm897, %v3070, %v3072
        %v3086 = vsel %vm897, %v3072, %v3074
        %v3087 = vsel %vm897, %v3074, %v3076
        %v3088 = vsel %vm897, %v3076, %v3078
        %v3089 = vsel %vm897, %v3078, %v3080
        %v3090 = vsel %vm897, %v3080, %v3082
        %3099 = vst [vmem:[#allocation3 + $0x180] sm:$0xff] %v3083
        %3100 = vst [vmem:[#allocation3 + $0x188] sm:$0xff] %v3084
        %3101 = vst [vmem:[#allocation3 + $0x190] sm:$0xff] %v3085
        %3102 = vst [vmem:[#allocation3 + $0x198] sm:$0xff] %v3086
        %3103 = vst [vmem:[#allocation3 + $0x1a0] sm:$0xff] %v3087
        %3104 = vst [vmem:[#allocation3 + $0x1a8] sm:$0xff] %v3088
        %3105 = vst [vmem:[#allocation3 + $0x1b0] sm:$0xff] %v3089
        %3106 = vst [vmem:[#allocation3 + $0x1b8] sm:$0xff] %v3090
        %v3107 = vld [vmem:[#allocation2] sm:$0xff]
        %v3108 = vld [vmem:[#allocation2 + $0x8] sm:$0xff]
        %v3109 = vld [vmem:[#allocation2 + $0x10] sm:$0xff]
        %v3110 = vld [vmem:[#allocation2 + $0x18] sm:$0xff]
        %v3111 = vld [vmem:[#allocation2 + $0x20] sm:$0xff]
        %v3112 = vld [vmem:[#allocation2 + $0x28] sm:$0xff]
        %v3113 = vld [vmem:[#allocation2 + $0x30] sm:$0xff]
        %v3114 = vld [vmem:[#allocation2 + $0x38] sm:$0xff]
        %v3115 = vld [vmem:[#allocation2 + $0x40] sm:$0xff]
        %3125 = vrot.lane.b32.xlu0 %v3107, 90
        %v3126 = vpop.permute.xlu0 %3125
        %3127 = vrot.lane.b32.xlu0 %v3108, 90
        %v3128 = vpop.permute.xlu0 %3127
        %3129 = vrot.lane.b32.xlu0 %v3109, 90
        %v3130 = vpop.permute.xlu0 %3129
        %3131 = vrot.lane.b32.xlu0 %v3110, 90
        %v3132 = vpop.permute.xlu0 %3131
        %3133 = vrot.lane.b32.xlu0 %v3111, 90
        %v3134 = vpop.permute.xlu0 %3133
        %3135 = vrot.lane.b32.xlu0 %v3112, 90
        %v3136 = vpop.permute.xlu0 %3135
        %3137 = vrot.lane.b32.xlu0 %v3113, 90
        %v3138 = vpop.permute.xlu0 %3137
        %3139 = vrot.lane.b32.xlu0 %v3114, 90
        %v3140 = vpop.permute.xlu0 %3139
        %3141 = vrot.lane.b32.xlu0 %v3115, 90
        %v3142 = vpop.permute.xlu0 %3141
        %v3143 = vsel %vm958, %v3126, %v3128
        %v3144 = vsel %vm958, %v3128, %v3130
        %v3145 = vsel %vm958, %v3130, %v3132
        %v3146 = vsel %vm958, %v3132, %v3134
        %v3147 = vsel %vm958, %v3134, %v3136
        %v3148 = vsel %vm958, %v3136, %v3138
        %v3149 = vsel %vm958, %v3138, %v3140
        %v3150 = vsel %vm958, %v3140, %v3142
        %3159 = vst [vmem:[#allocation3 + $0x1c0] sm:$0xff] %v3143
        %3160 = vst [vmem:[#allocation3 + $0x1c8] sm:$0xff] %v3144
        %3161 = vst [vmem:[#allocation3 + $0x1d0] sm:$0xff] %v3145
        %3162 = vst [vmem:[#allocation3 + $0x1d8] sm:$0xff] %v3146
        %3163 = vst [vmem:[#allocation3 + $0x1e0] sm:$0xff] %v3147
        %3164 = vst [vmem:[#allocation3 + $0x1e8] sm:$0xff] %v3148
        %3165 = vst [vmem:[#allocation3 + $0x1f0] sm:$0xff] %v3149
        %3166 = vst [vmem:[#allocation3 + $0x1f8] sm:$0xff] %v3150
        %v3167 = vld [vmem:[#allocation2] sm:$0xff]
        %v3168 = vld [vmem:[#allocation2 + $0x8] sm:$0xff]
        %v3169 = vld [vmem:[#allocation2 + $0x10] sm:$0xff]
        %v3170 = vld [vmem:[#allocation2 + $0x18] sm:$0xff]
        %v3171 = vld [vmem:[#allocation2 + $0x20] sm:$0xff]
        %v3172 = vld [vmem:[#allocation2 + $0x28] sm:$0xff]
        %v3173 = vld [vmem:[#allocation2 + $0x30] sm:$0xff]
        %v3174 = vld [vmem:[#allocation2 + $0x38] sm:$0xff]
        %v3175 = vld [vmem:[#allocation2 + $0x40] sm:$0xff]
        %3185 = vrot.lane.b32.xlu0 %v3167, 89
        %v3186 = vpop.permute.xlu0 %3185
        %3187 = vrot.lane.b32.xlu0 %v3168, 89
        %v3188 = vpop.permute.xlu0 %3187
        %3189 = vrot.lane.b32.xlu0 %v3169, 89
        %v3190 = vpop.permute.xlu0 %3189
        %3191 = vrot.lane.b32.xlu0 %v3170, 89
        %v3192 = vpop.permute.xlu0 %3191
        %3193 = vrot.lane.b32.xlu0 %v3171, 89
        %v3194 = vpop.permute.xlu0 %3193
        %3195 = vrot.lane.b32.xlu0 %v3172, 89
        %v3196 = vpop.permute.xlu0 %3195
        %3197 = vrot.lane.b32.xlu0 %v3173, 89
        %v3198 = vpop.permute.xlu0 %3197
        %3199 = vrot.lane.b32.xlu0 %v3174, 89
        %v3200 = vpop.permute.xlu0 %3199
        %3201 = vrot.lane.b32.xlu0 %v3175, 89
        %v3202 = vpop.permute.xlu0 %3201
        %v3203 = vsel %vm1019, %v3186, %v3188
        %v3204 = vsel %vm1019, %v3188, %v3190
        %v3205 = vsel %vm1019, %v3190, %v3192
        %v3206 = vsel %vm1019, %v3192, %v3194
        %v3207 = vsel %vm1019, %v3194, %v3196
        %v3208 = vsel %vm1019, %v3196, %v3198
        %v3209 = vsel %vm1019, %v3198, %v3200
        %v3210 = vsel %vm1019, %v3200, %v3202
        %3219 = vst [vmem:[#allocation3 + $0x200] sm:$0xff] %v3203
        %3220 = vst [vmem:[#allocation3 + $0x208] sm:$0xff] %v3204
        %3221 = vst [vmem:[#allocation3 + $0x210] sm:$0xff] %v3205
        %3222 = vst [vmem:[#allocation3 + $0x218] sm:$0xff] %v3206
        %3223 = vst [vmem:[#allocation3 + $0x220] sm:$0xff] %v3207
        %3224 = vst [vmem:[#allocation3 + $0x228] sm:$0xff] %v3208
        %3225 = vst [vmem:[#allocation3 + $0x230] sm:$0xff] %v3209
        %3226 = vst [vmem:[#allocation3 + $0x238] sm:$0xff] %v3210
        %v3227 = vld [vmem:[#allocation2] sm:$0xff]
        %v3228 = vld [vmem:[#allocation2 + $0x8] sm:$0xff]
        %v3229 = vld [vmem:[#allocation2 + $0x10] sm:$0xff]
        %v3230 = vld [vmem:[#allocation2 + $0x18] sm:$0xff]
        %v3231 = vld [vmem:[#allocation2 + $0x20] sm:$0xff]
        %v3232 = vld [vmem:[#allocation2 + $0x28] sm:$0xff]
        %v3233 = vld [vmem:[#allocation2 + $0x30] sm:$0xff]
        %v3234 = vld [vmem:[#allocation2 + $0x38] sm:$0xff]
        %v3235 = vld [vmem:[#allocation2 + $0x40] sm:$0xff]
        %3245 = vrot.lane.b32.xlu0 %v3227, 11
        %v3246 = vpop.permute.xlu0 %3245
        %3247 = vrot.lane.b32.xlu0 %v3228, 11
        %v3248 = vpop.permute.xlu0 %3247
        %3249 = vrot.lane.b32.xlu0 %v3229, 11
        %v3250 = vpop.permute.xlu0 %3249
        %3251 = vrot.lane.b32.xlu0 %v3230, 11
        %v3252 = vpop.permute.xlu0 %3251
        %3253 = vrot.lane.b32.xlu0 %v3231, 11
        %v3254 = vpop.permute.xlu0 %3253
        %3255 = vrot.lane.b32.xlu0 %v3232, 11
        %v3256 = vpop.permute.xlu0 %3255
        %3257 = vrot.lane.b32.xlu0 %v3233, 11
        %v3258 = vpop.permute.xlu0 %3257
        %3259 = vrot.lane.b32.xlu0 %v3234, 11
        %v3260 = vpop.permute.xlu0 %3259
        %3261 = vrot.lane.b32.xlu0 %v3235, 11
        %v3262 = vpop.permute.xlu0 %3261
        %v3263 = vsel %vm1080, %v3246, %v3248
        %v3264 = vsel %vm1080, %v3248, %v3250
        %v3265 = vsel %vm1080, %v3250, %v3252
        %v3266 = vsel %vm1080, %v3252, %v3254
        %v3267 = vsel %vm1080, %v3254, %v3256
        %v3268 = vsel %vm1080, %v3256, %v3258
        %v3269 = vsel %vm1080, %v3258, %v3260
        %v3270 = vsel %vm1080, %v3260, %v3262
        %3279 = vst [vmem:[#allocation3 + $0x240] sm:$0xff] %v3263
        %3280 = vst [vmem:[#allocation3 + $0x248] sm:$0xff] %v3264
        %3281 = vst [vmem:[#allocation3 + $0x250] sm:$0xff] %v3265
        %3282 = vst [vmem:[#allocation3 + $0x258] sm:$0xff] %v3266
        %3283 = vst [vmem:[#allocation3 + $0x260] sm:$0xff] %v3267
        %3284 = vst [vmem:[#allocation3 + $0x268] sm:$0xff] %v3268
        %3285 = vst [vmem:[#allocation3 + $0x270] sm:$0xff] %v3269
        %3286 = vst [vmem:[#allocation3 + $0x278] sm:$0xff] %v3270
        %v3287 = vld [vmem:[#allocation2] sm:$0xff]
        %v3288 = vld [vmem:[#allocation2 + $0x8] sm:$0xff]
        %v3289 = vld [vmem:[#allocation2 + $0x10] sm:$0xff]
        %v3290 = vld [vmem:[#allocation2 + $0x18] sm:$0xff]
        %v3291 = vld [vmem:[#allocation2 + $0x20] sm:$0xff]
        %v3292 = vld [vmem:[#allocation2 + $0x28] sm:$0xff]
        %v3293 = vld [vmem:[#allocation2 + $0x30] sm:$0xff]
        %v3294 = vld [vmem:[#allocation2 + $0x38] sm:$0xff]
        %v3295 = vld [vmem:[#allocation2 + $0x40] sm:$0xff]
        %3305 = vrot.lane.b32.xlu0 %v3287, 10
        %v3306 = vpop.permute.xlu0 %3305
        %3307 = vrot.lane.b32.xlu0 %v3288, 10
        %v3308 = vpop.permute.xlu0 %3307
        %3309 = vrot.lane.b32.xlu0 %v3289, 10
        %v3310 = vpop.permute.xlu0 %3309
        %3311 = vrot.lane.b32.xlu0 %v3290, 10
        %v3312 = vpop.permute.xlu0 %3311
        %3313 = vrot.lane.b32.xlu0 %v3291, 10
        %v3314 = vpop.permute.xlu0 %3313
        %3315 = vrot.lane.b32.xlu0 %v3292, 10
        %v3316 = vpop.permute.xlu0 %3315
        %3317 = vrot.lane.b32.xlu0 %v3293, 10
        %v3318 = vpop.permute.xlu0 %3317
        %3319 = vrot.lane.b32.xlu0 %v3294, 10
        %v3320 = vpop.permute.xlu0 %3319
        %3321 = vrot.lane.b32.xlu0 %v3295, 10
        %v3322 = vpop.permute.xlu0 %3321
        %v3323 = vsel %vm1141, %v3306, %v3308
        %v3324 = vsel %vm1141, %v3308, %v3310
        %v3325 = vsel %vm1141, %v3310, %v3312
        %v3326 = vsel %vm1141, %v3312, %v3314
        %v3327 = vsel %vm1141, %v3314, %v3316
        %v3328 = vsel %vm1141, %v3316, %v3318
        %v3329 = vsel %vm1141, %v3318, %v3320
        %v3330 = vsel %vm1141, %v3320, %v3322
        %3339 = vst [vmem:[#allocation3 + $0x280] sm:$0xff] %v3323
        %3340 = vst [vmem:[#allocation3 + $0x288] sm:$0xff] %v3324
        %3341 = vst [vmem:[#allocation3 + $0x290] sm:$0xff] %v3325
        %3342 = vst [vmem:[#allocation3 + $0x298] sm:$0xff] %v3326
        %3343 = vst [vmem:[#allocation3 + $0x2a0] sm:$0xff] %v3327
        %3344 = vst [vmem:[#allocation3 + $0x2a8] sm:$0xff] %v3328
        %3345 = vst [vmem:[#allocation3 + $0x2b0] sm:$0xff] %v3329
        %3346 = vst [vmem:[#allocation3 + $0x2b8] sm:$0xff] %v3330
        %v3347 = vld [vmem:[#allocation2] sm:$0xff]
        %v3348 = vld [vmem:[#allocation2 + $0x8] sm:$0xff]
        %v3349 = vld [vmem:[#allocation2 + $0x10] sm:$0xff]
        %v3350 = vld [vmem:[#allocation2 + $0x18] sm:$0xff]
        %v3351 = vld [vmem:[#allocation2 + $0x20] sm:$0xff]
        %v3352 = vld [vmem:[#allocation2 + $0x28] sm:$0xff]
        %v3353 = vld [vmem:[#allocation2 + $0x30] sm:$0xff]
        %v3354 = vld [vmem:[#allocation2 + $0x38] sm:$0xff]
        %v3355 = vld [vmem:[#allocation2 + $0x40] sm:$0xff]
        %3365 = vrot.lane.b32.xlu0 %v3347, 9
        %v3366 = vpop.permute.xlu0 %3365
        %3367 = vrot.lane.b32.xlu0 %v3348, 9
        %v3368 = vpop.permute.xlu0 %3367
        %3369 = vrot.lane.b32.xlu0 %v3349, 9
        %v3370 = vpop.permute.xlu0 %3369
        %3371 = vrot.lane.b32.xlu0 %v3350, 9
        %v3372 = vpop.permute.xlu0 %3371
        %3373 = vrot.lane.b32.xlu0 %v3351, 9
        %v3374 = vpop.permute.xlu0 %3373
        %3375 = vrot.lane.b32.xlu0 %v3352, 9
        %v3376 = vpop.permute.xlu0 %3375
        %3377 = vrot.lane.b32.xlu0 %v3353, 9
        %v3378 = vpop.permute.xlu0 %3377
        %3379 = vrot.lane.b32.xlu0 %v3354, 9
        %v3380 = vpop.permute.xlu0 %3379
        %3381 = vrot.lane.b32.xlu0 %v3355, 9
        %v3382 = vpop.permute.xlu0 %3381
        %v3383 = vsel %vm1202, %v3366, %v3368
        %v3384 = vsel %vm1202, %v3368, %v3370
        %v3385 = vsel %vm1202, %v3370, %v3372
        %v3386 = vsel %vm1202, %v3372, %v3374
        %v3387 = vsel %vm1202, %v3374, %v3376
        %v3388 = vsel %vm1202, %v3376, %v3378
        %v3389 = vsel %vm1202, %v3378, %v3380
        %v3390 = vsel %vm1202, %v3380, %v3382
        %3399 = vst [vmem:[#allocation3 + $0x2c0] sm:$0xff] %v3383
        %3400 = vst [vmem:[#allocation3 + $0x2c8] sm:$0xff] %v3384
        %3401 = vst [vmem:[#allocation3 + $0x2d0] sm:$0xff] %v3385
        %3402 = vst [vmem:[#allocation3 + $0x2d8] sm:$0xff] %v3386
        %3403 = vst [vmem:[#allocation3 + $0x2e0] sm:$0xff] %v3387
        %3404 = vst [vmem:[#allocation3 + $0x2e8] sm:$0xff] %v3388
        %3405 = vst [vmem:[#allocation3 + $0x2f0] sm:$0xff] %v3389
        %3406 = vst [vmem:[#allocation3 + $0x2f8] sm:$0xff] %v3390
        %v3407 = vld [vmem:[#allocation2] sm:$0xff]
        %v3408 = vld [vmem:[#allocation2 + $0x8] sm:$0xff]
        %v3409 = vld [vmem:[#allocation2 + $0x10] sm:$0xff]
        %v3410 = vld [vmem:[#allocation2 + $0x18] sm:$0xff]
        %v3411 = vld [vmem:[#allocation2 + $0x20] sm:$0xff]
        %v3412 = vld [vmem:[#allocation2 + $0x28] sm:$0xff]
        %v3413 = vld [vmem:[#allocation2 + $0x30] sm:$0xff]
        %v3414 = vld [vmem:[#allocation2 + $0x38] sm:$0xff]
        %v3415 = vld [vmem:[#allocation2 + $0x40] sm:$0xff]
        %3425 = vrot.lane.b32.xlu0 %v3407, 1
        %v3426 = vpop.permute.xlu0 %3425
        %3427 = vrot.lane.b32.xlu0 %v3408, 1
        %v3428 = vpop.permute.xlu0 %3427
        %3429 = vrot.lane.b32.xlu0 %v3409, 1
        %v3430 = vpop.permute.xlu0 %3429
        %3431 = vrot.lane.b32.xlu0 %v3410, 1
        %v3432 = vpop.permute.xlu0 %3431
        %3433 = vrot.lane.b32.xlu0 %v3411, 1
        %v3434 = vpop.permute.xlu0 %3433
        %3435 = vrot.lane.b32.xlu0 %v3412, 1
        %v3436 = vpop.permute.xlu0 %3435
        %3437 = vrot.lane.b32.xlu0 %v3413, 1
        %v3438 = vpop.permute.xlu0 %3437
        %3439 = vrot.lane.b32.xlu0 %v3414, 1
        %v3440 = vpop.permute.xlu0 %3439
        %3441 = vrot.lane.b32.xlu0 %v3415, 1
        %v3442 = vpop.permute.xlu0 %3441
        %v3443 = vsel %vm1263, %v3426, %v3428
        %v3444 = vsel %vm1263, %v3428, %v3430
        %v3445 = vsel %vm1263, %v3430, %v3432
        %v3446 = vsel %vm1263, %v3432, %v3434
        %v3447 = vsel %vm1263, %v3434, %v3436
        %v3448 = vsel %vm1263, %v3436, %v3438
        %v3449 = vsel %vm1263, %v3438, %v3440
        %v3450 = vsel %vm1263, %v3440, %v3442
        %3459 = vst [vmem:[#allocation3 + $0x300] sm:$0xff] %v3443
        %3460 = vst [vmem:[#allocation3 + $0x308] sm:$0xff] %v3444
        %3461 = vst [vmem:[#allocation3 + $0x310] sm:$0xff] %v3445
        %3462 = vst [vmem:[#allocation3 + $0x318] sm:$0xff] %v3446
        %3463 = vst [vmem:[#allocation3 + $0x320] sm:$0xff] %v3447
        %3464 = vst [vmem:[#allocation3 + $0x328] sm:$0xff] %v3448
        %3465 = vst [vmem:[#allocation3 + $0x330] sm:$0xff] %v3449
        %3466 = vst [vmem:[#allocation3 + $0x338] sm:$0xff] %v3450
        %v3467 = vld [vmem:[#allocation2 + $0x8] sm:$0xff]
        %v3468 = vld [vmem:[#allocation2 + $0x10] sm:$0xff]
        %v3469 = vld [vmem:[#allocation2 + $0x18] sm:$0xff]
        %v3470 = vld [vmem:[#allocation2 + $0x20] sm:$0xff]
        %v3471 = vld [vmem:[#allocation2 + $0x28] sm:$0xff]
        %v3472 = vld [vmem:[#allocation2 + $0x30] sm:$0xff]
        %v3473 = vld [vmem:[#allocation2 + $0x38] sm:$0xff]
        %v3474 = vld [vmem:[#allocation2 + $0x40] sm:$0xff]
        %3475 = vst [vmem:[#allocation3 + $0x340] sm:$0xff] %v3467
        %3476 = vst [vmem:[#allocation3 + $0x348] sm:$0xff] %v3468
        %3477 = vst [vmem:[#allocation3 + $0x350] sm:$0xff] %v3469
        %3478 = vst [vmem:[#allocation3 + $0x358] sm:$0xff] %v3470
        %3479 = vst [vmem:[#allocation3 + $0x360] sm:$0xff] %v3471
        %3480 = vst [vmem:[#allocation3 + $0x368] sm:$0xff] %v3472
        %3481 = vst [vmem:[#allocation3 + $0x370] sm:$0xff] %v3473
        %3482 = vst [vmem:[#allocation3 + $0x378] sm:$0xff] %v3474
        %v3483 = vld [vmem:[#allocation2 + $0x8] sm:$0xff]
        %v3484 = vld [vmem:[#allocation2 + $0x10] sm:$0xff]
        %v3485 = vld [vmem:[#allocation2 + $0x18] sm:$0xff]
        %v3486 = vld [vmem:[#allocation2 + $0x20] sm:$0xff]
        %v3487 = vld [vmem:[#allocation2 + $0x28] sm:$0xff]
        %v3488 = vld [vmem:[#allocation2 + $0x30] sm:$0xff]
        %v3489 = vld [vmem:[#allocation2 + $0x38] sm:$0xff]
        %v3490 = vld [vmem:[#allocation2 + $0x40] sm:$0xff]
        %v3491 = vld [vmem:[#allocation2 + $0x48] sm:$0xff]
        %3501 = vrot.lane.b32.xlu0 %v3483, 127
        %v3502 = vpop.permute.xlu0 %3501
        %3503 = vrot.lane.b32.xlu0 %v3484, 127
        %v3504 = vpop.permute.xlu0 %3503
        %3505 = vrot.lane.b32.xlu0 %v3485, 127
        %v3506 = vpop.permute.xlu0 %3505
        %3507 = vrot.lane.b32.xlu0 %v3486, 127
        %v3508 = vpop.permute.xlu0 %3507
        %3509 = vrot.lane.b32.xlu0 %v3487, 127
        %v3510 = vpop.permute.xlu0 %3509
        %3511 = vrot.lane.b32.xlu0 %v3488, 127
        %v3512 = vpop.permute.xlu0 %3511
        %3513 = vrot.lane.b32.xlu0 %v3489, 127
        %v3514 = vpop.permute.xlu0 %3513
        %3515 = vrot.lane.b32.xlu0 %v3490, 127
        %v3516 = vpop.permute.xlu0 %3515
        %3517 = vrot.lane.b32.xlu0 %v3491, 127
        %v3518 = vpop.permute.xlu0 %3517
        %v3519 = vsel %vm1340, %v3502, %v3504
        %v3520 = vsel %vm1340, %v3504, %v3506
        %v3521 = vsel %vm1340, %v3506, %v3508
        %v3522 = vsel %vm1340, %v3508, %v3510
        %v3523 = vsel %vm1340, %v3510, %v3512
        %v3524 = vsel %vm1340, %v3512, %v3514
        %v3525 = vsel %vm1340, %v3514, %v3516
        %v3526 = vsel %vm1340, %v3516, %v3518
        %3535 = vst [vmem:[#allocation3 + $0x380] sm:$0xff] %v3519
        %3536 = vst [vmem:[#allocation3 + $0x388] sm:$0xff] %v3520
        %3537 = vst [vmem:[#allocation3 + $0x390] sm:$0xff] %v3521
        %3538 = vst [vmem:[#allocation3 + $0x398] sm:$0xff] %v3522
        %3539 = vst [vmem:[#allocation3 + $0x3a0] sm:$0xff] %v3523
        %3540 = vst [vmem:[#allocation3 + $0x3a8] sm:$0xff] %v3524
        %3541 = vst [vmem:[#allocation3 + $0x3b0] sm:$0xff] %v3525
        %3542 = vst [vmem:[#allocation3 + $0x3b8] sm:$0xff] %v3526
        %v3543 = vld [vmem:[#allocation2 + $0x8] sm:$0xff]
        %v3544 = vld [vmem:[#allocation2 + $0x10] sm:$0xff]
        %v3545 = vld [vmem:[#allocation2 + $0x18] sm:$0xff]
        %v3546 = vld [vmem:[#allocation2 + $0x20] sm:$0xff]
        %v3547 = vld [vmem:[#allocation2 + $0x28] sm:$0xff]
        %v3548 = vld [vmem:[#allocation2 + $0x30] sm:$0xff]
        %v3549 = vld [vmem:[#allocation2 + $0x38] sm:$0xff]
        %v3550 = vld [vmem:[#allocation2 + $0x40] sm:$0xff]
        %v3551 = vld [vmem:[#allocation2 + $0x48] sm:$0xff]
        %3561 = vrot.lane.b32.xlu0 %v3543, 119
        %v3562 = vpop.permute.xlu0 %3561
        %3563 = vrot.lane.b32.xlu0 %v3544, 119
        %v3564 = vpop.permute.xlu0 %3563
        %3565 = vrot.lane.b32.xlu0 %v3545, 119
        %v3566 = vpop.permute.xlu0 %3565
        %3567 = vrot.lane.b32.xlu0 %v3546, 119
        %v3568 = vpop.permute.xlu0 %3567
        %3569 = vrot.lane.b32.xlu0 %v3547, 119
        %v3570 = vpop.permute.xlu0 %3569
        %3571 = vrot.lane.b32.xlu0 %v3548, 119
        %v3572 = vpop.permute.xlu0 %3571
        %3573 = vrot.lane.b32.xlu0 %v3549, 119
        %v3574 = vpop.permute.xlu0 %3573
        %3575 = vrot.lane.b32.xlu0 %v3550, 119
        %v3576 = vpop.permute.xlu0 %3575
        %3577 = vrot.lane.b32.xlu0 %v3551, 119
        %v3578 = vpop.permute.xlu0 %3577
        %v3579 = vsel %vm1401, %v3562, %v3564
        %v3580 = vsel %vm1401, %v3564, %v3566
        %v3581 = vsel %vm1401, %v3566, %v3568
        %v3582 = vsel %vm1401, %v3568, %v3570
        %v3583 = vsel %vm1401, %v3570, %v3572
        %v3584 = vsel %vm1401, %v3572, %v3574
        %v3585 = vsel %vm1401, %v3574, %v3576
        %v3586 = vsel %vm1401, %v3576, %v3578
        %3595 = vst [vmem:[#allocation3 + $0x3c0] sm:$0xff] %v3579
        %3596 = vst [vmem:[#allocation3 + $0x3c8] sm:$0xff] %v3580
        %3597 = vst [vmem:[#allocation3 + $0x3d0] sm:$0xff] %v3581
        %3598 = vst [vmem:[#allocation3 + $0x3d8] sm:$0xff] %v3582
        %3599 = vst [vmem:[#allocation3 + $0x3e0] sm:$0xff] %v3583
        %3600 = vst [vmem:[#allocation3 + $0x3e8] sm:$0xff] %v3584
        %3601 = vst [vmem:[#allocation3 + $0x3f0] sm:$0xff] %v3585
        %3602 = vst [vmem:[#allocation3 + $0x3f8] sm:$0xff] %v3586
        %v3603 = vld [vmem:[#allocation2 + $0x8] sm:$0xff]
        %v3604 = vld [vmem:[#allocation2 + $0x10] sm:$0xff]
        %v3605 = vld [vmem:[#allocation2 + $0x18] sm:$0xff]
        %v3606 = vld [vmem:[#allocation2 + $0x20] sm:$0xff]
        %v3607 = vld [vmem:[#allocation2 + $0x28] sm:$0xff]
        %v3608 = vld [vmem:[#allocation2 + $0x30] sm:$0xff]
        %v3609 = vld [vmem:[#allocation2 + $0x38] sm:$0xff]
        %v3610 = vld [vmem:[#allocation2 + $0x40] sm:$0xff]
        %v3611 = vld [vmem:[#allocation2 + $0x48] sm:$0xff]
        %3621 = vrot.lane.b32.xlu0 %v3603, 118
        %v3622 = vpop.permute.xlu0 %3621
        %3623 = vrot.lane.b32.xlu0 %v3604, 118
        %v3624 = vpop.permute.xlu0 %3623
        %3625 = vrot.lane.b32.xlu0 %v3605, 118
        %v3626 = vpop.permute.xlu0 %3625
        %3627 = vrot.lane.b32.xlu0 %v3606, 118
        %v3628 = vpop.permute.xlu0 %3627
        %3629 = vrot.lane.b32.xlu0 %v3607, 118
        %v3630 = vpop.permute.xlu0 %3629
        %3631 = vrot.lane.b32.xlu0 %v3608, 118
        %v3632 = vpop.permute.xlu0 %3631
        %3633 = vrot.lane.b32.xlu0 %v3609, 118
        %v3634 = vpop.permute.xlu0 %3633
        %3635 = vrot.lane.b32.xlu0 %v3610, 118
        %v3636 = vpop.permute.xlu0 %3635
        %3637 = vrot.lane.b32.xlu0 %v3611, 118
        %v3638 = vpop.permute.xlu0 %3637
        %v3639 = vsel %vm1462, %v3622, %v3624
        %v3640 = vsel %vm1462, %v3624, %v3626
        %v3641 = vsel %vm1462, %v3626, %v3628
        %v3642 = vsel %vm1462, %v3628, %v3630
        %v3643 = vsel %vm1462, %v3630, %v3632
        %v3644 = vsel %vm1462, %v3632, %v3634
        %v3645 = vsel %vm1462, %v3634, %v3636
        %v3646 = vsel %vm1462, %v3636, %v3638
        %3655 = vst [vmem:[#allocation3 + $0x400] sm:$0xff] %v3639
        %3656 = vst [vmem:[#allocation3 + $0x408] sm:$0xff] %v3640
        %3657 = vst [vmem:[#allocation3 + $0x410] sm:$0xff] %v3641
        %3658 = vst [vmem:[#allocation3 + $0x418] sm:$0xff] %v3642
        %3659 = vst [vmem:[#allocation3 + $0x420] sm:$0xff] %v3643
        %3660 = vst [vmem:[#allocation3 + $0x428] sm:$0xff] %v3644
        %3661 = vst [vmem:[#allocation3 + $0x430] sm:$0xff] %v3645
        %3662 = vst [vmem:[#allocation3 + $0x438] sm:$0xff] %v3646
        %v3663 = vld [vmem:[#allocation2 + $0x8] sm:$0xff]
        %v3664 = vld [vmem:[#allocation2 + $0x10] sm:$0xff]
        %v3665 = vld [vmem:[#allocation2 + $0x18] sm:$0xff]
        %v3666 = vld [vmem:[#allocation2 + $0x20] sm:$0xff]
        %v3667 = vld [vmem:[#allocation2 + $0x28] sm:$0xff]
        %v3668 = vld [vmem:[#allocation2 + $0x30] sm:$0xff]
        %v3669 = vld [vmem:[#allocation2 + $0x38] sm:$0xff]
        %v3670 = vld [vmem:[#allocation2 + $0x40] sm:$0xff]
        %v3671 = vld [vmem:[#allocation2 + $0x48] sm:$0xff]
        %3681 = vrot.lane.b32.xlu0 %v3663, 117
        %v3682 = vpop.permute.xlu0 %3681
        %3683 = vrot.lane.b32.xlu0 %v3664, 117
        %v3684 = vpop.permute.xlu0 %3683
        %3685 = vrot.lane.b32.xlu0 %v3665, 117
        %v3686 = vpop.permute.xlu0 %3685
        %3687 = vrot.lane.b32.xlu0 %v3666, 117
        %v3688 = vpop.permute.xlu0 %3687
        %3689 = vrot.lane.b32.xlu0 %v3667, 117
        %v3690 = vpop.permute.xlu0 %3689
        %3691 = vrot.lane.b32.xlu0 %v3668, 117
        %v3692 = vpop.permute.xlu0 %3691
        %3693 = vrot.lane.b32.xlu0 %v3669, 117
        %v3694 = vpop.permute.xlu0 %3693
        %3695 = vrot.lane.b32.xlu0 %v3670, 117
        %v3696 = vpop.permute.xlu0 %3695
        %3697 = vrot.lane.b32.xlu0 %v3671, 117
        %v3698 = vpop.permute.xlu0 %3697
        %v3699 = vsel %vm1523, %v3682, %v3684
        %v3700 = vsel %vm1523, %v3684, %v3686
        %v3701 = vsel %vm1523, %v3686, %v3688
        %v3702 = vsel %vm1523, %v3688, %v3690
        %v3703 = vsel %vm1523, %v3690, %v3692
        %v3704 = vsel %vm1523, %v3692, %v3694
        %v3705 = vsel %vm1523, %v3694, %v3696
        %v3706 = vsel %vm1523, %v3696, %v3698
        %3715 = vst [vmem:[#allocation3 + $0x440] sm:$0xff] %v3699
        %3716 = vst [vmem:[#allocation3 + $0x448] sm:$0xff] %v3700
        %3717 = vst [vmem:[#allocation3 + $0x450] sm:$0xff] %v3701
        %3718 = vst [vmem:[#allocation3 + $0x458] sm:$0xff] %v3702
        %3719 = vst [vmem:[#allocation3 + $0x460] sm:$0xff] %v3703
        %3720 = vst [vmem:[#allocation3 + $0x468] sm:$0xff] %v3704
        %3721 = vst [vmem:[#allocation3 + $0x470] sm:$0xff] %v3705
        %3722 = vst [vmem:[#allocation3 + $0x478] sm:$0xff] %v3706
        %v3723 = vld [vmem:[#allocation2 + $0x8] sm:$0xff]
        %v3724 = vld [vmem:[#allocation2 + $0x10] sm:$0xff]
        %v3725 = vld [vmem:[#allocation2 + $0x18] sm:$0xff]
        %v3726 = vld [vmem:[#allocation2 + $0x20] sm:$0xff]
        %v3727 = vld [vmem:[#allocation2 + $0x28] sm:$0xff]
        %v3728 = vld [vmem:[#allocation2 + $0x30] sm:$0xff]
        %v3729 = vld [vmem:[#allocation2 + $0x38] sm:$0xff]
        %v3730 = vld [vmem:[#allocation2 + $0x40] sm:$0xff]
        %v3731 = vld [vmem:[#allocation2 + $0x48] sm:$0xff]
        %3741 = vrot.lane.b32.xlu0 %v3723, 39
        %v3742 = vpop.permute.xlu0 %3741
        %3743 = vrot.lane.b32.xlu0 %v3724, 39
        %v3744 = vpop.permute.xlu0 %3743
        %3745 = vrot.lane.b32.xlu0 %v3725, 39
        %v3746 = vpop.permute.xlu0 %3745
        %3747 = vrot.lane.b32.xlu0 %v3726, 39
        %v3748 = vpop.permute.xlu0 %3747
        %3749 = vrot.lane.b32.xlu0 %v3727, 39
        %v3750 = vpop.permute.xlu0 %3749
        %3751 = vrot.lane.b32.xlu0 %v3728, 39
        %v3752 = vpop.permute.xlu0 %3751
        %3753 = vrot.lane.b32.xlu0 %v3729, 39
        %v3754 = vpop.permute.xlu0 %3753
        %3755 = vrot.lane.b32.xlu0 %v3730, 39
        %v3756 = vpop.permute.xlu0 %3755
        %3757 = vrot.lane.b32.xlu0 %v3731, 39
        %v3758 = vpop.permute.xlu0 %3757
        %v3759 = vsel %vm1584, %v3742, %v3744
        %v3760 = vsel %vm1584, %v3744, %v3746
        %v3761 = vsel %vm1584, %v3746, %v3748
        %v3762 = vsel %vm1584, %v3748, %v3750
        %v3763 = vsel %vm1584, %v3750, %v3752
        %v3764 = vsel %vm1584, %v3752, %v3754
        %v3765 = vsel %vm1584, %v3754, %v3756
        %v3766 = vsel %vm1584, %v3756, %v3758
        %3775 = vst [vmem:[#allocation3 + $0x480] sm:$0xff] %v3759
        %3776 = vst [vmem:[#allocation3 + $0x488] sm:$0xff] %v3760
        %3777 = vst [vmem:[#allocation3 + $0x490] sm:$0xff] %v3761
        %3778 = vst [vmem:[#allocation3 + $0x498] sm:$0xff] %v3762
        %3779 = vst [vmem:[#allocation3 + $0x4a0] sm:$0xff] %v3763
        %3780 = vst [vmem:[#allocation3 + $0x4a8] sm:$0xff] %v3764
        %3781 = vst [vmem:[#allocation3 + $0x4b0] sm:$0xff] %v3765
        %3782 = vst [vmem:[#allocation3 + $0x4b8] sm:$0xff] %v3766
        %v3783 = vld [vmem:[#allocation2 + $0x8] sm:$0xff]
        %v3784 = vld [vmem:[#allocation2 + $0x10] sm:$0xff]
        %v3785 = vld [vmem:[#allocation2 + $0x18] sm:$0xff]
        %v3786 = vld [vmem:[#allocation2 + $0x20] sm:$0xff]
        %v3787 = vld [vmem:[#allocation2 + $0x28] sm:$0xff]
        %v3788 = vld [vmem:[#allocation2 + $0x30] sm:$0xff]
        %v3789 = vld [vmem:[#allocation2 + $0x38] sm:$0xff]
        %v3790 = vld [vmem:[#allocation2 + $0x40] sm:$0xff]
        %v3791 = vld [vmem:[#allocation2 + $0x48] sm:$0xff]
        %3801 = vrot.lane.b32.xlu0 %v3783, 38
        %v3802 = vpop.permute.xlu0 %3801
        %3803 = vrot.lane.b32.xlu0 %v3784, 38
        %v3804 = vpop.permute.xlu0 %3803
        %3805 = vrot.lane.b32.xlu0 %v3785, 38
        %v3806 = vpop.permute.xlu0 %3805
        %3807 = vrot.lane.b32.xlu0 %v3786, 38
        %v3808 = vpop.permute.xlu0 %3807
        %3809 = vrot.lane.b32.xlu0 %v3787, 38
        %v3810 = vpop.permute.xlu0 %3809
        %3811 = vrot.lane.b32.xlu0 %v3788, 38
        %v3812 = vpop.permute.xlu0 %3811
        %3813 = vrot.lane.b32.xlu0 %v3789, 38
        %v3814 = vpop.permute.xlu0 %3813
        %3815 = vrot.lane.b32.xlu0 %v3790, 38
        %v3816 = vpop.permute.xlu0 %3815
        %3817 = vrot.lane.b32.xlu0 %v3791, 38
        %v3818 = vpop.permute.xlu0 %3817
        %v3819 = vsel %vm1645, %v3802, %v3804
        %v3820 = vsel %vm1645, %v3804, %v3806
        %v3821 = vsel %vm1645, %v3806, %v3808
        %v3822 = vsel %vm1645, %v3808, %v3810
        %v3823 = vsel %vm1645, %v3810, %v3812
        %v3824 = vsel %vm1645, %v3812, %v3814
        %v3825 = vsel %vm1645, %v3814, %v3816
        %v3826 = vsel %vm1645, %v3816, %v3818
        %3835 = vst [vmem:[#allocation3 + $0x4c0] sm:$0xff] %v3819
        %3836 = vst [vmem:[#allocation3 + $0x4c8] sm:$0xff] %v3820
        %3837 = vst [vmem:[#allocation3 + $0x4d0] sm:$0xff] %v3821
        %3838 = vst [vmem:[#allocation3 + $0x4d8] sm:$0xff] %v3822
        %3839 = vst [vmem:[#allocation3 + $0x4e0] sm:$0xff] %v3823
        %3840 = vst [vmem:[#allocation3 + $0x4e8] sm:$0xff] %v3824
        %3841 = vst [vmem:[#allocation3 + $0x4f0] sm:$0xff] %v3825
        %3842 = vst [vmem:[#allocation3 + $0x4f8] sm:$0xff] %v3826
        %v3843 = vld [vmem:[#allocation2 + $0x8] sm:$0xff]
        %v3844 = vld [vmem:[#allocation2 + $0x10] sm:$0xff]
        %v3845 = vld [vmem:[#allocation2 + $0x18] sm:$0xff]
        %v3846 = vld [vmem:[#allocation2 + $0x20] sm:$0xff]
        %v3847 = vld [vmem:[#allocation2 + $0x28] sm:$0xff]
        %v3848 = vld [vmem:[#allocation2 + $0x30] sm:$0xff]
        %v3849 = vld [vmem:[#allocation2 + $0x38] sm:$0xff]
        %v3850 = vld [vmem:[#allocation2 + $0x40] sm:$0xff]
        %v3851 = vld [vmem:[#allocation2 + $0x48] sm:$0xff]
        %3861 = vrot.lane.b32.xlu0 %v3843, 37
        %v3862 = vpop.permute.xlu0 %3861
        %3863 = vrot.lane.b32.xlu0 %v3844, 37
        %v3864 = vpop.permute.xlu0 %3863
        %3865 = vrot.lane.b32.xlu0 %v3845, 37
        %v3866 = vpop.permute.xlu0 %3865
        %3867 = vrot.lane.b32.xlu0 %v3846, 37
        %v3868 = vpop.permute.xlu0 %3867
        %3869 = vrot.lane.b32.xlu0 %v3847, 37
        %v3870 = vpop.permute.xlu0 %3869
        %3871 = vrot.lane.b32.xlu0 %v3848, 37
        %v3872 = vpop.permute.xlu0 %3871
        %3873 = vrot.lane.b32.xlu0 %v3849, 37
        %v3874 = vpop.permute.xlu0 %3873
        %3875 = vrot.lane.b32.xlu0 %v3850, 37
        %v3876 = vpop.permute.xlu0 %3875
        %3877 = vrot.lane.b32.xlu0 %v3851, 37
        %v3878 = vpop.permute.xlu0 %3877
        %v3879 = vsel %vm1706, %v3862, %v3864
        %v3880 = vsel %vm1706, %v3864, %v3866
        %v3881 = vsel %vm1706, %v3866, %v3868
        %v3882 = vsel %vm1706, %v3868, %v3870
        %v3883 = vsel %vm1706, %v3870, %v3872
        %v3884 = vsel %vm1706, %v3872, %v3874
        %v3885 = vsel %vm1706, %v3874, %v3876
        %v3886 = vsel %vm1706, %v3876, %v3878
        %3895 = vst [vmem:[#allocation3 + $0x500] sm:$0xff] %v3879
        %3896 = vst [vmem:[#allocation3 + $0x508] sm:$0xff] %v3880
        %3897 = vst [vmem:[#allocation3 + $0x510] sm:$0xff] %v3881
        %3898 = vst [vmem:[#allocation3 + $0x518] sm:$0xff] %v3882
        %3899 = vst [vmem:[#allocation3 + $0x520] sm:$0xff] %v3883
        %3900 = vst [vmem:[#allocation3 + $0x528] sm:$0xff] %v3884
        %3901 = vst [vmem:[#allocation3 + $0x530] sm:$0xff] %v3885
        %3902 = vst [vmem:[#allocation3 + $0x538] sm:$0xff] %v3886
        %v3903 = vld [vmem:[#allocation2 + $0x8] sm:$0xff]
        %v3904 = vld [vmem:[#allocation2 + $0x10] sm:$0xff]
        %v3905 = vld [vmem:[#allocation2 + $0x18] sm:$0xff]
        %v3906 = vld [vmem:[#allocation2 + $0x20] sm:$0xff]
        %v3907 = vld [vmem:[#allocation2 + $0x28] sm:$0xff]
        %v3908 = vld [vmem:[#allocation2 + $0x30] sm:$0xff]
        %v3909 = vld [vmem:[#allocation2 + $0x38] sm:$0xff]
        %v3910 = vld [vmem:[#allocation2 + $0x40] sm:$0xff]
        %v3911 = vld [vmem:[#allocation2 + $0x48] sm:$0xff]
        %3921 = vrot.lane.b32.xlu0 %v3903, 29
        %v3922 = vpop.permute.xlu0 %3921
        %3923 = vrot.lane.b32.xlu0 %v3904, 29
        %v3924 = vpop.permute.xlu0 %3923
        %3925 = vrot.lane.b32.xlu0 %v3905, 29
        %v3926 = vpop.permute.xlu0 %3925
        %3927 = vrot.lane.b32.xlu0 %v3906, 29
        %v3928 = vpop.permute.xlu0 %3927
        %3929 = vrot.lane.b32.xlu0 %v3907, 29
        %v3930 = vpop.permute.xlu0 %3929
        %3931 = vrot.lane.b32.xlu0 %v3908, 29
        %v3932 = vpop.permute.xlu0 %3931
        %3933 = vrot.lane.b32.xlu0 %v3909, 29
        %v3934 = vpop.permute.xlu0 %3933
        %3935 = vrot.lane.b32.xlu0 %v3910, 29
        %v3936 = vpop.permute.xlu0 %3935
        %3937 = vrot.lane.b32.xlu0 %v3911, 29
        %v3938 = vpop.permute.xlu0 %3937
        %v3939 = vsel %vm1767, %v3922, %v3924
        %v3940 = vsel %vm1767, %v3924, %v3926
        %v3941 = vsel %vm1767, %v3926, %v3928
        %v3942 = vsel %vm1767, %v3928, %v3930
        %v3943 = vsel %vm1767, %v3930, %v3932
        %v3944 = vsel %vm1767, %v3932, %v3934
        %v3945 = vsel %vm1767, %v3934, %v3936
        %v3946 = vsel %vm1767, %v3936, %v3938
        %3955 = vst [vmem:[#allocation3 + $0x540] sm:$0xff] %v3939
        %3956 = vst [vmem:[#allocation3 + $0x548] sm:$0xff] %v3940
        %3957 = vst [vmem:[#allocation3 + $0x550] sm:$0xff] %v3941
        %3958 = vst [vmem:[#allocation3 + $0x558] sm:$0xff] %v3942
        %3959 = vst [vmem:[#allocation3 + $0x560] sm:$0xff] %v3943
        %3960 = vst [vmem:[#allocation3 + $0x568] sm:$0xff] %v3944
        %3961 = vst [vmem:[#allocation3 + $0x570] sm:$0xff] %v3945
        %3962 = vst [vmem:[#allocation3 + $0x578] sm:$0xff] %v3946
        %v3963 = vld [vmem:[#allocation2 + $0x8] sm:$0xff]
        %v3964 = vld [vmem:[#allocation2 + $0x10] sm:$0xff]
        %v3965 = vld [vmem:[#allocation2 + $0x18] sm:$0xff]
        %v3966 = vld [vmem:[#allocation2 + $0x20] sm:$0xff]
        %v3967 = vld [vmem:[#allocation2 + $0x28] sm:$0xff]
        %v3968 = vld [vmem:[#allocation2 + $0x30] sm:$0xff]
        %v3969 = vld [vmem:[#allocation2 + $0x38] sm:$0xff]
        %v3970 = vld [vmem:[#allocation2 + $0x40] sm:$0xff]
        %v3971 = vld [vmem:[#allocation2 + $0x48] sm:$0xff]
        %3981 = vrot.lane.b32.xlu0 %v3963, 28
        %v3982 = vpop.permute.xlu0 %3981
        %3983 = vrot.lane.b32.xlu0 %v3964, 28
        %v3984 = vpop.permute.xlu0 %3983
        %3985 = vrot.lane.b32.xlu0 %v3965, 28
        %v3986 = vpop.permute.xlu0 %3985
        %3987 = vrot.lane.b32.xlu0 %v3966, 28
        %v3988 = vpop.permute.xlu0 %3987
        %3989 = vrot.lane.b32.xlu0 %v3967, 28
        %v3990 = vpop.permute.xlu0 %3989
        %3991 = vrot.lane.b32.xlu0 %v3968, 28
        %v3992 = vpop.permute.xlu0 %3991
        %3993 = vrot.lane.b32.xlu0 %v3969, 28
        %v3994 = vpop.permute.xlu0 %3993
        %3995 = vrot.lane.b32.xlu0 %v3970, 28
        %v3996 = vpop.permute.xlu0 %3995
        %3997 = vrot.lane.b32.xlu0 %v3971, 28
        %v3998 = vpop.permute.xlu0 %3997
        %v3999 = vsel %vm1828, %v3982, %v3984
        %v4000 = vsel %vm1828, %v3984, %v3986
        %v4001 = vsel %vm1828, %v3986, %v3988
        %v4002 = vsel %vm1828, %v3988, %v3990
        %v4003 = vsel %vm1828, %v3990, %v3992
        %v4004 = vsel %vm1828, %v3992, %v3994
        %v4005 = vsel %vm1828, %v3994, %v3996
        %v4006 = vsel %vm1828, %v3996, %v3998
        %4015 = vst [vmem:[#allocation3 + $0x580] sm:$0xff] %v3999
        %4016 = vst [vmem:[#allocation3 + $0x588] sm:$0xff] %v4000
        %4017 = vst [vmem:[#allocation3 + $0x590] sm:$0xff] %v4001
        %4018 = vst [vmem:[#allocation3 + $0x598] sm:$0xff] %v4002
        %4019 = vst [vmem:[#allocation3 + $0x5a0] sm:$0xff] %v4003
        %4020 = vst [vmem:[#allocation3 + $0x5a8] sm:$0xff] %v4004
        %4021 = vst [vmem:[#allocation3 + $0x5b0] sm:$0xff] %v4005
        %4022 = vst [vmem:[#allocation3 + $0x5b8] sm:$0xff] %v4006
        %v4023 = vld [vmem:[#allocation2 + $0x8] sm:$0xff]
        %v4024 = vld [vmem:[#allocation2 + $0x10] sm:$0xff]
        %v4025 = vld [vmem:[#allocation2 + $0x18] sm:$0xff]
        %v4026 = vld [vmem:[#allocation2 + $0x20] sm:$0xff]
        %v4027 = vld [vmem:[#allocation2 + $0x28] sm:$0xff]
        %v4028 = vld [vmem:[#allocation2 + $0x30] sm:$0xff]
        %v4029 = vld [vmem:[#allocation2 + $0x38] sm:$0xff]
        %v4030 = vld [vmem:[#allocation2 + $0x40] sm:$0xff]
        %v4031 = vld [vmem:[#allocation2 + $0x48] sm:$0xff]
        %4041 = vrot.lane.b32.xlu0 %v4023, 27
        %v4042 = vpop.permute.xlu0 %4041
        %4043 = vrot.lane.b32.xlu0 %v4024, 27
        %v4044 = vpop.permute.xlu0 %4043
        %4045 = vrot.lane.b32.xlu0 %v4025, 27
        %v4046 = vpop.permute.xlu0 %4045
        %4047 = vrot.lane.b32.xlu0 %v4026, 27
        %v4048 = vpop.permute.xlu0 %4047
        %4049 = vrot.lane.b32.xlu0 %v4027, 27
        %v4050 = vpop.permute.xlu0 %4049
        %4051 = vrot.lane.b32.xlu0 %v4028, 27
        %v4052 = vpop.permute.xlu0 %4051
        %4053 = vrot.lane.b32.xlu0 %v4029, 27
        %v4054 = vpop.permute.xlu0 %4053
        %4055 = vrot.lane.b32.xlu0 %v4030, 27
        %v4056 = vpop.permute.xlu0 %4055
        %4057 = vrot.lane.b32.xlu0 %v4031, 27
        %v4058 = vpop.permute.xlu0 %4057
        %v4059 = vsel %vm1889, %v4042, %v4044
        %v4060 = vsel %vm1889, %v4044, %v4046
        %v4061 = vsel %vm1889, %v4046, %v4048
        %v4062 = vsel %vm1889, %v4048, %v4050
        %v4063 = vsel %vm1889, %v4050, %v4052
        %v4064 = vsel %vm1889, %v4052, %v4054
        %v4065 = vsel %vm1889, %v4054, %v4056
        %v4066 = vsel %vm1889, %v4056, %v4058
        %4075 = vst [vmem:[#allocation3 + $0x5c0] sm:$0xff] %v4059
        %4076 = vst [vmem:[#allocation3 + $0x5c8] sm:$0xff] %v4060
        %4077 = vst [vmem:[#allocation3 + $0x5d0] sm:$0xff] %v4061
        %4078 = vst [vmem:[#allocation3 + $0x5d8] sm:$0xff] %v4062
        %4079 = vst [vmem:[#allocation3 + $0x5e0] sm:$0xff] %v4063
        %4080 = vst [vmem:[#allocation3 + $0x5e8] sm:$0xff] %v4064
        %4081 = vst [vmem:[#allocation3 + $0x5f0] sm:$0xff] %v4065
        %4082 = vst [vmem:[#allocation3 + $0x5f8] sm:$0xff] %v4066
        %v4083 = vld [vmem:[#allocation2 + $0x8] sm:$0xff]
        %v4084 = vld [vmem:[#allocation2 + $0x10] sm:$0xff]
        %v4085 = vld [vmem:[#allocation2 + $0x18] sm:$0xff]
        %v4086 = vld [vmem:[#allocation2 + $0x20] sm:$0xff]
        %v4087 = vld [vmem:[#allocation2 + $0x28] sm:$0xff]
        %v4088 = vld [vmem:[#allocation2 + $0x30] sm:$0xff]
        %v4089 = vld [vmem:[#allocation2 + $0x38] sm:$0xff]
        %v4090 = vld [vmem:[#allocation2 + $0x40] sm:$0xff]
        %v4091 = vld [vmem:[#allocation2 + $0x48] sm:$0xff]
        %4101 = vrot.lane.b32.xlu0 %v4083, 19
        %v4102 = vpop.permute.xlu0 %4101
        %4103 = vrot.lane.b32.xlu0 %v4084, 19
        %v4104 = vpop.permute.xlu0 %4103
        %4105 = vrot.lane.b32.xlu0 %v4085, 19
        %v4106 = vpop.permute.xlu0 %4105
        %4107 = vrot.lane.b32.xlu0 %v4086, 19
        %v4108 = vpop.permute.xlu0 %4107
        %4109 = vrot.lane.b32.xlu0 %v4087, 19
        %v4110 = vpop.permute.xlu0 %4109
        %4111 = vrot.lane.b32.xlu0 %v4088, 19
        %v4112 = vpop.permute.xlu0 %4111
        %4113 = vrot.lane.b32.xlu0 %v4089, 19
        %v4114 = vpop.permute.xlu0 %4113
        %4115 = vrot.lane.b32.xlu0 %v4090, 19
        %v4116 = vpop.permute.xlu0 %4115
        %4117 = vrot.lane.b32.xlu0 %v4091, 19
        %v4118 = vpop.permute.xlu0 %4117
        %v4119 = vsel %vm1950, %v4102, %v4104
        %v4120 = vsel %vm1950, %v4104, %v4106
        %v4121 = vsel %vm1950, %v4106, %v4108
        %v4122 = vsel %vm1950, %v4108, %v4110
        %v4123 = vsel %vm1950, %v4110, %v4112
        %v4124 = vsel %vm1950, %v4112, %v4114
        %v4125 = vsel %vm1950, %v4114, %v4116
        %v4126 = vsel %vm1950, %v4116, %v4118
        %4135 = vst [vmem:[#allocation3 + $0x600] sm:$0xff] %v4119
        %4136 = vst [vmem:[#allocation3 + $0x608] sm:$0xff] %v4120
        %4137 = vst [vmem:[#allocation3 + $0x610] sm:$0xff] %v4121
        %4138 = vst [vmem:[#allocation3 + $0x618] sm:$0xff] %v4122
        %4139 = vst [vmem:[#allocation3 + $0x620] sm:$0xff] %v4123
        %4140 = vst [vmem:[#allocation3 + $0x628] sm:$0xff] %v4124
        %4141 = vst [vmem:[#allocation3 + $0x630] sm:$0xff] %v4125
        %4142 = vst [vmem:[#allocation3 + $0x638] sm:$0xff] %v4126
        %v4143 = vld [vmem:[#allocation2 + $0x8] sm:$0xff]
        %v4144 = vld [vmem:[#allocation2 + $0x10] sm:$0xff]
        %v4145 = vld [vmem:[#allocation2 + $0x18] sm:$0xff]
        %v4146 = vld [vmem:[#allocation2 + $0x20] sm:$0xff]
        %v4147 = vld [vmem:[#allocation2 + $0x28] sm:$0xff]
        %v4148 = vld [vmem:[#allocation2 + $0x30] sm:$0xff]
        %v4149 = vld [vmem:[#allocation2 + $0x38] sm:$0xff]
        %v4150 = vld [vmem:[#allocation2 + $0x40] sm:$0xff]
        %v4151 = vld [vmem:[#allocation2 + $0x48] sm:$0xff]
        %4161 = vrot.lane.b32.xlu0 %v4143, 18
        %v4162 = vpop.permute.xlu0 %4161
        %4163 = vrot.lane.b32.xlu0 %v4144, 18
        %v4164 = vpop.permute.xlu0 %4163
        %4165 = vrot.lane.b32.xlu0 %v4145, 18
        %v4166 = vpop.permute.xlu0 %4165
        %4167 = vrot.lane.b32.xlu0 %v4146, 18
        %v4168 = vpop.permute.xlu0 %4167
        %4169 = vrot.lane.b32.xlu0 %v4147, 18
        %v4170 = vpop.permute.xlu0 %4169
        %4171 = vrot.lane.b32.xlu0 %v4148, 18
        %v4172 = vpop.permute.xlu0 %4171
        %4173 = vrot.lane.b32.xlu0 %v4149, 18
        %v4174 = vpop.permute.xlu0 %4173
        %4175 = vrot.lane.b32.xlu0 %v4150, 18
        %v4176 = vpop.permute.xlu0 %4175
        %4177 = vrot.lane.b32.xlu0 %v4151, 18
        %v4178 = vpop.permute.xlu0 %4177
        %v4179 = vsel %vm2011, %v4162, %v4164
        %v4180 = vsel %vm2011, %v4164, %v4166
        %v4181 = vsel %vm2011, %v4166, %v4168
        %v4182 = vsel %vm2011, %v4168, %v4170
        %v4183 = vsel %vm2011, %v4170, %v4172
        %v4184 = vsel %vm2011, %v4172, %v4174
        %v4185 = vsel %vm2011, %v4174, %v4176
        %v4186 = vsel %vm2011, %v4176, %v4178
        %4195 = vst [vmem:[#allocation3 + $0x640] sm:$0xff] %v4179
        %4196 = vst [vmem:[#allocation3 + $0x648] sm:$0xff] %v4180
        %4197 = vst [vmem:[#allocation3 + $0x650] sm:$0xff] %v4181
        %4198 = vst [vmem:[#allocation3 + $0x658] sm:$0xff] %v4182
        %4199 = vst [vmem:[#allocation3 + $0x660] sm:$0xff] %v4183
        %4200 = vst [vmem:[#allocation3 + $0x668] sm:$0xff] %v4184
        %4201 = vst [vmem:[#allocation3 + $0x670] sm:$0xff] %v4185
        %4202 = vst [vmem:[#allocation3 + $0x678] sm:$0xff] %v4186
        %v4203 = vld [vmem:[#allocation2 + $0x8] sm:$0xff]
        %v4204 = vld [vmem:[#allocation2 + $0x10] sm:$0xff]
        %v4205 = vld [vmem:[#allocation2 + $0x18] sm:$0xff]
        %v4206 = vld [vmem:[#allocation2 + $0x20] sm:$0xff]
        %v4207 = vld [vmem:[#allocation2 + $0x28] sm:$0xff]
        %v4208 = vld [vmem:[#allocation2 + $0x30] sm:$0xff]
        %v4209 = vld [vmem:[#allocation2 + $0x38] sm:$0xff]
        %v4210 = vld [vmem:[#allocation2 + $0x40] sm:$0xff]
        %v4211 = vld [vmem:[#allocation2 + $0x48] sm:$0xff]
        %4221 = vrot.lane.b32.xlu0 %v4203, 17
        %v4222 = vpop.permute.xlu0 %4221
        %4223 = vrot.lane.b32.xlu0 %v4204, 17
        %v4224 = vpop.permute.xlu0 %4223
        %4225 = vrot.lane.b32.xlu0 %v4205, 17
        %v4226 = vpop.permute.xlu0 %4225
        %4227 = vrot.lane.b32.xlu0 %v4206, 17
        %v4228 = vpop.permute.xlu0 %4227
        %4229 = vrot.lane.b32.xlu0 %v4207, 17
        %v4230 = vpop.permute.xlu0 %4229
        %4231 = vrot.lane.b32.xlu0 %v4208, 17
        %v4232 = vpop.permute.xlu0 %4231
        %4233 = vrot.lane.b32.xlu0 %v4209, 17
        %v4234 = vpop.permute.xlu0 %4233
        %4235 = vrot.lane.b32.xlu0 %v4210, 17
        %v4236 = vpop.permute.xlu0 %4235
        %4237 = vrot.lane.b32.xlu0 %v4211, 17
        %v4238 = vpop.permute.xlu0 %4237
        %v4239 = vsel %vm2072, %v4222, %v4224
        %v4240 = vsel %vm2072, %v4224, %v4226
        %v4241 = vsel %vm2072, %v4226, %v4228
        %v4242 = vsel %vm2072, %v4228, %v4230
        %v4243 = vsel %vm2072, %v4230, %v4232
        %v4244 = vsel %vm2072, %v4232, %v4234
        %v4245 = vsel %vm2072, %v4234, %v4236
        %v4246 = vsel %vm2072, %v4236, %v4238
        %4255 = vst [vmem:[#allocation3 + $0x680] sm:$0xff] %v4239
        %4256 = vst [vmem:[#allocation3 + $0x688] sm:$0xff] %v4240
        %4257 = vst [vmem:[#allocation3 + $0x690] sm:$0xff] %v4241
        %4258 = vst [vmem:[#allocation3 + $0x698] sm:$0xff] %v4242
        %4259 = vst [vmem:[#allocation3 + $0x6a0] sm:$0xff] %v4243
        %4260 = vst [vmem:[#allocation3 + $0x6a8] sm:$0xff] %v4244
        %4261 = vst [vmem:[#allocation3 + $0x6b0] sm:$0xff] %v4245
        %4262 = vst [vmem:[#allocation3 + $0x6b8] sm:$0xff] %v4246
        %v4263 = vld [vmem:[#allocation10] sm:$0xff]
        %v4264 = vld [vmem:[#allocation10 + $0x8] sm:$0xff]
        %v4265 = vld [vmem:[#allocation3] sm:$0xff]
        %v4266 = vld [vmem:[#allocation3 + $0x8] sm:$0xff]
        %v4267 = vld [vmem:[#allocation3 + $0x10] sm:$0xff]
        %v4268 = vld [vmem:[#allocation3 + $0x18] sm:$0xff]
        %v4269 = vld [vmem:[#allocation3 + $0x20] sm:$0xff]
        %v4270 = vld [vmem:[#allocation3 + $0x28] sm:$0xff]
        %v4271 = vld [vmem:[#allocation3 + $0x30] sm:$0xff]
        %v4272 = vld [vmem:[#allocation3 + $0x38] sm:$0xff]
        %v4273 = vld [vmem:[#allocation3 + $0x40] sm:$0xff]
        %v4274 = vld [vmem:[#allocation3 + $0x48] sm:$0xff]
        %v4275 = vld [vmem:[#allocation3 + $0x50] sm:$0xff]
        %v4276 = vld [vmem:[#allocation3 + $0x58] sm:$0xff]
        %v4277 = vld [vmem:[#allocation3 + $0x60] sm:$0xff]
        %v4278 = vld [vmem:[#allocation3 + $0x68] sm:$0xff]
        %v4279 = vld [vmem:[#allocation3 + $0x70] sm:$0xff]
        %v4280 = vld [vmem:[#allocation3 + $0x78] sm:$0xff]
        %v4281 = vld [vmem:[#allocation3 + $0x80] sm:$0xff]
        %v4282 = vld [vmem:[#allocation3 + $0x88] sm:$0xff]
        %v4283 = vld [vmem:[#allocation3 + $0x90] sm:$0xff]
        %v4284 = vld [vmem:[#allocation3 + $0x98] sm:$0xff]
        %v4285 = vld [vmem:[#allocation3 + $0xa0] sm:$0xff]
        %v4286 = vld [vmem:[#allocation3 + $0xa8] sm:$0xff]
        %v4287 = vld [vmem:[#allocation3 + $0xb0] sm:$0xff]
        %v4288 = vld [vmem:[#allocation3 + $0xb8] sm:$0xff]
        %v4289 = vld [vmem:[#allocation3 + $0xc0] sm:$0xff]
        %v4290 = vld [vmem:[#allocation3 + $0xc8] sm:$0xff]
        %v4291 = vld [vmem:[#allocation3 + $0xd0] sm:$0xff]
        %v4292 = vld [vmem:[#allocation3 + $0xd8] sm:$0xff]
        %v4293 = vld [vmem:[#allocation3 + $0xe0] sm:$0xff]
        %v4294 = vld [vmem:[#allocation3 + $0xe8] sm:$0xff]
        %v4295 = vld [vmem:[#allocation3 + $0xf0] sm:$0xff]
        %v4296 = vld [vmem:[#allocation3 + $0xf8] sm:$0xff]
        %v4297 = vld [vmem:[#allocation3 + $0x100] sm:$0xff]
        %v4298 = vld [vmem:[#allocation3 + $0x108] sm:$0xff]
        %v4299 = vld [vmem:[#allocation3 + $0x110] sm:$0xff]
        %v4300 = vld [vmem:[#allocation3 + $0x118] sm:$0xff]
        %v4301 = vld [vmem:[#allocation3 + $0x120] sm:$0xff]
        %v4302 = vld [vmem:[#allocation3 + $0x128] sm:$0xff]
        %v4303 = vld [vmem:[#allocation3 + $0x130] sm:$0xff]
        %v4304 = vld [vmem:[#allocation3 + $0x138] sm:$0xff]
        %v4305 = vld [vmem:[#allocation3 + $0x140] sm:$0xff]
        %v4306 = vld [vmem:[#allocation3 + $0x148] sm:$0xff]
        %v4307 = vld [vmem:[#allocation3 + $0x150] sm:$0xff]
        %v4308 = vld [vmem:[#allocation3 + $0x158] sm:$0xff]
        %v4309 = vld [vmem:[#allocation3 + $0x160] sm:$0xff]
        %v4310 = vld [vmem:[#allocation3 + $0x168] sm:$0xff]
        %v4311 = vld [vmem:[#allocation3 + $0x170] sm:$0xff]
        %v4312 = vld [vmem:[#allocation3 + $0x178] sm:$0xff]
        %v4313 = vld [vmem:[#allocation3 + $0x180] sm:$0xff]
        %v4314 = vld [vmem:[#allocation3 + $0x188] sm:$0xff]
        %v4315 = vld [vmem:[#allocation3 + $0x190] sm:$0xff]
        %v4316 = vld [vmem:[#allocation3 + $0x198] sm:$0xff]
        %v4317 = vld [vmem:[#allocation3 + $0x1a0] sm:$0xff]
        %v4318 = vld [vmem:[#allocation3 + $0x1a8] sm:$0xff]
        %v4319 = vld [vmem:[#allocation3 + $0x1b0] sm:$0xff]
        %v4320 = vld [vmem:[#allocation3 + $0x1b8] sm:$0xff]
        %v4321 = vld [vmem:[#allocation3 + $0x1c0] sm:$0xff]
        %v4322 = vld [vmem:[#allocation3 + $0x1c8] sm:$0xff]
        %v4323 = vld [vmem:[#allocation3 + $0x1d0] sm:$0xff]
        %v4324 = vld [vmem:[#allocation3 + $0x1d8] sm:$0xff]
        %v4325 = vld [vmem:[#allocation3 + $0x1e0] sm:$0xff]
        %v4326 = vld [vmem:[#allocation3 + $0x1e8] sm:$0xff]
        %v4327 = vld [vmem:[#allocation3 + $0x1f0] sm:$0xff]
        %v4328 = vld [vmem:[#allocation3 + $0x1f8] sm:$0xff]
        %v4329 = vld [vmem:[#allocation3 + $0x200] sm:$0xff]
        %v4330 = vld [vmem:[#allocation3 + $0x208] sm:$0xff]
        %v4331 = vld [vmem:[#allocation3 + $0x210] sm:$0xff]
        %v4332 = vld [vmem:[#allocation3 + $0x218] sm:$0xff]
        %v4333 = vld [vmem:[#allocation3 + $0x220] sm:$0xff]
        %v4334 = vld [vmem:[#allocation3 + $0x228] sm:$0xff]
        %v4335 = vld [vmem:[#allocation3 + $0x230] sm:$0xff]
        %v4336 = vld [vmem:[#allocation3 + $0x238] sm:$0xff]
        %v4337 = vld [vmem:[#allocation3 + $0x240] sm:$0xff]
        %v4338 = vld [vmem:[#allocation3 + $0x248] sm:$0xff]
        %v4339 = vld [vmem:[#allocation3 + $0x250] sm:$0xff]
        %v4340 = vld [vmem:[#allocation3 + $0x258] sm:$0xff]
        %v4341 = vld [vmem:[#allocation3 + $0x260] sm:$0xff]
        %v4342 = vld [vmem:[#allocation3 + $0x268] sm:$0xff]
        %v4343 = vld [vmem:[#allocation3 + $0x270] sm:$0xff]
        %v4344 = vld [vmem:[#allocation3 + $0x278] sm:$0xff]
        %v4345 = vld [vmem:[#allocation3 + $0x280] sm:$0xff]
        %v4346 = vld [vmem:[#allocation3 + $0x288] sm:$0xff]
        %v4347 = vld [vmem:[#allocation3 + $0x290] sm:$0xff]
        %v4348 = vld [vmem:[#allocation3 + $0x298] sm:$0xff]
        %v4349 = vld [vmem:[#allocation3 + $0x2a0] sm:$0xff]
        %v4350 = vld [vmem:[#allocation3 + $0x2a8] sm:$0xff]
        %v4351 = vld [vmem:[#allocation3 + $0x2b0] sm:$0xff]
        %v4352 = vld [vmem:[#allocation3 + $0x2b8] sm:$0xff]
        %v4353 = vld [vmem:[#allocation3 + $0x2c0] sm:$0xff]
        %v4354 = vld [vmem:[#allocation3 + $0x2c8] sm:$0xff]
        %v4355 = vld [vmem:[#allocation3 + $0x2d0] sm:$0xff]
        %v4356 = vld [vmem:[#allocation3 + $0x2d8] sm:$0xff]
        %v4357 = vld [vmem:[#allocation3 + $0x2e0] sm:$0xff]
        %v4358 = vld [vmem:[#allocation3 + $0x2e8] sm:$0xff]
        %v4359 = vld [vmem:[#allocation3 + $0x2f0] sm:$0xff]
        %v4360 = vld [vmem:[#allocation3 + $0x2f8] sm:$0xff]
        %v4361 = vld [vmem:[#allocation3 + $0x300] sm:$0xff]
        %v4362 = vld [vmem:[#allocation3 + $0x308] sm:$0xff]
        %v4363 = vld [vmem:[#allocation3 + $0x310] sm:$0xff]
        %v4364 = vld [vmem:[#allocation3 + $0x318] sm:$0xff]
        %v4365 = vld [vmem:[#allocation3 + $0x320] sm:$0xff]
        %v4366 = vld [vmem:[#allocation3 + $0x328] sm:$0xff]
        %v4367 = vld [vmem:[#allocation3 + $0x330] sm:$0xff]
        %v4368 = vld [vmem:[#allocation3 + $0x338] sm:$0xff]
        %v4369 = vld [vmem:[#allocation3 + $0x340] sm:$0xff]
        %v4370 = vld [vmem:[#allocation3 + $0x348] sm:$0xff]
        %v4371 = vld [vmem:[#allocation3 + $0x350] sm:$0xff]
        %v4372 = vld [vmem:[#allocation3 + $0x358] sm:$0xff]
        %v4373 = vld [vmem:[#allocation3 + $0x360] sm:$0xff]
        %v4374 = vld [vmem:[#allocation3 + $0x368] sm:$0xff]
        %v4375 = vld [vmem:[#allocation3 + $0x370] sm:$0xff]
        %v4376 = vld [vmem:[#allocation3 + $0x378] sm:$0xff]
        %v4377 = vld [vmem:[#allocation3 + $0x380] sm:$0xff]
        %v4378 = vld [vmem:[#allocation3 + $0x388] sm:$0xff]
        %v4379 = vld [vmem:[#allocation3 + $0x390] sm:$0xff]
        %v4380 = vld [vmem:[#allocation3 + $0x398] sm:$0xff]
        %v4381 = vld [vmem:[#allocation3 + $0x3a0] sm:$0xff]
        %v4382 = vld [vmem:[#allocation3 + $0x3a8] sm:$0xff]
        %v4383 = vld [vmem:[#allocation3 + $0x3b0] sm:$0xff]
        %v4384 = vld [vmem:[#allocation3 + $0x3b8] sm:$0xff]
        %v4385 = vld [vmem:[#allocation3 + $0x3c0] sm:$0xff]
        %v4386 = vld [vmem:[#allocation3 + $0x3c8] sm:$0xff]
        %v4387 = vld [vmem:[#allocation3 + $0x3d0] sm:$0xff]
        %v4388 = vld [vmem:[#allocation3 + $0x3d8] sm:$0xff]
        %v4389 = vld [vmem:[#allocation3 + $0x3e0] sm:$0xff]
        %v4390 = vld [vmem:[#allocation3 + $0x3e8] sm:$0xff]
        %v4391 = vld [vmem:[#allocation3 + $0x3f0] sm:$0xff]
        %v4392 = vld [vmem:[#allocation3 + $0x3f8] sm:$0xff]
        %v4393 = vld [vmem:[#allocation3 + $0x400] sm:$0xff]
        %v4394 = vld [vmem:[#allocation3 + $0x408] sm:$0xff]
        %v4395 = vld [vmem:[#allocation3 + $0x410] sm:$0xff]
        %v4396 = vld [vmem:[#allocation3 + $0x418] sm:$0xff]
        %v4397 = vld [vmem:[#allocation3 + $0x420] sm:$0xff]
        %v4398 = vld [vmem:[#allocation3 + $0x428] sm:$0xff]
        %v4399 = vld [vmem:[#allocation3 + $0x430] sm:$0xff]
        %v4400 = vld [vmem:[#allocation3 + $0x438] sm:$0xff]
        %v4401 = vld [vmem:[#allocation3 + $0x440] sm:$0xff]
        %v4402 = vld [vmem:[#allocation3 + $0x448] sm:$0xff]
        %v4403 = vld [vmem:[#allocation3 + $0x450] sm:$0xff]
        %v4404 = vld [vmem:[#allocation3 + $0x458] sm:$0xff]
        %v4405 = vld [vmem:[#allocation3 + $0x460] sm:$0xff]
        %v4406 = vld [vmem:[#allocation3 + $0x468] sm:$0xff]
        %v4407 = vld [vmem:[#allocation3 + $0x470] sm:$0xff]
        %v4408 = vld [vmem:[#allocation3 + $0x478] sm:$0xff]
        %v4409 = vld [vmem:[#allocation3 + $0x480] sm:$0xff]
        %v4410 = vld [vmem:[#allocation3 + $0x488] sm:$0xff]
        %v4411 = vld [vmem:[#allocation3 + $0x490] sm:$0xff]
        %v4412 = vld [vmem:[#allocation3 + $0x498] sm:$0xff]
        %v4413 = vld [vmem:[#allocation3 + $0x4a0] sm:$0xff]
        %v4414 = vld [vmem:[#allocation3 + $0x4a8] sm:$0xff]
        %v4415 = vld [vmem:[#allocation3 + $0x4b0] sm:$0xff]
        %v4416 = vld [vmem:[#allocation3 + $0x4b8] sm:$0xff]
        %v4417 = vld [vmem:[#allocation3 + $0x4c0] sm:$0xff]
        %v4418 = vld [vmem:[#allocation3 + $0x4c8] sm:$0xff]
        %v4419 = vld [vmem:[#allocation3 + $0x4d0] sm:$0xff]
        %v4420 = vld [vmem:[#allocation3 + $0x4d8] sm:$0xff]
        %v4421 = vld [vmem:[#allocation3 + $0x4e0] sm:$0xff]
        %v4422 = vld [vmem:[#allocation3 + $0x4e8] sm:$0xff]
        %v4423 = vld [vmem:[#allocation3 + $0x4f0] sm:$0xff]
        %v4424 = vld [vmem:[#allocation3 + $0x4f8] sm:$0xff]
        %v4425 = vld [vmem:[#allocation3 + $0x500] sm:$0xff]
        %v4426 = vld [vmem:[#allocation3 + $0x508] sm:$0xff]
        %v4427 = vld [vmem:[#allocation3 + $0x510] sm:$0xff]
        %v4428 = vld [vmem:[#allocation3 + $0x518] sm:$0xff]
        %v4429 = vld [vmem:[#allocation3 + $0x520] sm:$0xff]
        %v4430 = vld [vmem:[#allocation3 + $0x528] sm:$0xff]
        %v4431 = vld [vmem:[#allocation3 + $0x530] sm:$0xff]
        %v4432 = vld [vmem:[#allocation3 + $0x538] sm:$0xff]
        %v4433 = vld [vmem:[#allocation3 + $0x540] sm:$0xff]
        %v4434 = vld [vmem:[#allocation3 + $0x548] sm:$0xff]
        %v4435 = vld [vmem:[#allocation3 + $0x550] sm:$0xff]
        %v4436 = vld [vmem:[#allocation3 + $0x558] sm:$0xff]
        %v4437 = vld [vmem:[#allocation3 + $0x560] sm:$0xff]
        %v4438 = vld [vmem:[#allocation3 + $0x568] sm:$0xff]
        %v4439 = vld [vmem:[#allocation3 + $0x570] sm:$0xff]
        %v4440 = vld [vmem:[#allocation3 + $0x578] sm:$0xff]
        %v4441 = vld [vmem:[#allocation3 + $0x580] sm:$0xff]
        %v4442 = vld [vmem:[#allocation3 + $0x588] sm:$0xff]
        %v4443 = vld [vmem:[#allocation3 + $0x590] sm:$0xff]
        %v4444 = vld [vmem:[#allocation3 + $0x598] sm:$0xff]
        %v4445 = vld [vmem:[#allocation3 + $0x5a0] sm:$0xff]
        %v4446 = vld [vmem:[#allocation3 + $0x5a8] sm:$0xff]
        %v4447 = vld [vmem:[#allocation3 + $0x5b0] sm:$0xff]
        %v4448 = vld [vmem:[#allocation3 + $0x5b8] sm:$0xff]
        %v4449 = vld [vmem:[#allocation3 + $0x5c0] sm:$0xff]
        %v4450 = vld [vmem:[#allocation3 + $0x5c8] sm:$0xff]
        %v4451 = vld [vmem:[#allocation3 + $0x5d0] sm:$0xff]
        %v4452 = vld [vmem:[#allocation3 + $0x5d8] sm:$0xff]
        %v4453 = vld [vmem:[#allocation3 + $0x5e0] sm:$0xff]
        %v4454 = vld [vmem:[#allocation3 + $0x5e8] sm:$0xff]
        %v4455 = vld [vmem:[#allocation3 + $0x5f0] sm:$0xff]
        %v4456 = vld [vmem:[#allocation3 + $0x5f8] sm:$0xff]
        %v4457 = vld [vmem:[#allocation3 + $0x600] sm:$0xff]
        %v4458 = vld [vmem:[#allocation3 + $0x608] sm:$0xff]
        %v4459 = vld [vmem:[#allocation3 + $0x610] sm:$0xff]
        %v4460 = vld [vmem:[#allocation3 + $0x618] sm:$0xff]
        %v4461 = vld [vmem:[#allocation3 + $0x620] sm:$0xff]
        %v4462 = vld [vmem:[#allocation3 + $0x628] sm:$0xff]
        %v4463 = vld [vmem:[#allocation3 + $0x630] sm:$0xff]
        %v4464 = vld [vmem:[#allocation3 + $0x638] sm:$0xff]
        %v4465 = vld [vmem:[#allocation3 + $0x640] sm:$0xff]
        %v4466 = vld [vmem:[#allocation3 + $0x648] sm:$0xff]
        %v4467 = vld [vmem:[#allocation3 + $0x650] sm:$0xff]
        %v4468 = vld [vmem:[#allocation3 + $0x658] sm:$0xff]
        %v4469 = vld [vmem:[#allocation3 + $0x660] sm:$0xff]
        %v4470 = vld [vmem:[#allocation3 + $0x668] sm:$0xff]
        %v4471 = vld [vmem:[#allocation3 + $0x670] sm:$0xff]
        %v4472 = vld [vmem:[#allocation3 + $0x678] sm:$0xff]
        %v4473 = vld [vmem:[#allocation3 + $0x680] sm:$0xff]
        %v4474 = vld [vmem:[#allocation3 + $0x688] sm:$0xff]
        %v4475 = vld [vmem:[#allocation3 + $0x690] sm:$0xff]
        %v4476 = vld [vmem:[#allocation3 + $0x698] sm:$0xff]
        %v4477 = vld [vmem:[#allocation3 + $0x6a0] sm:$0xff]
        %v4478 = vld [vmem:[#allocation3 + $0x6a8] sm:$0xff]
        %v4479 = vld [vmem:[#allocation3 + $0x6b0] sm:$0xff]
        %v4480 = vld [vmem:[#allocation3 + $0x6b8] sm:$0xff]
        %v4481 = vld [vmem:[%s6] sm:$0xff]
        %4483 = vset.pattern.permute.xlu0 0
        %4484 = vperm.xlu0 %4483, %v4481
        %v4485 = vpop.permute.xlu0 %4484
        %v4488 = vsel %vm2321, %v4264, 0
        %4490 = vmatpush.msra.mxu0 %v4385
        %4491 = vmatpush.msra.mxu0 %v4377
        %4492 = vmatpush.msra.mxu0 %v4369
        %4493 = vmatpush.msra.mxu0 %v4361
        %4494 = vmatpush.msra.mxu0 %v4353
        %4495 = vmatpush.msra.mxu0 %v4345
        %4496 = vmatpush.msra.mxu0 %v4337
        %4497 = vmatpush.msra.mxu0 %v4329
        %4498 = vmatpush.msra.mxu0 %v4321
        %4499 = vmatpush.msra.mxu0 %v4313
        %4500 = vmatpush.msra.mxu0 %v4305
        %4501 = vmatpush.msra.mxu0 %v4297
        %4502 = vmatpush.msra.mxu0 %v4289
        %4503 = vmatpush.msra.mxu0 %v4281
        %4504 = vmatpush.msra.mxu0 %v4273
        %4505 = vmatpush.msra.mxu0 %v4265
        %4506 = vmatmul.f32.gmra.mxu0 %v4263
        %v4507 = vpop.f32.mrf.mxu0
        %v4508 = vadd.f32 %v4485, %v4507
        %4509 = vdwg.mxu0
        %4510 = vmatpush.msra.mxu0 0.0
        %4511 = vmatpush.msra.mxu0 0.0
        %4512 = vmatpush.msra.mxu0 0.0
        %4513 = vmatpush.msra.mxu0 0.0
        %4514 = vmatpush.msra.mxu0 0.0
        %4515 = vmatpush.msra.mxu0 %v4473
        %4516 = vmatpush.msra.mxu0 %v4465
        %4517 = vmatpush.msra.mxu0 %v4457
        %4518 = vmatpush.msra.mxu0 %v4449
        %4519 = vmatpush.msra.mxu0 %v4441
        %4520 = vmatpush.msra.mxu0 %v4433
        %4521 = vmatpush.msra.mxu0 %v4425
        %4522 = vmatpush.msra.mxu0 %v4417
        %4523 = vmatpush.msra.mxu0 %v4409
        %4524 = vmatpush.msra.mxu0 %v4401
        %4525 = vmatpush.msra.mxu0 %v4393
        %4526 = vmatmul.f32.gmra.mxu0 %v4488
        %v4527 = vpop.f32.mrf.mxu0
        %v4528 = vadd.f32 %v4508, %v4527
        %4529 = vdwg.mxu0
        %4530 = vmatpush.msra.mxu0 %v4386
        %4531 = vmatpush.msra.mxu0 %v4378
        %4532 = vmatpush.msra.mxu0 %v4370
        %4533 = vmatpush.msra.mxu0 %v4362
        %4534 = vmatpush.msra.mxu0 %v4354
        %4535 = vmatpush.msra.mxu0 %v4346
        %4536 = vmatpush.msra.mxu0 %v4338
        %4537 = vmatpush.msra.mxu0 %v4330
        %4538 = vmatpush.msra.mxu0 %v4322
        %4539 = vmatpush.msra.mxu0 %v4314
        %4540 = vmatpush.msra.mxu0 %v4306
        %4541 = vmatpush.msra.mxu0 %v4298
        %4542 = vmatpush.msra.mxu0 %v4290
        %4543 = vmatpush.msra.mxu0 %v4282
        %4544 = vmatpush.msra.mxu0 %v4274
        %4545 = vmatpush.msra.mxu0 %v4266
        %4546 = vmatmul.f32.gmra.mxu0 %v4263
        %v4547 = vpop.f32.mrf.mxu0
        %v4548 = vadd.f32 %v4485, %v4547
        %4549 = vdwg.mxu0
        %4550 = vmatpush.msra.mxu0 0.0
        %4551 = vmatpush.msra.mxu0 0.0
        %4552 = vmatpush.msra.mxu0 0.0
        %4553 = vmatpush.msra.mxu0 0.0
        %4554 = vmatpush.msra.mxu0 0.0
        %4555 = vmatpush.msra.mxu0 %v4474
        %4556 = vmatpush.msra.mxu0 %v4466
        %4557 = vmatpush.msra.mxu0 %v4458
        %4558 = vmatpush.msra.mxu0 %v4450
        %4559 = vmatpush.msra.mxu0 %v4442
        %4560 = vmatpush.msra.mxu0 %v4434
        %4561 = vmatpush.msra.mxu0 %v4426
        %4562 = vmatpush.msra.mxu0 %v4418
        %4563 = vmatpush.msra.mxu0 %v4410
        %4564 = vmatpush.msra.mxu0 %v4402
        %4565 = vmatpush.msra.mxu0 %v4394
        %4566 = vmatmul.f32.gmra.mxu0 %v4488
        %v4567 = vpop.f32.mrf.mxu0
        %v4568 = vadd.f32 %v4548, %v4567
        %4569 = vdwg.mxu0
        %4570 = vmatpush.msra.mxu0 %v4387
        %4571 = vmatpush.msra.mxu0 %v4379
        %4572 = vmatpush.msra.mxu0 %v4371
        %4573 = vmatpush.msra.mxu0 %v4363
        %4574 = vmatpush.msra.mxu0 %v4355
        %4575 = vmatpush.msra.mxu0 %v4347
        %4576 = vmatpush.msra.mxu0 %v4339
        %4577 = vmatpush.msra.mxu0 %v4331
        %4578 = vmatpush.msra.mxu0 %v4323
        %4579 = vmatpush.msra.mxu0 %v4315
        %4580 = vmatpush.msra.mxu0 %v4307
        %4581 = vmatpush.msra.mxu0 %v4299
        %4582 = vmatpush.msra.mxu0 %v4291
        %4583 = vmatpush.msra.mxu0 %v4283
        %4584 = vmatpush.msra.mxu0 %v4275
        %4585 = vmatpush.msra.mxu0 %v4267
        %4586 = vmatmul.f32.gmra.mxu0 %v4263
        %v4587 = vpop.f32.mrf.mxu0
        %v4588 = vadd.f32 %v4485, %v4587
        %4589 = vdwg.mxu0
        %4590 = vmatpush.msra.mxu0 0.0
        %4591 = vmatpush.msra.mxu0 0.0
        %4592 = vmatpush.msra.mxu0 0.0
        %4593 = vmatpush.msra.mxu0 0.0
        %4594 = vmatpush.msra.mxu0 0.0
        %4595 = vmatpush.msra.mxu0 %v4475
        %4596 = vmatpush.msra.mxu0 %v4467
        %4597 = vmatpush.msra.mxu0 %v4459
        %4598 = vmatpush.msra.mxu0 %v4451
        %4599 = vmatpush.msra.mxu0 %v4443
        %4600 = vmatpush.msra.mxu0 %v4435
        %4601 = vmatpush.msra.mxu0 %v4427
        %4602 = vmatpush.msra.mxu0 %v4419
        %4603 = vmatpush.msra.mxu0 %v4411
        %4604 = vmatpush.msra.mxu0 %v4403
        %4605 = vmatpush.msra.mxu0 %v4395
        %4606 = vmatmul.f32.gmra.mxu0 %v4488
        %v4607 = vpop.f32.mrf.mxu0
        %v4608 = vadd.f32 %v4588, %v4607
        %4609 = vdwg.mxu0
        %4610 = vmatpush.msra.mxu0 %v4388
        %4611 = vmatpush.msra.mxu0 %v4380
        %4612 = vmatpush.msra.mxu0 %v4372
        %4613 = vmatpush.msra.mxu0 %v4364
        %4614 = vmatpush.msra.mxu0 %v4356
        %4615 = vmatpush.msra.mxu0 %v4348
        %4616 = vmatpush.msra.mxu0 %v4340
        %4617 = vmatpush.msra.mxu0 %v4332
        %4618 = vmatpush.msra.mxu0 %v4324
        %4619 = vmatpush.msra.mxu0 %v4316
        %4620 = vmatpush.msra.mxu0 %v4308
        %4621 = vmatpush.msra.mxu0 %v4300
        %4622 = vmatpush.msra.mxu0 %v4292
        %4623 = vmatpush.msra.mxu0 %v4284
        %4624 = vmatpush.msra.mxu0 %v4276
        %4625 = vmatpush.msra.mxu0 %v4268
        %4626 = vmatmul.f32.gmra.mxu0 %v4263
        %v4627 = vpop.f32.mrf.mxu0
        %v4628 = vadd.f32 %v4485, %v4627
        %4629 = vdwg.mxu0
        %4630 = vmatpush.msra.mxu0 0.0
        %4631 = vmatpush.msra.mxu0 0.0
        %4632 = vmatpush.msra.mxu0 0.0
        %4633 = vmatpush.msra.mxu0 0.0
        %4634 = vmatpush.msra.mxu0 0.0
        %4635 = vmatpush.msra.mxu0 %v4476
        %4636 = vmatpush.msra.mxu0 %v4468
        %4637 = vmatpush.msra.mxu0 %v4460
        %4638 = vmatpush.msra.mxu0 %v4452
        %4639 = vmatpush.msra.mxu0 %v4444
        %4640 = vmatpush.msra.mxu0 %v4436
        %4641 = vmatpush.msra.mxu0 %v4428
        %4642 = vmatpush.msra.mxu0 %v4420
        %4643 = vmatpush.msra.mxu0 %v4412
        %4644 = vmatpush.msra.mxu0 %v4404
        %4645 = vmatpush.msra.mxu0 %v4396
        %4646 = vmatmul.f32.gmra.mxu0 %v4488
        %v4647 = vpop.f32.mrf.mxu0
        %v4648 = vadd.f32 %v4628, %v4647
        %4649 = vdwg.mxu0
        %4650 = vmatpush.msra.mxu0 %v4389
        %4651 = vmatpush.msra.mxu0 %v4381
        %4652 = vmatpush.msra.mxu0 %v4373
        %4653 = vmatpush.msra.mxu0 %v4365
        %4654 = vmatpush.msra.mxu0 %v4357
        %4655 = vmatpush.msra.mxu0 %v4349
        %4656 = vmatpush.msra.mxu0 %v4341
        %4657 = vmatpush.msra.mxu0 %v4333
        %4658 = vmatpush.msra.mxu0 %v4325
        %4659 = vmatpush.msra.mxu0 %v4317
        %4660 = vmatpush.msra.mxu0 %v4309
        %4661 = vmatpush.msra.mxu0 %v4301
        %4662 = vmatpush.msra.mxu0 %v4293
        %4663 = vmatpush.msra.mxu0 %v4285
        %4664 = vmatpush.msra.mxu0 %v4277
        %4665 = vmatpush.msra.mxu0 %v4269
        %4666 = vmatmul.f32.gmra.mxu0 %v4263
        %v4667 = vpop.f32.mrf.mxu0
        %v4668 = vadd.f32 %v4485, %v4667
        %4669 = vdwg.mxu0
        %4670 = vmatpush.msra.mxu0 0.0
        %4671 = vmatpush.msra.mxu0 0.0
        %4672 = vmatpush.msra.mxu0 0.0
        %4673 = vmatpush.msra.mxu0 0.0
        %4674 = vmatpush.msra.mxu0 0.0
        %4675 = vmatpush.msra.mxu0 %v4477
        %4676 = vmatpush.msra.mxu0 %v4469
        %4677 = vmatpush.msra.mxu0 %v4461
        %4678 = vmatpush.msra.mxu0 %v4453
        %4679 = vmatpush.msra.mxu0 %v4445
        %4680 = vmatpush.msra.mxu0 %v4437
        %4681 = vmatpush.msra.mxu0 %v4429
        %4682 = vmatpush.msra.mxu0 %v4421
        %4683 = vmatpush.msra.mxu0 %v4413
        %4684 = vmatpush.msra.mxu0 %v4405
        %4685 = vmatpush.msra.mxu0 %v4397
        %4686 = vmatmul.f32.gmra.mxu0 %v4488
        %v4687 = vpop.f32.mrf.mxu0
        %v4688 = vadd.f32 %v4668, %v4687
        %4689 = vdwg.mxu0
        %4690 = vmatpush.msra.mxu0 %v4390
        %4691 = vmatpush.msra.mxu0 %v4382
        %4692 = vmatpush.msra.mxu0 %v4374
        %4693 = vmatpush.msra.mxu0 %v4366
        %4694 = vmatpush.msra.mxu0 %v4358
        %4695 = vmatpush.msra.mxu0 %v4350
        %4696 = vmatpush.msra.mxu0 %v4342
        %4697 = vmatpush.msra.mxu0 %v4334
        %4698 = vmatpush.msra.mxu0 %v4326
        %4699 = vmatpush.msra.mxu0 %v4318
        %4700 = vmatpush.msra.mxu0 %v4310
        %4701 = vmatpush.msra.mxu0 %v4302
        %4702 = vmatpush.msra.mxu0 %v4294
        %4703 = vmatpush.msra.mxu0 %v4286
        %4704 = vmatpush.msra.mxu0 %v4278
        %4705 = vmatpush.msra.mxu0 %v4270
        %4706 = vmatmul.f32.gmra.mxu0 %v4263
        %v4707 = vpop.f32.mrf.mxu0
        %v4708 = vadd.f32 %v4485, %v4707
        %4709 = vdwg.mxu0
        %4710 = vmatpush.msra.mxu0 0.0
        %4711 = vmatpush.msra.mxu0 0.0
        %4712 = vmatpush.msra.mxu0 0.0
        %4713 = vmatpush.msra.mxu0 0.0
        %4714 = vmatpush.msra.mxu0 0.0
        %4715 = vmatpush.msra.mxu0 %v4478
        %4716 = vmatpush.msra.mxu0 %v4470
        %4717 = vmatpush.msra.mxu0 %v4462
        %4718 = vmatpush.msra.mxu0 %v4454
        %4719 = vmatpush.msra.mxu0 %v4446
        %4720 = vmatpush.msra.mxu0 %v4438
        %4721 = vmatpush.msra.mxu0 %v4430
        %4722 = vmatpush.msra.mxu0 %v4422
        %4723 = vmatpush.msra.mxu0 %v4414
        %4724 = vmatpush.msra.mxu0 %v4406
        %4725 = vmatpush.msra.mxu0 %v4398
        %4726 = vmatmul.f32.gmra.mxu0 %v4488
        %v4727 = vpop.f32.mrf.mxu0
        %v4728 = vadd.f32 %v4708, %v4727
        %4729 = vdwg.mxu0
        %4730 = vmatpush.msra.mxu0 %v4391
        %4731 = vmatpush.msra.mxu0 %v4383
        %4732 = vmatpush.msra.mxu0 %v4375
        %4733 = vmatpush.msra.mxu0 %v4367
        %4734 = vmatpush.msra.mxu0 %v4359
        %4735 = vmatpush.msra.mxu0 %v4351
        %4736 = vmatpush.msra.mxu0 %v4343
        %4737 = vmatpush.msra.mxu0 %v4335
        %4738 = vmatpush.msra.mxu0 %v4327
        %4739 = vmatpush.msra.mxu0 %v4319
        %4740 = vmatpush.msra.mxu0 %v4311
        %4741 = vmatpush.msra.mxu0 %v4303
        %4742 = vmatpush.msra.mxu0 %v4295
        %4743 = vmatpush.msra.mxu0 %v4287
        %4744 = vmatpush.msra.mxu0 %v4279
        %4745 = vmatpush.msra.mxu0 %v4271
        %4746 = vmatmul.f32.gmra.mxu0 %v4263
        %v4747 = vpop.f32.mrf.mxu0
        %v4748 = vadd.f32 %v4485, %v4747
        %4749 = vdwg.mxu0
        %4750 = vmatpush.msra.mxu0 0.0
        %4751 = vmatpush.msra.mxu0 0.0
        %4752 = vmatpush.msra.mxu0 0.0
        %4753 = vmatpush.msra.mxu0 0.0
        %4754 = vmatpush.msra.mxu0 0.0
        %4755 = vmatpush.msra.mxu0 %v4479
        %4756 = vmatpush.msra.mxu0 %v4471
        %4757 = vmatpush.msra.mxu0 %v4463
        %4758 = vmatpush.msra.mxu0 %v4455
        %4759 = vmatpush.msra.mxu0 %v4447
        %4760 = vmatpush.msra.mxu0 %v4439
        %4761 = vmatpush.msra.mxu0 %v4431
        %4762 = vmatpush.msra.mxu0 %v4423
        %4763 = vmatpush.msra.mxu0 %v4415
        %4764 = vmatpush.msra.mxu0 %v4407
        %4765 = vmatpush.msra.mxu0 %v4399
        %4766 = vmatmul.f32.gmra.mxu0 %v4488
        %v4767 = vpop.f32.mrf.mxu0
        %v4768 = vadd.f32 %v4748, %v4767
        %4769 = vdwg.mxu0
        %4770 = vmatpush.msra.mxu0 %v4392
        %4771 = vmatpush.msra.mxu0 %v4384
        %4772 = vmatpush.msra.mxu0 %v4376
        %4773 = vmatpush.msra.mxu0 %v4368
        %4774 = vmatpush.msra.mxu0 %v4360
        %4775 = vmatpush.msra.mxu0 %v4352
        %4776 = vmatpush.msra.mxu0 %v4344
        %4777 = vmatpush.msra.mxu0 %v4336
        %4778 = vmatpush.msra.mxu0 %v4328
        %4779 = vmatpush.msra.mxu0 %v4320
        %4780 = vmatpush.msra.mxu0 %v4312
        %4781 = vmatpush.msra.mxu0 %v4304
        %4782 = vmatpush.msra.mxu0 %v4296
        %4783 = vmatpush.msra.mxu0 %v4288
        %4784 = vmatpush.msra.mxu0 %v4280
        %4785 = vmatpush.msra.mxu0 %v4272
        %4786 = vmatmul.f32.gmra.mxu0 %v4263
        %v4787 = vpop.f32.mrf.mxu0
        %v4788 = vadd.f32 %v4485, %v4787
        %4789 = vdwg.mxu0
        %4790 = vmatpush.msra.mxu0 0.0
        %4791 = vmatpush.msra.mxu0 0.0
        %4792 = vmatpush.msra.mxu0 0.0
        %4793 = vmatpush.msra.mxu0 0.0
        %4794 = vmatpush.msra.mxu0 0.0
        %4795 = vmatpush.msra.mxu0 %v4480
        %4796 = vmatpush.msra.mxu0 %v4472
        %4797 = vmatpush.msra.mxu0 %v4464
        %4798 = vmatpush.msra.mxu0 %v4456
        %4799 = vmatpush.msra.mxu0 %v4448
        %4800 = vmatpush.msra.mxu0 %v4440
        %4801 = vmatpush.msra.mxu0 %v4432
        %4802 = vmatpush.msra.mxu0 %v4424
        %4803 = vmatpush.msra.mxu0 %v4416
        %4804 = vmatpush.msra.mxu0 %v4408
        %4805 = vmatpush.msra.mxu0 %v4400
        %4806 = vmatmul.f32.gmra.mxu0 %v4488
        %v4807 = vpop.f32.mrf.mxu0
        %v4808 = vadd.f32 %v4788, %v4807
        %4809 = vdwg.mxu0
        %v4810 = vld [vmem:[#allocation9] sm:$0xff]
        %v4812 = vperm.slane %v4810, 0
        %v4813 = vperm.slane %v4810, 1
        %v4814 = vperm.slane %v4810, 2
        %v4815 = vperm.slane %v4810, 3
        %v4816 = vperm.slane %v4810, 4
        %v4817 = vperm.slane %v4810, 5
        %v4818 = vperm.slane %v4810, 6
        %v4819 = vperm.slane %v4810, 7
        %v4828 = vmul.f32 %v4528, %v4812
        %v4829 = vmul.f32 %v4568, %v4813
        %v4830 = vmul.f32 %v4608, %v4814
        %v4831 = vmul.f32 %v4648, %v4815
        %v4832 = vmul.f32 %v4688, %v4816
        %v4833 = vmul.f32 %v4728, %v4817
        %v4834 = vmul.f32 %v4768, %v4818
        %v4835 = vmul.f32 %v4808, %v4819
        %4836 = vst [vmem:[#allocation2 + $0x8] sm:$0xff] %v4828
        %4837 = vst [vmem:[#allocation2 + $0x10] sm:$0xff] %v4829
        %4838 = vst [vmem:[#allocation2 + $0x18] sm:$0xff] %v4830
        %4839 = vst [vmem:[#allocation2 + $0x20] sm:$0xff] %v4831
        %4840 = vst [vmem:[#allocation2 + $0x28] sm:$0xff] %v4832
        %4841 = vst [vmem:[#allocation2 + $0x30] sm:$0xff] %v4833
        %4842 = vst [vmem:[#allocation2 + $0x38] sm:$0xff] %v4834
        %4843 = vst [vmem:[#allocation2 + $0x40] sm:$0xff] %v4835
        %v4844 = vld [vmem:[#allocation2] sm:$0xff]
        %v4845 = vld [vmem:[#allocation2 + $0x8] sm:$0xff]
        %v4846 = vld [vmem:[#allocation2 + $0x10] sm:$0xff]
        %v4847 = vld [vmem:[#allocation2 + $0x18] sm:$0xff]
        %v4848 = vld [vmem:[#allocation2 + $0x20] sm:$0xff]
        %v4849 = vld [vmem:[#allocation2 + $0x28] sm:$0xff]
        %v4850 = vld [vmem:[#allocation2 + $0x30] sm:$0xff]
        %v4851 = vld [vmem:[#allocation2 + $0x38] sm:$0xff]
        %v4852 = vld [vmem:[#allocation2 + $0x40] sm:$0xff]
        %4862 = vrot.lane.b32.xlu0 %v4844, 111
        %v4863 = vpop.permute.xlu0 %4862
        %4864 = vrot.lane.b32.xlu0 %v4845, 111
        %v4865 = vpop.permute.xlu0 %4864
        %4866 = vrot.lane.b32.xlu0 %v4846, 111
        %v4867 = vpop.permute.xlu0 %4866
        %4868 = vrot.lane.b32.xlu0 %v4847, 111
        %v4869 = vpop.permute.xlu0 %4868
        %4870 = vrot.lane.b32.xlu0 %v4848, 111
        %v4871 = vpop.permute.xlu0 %4870
        %4872 = vrot.lane.b32.xlu0 %v4849, 111
        %v4873 = vpop.permute.xlu0 %4872
        %4874 = vrot.lane.b32.xlu0 %v4850, 111
        %v4875 = vpop.permute.xlu0 %4874
        %4876 = vrot.lane.b32.xlu0 %v4851, 111
        %v4877 = vpop.permute.xlu0 %4876
        %4878 = vrot.lane.b32.xlu0 %v4852, 111
        %v4879 = vpop.permute.xlu0 %4878
        %v4880 = vsel %vm531, %v4863, %v4865
        %v4881 = vsel %vm531, %v4865, %v4867
        %v4882 = vsel %vm531, %v4867, %v4869
        %v4883 = vsel %vm531, %v4869, %v4871
        %v4884 = vsel %vm531, %v4871, %v4873
        %v4885 = vsel %vm531, %v4873, %v4875
        %v4886 = vsel %vm531, %v4875, %v4877
        %v4887 = vsel %vm531, %v4877, %v4879
        %4896 = vst [vmem:[#allocation3] sm:$0xff] %v4880
        %4897 = vst [vmem:[#allocation3 + $0x8] sm:$0xff] %v4881
        %4898 = vst [vmem:[#allocation3 + $0x10] sm:$0xff] %v4882
        %4899 = vst [vmem:[#allocation3 + $0x18] sm:$0xff] %v4883
        %4900 = vst [vmem:[#allocation3 + $0x20] sm:$0xff] %v4884
        %4901 = vst [vmem:[#allocation3 + $0x28] sm:$0xff] %v4885
        %4902 = vst [vmem:[#allocation3 + $0x30] sm:$0xff] %v4886
        %4903 = vst [vmem:[#allocation3 + $0x38] sm:$0xff] %v4887
        %v4904 = vld [vmem:[#allocation2] sm:$0xff]
        %v4905 = vld [vmem:[#allocation2 + $0x8] sm:$0xff]
        %v4906 = vld [vmem:[#allocation2 + $0x10] sm:$0xff]
        %v4907 = vld [vmem:[#allocation2 + $0x18] sm:$0xff]
        %v4908 = vld [vmem:[#allocation2 + $0x20] sm:$0xff]
        %v4909 = vld [vmem:[#allocation2 + $0x28] sm:$0xff]
        %v4910 = vld [vmem:[#allocation2 + $0x30] sm:$0xff]
        %v4911 = vld [vmem:[#allocation2 + $0x38] sm:$0xff]
        %v4912 = vld [vmem:[#allocation2 + $0x40] sm:$0xff]
        %4922 = vrot.lane.b32.xlu0 %v4904, 110
        %v4923 = vpop.permute.xlu0 %4922
        %4924 = vrot.lane.b32.xlu0 %v4905, 110
        %v4925 = vpop.permute.xlu0 %4924
        %4926 = vrot.lane.b32.xlu0 %v4906, 110
        %v4927 = vpop.permute.xlu0 %4926
        %4928 = vrot.lane.b32.xlu0 %v4907, 110
        %v4929 = vpop.permute.xlu0 %4928
        %4930 = vrot.lane.b32.xlu0 %v4908, 110
        %v4931 = vpop.permute.xlu0 %4930
        %4932 = vrot.lane.b32.xlu0 %v4909, 110
        %v4933 = vpop.permute.xlu0 %4932
        %4934 = vrot.lane.b32.xlu0 %v4910, 110
        %v4935 = vpop.permute.xlu0 %4934
        %4936 = vrot.lane.b32.xlu0 %v4911, 110
        %v4937 = vpop.permute.xlu0 %4936
        %4938 = vrot.lane.b32.xlu0 %v4912, 110
        %v4939 = vpop.permute.xlu0 %4938
        %v4940 = vsel %vm592, %v4923, %v4925
        %v4941 = vsel %vm592, %v4925, %v4927
        %v4942 = vsel %vm592, %v4927, %v4929
        %v4943 = vsel %vm592, %v4929, %v4931
        %v4944 = vsel %vm592, %v4931, %v4933
        %v4945 = vsel %vm592, %v4933, %v4935
        %v4946 = vsel %vm592, %v4935, %v4937
        %v4947 = vsel %vm592, %v4937, %v4939
        %4956 = vst [vmem:[#allocation3 + $0x40] sm:$0xff] %v4940
        %4957 = vst [vmem:[#allocation3 + $0x48] sm:$0xff] %v4941
        %4958 = vst [vmem:[#allocation3 + $0x50] sm:$0xff] %v4942
        %4959 = vst [vmem:[#allocation3 + $0x58] sm:$0xff] %v4943
        %4960 = vst [vmem:[#allocation3 + $0x60] sm:$0xff] %v4944
        %4961 = vst [vmem:[#allocation3 + $0x68] sm:$0xff] %v4945
        %4962 = vst [vmem:[#allocation3 + $0x70] sm:$0xff] %v4946
        %4963 = vst [vmem:[#allocation3 + $0x78] sm:$0xff] %v4947
        %v4964 = vld [vmem:[#allocation2] sm:$0xff]
        %v4965 = vld [vmem:[#allocation2 + $0x8] sm:$0xff]
        %v4966 = vld [vmem:[#allocation2 + $0x10] sm:$0xff]
        %v4967 = vld [vmem:[#allocation2 + $0x18] sm:$0xff]
        %v4968 = vld [vmem:[#allocation2 + $0x20] sm:$0xff]
        %v4969 = vld [vmem:[#allocation2 + $0x28] sm:$0xff]
        %v4970 = vld [vmem:[#allocation2 + $0x30] sm:$0xff]
        %v4971 = vld [vmem:[#allocation2 + $0x38] sm:$0xff]
        %v4972 = vld [vmem:[#allocation2 + $0x40] sm:$0xff]
        %4982 = vrot.lane.b32.xlu0 %v4964, 109
        %v4983 = vpop.permute.xlu0 %4982
        %4984 = vrot.lane.b32.xlu0 %v4965, 109
        %v4985 = vpop.permute.xlu0 %4984
        %4986 = vrot.lane.b32.xlu0 %v4966, 109
        %v4987 = vpop.permute.xlu0 %4986
        %4988 = vrot.lane.b32.xlu0 %v4967, 109
        %v4989 = vpop.permute.xlu0 %4988
        %4990 = vrot.lane.b32.xlu0 %v4968, 109
        %v4991 = vpop.permute.xlu0 %4990
        %4992 = vrot.lane.b32.xlu0 %v4969, 109
        %v4993 = vpop.permute.xlu0 %4992
        %4994 = vrot.lane.b32.xlu0 %v4970, 109
        %v4995 = vpop.permute.xlu0 %4994
        %4996 = vrot.lane.b32.xlu0 %v4971, 109
        %v4997 = vpop.permute.xlu0 %4996
        %4998 = vrot.lane.b32.xlu0 %v4972, 109
        %v4999 = vpop.permute.xlu0 %4998
        %v5000 = vsel %vm653, %v4983, %v4985
        %v5001 = vsel %vm653, %v4985, %v4987
        %v5002 = vsel %vm653, %v4987, %v4989
        %v5003 = vsel %vm653, %v4989, %v4991
        %v5004 = vsel %vm653, %v4991, %v4993
        %v5005 = vsel %vm653, %v4993, %v4995
        %v5006 = vsel %vm653, %v4995, %v4997
        %v5007 = vsel %vm653, %v4997, %v4999
        %5016 = vst [vmem:[#allocation3 + $0x80] sm:$0xff] %v5000
        %5017 = vst [vmem:[#allocation3 + $0x88] sm:$0xff] %v5001
        %5018 = vst [vmem:[#allocation3 + $0x90] sm:$0xff] %v5002
        %5019 = vst [vmem:[#allocation3 + $0x98] sm:$0xff] %v5003
        %5020 = vst [vmem:[#allocation3 + $0xa0] sm:$0xff] %v5004
        %5021 = vst [vmem:[#allocation3 + $0xa8] sm:$0xff] %v5005
        %5022 = vst [vmem:[#allocation3 + $0xb0] sm:$0xff] %v5006
        %5023 = vst [vmem:[#allocation3 + $0xb8] sm:$0xff] %v5007
        %v5024 = vld [vmem:[#allocation2] sm:$0xff]
        %v5025 = vld [vmem:[#allocation2 + $0x8] sm:$0xff]
        %v5026 = vld [vmem:[#allocation2 + $0x10] sm:$0xff]
        %v5027 = vld [vmem:[#allocation2 + $0x18] sm:$0xff]
        %v5028 = vld [vmem:[#allocation2 + $0x20] sm:$0xff]
        %v5029 = vld [vmem:[#allocation2 + $0x28] sm:$0xff]
        %v5030 = vld [vmem:[#allocation2 + $0x30] sm:$0xff]
        %v5031 = vld [vmem:[#allocation2 + $0x38] sm:$0xff]
        %v5032 = vld [vmem:[#allocation2 + $0x40] sm:$0xff]
        %5042 = vrot.lane.b32.xlu0 %v5024, 101
        %v5043 = vpop.permute.xlu0 %5042
        %5044 = vrot.lane.b32.xlu0 %v5025, 101
        %v5045 = vpop.permute.xlu0 %5044
        %5046 = vrot.lane.b32.xlu0 %v5026, 101
        %v5047 = vpop.permute.xlu0 %5046
        %5048 = vrot.lane.b32.xlu0 %v5027, 101
        %v5049 = vpop.permute.xlu0 %5048
        %5050 = vrot.lane.b32.xlu0 %v5028, 101
        %v5051 = vpop.permute.xlu0 %5050
        %5052 = vrot.lane.b32.xlu0 %v5029, 101
        %v5053 = vpop.permute.xlu0 %5052
        %5054 = vrot.lane.b32.xlu0 %v5030, 101
        %v5055 = vpop.permute.xlu0 %5054
        %5056 = vrot.lane.b32.xlu0 %v5031, 101
        %v5057 = vpop.permute.xlu0 %5056
        %5058 = vrot.lane.b32.xlu0 %v5032, 101
        %v5059 = vpop.permute.xlu0 %5058
        %v5060 = vsel %vm714, %v5043, %v5045
        %v5061 = vsel %vm714, %v5045, %v5047
        %v5062 = vsel %vm714, %v5047, %v5049
        %v5063 = vsel %vm714, %v5049, %v5051
        %v5064 = vsel %vm714, %v5051, %v5053
        %v5065 = vsel %vm714, %v5053, %v5055
        %v5066 = vsel %vm714, %v5055, %v5057
        %v5067 = vsel %vm714, %v5057, %v5059
        %5076 = vst [vmem:[#allocation3 + $0xc0] sm:$0xff] %v5060
        %5077 = vst [vmem:[#allocation3 + $0xc8] sm:$0xff] %v5061
        %5078 = vst [vmem:[#allocation3 + $0xd0] sm:$0xff] %v5062
        %5079 = vst [vmem:[#allocation3 + $0xd8] sm:$0xff] %v5063
        %5080 = vst [vmem:[#allocation3 + $0xe0] sm:$0xff] %v5064
        %5081 = vst [vmem:[#allocation3 + $0xe8] sm:$0xff] %v5065
        %5082 = vst [vmem:[#allocation3 + $0xf0] sm:$0xff] %v5066
        %5083 = vst [vmem:[#allocation3 + $0xf8] sm:$0xff] %v5067
        %v5084 = vld [vmem:[#allocation2] sm:$0xff]
        %v5085 = vld [vmem:[#allocation2 + $0x8] sm:$0xff]
        %v5086 = vld [vmem:[#allocation2 + $0x10] sm:$0xff]
        %v5087 = vld [vmem:[#allocation2 + $0x18] sm:$0xff]
        %v5088 = vld [vmem:[#allocation2 + $0x20] sm:$0xff]
        %v5089 = vld [vmem:[#allocation2 + $0x28] sm:$0xff]
        %v5090 = vld [vmem:[#allocation2 + $0x30] sm:$0xff]
        %v5091 = vld [vmem:[#allocation2 + $0x38] sm:$0xff]
        %v5092 = vld [vmem:[#allocation2 + $0x40] sm:$0xff]
        %5102 = vrot.lane.b32.xlu0 %v5084, 100
        %v5103 = vpop.permute.xlu0 %5102
        %5104 = vrot.lane.b32.xlu0 %v5085, 100
        %v5105 = vpop.permute.xlu0 %5104
        %5106 = vrot.lane.b32.xlu0 %v5086, 100
        %v5107 = vpop.permute.xlu0 %5106
        %5108 = vrot.lane.b32.xlu0 %v5087, 100
        %v5109 = vpop.permute.xlu0 %5108
        %5110 = vrot.lane.b32.xlu0 %v5088, 100
        %v5111 = vpop.permute.xlu0 %5110
        %5112 = vrot.lane.b32.xlu0 %v5089, 100
        %v5113 = vpop.permute.xlu0 %5112
        %5114 = vrot.lane.b32.xlu0 %v5090, 100
        %v5115 = vpop.permute.xlu0 %5114
        %5116 = vrot.lane.b32.xlu0 %v5091, 100
        %v5117 = vpop.permute.xlu0 %5116
        %5118 = vrot.lane.b32.xlu0 %v5092, 100
        %v5119 = vpop.permute.xlu0 %5118
        %v5120 = vsel %vm775, %v5103, %v5105
        %v5121 = vsel %vm775, %v5105, %v5107
        %v5122 = vsel %vm775, %v5107, %v5109
        %v5123 = vsel %vm775, %v5109, %v5111
        %v5124 = vsel %vm775, %v5111, %v5113
        %v5125 = vsel %vm775, %v5113, %v5115
        %v5126 = vsel %vm775, %v5115, %v5117
        %v5127 = vsel %vm775, %v5117, %v5119
        %5136 = vst [vmem:[#allocation3 + $0x100] sm:$0xff] %v5120
        %5137 = vst [vmem:[#allocation3 + $0x108] sm:$0xff] %v5121
        %5138 = vst [vmem:[#allocation3 + $0x110] sm:$0xff] %v5122
        %5139 = vst [vmem:[#allocation3 + $0x118] sm:$0xff] %v5123
        %5140 = vst [vmem:[#allocation3 + $0x120] sm:$0xff] %v5124
        %5141 = vst [vmem:[#allocation3 + $0x128] sm:$0xff] %v5125
        %5142 = vst [vmem:[#allocation3 + $0x130] sm:$0xff] %v5126
        %5143 = vst [vmem:[#allocation3 + $0x138] sm:$0xff] %v5127
        %v5144 = vld [vmem:[#allocation2] sm:$0xff]
        %v5145 = vld [vmem:[#allocation2 + $0x8] sm:$0xff]
        %v5146 = vld [vmem:[#allocation2 + $0x10] sm:$0xff]
        %v5147 = vld [vmem:[#allocation2 + $0x18] sm:$0xff]
        %v5148 = vld [vmem:[#allocation2 + $0x20] sm:$0xff]
        %v5149 = vld [vmem:[#allocation2 + $0x28] sm:$0xff]
        %v5150 = vld [vmem:[#allocation2 + $0x30] sm:$0xff]
        %v5151 = vld [vmem:[#allocation2 + $0x38] sm:$0xff]
        %v5152 = vld [vmem:[#allocation2 + $0x40] sm:$0xff]
        %5162 = vrot.lane.b32.xlu0 %v5144, 99
        %v5163 = vpop.permute.xlu0 %5162
        %5164 = vrot.lane.b32.xlu0 %v5145, 99
        %v5165 = vpop.permute.xlu0 %5164
        %5166 = vrot.lane.b32.xlu0 %v5146, 99
        %v5167 = vpop.permute.xlu0 %5166
        %5168 = vrot.lane.b32.xlu0 %v5147, 99
        %v5169 = vpop.permute.xlu0 %5168
        %5170 = vrot.lane.b32.xlu0 %v5148, 99
        %v5171 = vpop.permute.xlu0 %5170
        %5172 = vrot.lane.b32.xlu0 %v5149, 99
        %v5173 = vpop.permute.xlu0 %5172
        %5174 = vrot.lane.b32.xlu0 %v5150, 99
        %v5175 = vpop.permute.xlu0 %5174
        %5176 = vrot.lane.b32.xlu0 %v5151, 99
        %v5177 = vpop.permute.xlu0 %5176
        %5178 = vrot.lane.b32.xlu0 %v5152, 99
        %v5179 = vpop.permute.xlu0 %5178
        %v5180 = vsel %vm836, %v5163, %v5165
        %v5181 = vsel %vm836, %v5165, %v5167
        %v5182 = vsel %vm836, %v5167, %v5169
        %v5183 = vsel %vm836, %v5169, %v5171
        %v5184 = vsel %vm836, %v5171, %v5173
        %v5185 = vsel %vm836, %v5173, %v5175
        %v5186 = vsel %vm836, %v5175, %v5177
        %v5187 = vsel %vm836, %v5177, %v5179
        %5196 = vst [vmem:[#allocation3 + $0x140] sm:$0xff] %v5180
        %5197 = vst [vmem:[#allocation3 + $0x148] sm:$0xff] %v5181
        %5198 = vst [vmem:[#allocation3 + $0x150] sm:$0xff] %v5182
        %5199 = vst [vmem:[#allocation3 + $0x158] sm:$0xff] %v5183
        %5200 = vst [vmem:[#allocation3 + $0x160] sm:$0xff] %v5184
        %5201 = vst [vmem:[#allocation3 + $0x168] sm:$0xff] %v5185
        %5202 = vst [vmem:[#allocation3 + $0x170] sm:$0xff] %v5186
        %5203 = vst [vmem:[#allocation3 + $0x178] sm:$0xff] %v5187
        %v5204 = vld [vmem:[#allocation2] sm:$0xff]
        %v5205 = vld [vmem:[#allocation2 + $0x8] sm:$0xff]
        %v5206 = vld [vmem:[#allocation2 + $0x10] sm:$0xff]
        %v5207 = vld [vmem:[#allocation2 + $0x18] sm:$0xff]
        %v5208 = vld [vmem:[#allocation2 + $0x20] sm:$0xff]
        %v5209 = vld [vmem:[#allocation2 + $0x28] sm:$0xff]
        %v5210 = vld [vmem:[#allocation2 + $0x30] sm:$0xff]
        %v5211 = vld [vmem:[#allocation2 + $0x38] sm:$0xff]
        %v5212 = vld [vmem:[#allocation2 + $0x40] sm:$0xff]
        %5222 = vrot.lane.b32.xlu0 %v5204, 91
        %v5223 = vpop.permute.xlu0 %5222
        %5224 = vrot.lane.b32.xlu0 %v5205, 91
        %v5225 = vpop.permute.xlu0 %5224
        %5226 = vrot.lane.b32.xlu0 %v5206, 91
        %v5227 = vpop.permute.xlu0 %5226
        %5228 = vrot.lane.b32.xlu0 %v5207, 91
        %v5229 = vpop.permute.xlu0 %5228
        %5230 = vrot.lane.b32.xlu0 %v5208, 91
        %v5231 = vpop.permute.xlu0 %5230
        %5232 = vrot.lane.b32.xlu0 %v5209, 91
        %v5233 = vpop.permute.xlu0 %5232
        %5234 = vrot.lane.b32.xlu0 %v5210, 91
        %v5235 = vpop.permute.xlu0 %5234
        %5236 = vrot.lane.b32.xlu0 %v5211, 91
        %v5237 = vpop.permute.xlu0 %5236
        %5238 = vrot.lane.b32.xlu0 %v5212, 91
        %v5239 = vpop.permute.xlu0 %5238
        %v5240 = vsel %vm897, %v5223, %v5225
        %v5241 = vsel %vm897, %v5225, %v5227
        %v5242 = vsel %vm897, %v5227, %v5229
        %v5243 = vsel %vm897, %v5229, %v5231
        %v5244 = vsel %vm897, %v5231, %v5233
        %v5245 = vsel %vm897, %v5233, %v5235
        %v5246 = vsel %vm897, %v5235, %v5237
        %v5247 = vsel %vm897, %v5237, %v5239
        %5256 = vst [vmem:[#allocation3 + $0x180] sm:$0xff] %v5240
        %5257 = vst [vmem:[#allocation3 + $0x188] sm:$0xff] %v5241
        %5258 = vst [vmem:[#allocation3 + $0x190] sm:$0xff] %v5242
        %5259 = vst [vmem:[#allocation3 + $0x198] sm:$0xff] %v5243
        %5260 = vst [vmem:[#allocation3 + $0x1a0] sm:$0xff] %v5244
        %5261 = vst [vmem:[#allocation3 + $0x1a8] sm:$0xff] %v5245
        %5262 = vst [vmem:[#allocation3 + $0x1b0] sm:$0xff] %v5246
        %5263 = vst [vmem:[#allocation3 + $0x1b8] sm:$0xff] %v5247
        %v5264 = vld [vmem:[#allocation2] sm:$0xff]
        %v5265 = vld [vmem:[#allocation2 + $0x8] sm:$0xff]
        %v5266 = vld [vmem:[#allocation2 + $0x10] sm:$0xff]
        %v5267 = vld [vmem:[#allocation2 + $0x18] sm:$0xff]
        %v5268 = vld [vmem:[#allocation2 + $0x20] sm:$0xff]
        %v5269 = vld [vmem:[#allocation2 + $0x28] sm:$0xff]
        %v5270 = vld [vmem:[#allocation2 + $0x30] sm:$0xff]
        %v5271 = vld [vmem:[#allocation2 + $0x38] sm:$0xff]
        %v5272 = vld [vmem:[#allocation2 + $0x40] sm:$0xff]
        %5282 = vrot.lane.b32.xlu0 %v5264, 90
        %v5283 = vpop.permute.xlu0 %5282
        %5284 = vrot.lane.b32.xlu0 %v5265, 90
        %v5285 = vpop.permute.xlu0 %5284
        %5286 = vrot.lane.b32.xlu0 %v5266, 90
        %v5287 = vpop.permute.xlu0 %5286
        %5288 = vrot.lane.b32.xlu0 %v5267, 90
        %v5289 = vpop.permute.xlu0 %5288
        %5290 = vrot.lane.b32.xlu0 %v5268, 90
        %v5291 = vpop.permute.xlu0 %5290
        %5292 = vrot.lane.b32.xlu0 %v5269, 90
        %v5293 = vpop.permute.xlu0 %5292
        %5294 = vrot.lane.b32.xlu0 %v5270, 90
        %v5295 = vpop.permute.xlu0 %5294
        %5296 = vrot.lane.b32.xlu0 %v5271, 90
        %v5297 = vpop.permute.xlu0 %5296
        %5298 = vrot.lane.b32.xlu0 %v5272, 90
        %v5299 = vpop.permute.xlu0 %5298
        %v5300 = vsel %vm958, %v5283, %v5285
        %v5301 = vsel %vm958, %v5285, %v5287
        %v5302 = vsel %vm958, %v5287, %v5289
        %v5303 = vsel %vm958, %v5289, %v5291
        %v5304 = vsel %vm958, %v5291, %v5293
        %v5305 = vsel %vm958, %v5293, %v5295
        %v5306 = vsel %vm958, %v5295, %v5297
        %v5307 = vsel %vm958, %v5297, %v5299
        %5316 = vst [vmem:[#allocation3 + $0x1c0] sm:$0xff] %v5300
        %5317 = vst [vmem:[#allocation3 + $0x1c8] sm:$0xff] %v5301
        %5318 = vst [vmem:[#allocation3 + $0x1d0] sm:$0xff] %v5302
        %5319 = vst [vmem:[#allocation3 + $0x1d8] sm:$0xff] %v5303
        %5320 = vst [vmem:[#allocation3 + $0x1e0] sm:$0xff] %v5304
        %5321 = vst [vmem:[#allocation3 + $0x1e8] sm:$0xff] %v5305
        %5322 = vst [vmem:[#allocation3 + $0x1f0] sm:$0xff] %v5306
        %5323 = vst [vmem:[#allocation3 + $0x1f8] sm:$0xff] %v5307
        %v5324 = vld [vmem:[#allocation2] sm:$0xff]
        %v5325 = vld [vmem:[#allocation2 + $0x8] sm:$0xff]
        %v5326 = vld [vmem:[#allocation2 + $0x10] sm:$0xff]
        %v5327 = vld [vmem:[#allocation2 + $0x18] sm:$0xff]
        %v5328 = vld [vmem:[#allocation2 + $0x20] sm:$0xff]
        %v5329 = vld [vmem:[#allocation2 + $0x28] sm:$0xff]
        %v5330 = vld [vmem:[#allocation2 + $0x30] sm:$0xff]
        %v5331 = vld [vmem:[#allocation2 + $0x38] sm:$0xff]
        %v5332 = vld [vmem:[#allocation2 + $0x40] sm:$0xff]
        %5342 = vrot.lane.b32.xlu0 %v5324, 89
        %v5343 = vpop.permute.xlu0 %5342
        %5344 = vrot.lane.b32.xlu0 %v5325, 89
        %v5345 = vpop.permute.xlu0 %5344
        %5346 = vrot.lane.b32.xlu0 %v5326, 89
        %v5347 = vpop.permute.xlu0 %5346
        %5348 = vrot.lane.b32.xlu0 %v5327, 89
        %v5349 = vpop.permute.xlu0 %5348
        %5350 = vrot.lane.b32.xlu0 %v5328, 89
        %v5351 = vpop.permute.xlu0 %5350
        %5352 = vrot.lane.b32.xlu0 %v5329, 89
        %v5353 = vpop.permute.xlu0 %5352
        %5354 = vrot.lane.b32.xlu0 %v5330, 89
        %v5355 = vpop.permute.xlu0 %5354
        %5356 = vrot.lane.b32.xlu0 %v5331, 89
        %v5357 = vpop.permute.xlu0 %5356
        %5358 = vrot.lane.b32.xlu0 %v5332, 89
        %v5359 = vpop.permute.xlu0 %5358
        %v5360 = vsel %vm1019, %v5343, %v5345
        %v5361 = vsel %vm1019, %v5345, %v5347
        %v5362 = vsel %vm1019, %v5347, %v5349
        %v5363 = vsel %vm1019, %v5349, %v5351
        %v5364 = vsel %vm1019, %v5351, %v5353
        %v5365 = vsel %vm1019, %v5353, %v5355
        %v5366 = vsel %vm1019, %v5355, %v5357
        %v5367 = vsel %vm1019, %v5357, %v5359
        %5376 = vst [vmem:[#allocation3 + $0x200] sm:$0xff] %v5360
        %5377 = vst [vmem:[#allocation3 + $0x208] sm:$0xff] %v5361
        %5378 = vst [vmem:[#allocation3 + $0x210] sm:$0xff] %v5362
        %5379 = vst [vmem:[#allocation3 + $0x218] sm:$0xff] %v5363
        %5380 = vst [vmem:[#allocation3 + $0x220] sm:$0xff] %v5364
        %5381 = vst [vmem:[#allocation3 + $0x228] sm:$0xff] %v5365
        %5382 = vst [vmem:[#allocation3 + $0x230] sm:$0xff] %v5366
        %5383 = vst [vmem:[#allocation3 + $0x238] sm:$0xff] %v5367
        %v5384 = vld [vmem:[#allocation2] sm:$0xff]
        %v5385 = vld [vmem:[#allocation2 + $0x8] sm:$0xff]
        %v5386 = vld [vmem:[#allocation2 + $0x10] sm:$0xff]
        %v5387 = vld [vmem:[#allocation2 + $0x18] sm:$0xff]
        %v5388 = vld [vmem:[#allocation2 + $0x20] sm:$0xff]
        %v5389 = vld [vmem:[#allocation2 + $0x28] sm:$0xff]
        %v5390 = vld [vmem:[#allocation2 + $0x30] sm:$0xff]
        %v5391 = vld [vmem:[#allocation2 + $0x38] sm:$0xff]
        %v5392 = vld [vmem:[#allocation2 + $0x40] sm:$0xff]
        %5402 = vrot.lane.b32.xlu0 %v5384, 11
        %v5403 = vpop.permute.xlu0 %5402
        %5404 = vrot.lane.b32.xlu0 %v5385, 11
        %v5405 = vpop.permute.xlu0 %5404
        %5406 = vrot.lane.b32.xlu0 %v5386, 11
        %v5407 = vpop.permute.xlu0 %5406
        %5408 = vrot.lane.b32.xlu0 %v5387, 11
        %v5409 = vpop.permute.xlu0 %5408
        %5410 = vrot.lane.b32.xlu0 %v5388, 11
        %v5411 = vpop.permute.xlu0 %5410
        %5412 = vrot.lane.b32.xlu0 %v5389, 11
        %v5413 = vpop.permute.xlu0 %5412
        %5414 = vrot.lane.b32.xlu0 %v5390, 11
        %v5415 = vpop.permute.xlu0 %5414
        %5416 = vrot.lane.b32.xlu0 %v5391, 11
        %v5417 = vpop.permute.xlu0 %5416
        %5418 = vrot.lane.b32.xlu0 %v5392, 11
        %v5419 = vpop.permute.xlu0 %5418
        %v5420 = vsel %vm1080, %v5403, %v5405
        %v5421 = vsel %vm1080, %v5405, %v5407
        %v5422 = vsel %vm1080, %v5407, %v5409
        %v5423 = vsel %vm1080, %v5409, %v5411
        %v5424 = vsel %vm1080, %v5411, %v5413
        %v5425 = vsel %vm1080, %v5413, %v5415
        %v5426 = vsel %vm1080, %v5415, %v5417
        %v5427 = vsel %vm1080, %v5417, %v5419
        %5436 = vst [vmem:[#allocation3 + $0x240] sm:$0xff] %v5420
        %5437 = vst [vmem:[#allocation3 + $0x248] sm:$0xff] %v5421
        %5438 = vst [vmem:[#allocation3 + $0x250] sm:$0xff] %v5422
        %5439 = vst [vmem:[#allocation3 + $0x258] sm:$0xff] %v5423
        %5440 = vst [vmem:[#allocation3 + $0x260] sm:$0xff] %v5424
        %5441 = vst [vmem:[#allocation3 + $0x268] sm:$0xff] %v5425
        %5442 = vst [vmem:[#allocation3 + $0x270] sm:$0xff] %v5426
        %5443 = vst [vmem:[#allocation3 + $0x278] sm:$0xff] %v5427
        %v5444 = vld [vmem:[#allocation2] sm:$0xff]
        %v5445 = vld [vmem:[#allocation2 + $0x8] sm:$0xff]
        %v5446 = vld [vmem:[#allocation2 + $0x10] sm:$0xff]
        %v5447 = vld [vmem:[#allocation2 + $0x18] sm:$0xff]
        %v5448 = vld [vmem:[#allocation2 + $0x20] sm:$0xff]
        %v5449 = vld [vmem:[#allocation2 + $0x28] sm:$0xff]
        %v5450 = vld [vmem:[#allocation2 + $0x30] sm:$0xff]
        %v5451 = vld [vmem:[#allocation2 + $0x38] sm:$0xff]
        %v5452 = vld [vmem:[#allocation2 + $0x40] sm:$0xff]
        %5462 = vrot.lane.b32.xlu0 %v5444, 10
        %v5463 = vpop.permute.xlu0 %5462
        %5464 = vrot.lane.b32.xlu0 %v5445, 10
        %v5465 = vpop.permute.xlu0 %5464
        %5466 = vrot.lane.b32.xlu0 %v5446, 10
        %v5467 = vpop.permute.xlu0 %5466
        %5468 = vrot.lane.b32.xlu0 %v5447, 10
        %v5469 = vpop.permute.xlu0 %5468
        %5470 = vrot.lane.b32.xlu0 %v5448, 10
        %v5471 = vpop.permute.xlu0 %5470
        %5472 = vrot.lane.b32.xlu0 %v5449, 10
        %v5473 = vpop.permute.xlu0 %5472
        %5474 = vrot.lane.b32.xlu0 %v5450, 10
        %v5475 = vpop.permute.xlu0 %5474
        %5476 = vrot.lane.b32.xlu0 %v5451, 10
        %v5477 = vpop.permute.xlu0 %5476
        %5478 = vrot.lane.b32.xlu0 %v5452, 10
        %v5479 = vpop.permute.xlu0 %5478
        %v5480 = vsel %vm1141, %v5463, %v5465
        %v5481 = vsel %vm1141, %v5465, %v5467
        %v5482 = vsel %vm1141, %v5467, %v5469
        %v5483 = vsel %vm1141, %v5469, %v5471
        %v5484 = vsel %vm1141, %v5471, %v5473
        %v5485 = vsel %vm1141, %v5473, %v5475
        %v5486 = vsel %vm1141, %v5475, %v5477
        %v5487 = vsel %vm1141, %v5477, %v5479
        %5496 = vst [vmem:[#allocation3 + $0x280] sm:$0xff] %v5480
        %5497 = vst [vmem:[#allocation3 + $0x288] sm:$0xff] %v5481
        %5498 = vst [vmem:[#allocation3 + $0x290] sm:$0xff] %v5482
        %5499 = vst [vmem:[#allocation3 + $0x298] sm:$0xff] %v5483
        %5500 = vst [vmem:[#allocation3 + $0x2a0] sm:$0xff] %v5484
        %5501 = vst [vmem:[#allocation3 + $0x2a8] sm:$0xff] %v5485
        %5502 = vst [vmem:[#allocation3 + $0x2b0] sm:$0xff] %v5486
        %5503 = vst [vmem:[#allocation3 + $0x2b8] sm:$0xff] %v5487
        %v5504 = vld [vmem:[#allocation2] sm:$0xff]
        %v5505 = vld [vmem:[#allocation2 + $0x8] sm:$0xff]
        %v5506 = vld [vmem:[#allocation2 + $0x10] sm:$0xff]
        %v5507 = vld [vmem:[#allocation2 + $0x18] sm:$0xff]
        %v5508 = vld [vmem:[#allocation2 + $0x20] sm:$0xff]
        %v5509 = vld [vmem:[#allocation2 + $0x28] sm:$0xff]
        %v5510 = vld [vmem:[#allocation2 + $0x30] sm:$0xff]
        %v5511 = vld [vmem:[#allocation2 + $0x38] sm:$0xff]
        %v5512 = vld [vmem:[#allocation2 + $0x40] sm:$0xff]
        %5522 = vrot.lane.b32.xlu0 %v5504, 9
        %v5523 = vpop.permute.xlu0 %5522
        %5524 = vrot.lane.b32.xlu0 %v5505, 9
        %v5525 = vpop.permute.xlu0 %5524
        %5526 = vrot.lane.b32.xlu0 %v5506, 9
        %v5527 = vpop.permute.xlu0 %5526
        %5528 = vrot.lane.b32.xlu0 %v5507, 9
        %v5529 = vpop.permute.xlu0 %5528
        %5530 = vrot.lane.b32.xlu0 %v5508, 9
        %v5531 = vpop.permute.xlu0 %5530
        %5532 = vrot.lane.b32.xlu0 %v5509, 9
        %v5533 = vpop.permute.xlu0 %5532
        %5534 = vrot.lane.b32.xlu0 %v5510, 9
        %v5535 = vpop.permute.xlu0 %5534
        %5536 = vrot.lane.b32.xlu0 %v5511, 9
        %v5537 = vpop.permute.xlu0 %5536
        %5538 = vrot.lane.b32.xlu0 %v5512, 9
        %v5539 = vpop.permute.xlu0 %5538
        %v5540 = vsel %vm1202, %v5523, %v5525
        %v5541 = vsel %vm1202, %v5525, %v5527
        %v5542 = vsel %vm1202, %v5527, %v5529
        %v5543 = vsel %vm1202, %v5529, %v5531
        %v5544 = vsel %vm1202, %v5531, %v5533
        %v5545 = vsel %vm1202, %v5533, %v5535
        %v5546 = vsel %vm1202, %v5535, %v5537
        %v5547 = vsel %vm1202, %v5537, %v5539
        %5556 = vst [vmem:[#allocation3 + $0x2c0] sm:$0xff] %v5540
        %5557 = vst [vmem:[#allocation3 + $0x2c8] sm:$0xff] %v5541
        %5558 = vst [vmem:[#allocation3 + $0x2d0] sm:$0xff] %v5542
        %5559 = vst [vmem:[#allocation3 + $0x2d8] sm:$0xff] %v5543
        %5560 = vst [vmem:[#allocation3 + $0x2e0] sm:$0xff] %v5544
        %5561 = vst [vmem:[#allocation3 + $0x2e8] sm:$0xff] %v5545
        %5562 = vst [vmem:[#allocation3 + $0x2f0] sm:$0xff] %v5546
        %5563 = vst [vmem:[#allocation3 + $0x2f8] sm:$0xff] %v5547
        %v5564 = vld [vmem:[#allocation2] sm:$0xff]
        %v5565 = vld [vmem:[#allocation2 + $0x8] sm:$0xff]
        %v5566 = vld [vmem:[#allocation2 + $0x10] sm:$0xff]
        %v5567 = vld [vmem:[#allocation2 + $0x18] sm:$0xff]
        %v5568 = vld [vmem:[#allocation2 + $0x20] sm:$0xff]
        %v5569 = vld [vmem:[#allocation2 + $0x28] sm:$0xff]
        %v5570 = vld [vmem:[#allocation2 + $0x30] sm:$0xff]
        %v5571 = vld [vmem:[#allocation2 + $0x38] sm:$0xff]
        %v5572 = vld [vmem:[#allocation2 + $0x40] sm:$0xff]
        %5582 = vrot.lane.b32.xlu0 %v5564, 1
        %v5583 = vpop.permute.xlu0 %5582
        %5584 = vrot.lane.b32.xlu0 %v5565, 1
        %v5585 = vpop.permute.xlu0 %5584
        %5586 = vrot.lane.b32.xlu0 %v5566, 1
        %v5587 = vpop.permute.xlu0 %5586
        %5588 = vrot.lane.b32.xlu0 %v5567, 1
        %v5589 = vpop.permute.xlu0 %5588
        %5590 = vrot.lane.b32.xlu0 %v5568, 1
        %v5591 = vpop.permute.xlu0 %5590
        %5592 = vrot.lane.b32.xlu0 %v5569, 1
        %v5593 = vpop.permute.xlu0 %5592
        %5594 = vrot.lane.b32.xlu0 %v5570, 1
        %v5595 = vpop.permute.xlu0 %5594
        %5596 = vrot.lane.b32.xlu0 %v5571, 1
        %v5597 = vpop.permute.xlu0 %5596
        %5598 = vrot.lane.b32.xlu0 %v5572, 1
        %v5599 = vpop.permute.xlu0 %5598
        %v5600 = vsel %vm1263, %v5583, %v5585
        %v5601 = vsel %vm1263, %v5585, %v5587
        %v5602 = vsel %vm1263, %v5587, %v5589
        %v5603 = vsel %vm1263, %v5589, %v5591
        %v5604 = vsel %vm1263, %v5591, %v5593
        %v5605 = vsel %vm1263, %v5593, %v5595
        %v5606 = vsel %vm1263, %v5595, %v5597
        %v5607 = vsel %vm1263, %v5597, %v5599
        %5616 = vst [vmem:[#allocation3 + $0x300] sm:$0xff] %v5600
        %5617 = vst [vmem:[#allocation3 + $0x308] sm:$0xff] %v5601
        %5618 = vst [vmem:[#allocation3 + $0x310] sm:$0xff] %v5602
        %5619 = vst [vmem:[#allocation3 + $0x318] sm:$0xff] %v5603
        %5620 = vst [vmem:[#allocation3 + $0x320] sm:$0xff] %v5604
        %5621 = vst [vmem:[#allocation3 + $0x328] sm:$0xff] %v5605
        %5622 = vst [vmem:[#allocation3 + $0x330] sm:$0xff] %v5606
        %5623 = vst [vmem:[#allocation3 + $0x338] sm:$0xff] %v5607
        %v5624 = vld [vmem:[#allocation2 + $0x8] sm:$0xff]
        %v5625 = vld [vmem:[#allocation2 + $0x10] sm:$0xff]
        %v5626 = vld [vmem:[#allocation2 + $0x18] sm:$0xff]
        %v5627 = vld [vmem:[#allocation2 + $0x20] sm:$0xff]
        %v5628 = vld [vmem:[#allocation2 + $0x28] sm:$0xff]
        %v5629 = vld [vmem:[#allocation2 + $0x30] sm:$0xff]
        %v5630 = vld [vmem:[#allocation2 + $0x38] sm:$0xff]
        %v5631 = vld [vmem:[#allocation2 + $0x40] sm:$0xff]
        %5632 = vst [vmem:[#allocation3 + $0x340] sm:$0xff] %v5624
        %5633 = vst [vmem:[#allocation3 + $0x348] sm:$0xff] %v5625
        %5634 = vst [vmem:[#allocation3 + $0x350] sm:$0xff] %v5626
        %5635 = vst [vmem:[#allocation3 + $0x358] sm:$0xff] %v5627
        %5636 = vst [vmem:[#allocation3 + $0x360] sm:$0xff] %v5628
        %5637 = vst [vmem:[#allocation3 + $0x368] sm:$0xff] %v5629
        %5638 = vst [vmem:[#allocation3 + $0x370] sm:$0xff] %v5630
        %5639 = vst [vmem:[#allocation3 + $0x378] sm:$0xff] %v5631
        %v5640 = vld [vmem:[#allocation2 + $0x8] sm:$0xff]
        %v5641 = vld [vmem:[#allocation2 + $0x10] sm:$0xff]
        %v5642 = vld [vmem:[#allocation2 + $0x18] sm:$0xff]
        %v5643 = vld [vmem:[#allocation2 + $0x20] sm:$0xff]
        %v5644 = vld [vmem:[#allocation2 + $0x28] sm:$0xff]
        %v5645 = vld [vmem:[#allocation2 + $0x30] sm:$0xff]
        %v5646 = vld [vmem:[#allocation2 + $0x38] sm:$0xff]
        %v5647 = vld [vmem:[#allocation2 + $0x40] sm:$0xff]
        %v5648 = vld [vmem:[#allocation2 + $0x48] sm:$0xff]
        %5658 = vrot.lane.b32.xlu0 %v5640, 127
        %v5659 = vpop.permute.xlu0 %5658
        %5660 = vrot.lane.b32.xlu0 %v5641, 127
        %v5661 = vpop.permute.xlu0 %5660
        %5662 = vrot.lane.b32.xlu0 %v5642, 127
        %v5663 = vpop.permute.xlu0 %5662
        %5664 = vrot.lane.b32.xlu0 %v5643, 127
        %v5665 = vpop.permute.xlu0 %5664
        %5666 = vrot.lane.b32.xlu0 %v5644, 127
        %v5667 = vpop.permute.xlu0 %5666
        %5668 = vrot.lane.b32.xlu0 %v5645, 127
        %v5669 = vpop.permute.xlu0 %5668
        %5670 = vrot.lane.b32.xlu0 %v5646, 127
        %v5671 = vpop.permute.xlu0 %5670
        %5672 = vrot.lane.b32.xlu0 %v5647, 127
        %v5673 = vpop.permute.xlu0 %5672
        %5674 = vrot.lane.b32.xlu0 %v5648, 127
        %v5675 = vpop.permute.xlu0 %5674
        %v5676 = vsel %vm1340, %v5659, %v5661
        %v5677 = vsel %vm1340, %v5661, %v5663
        %v5678 = vsel %vm1340, %v5663, %v5665
        %v5679 = vsel %vm1340, %v5665, %v5667
        %v5680 = vsel %vm1340, %v5667, %v5669
        %v5681 = vsel %vm1340, %v5669, %v5671
        %v5682 = vsel %vm1340, %v5671, %v5673
        %v5683 = vsel %vm1340, %v5673, %v5675
        %5692 = vst [vmem:[#allocation3 + $0x380] sm:$0xff] %v5676
        %5693 = vst [vmem:[#allocation3 + $0x388] sm:$0xff] %v5677
        %5694 = vst [vmem:[#allocation3 + $0x390] sm:$0xff] %v5678
        %5695 = vst [vmem:[#allocation3 + $0x398] sm:$0xff] %v5679
        %5696 = vst [vmem:[#allocation3 + $0x3a0] sm:$0xff] %v5680
        %5697 = vst [vmem:[#allocation3 + $0x3a8] sm:$0xff] %v5681
        %5698 = vst [vmem:[#allocation3 + $0x3b0] sm:$0xff] %v5682
        %5699 = vst [vmem:[#allocation3 + $0x3b8] sm:$0xff] %v5683
        %v5700 = vld [vmem:[#allocation2 + $0x8] sm:$0xff]
        %v5701 = vld [vmem:[#allocation2 + $0x10] sm:$0xff]
        %v5702 = vld [vmem:[#allocation2 + $0x18] sm:$0xff]
        %v5703 = vld [vmem:[#allocation2 + $0x20] sm:$0xff]
        %v5704 = vld [vmem:[#allocation2 + $0x28] sm:$0xff]
        %v5705 = vld [vmem:[#allocation2 + $0x30] sm:$0xff]
        %v5706 = vld [vmem:[#allocation2 + $0x38] sm:$0xff]
        %v5707 = vld [vmem:[#allocation2 + $0x40] sm:$0xff]
        %v5708 = vld [vmem:[#allocation2 + $0x48] sm:$0xff]
        %5718 = vrot.lane.b32.xlu0 %v5700, 119
        %v5719 = vpop.permute.xlu0 %5718
        %5720 = vrot.lane.b32.xlu0 %v5701, 119
        %v5721 = vpop.permute.xlu0 %5720
        %5722 = vrot.lane.b32.xlu0 %v5702, 119
        %v5723 = vpop.permute.xlu0 %5722
        %5724 = vrot.lane.b32.xlu0 %v5703, 119
        %v5725 = vpop.permute.xlu0 %5724
        %5726 = vrot.lane.b32.xlu0 %v5704, 119
        %v5727 = vpop.permute.xlu0 %5726
        %5728 = vrot.lane.b32.xlu0 %v5705, 119
        %v5729 = vpop.permute.xlu0 %5728
        %5730 = vrot.lane.b32.xlu0 %v5706, 119
        %v5731 = vpop.permute.xlu0 %5730
        %5732 = vrot.lane.b32.xlu0 %v5707, 119
        %v5733 = vpop.permute.xlu0 %5732
        %5734 = vrot.lane.b32.xlu0 %v5708, 119
        %v5735 = vpop.permute.xlu0 %5734
        %v5736 = vsel %vm1401, %v5719, %v5721
        %v5737 = vsel %vm1401, %v5721, %v5723
        %v5738 = vsel %vm1401, %v5723, %v5725
        %v5739 = vsel %vm1401, %v5725, %v5727
        %v5740 = vsel %vm1401, %v5727, %v5729
        %v5741 = vsel %vm1401, %v5729, %v5731
        %v5742 = vsel %vm1401, %v5731, %v5733
        %v5743 = vsel %vm1401, %v5733, %v5735
        %5752 = vst [vmem:[#allocation3 + $0x3c0] sm:$0xff] %v5736
        %5753 = vst [vmem:[#allocation3 + $0x3c8] sm:$0xff] %v5737
        %5754 = vst [vmem:[#allocation3 + $0x3d0] sm:$0xff] %v5738
        %5755 = vst [vmem:[#allocation3 + $0x3d8] sm:$0xff] %v5739
        %5756 = vst [vmem:[#allocation3 + $0x3e0] sm:$0xff] %v5740
        %5757 = vst [vmem:[#allocation3 + $0x3e8] sm:$0xff] %v5741
        %5758 = vst [vmem:[#allocation3 + $0x3f0] sm:$0xff] %v5742
        %5759 = vst [vmem:[#allocation3 + $0x3f8] sm:$0xff] %v5743
        %v5760 = vld [vmem:[#allocation2 + $0x8] sm:$0xff]
        %v5761 = vld [vmem:[#allocation2 + $0x10] sm:$0xff]
        %v5762 = vld [vmem:[#allocation2 + $0x18] sm:$0xff]
        %v5763 = vld [vmem:[#allocation2 + $0x20] sm:$0xff]
        %v5764 = vld [vmem:[#allocation2 + $0x28] sm:$0xff]
        %v5765 = vld [vmem:[#allocation2 + $0x30] sm:$0xff]
        %v5766 = vld [vmem:[#allocation2 + $0x38] sm:$0xff]
        %v5767 = vld [vmem:[#allocation2 + $0x40] sm:$0xff]
        %v5768 = vld [vmem:[#allocation2 + $0x48] sm:$0xff]
        %5778 = vrot.lane.b32.xlu0 %v5760, 118
        %v5779 = vpop.permute.xlu0 %5778
        %5780 = vrot.lane.b32.xlu0 %v5761, 118
        %v5781 = vpop.permute.xlu0 %5780
        %5782 = vrot.lane.b32.xlu0 %v5762, 118
        %v5783 = vpop.permute.xlu0 %5782
        %5784 = vrot.lane.b32.xlu0 %v5763, 118
        %v5785 = vpop.permute.xlu0 %5784
        %5786 = vrot.lane.b32.xlu0 %v5764, 118
        %v5787 = vpop.permute.xlu0 %5786
        %5788 = vrot.lane.b32.xlu0 %v5765, 118
        %v5789 = vpop.permute.xlu0 %5788
        %5790 = vrot.lane.b32.xlu0 %v5766, 118
        %v5791 = vpop.permute.xlu0 %5790
        %5792 = vrot.lane.b32.xlu0 %v5767, 118
        %v5793 = vpop.permute.xlu0 %5792
        %5794 = vrot.lane.b32.xlu0 %v5768, 118
        %v5795 = vpop.permute.xlu0 %5794
        %v5796 = vsel %vm1462, %v5779, %v5781
        %v5797 = vsel %vm1462, %v5781, %v5783
        %v5798 = vsel %vm1462, %v5783, %v5785
        %v5799 = vsel %vm1462, %v5785, %v5787
        %v5800 = vsel %vm1462, %v5787, %v5789
        %v5801 = vsel %vm1462, %v5789, %v5791
        %v5802 = vsel %vm1462, %v5791, %v5793
        %v5803 = vsel %vm1462, %v5793, %v5795
        %5812 = vst [vmem:[#allocation3 + $0x400] sm:$0xff] %v5796
        %5813 = vst [vmem:[#allocation3 + $0x408] sm:$0xff] %v5797
        %5814 = vst [vmem:[#allocation3 + $0x410] sm:$0xff] %v5798
        %5815 = vst [vmem:[#allocation3 + $0x418] sm:$0xff] %v5799
        %5816 = vst [vmem:[#allocation3 + $0x420] sm:$0xff] %v5800
        %5817 = vst [vmem:[#allocation3 + $0x428] sm:$0xff] %v5801
        %5818 = vst [vmem:[#allocation3 + $0x430] sm:$0xff] %v5802
        %5819 = vst [vmem:[#allocation3 + $0x438] sm:$0xff] %v5803
        %v5820 = vld [vmem:[#allocation2 + $0x8] sm:$0xff]
        %v5821 = vld [vmem:[#allocation2 + $0x10] sm:$0xff]
        %v5822 = vld [vmem:[#allocation2 + $0x18] sm:$0xff]
        %v5823 = vld [vmem:[#allocation2 + $0x20] sm:$0xff]
        %v5824 = vld [vmem:[#allocation2 + $0x28] sm:$0xff]
        %v5825 = vld [vmem:[#allocation2 + $0x30] sm:$0xff]
        %v5826 = vld [vmem:[#allocation2 + $0x38] sm:$0xff]
        %v5827 = vld [vmem:[#allocation2 + $0x40] sm:$0xff]
        %v5828 = vld [vmem:[#allocation2 + $0x48] sm:$0xff]
        %5838 = vrot.lane.b32.xlu0 %v5820, 117
        %v5839 = vpop.permute.xlu0 %5838
        %5840 = vrot.lane.b32.xlu0 %v5821, 117
        %v5841 = vpop.permute.xlu0 %5840
        %5842 = vrot.lane.b32.xlu0 %v5822, 117
        %v5843 = vpop.permute.xlu0 %5842
        %5844 = vrot.lane.b32.xlu0 %v5823, 117
        %v5845 = vpop.permute.xlu0 %5844
        %5846 = vrot.lane.b32.xlu0 %v5824, 117
        %v5847 = vpop.permute.xlu0 %5846
        %5848 = vrot.lane.b32.xlu0 %v5825, 117
        %v5849 = vpop.permute.xlu0 %5848
        %5850 = vrot.lane.b32.xlu0 %v5826, 117
        %v5851 = vpop.permute.xlu0 %5850
        %5852 = vrot.lane.b32.xlu0 %v5827, 117
        %v5853 = vpop.permute.xlu0 %5852
        %5854 = vrot.lane.b32.xlu0 %v5828, 117
        %v5855 = vpop.permute.xlu0 %5854
        %v5856 = vsel %vm1523, %v5839, %v5841
        %v5857 = vsel %vm1523, %v5841, %v5843
        %v5858 = vsel %vm1523, %v5843, %v5845
        %v5859 = vsel %vm1523, %v5845, %v5847
        %v5860 = vsel %vm1523, %v5847, %v5849
        %v5861 = vsel %vm1523, %v5849, %v5851
        %v5862 = vsel %vm1523, %v5851, %v5853
        %v5863 = vsel %vm1523, %v5853, %v5855
        %5872 = vst [vmem:[#allocation3 + $0x440] sm:$0xff] %v5856
        %5873 = vst [vmem:[#allocation3 + $0x448] sm:$0xff] %v5857
        %5874 = vst [vmem:[#allocation3 + $0x450] sm:$0xff] %v5858
        %5875 = vst [vmem:[#allocation3 + $0x458] sm:$0xff] %v5859
        %5876 = vst [vmem:[#allocation3 + $0x460] sm:$0xff] %v5860
        %5877 = vst [vmem:[#allocation3 + $0x468] sm:$0xff] %v5861
        %5878 = vst [vmem:[#allocation3 + $0x470] sm:$0xff] %v5862
        %5879 = vst [vmem:[#allocation3 + $0x478] sm:$0xff] %v5863
        %v5880 = vld [vmem:[#allocation2 + $0x8] sm:$0xff]
        %v5881 = vld [vmem:[#allocation2 + $0x10] sm:$0xff]
        %v5882 = vld [vmem:[#allocation2 + $0x18] sm:$0xff]
        %v5883 = vld [vmem:[#allocation2 + $0x20] sm:$0xff]
        %v5884 = vld [vmem:[#allocation2 + $0x28] sm:$0xff]
        %v5885 = vld [vmem:[#allocation2 + $0x30] sm:$0xff]
        %v5886 = vld [vmem:[#allocation2 + $0x38] sm:$0xff]
        %v5887 = vld [vmem:[#allocation2 + $0x40] sm:$0xff]
        %v5888 = vld [vmem:[#allocation2 + $0x48] sm:$0xff]
        %5898 = vrot.lane.b32.xlu0 %v5880, 39
        %v5899 = vpop.permute.xlu0 %5898
        %5900 = vrot.lane.b32.xlu0 %v5881, 39
        %v5901 = vpop.permute.xlu0 %5900
        %5902 = vrot.lane.b32.xlu0 %v5882, 39
        %v5903 = vpop.permute.xlu0 %5902
        %5904 = vrot.lane.b32.xlu0 %v5883, 39
        %v5905 = vpop.permute.xlu0 %5904
        %5906 = vrot.lane.b32.xlu0 %v5884, 39
        %v5907 = vpop.permute.xlu0 %5906
        %5908 = vrot.lane.b32.xlu0 %v5885, 39
        %v5909 = vpop.permute.xlu0 %5908
        %5910 = vrot.lane.b32.xlu0 %v5886, 39
        %v5911 = vpop.permute.xlu0 %5910
        %5912 = vrot.lane.b32.xlu0 %v5887, 39
        %v5913 = vpop.permute.xlu0 %5912
        %5914 = vrot.lane.b32.xlu0 %v5888, 39
        %v5915 = vpop.permute.xlu0 %5914
        %v5916 = vsel %vm1584, %v5899, %v5901
        %v5917 = vsel %vm1584, %v5901, %v5903
        %v5918 = vsel %vm1584, %v5903, %v5905
        %v5919 = vsel %vm1584, %v5905, %v5907
        %v5920 = vsel %vm1584, %v5907, %v5909
        %v5921 = vsel %vm1584, %v5909, %v5911
        %v5922 = vsel %vm1584, %v5911, %v5913
        %v5923 = vsel %vm1584, %v5913, %v5915
        %5932 = vst [vmem:[#allocation3 + $0x480] sm:$0xff] %v5916
        %5933 = vst [vmem:[#allocation3 + $0x488] sm:$0xff] %v5917
        %5934 = vst [vmem:[#allocation3 + $0x490] sm:$0xff] %v5918
        %5935 = vst [vmem:[#allocation3 + $0x498] sm:$0xff] %v5919
        %5936 = vst [vmem:[#allocation3 + $0x4a0] sm:$0xff] %v5920
        %5937 = vst [vmem:[#allocation3 + $0x4a8] sm:$0xff] %v5921
        %5938 = vst [vmem:[#allocation3 + $0x4b0] sm:$0xff] %v5922
        %5939 = vst [vmem:[#allocation3 + $0x4b8] sm:$0xff] %v5923
        %v5940 = vld [vmem:[#allocation2 + $0x8] sm:$0xff]
        %v5941 = vld [vmem:[#allocation2 + $0x10] sm:$0xff]
        %v5942 = vld [vmem:[#allocation2 + $0x18] sm:$0xff]
        %v5943 = vld [vmem:[#allocation2 + $0x20] sm:$0xff]
        %v5944 = vld [vmem:[#allocation2 + $0x28] sm:$0xff]
        %v5945 = vld [vmem:[#allocation2 + $0x30] sm:$0xff]
        %v5946 = vld [vmem:[#allocation2 + $0x38] sm:$0xff]
        %v5947 = vld [vmem:[#allocation2 + $0x40] sm:$0xff]
        %v5948 = vld [vmem:[#allocation2 + $0x48] sm:$0xff]
        %5958 = vrot.lane.b32.xlu0 %v5940, 38
        %v5959 = vpop.permute.xlu0 %5958
        %5960 = vrot.lane.b32.xlu0 %v5941, 38
        %v5961 = vpop.permute.xlu0 %5960
        %5962 = vrot.lane.b32.xlu0 %v5942, 38
        %v5963 = vpop.permute.xlu0 %5962
        %5964 = vrot.lane.b32.xlu0 %v5943, 38
        %v5965 = vpop.permute.xlu0 %5964
        %5966 = vrot.lane.b32.xlu0 %v5944, 38
        %v5967 = vpop.permute.xlu0 %5966
        %5968 = vrot.lane.b32.xlu0 %v5945, 38
        %v5969 = vpop.permute.xlu0 %5968
        %5970 = vrot.lane.b32.xlu0 %v5946, 38
        %v5971 = vpop.permute.xlu0 %5970
        %5972 = vrot.lane.b32.xlu0 %v5947, 38
        %v5973 = vpop.permute.xlu0 %5972
        %5974 = vrot.lane.b32.xlu0 %v5948, 38
        %v5975 = vpop.permute.xlu0 %5974
        %v5976 = vsel %vm1645, %v5959, %v5961
        %v5977 = vsel %vm1645, %v5961, %v5963
        %v5978 = vsel %vm1645, %v5963, %v5965
        %v5979 = vsel %vm1645, %v5965, %v5967
        %v5980 = vsel %vm1645, %v5967, %v5969
        %v5981 = vsel %vm1645, %v5969, %v5971
        %v5982 = vsel %vm1645, %v5971, %v5973
        %v5983 = vsel %vm1645, %v5973, %v5975
        %5992 = vst [vmem:[#allocation3 + $0x4c0] sm:$0xff] %v5976
        %5993 = vst [vmem:[#allocation3 + $0x4c8] sm:$0xff] %v5977
        %5994 = vst [vmem:[#allocation3 + $0x4d0] sm:$0xff] %v5978
        %5995 = vst [vmem:[#allocation3 + $0x4d8] sm:$0xff] %v5979
        %5996 = vst [vmem:[#allocation3 + $0x4e0] sm:$0xff] %v5980
        %5997 = vst [vmem:[#allocation3 + $0x4e8] sm:$0xff] %v5981
        %5998 = vst [vmem:[#allocation3 + $0x4f0] sm:$0xff] %v5982
        %5999 = vst [vmem:[#allocation3 + $0x4f8] sm:$0xff] %v5983
        %v6000 = vld [vmem:[#allocation2 + $0x8] sm:$0xff]
        %v6001 = vld [vmem:[#allocation2 + $0x10] sm:$0xff]
        %v6002 = vld [vmem:[#allocation2 + $0x18] sm:$0xff]
        %v6003 = vld [vmem:[#allocation2 + $0x20] sm:$0xff]
        %v6004 = vld [vmem:[#allocation2 + $0x28] sm:$0xff]
        %v6005 = vld [vmem:[#allocation2 + $0x30] sm:$0xff]
        %v6006 = vld [vmem:[#allocation2 + $0x38] sm:$0xff]
        %v6007 = vld [vmem:[#allocation2 + $0x40] sm:$0xff]
        %v6008 = vld [vmem:[#allocation2 + $0x48] sm:$0xff]
        %6018 = vrot.lane.b32.xlu0 %v6000, 37
        %v6019 = vpop.permute.xlu0 %6018
        %6020 = vrot.lane.b32.xlu0 %v6001, 37
        %v6021 = vpop.permute.xlu0 %6020
        %6022 = vrot.lane.b32.xlu0 %v6002, 37
        %v6023 = vpop.permute.xlu0 %6022
        %6024 = vrot.lane.b32.xlu0 %v6003, 37
        %v6025 = vpop.permute.xlu0 %6024
        %6026 = vrot.lane.b32.xlu0 %v6004, 37
        %v6027 = vpop.permute.xlu0 %6026
        %6028 = vrot.lane.b32.xlu0 %v6005, 37
        %v6029 = vpop.permute.xlu0 %6028
        %6030 = vrot.lane.b32.xlu0 %v6006, 37
        %v6031 = vpop.permute.xlu0 %6030
        %6032 = vrot.lane.b32.xlu0 %v6007, 37
        %v6033 = vpop.permute.xlu0 %6032
        %6034 = vrot.lane.b32.xlu0 %v6008, 37
        %v6035 = vpop.permute.xlu0 %6034
        %v6036 = vsel %vm1706, %v6019, %v6021
        %v6037 = vsel %vm1706, %v6021, %v6023
        %v6038 = vsel %vm1706, %v6023, %v6025
        %v6039 = vsel %vm1706, %v6025, %v6027
        %v6040 = vsel %vm1706, %v6027, %v6029
        %v6041 = vsel %vm1706, %v6029, %v6031
        %v6042 = vsel %vm1706, %v6031, %v6033
        %v6043 = vsel %vm1706, %v6033, %v6035
        %6052 = vst [vmem:[#allocation3 + $0x500] sm:$0xff] %v6036
        %6053 = vst [vmem:[#allocation3 + $0x508] sm:$0xff] %v6037
        %6054 = vst [vmem:[#allocation3 + $0x510] sm:$0xff] %v6038
        %6055 = vst [vmem:[#allocation3 + $0x518] sm:$0xff] %v6039
        %6056 = vst [vmem:[#allocation3 + $0x520] sm:$0xff] %v6040
        %6057 = vst [vmem:[#allocation3 + $0x528] sm:$0xff] %v6041
        %6058 = vst [vmem:[#allocation3 + $0x530] sm:$0xff] %v6042
        %6059 = vst [vmem:[#allocation3 + $0x538] sm:$0xff] %v6043
        %v6060 = vld [vmem:[#allocation2 + $0x8] sm:$0xff]
        %v6061 = vld [vmem:[#allocation2 + $0x10] sm:$0xff]
        %v6062 = vld [vmem:[#allocation2 + $0x18] sm:$0xff]
        %v6063 = vld [vmem:[#allocation2 + $0x20] sm:$0xff]
        %v6064 = vld [vmem:[#allocation2 + $0x28] sm:$0xff]
        %v6065 = vld [vmem:[#allocation2 + $0x30] sm:$0xff]
        %v6066 = vld [vmem:[#allocation2 + $0x38] sm:$0xff]
        %v6067 = vld [vmem:[#allocation2 + $0x40] sm:$0xff]
        %v6068 = vld [vmem:[#allocation2 + $0x48] sm:$0xff]
        %6078 = vrot.lane.b32.xlu0 %v6060, 29
        %v6079 = vpop.permute.xlu0 %6078
        %6080 = vrot.lane.b32.xlu0 %v6061, 29
        %v6081 = vpop.permute.xlu0 %6080
        %6082 = vrot.lane.b32.xlu0 %v6062, 29
        %v6083 = vpop.permute.xlu0 %6082
        %6084 = vrot.lane.b32.xlu0 %v6063, 29
        %v6085 = vpop.permute.xlu0 %6084
        %6086 = vrot.lane.b32.xlu0 %v6064, 29
        %v6087 = vpop.permute.xlu0 %6086
        %6088 = vrot.lane.b32.xlu0 %v6065, 29
        %v6089 = vpop.permute.xlu0 %6088
        %6090 = vrot.lane.b32.xlu0 %v6066, 29
        %v6091 = vpop.permute.xlu0 %6090
        %6092 = vrot.lane.b32.xlu0 %v6067, 29
        %v6093 = vpop.permute.xlu0 %6092
        %6094 = vrot.lane.b32.xlu0 %v6068, 29
        %v6095 = vpop.permute.xlu0 %6094
        %v6096 = vsel %vm1767, %v6079, %v6081
        %v6097 = vsel %vm1767, %v6081, %v6083
        %v6098 = vsel %vm1767, %v6083, %v6085
        %v6099 = vsel %vm1767, %v6085, %v6087
        %v6100 = vsel %vm1767, %v6087, %v6089
        %v6101 = vsel %vm1767, %v6089, %v6091
        %v6102 = vsel %vm1767, %v6091, %v6093
        %v6103 = vsel %vm1767, %v6093, %v6095
        %6112 = vst [vmem:[#allocation3 + $0x540] sm:$0xff] %v6096
        %6113 = vst [vmem:[#allocation3 + $0x548] sm:$0xff] %v6097
        %6114 = vst [vmem:[#allocation3 + $0x550] sm:$0xff] %v6098
        %6115 = vst [vmem:[#allocation3 + $0x558] sm:$0xff] %v6099
        %6116 = vst [vmem:[#allocation3 + $0x560] sm:$0xff] %v6100
        %6117 = vst [vmem:[#allocation3 + $0x568] sm:$0xff] %v6101
        %6118 = vst [vmem:[#allocation3 + $0x570] sm:$0xff] %v6102
        %6119 = vst [vmem:[#allocation3 + $0x578] sm:$0xff] %v6103
        %v6120 = vld [vmem:[#allocation2 + $0x8] sm:$0xff]
        %v6121 = vld [vmem:[#allocation2 + $0x10] sm:$0xff]
        %v6122 = vld [vmem:[#allocation2 + $0x18] sm:$0xff]
        %v6123 = vld [vmem:[#allocation2 + $0x20] sm:$0xff]
        %v6124 = vld [vmem:[#allocation2 + $0x28] sm:$0xff]
        %v6125 = vld [vmem:[#allocation2 + $0x30] sm:$0xff]
        %v6126 = vld [vmem:[#allocation2 + $0x38] sm:$0xff]
        %v6127 = vld [vmem:[#allocation2 + $0x40] sm:$0xff]
        %v6128 = vld [vmem:[#allocation2 + $0x48] sm:$0xff]
        %6138 = vrot.lane.b32.xlu0 %v6120, 28
        %v6139 = vpop.permute.xlu0 %6138
        %6140 = vrot.lane.b32.xlu0 %v6121, 28
        %v6141 = vpop.permute.xlu0 %6140
        %6142 = vrot.lane.b32.xlu0 %v6122, 28
        %v6143 = vpop.permute.xlu0 %6142
        %6144 = vrot.lane.b32.xlu0 %v6123, 28
        %v6145 = vpop.permute.xlu0 %6144
        %6146 = vrot.lane.b32.xlu0 %v6124, 28
        %v6147 = vpop.permute.xlu0 %6146
        %6148 = vrot.lane.b32.xlu0 %v6125, 28
        %v6149 = vpop.permute.xlu0 %6148
        %6150 = vrot.lane.b32.xlu0 %v6126, 28
        %v6151 = vpop.permute.xlu0 %6150
        %6152 = vrot.lane.b32.xlu0 %v6127, 28
        %v6153 = vpop.permute.xlu0 %6152
        %6154 = vrot.lane.b32.xlu0 %v6128, 28
        %v6155 = vpop.permute.xlu0 %6154
        %v6156 = vsel %vm1828, %v6139, %v6141
        %v6157 = vsel %vm1828, %v6141, %v6143
        %v6158 = vsel %vm1828, %v6143, %v6145
        %v6159 = vsel %vm1828, %v6145, %v6147
        %v6160 = vsel %vm1828, %v6147, %v6149
        %v6161 = vsel %vm1828, %v6149, %v6151
        %v6162 = vsel %vm1828, %v6151, %v6153
        %v6163 = vsel %vm1828, %v6153, %v6155
        %6172 = vst [vmem:[#allocation3 + $0x580] sm:$0xff] %v6156
        %6173 = vst [vmem:[#allocation3 + $0x588] sm:$0xff] %v6157
        %6174 = vst [vmem:[#allocation3 + $0x590] sm:$0xff] %v6158
        %6175 = vst [vmem:[#allocation3 + $0x598] sm:$0xff] %v6159
        %6176 = vst [vmem:[#allocation3 + $0x5a0] sm:$0xff] %v6160
        %6177 = vst [vmem:[#allocation3 + $0x5a8] sm:$0xff] %v6161
        %6178 = vst [vmem:[#allocation3 + $0x5b0] sm:$0xff] %v6162
        %6179 = vst [vmem:[#allocation3 + $0x5b8] sm:$0xff] %v6163
        %v6180 = vld [vmem:[#allocation2 + $0x8] sm:$0xff]
        %v6181 = vld [vmem:[#allocation2 + $0x10] sm:$0xff]
        %v6182 = vld [vmem:[#allocation2 + $0x18] sm:$0xff]
        %v6183 = vld [vmem:[#allocation2 + $0x20] sm:$0xff]
        %v6184 = vld [vmem:[#allocation2 + $0x28] sm:$0xff]
        %v6185 = vld [vmem:[#allocation2 + $0x30] sm:$0xff]
        %v6186 = vld [vmem:[#allocation2 + $0x38] sm:$0xff]
        %v6187 = vld [vmem:[#allocation2 + $0x40] sm:$0xff]
        %v6188 = vld [vmem:[#allocation2 + $0x48] sm:$0xff]
        %6198 = vrot.lane.b32.xlu0 %v6180, 27
        %v6199 = vpop.permute.xlu0 %6198
        %6200 = vrot.lane.b32.xlu0 %v6181, 27
        %v6201 = vpop.permute.xlu0 %6200
        %6202 = vrot.lane.b32.xlu0 %v6182, 27
        %v6203 = vpop.permute.xlu0 %6202
        %6204 = vrot.lane.b32.xlu0 %v6183, 27
        %v6205 = vpop.permute.xlu0 %6204
        %6206 = vrot.lane.b32.xlu0 %v6184, 27
        %v6207 = vpop.permute.xlu0 %6206
        %6208 = vrot.lane.b32.xlu0 %v6185, 27
        %v6209 = vpop.permute.xlu0 %6208
        %6210 = vrot.lane.b32.xlu0 %v6186, 27
        %v6211 = vpop.permute.xlu0 %6210
        %6212 = vrot.lane.b32.xlu0 %v6187, 27
        %v6213 = vpop.permute.xlu0 %6212
        %6214 = vrot.lane.b32.xlu0 %v6188, 27
        %v6215 = vpop.permute.xlu0 %6214
        %v6216 = vsel %vm1889, %v6199, %v6201
        %v6217 = vsel %vm1889, %v6201, %v6203
        %v6218 = vsel %vm1889, %v6203, %v6205
        %v6219 = vsel %vm1889, %v6205, %v6207
        %v6220 = vsel %vm1889, %v6207, %v6209
        %v6221 = vsel %vm1889, %v6209, %v6211
        %v6222 = vsel %vm1889, %v6211, %v6213
        %v6223 = vsel %vm1889, %v6213, %v6215
        %6232 = vst [vmem:[#allocation3 + $0x5c0] sm:$0xff] %v6216
        %6233 = vst [vmem:[#allocation3 + $0x5c8] sm:$0xff] %v6217
        %6234 = vst [vmem:[#allocation3 + $0x5d0] sm:$0xff] %v6218
        %6235 = vst [vmem:[#allocation3 + $0x5d8] sm:$0xff] %v6219
        %6236 = vst [vmem:[#allocation3 + $0x5e0] sm:$0xff] %v6220
        %6237 = vst [vmem:[#allocation3 + $0x5e8] sm:$0xff] %v6221
        %6238 = vst [vmem:[#allocation3 + $0x5f0] sm:$0xff] %v6222
        %6239 = vst [vmem:[#allocation3 + $0x5f8] sm:$0xff] %v6223
        %v6240 = vld [vmem:[#allocation2 + $0x8] sm:$0xff]
        %v6241 = vld [vmem:[#allocation2 + $0x10] sm:$0xff]
        %v6242 = vld [vmem:[#allocation2 + $0x18] sm:$0xff]
        %v6243 = vld [vmem:[#allocation2 + $0x20] sm:$0xff]
        %v6244 = vld [vmem:[#allocation2 + $0x28] sm:$0xff]
        %v6245 = vld [vmem:[#allocation2 + $0x30] sm:$0xff]
        %v6246 = vld [vmem:[#allocation2 + $0x38] sm:$0xff]
        %v6247 = vld [vmem:[#allocation2 + $0x40] sm:$0xff]
        %v6248 = vld [vmem:[#allocation2 + $0x48] sm:$0xff]
        %6258 = vrot.lane.b32.xlu0 %v6240, 19
        %v6259 = vpop.permute.xlu0 %6258
        %6260 = vrot.lane.b32.xlu0 %v6241, 19
        %v6261 = vpop.permute.xlu0 %6260
        %6262 = vrot.lane.b32.xlu0 %v6242, 19
        %v6263 = vpop.permute.xlu0 %6262
        %6264 = vrot.lane.b32.xlu0 %v6243, 19
        %v6265 = vpop.permute.xlu0 %6264
        %6266 = vrot.lane.b32.xlu0 %v6244, 19
        %v6267 = vpop.permute.xlu0 %6266
        %6268 = vrot.lane.b32.xlu0 %v6245, 19
        %v6269 = vpop.permute.xlu0 %6268
        %6270 = vrot.lane.b32.xlu0 %v6246, 19
        %v6271 = vpop.permute.xlu0 %6270
        %6272 = vrot.lane.b32.xlu0 %v6247, 19
        %v6273 = vpop.permute.xlu0 %6272
        %6274 = vrot.lane.b32.xlu0 %v6248, 19
        %v6275 = vpop.permute.xlu0 %6274
        %v6276 = vsel %vm1950, %v6259, %v6261
        %v6277 = vsel %vm1950, %v6261, %v6263
        %v6278 = vsel %vm1950, %v6263, %v6265
        %v6279 = vsel %vm1950, %v6265, %v6267
        %v6280 = vsel %vm1950, %v6267, %v6269
        %v6281 = vsel %vm1950, %v6269, %v6271
        %v6282 = vsel %vm1950, %v6271, %v6273
        %v6283 = vsel %vm1950, %v6273, %v6275
        %6292 = vst [vmem:[#allocation3 + $0x600] sm:$0xff] %v6276
        %6293 = vst [vmem:[#allocation3 + $0x608] sm:$0xff] %v6277
        %6294 = vst [vmem:[#allocation3 + $0x610] sm:$0xff] %v6278
        %6295 = vst [vmem:[#allocation3 + $0x618] sm:$0xff] %v6279
        %6296 = vst [vmem:[#allocation3 + $0x620] sm:$0xff] %v6280
        %6297 = vst [vmem:[#allocation3 + $0x628] sm:$0xff] %v6281
        %6298 = vst [vmem:[#allocation3 + $0x630] sm:$0xff] %v6282
        %6299 = vst [vmem:[#allocation3 + $0x638] sm:$0xff] %v6283
        %v6300 = vld [vmem:[#allocation2 + $0x8] sm:$0xff]
        %v6301 = vld [vmem:[#allocation2 + $0x10] sm:$0xff]
        %v6302 = vld [vmem:[#allocation2 + $0x18] sm:$0xff]
        %v6303 = vld [vmem:[#allocation2 + $0x20] sm:$0xff]
        %v6304 = vld [vmem:[#allocation2 + $0x28] sm:$0xff]
        %v6305 = vld [vmem:[#allocation2 + $0x30] sm:$0xff]
        %v6306 = vld [vmem:[#allocation2 + $0x38] sm:$0xff]
        %v6307 = vld [vmem:[#allocation2 + $0x40] sm:$0xff]
        %v6308 = vld [vmem:[#allocation2 + $0x48] sm:$0xff]
        %6318 = vrot.lane.b32.xlu0 %v6300, 18
        %v6319 = vpop.permute.xlu0 %6318
        %6320 = vrot.lane.b32.xlu0 %v6301, 18
        %v6321 = vpop.permute.xlu0 %6320
        %6322 = vrot.lane.b32.xlu0 %v6302, 18
        %v6323 = vpop.permute.xlu0 %6322
        %6324 = vrot.lane.b32.xlu0 %v6303, 18
        %v6325 = vpop.permute.xlu0 %6324
        %6326 = vrot.lane.b32.xlu0 %v6304, 18
        %v6327 = vpop.permute.xlu0 %6326
        %6328 = vrot.lane.b32.xlu0 %v6305, 18
        %v6329 = vpop.permute.xlu0 %6328
        %6330 = vrot.lane.b32.xlu0 %v6306, 18
        %v6331 = vpop.permute.xlu0 %6330
        %6332 = vrot.lane.b32.xlu0 %v6307, 18
        %v6333 = vpop.permute.xlu0 %6332
        %6334 = vrot.lane.b32.xlu0 %v6308, 18
        %v6335 = vpop.permute.xlu0 %6334
        %v6336 = vsel %vm2011, %v6319, %v6321
        %v6337 = vsel %vm2011, %v6321, %v6323
        %v6338 = vsel %vm2011, %v6323, %v6325
        %v6339 = vsel %vm2011, %v6325, %v6327
        %v6340 = vsel %vm2011, %v6327, %v6329
        %v6341 = vsel %vm2011, %v6329, %v6331
        %v6342 = vsel %vm2011, %v6331, %v6333
        %v6343 = vsel %vm2011, %v6333, %v6335
        %6352 = vst [vmem:[#allocation3 + $0x640] sm:$0xff] %v6336
        %6353 = vst [vmem:[#allocation3 + $0x648] sm:$0xff] %v6337
        %6354 = vst [vmem:[#allocation3 + $0x650] sm:$0xff] %v6338
        %6355 = vst [vmem:[#allocation3 + $0x658] sm:$0xff] %v6339
        %6356 = vst [vmem:[#allocation3 + $0x660] sm:$0xff] %v6340
        %6357 = vst [vmem:[#allocation3 + $0x668] sm:$0xff] %v6341
        %6358 = vst [vmem:[#allocation3 + $0x670] sm:$0xff] %v6342
        %6359 = vst [vmem:[#allocation3 + $0x678] sm:$0xff] %v6343
        %v6360 = vld [vmem:[#allocation2 + $0x8] sm:$0xff]
        %v6361 = vld [vmem:[#allocation2 + $0x10] sm:$0xff]
        %v6362 = vld [vmem:[#allocation2 + $0x18] sm:$0xff]
        %v6363 = vld [vmem:[#allocation2 + $0x20] sm:$0xff]
        %v6364 = vld [vmem:[#allocation2 + $0x28] sm:$0xff]
        %v6365 = vld [vmem:[#allocation2 + $0x30] sm:$0xff]
        %v6366 = vld [vmem:[#allocation2 + $0x38] sm:$0xff]
        %v6367 = vld [vmem:[#allocation2 + $0x40] sm:$0xff]
        %v6368 = vld [vmem:[#allocation2 + $0x48] sm:$0xff]
        %6378 = vrot.lane.b32.xlu0 %v6360, 17
        %v6379 = vpop.permute.xlu0 %6378
        %6380 = vrot.lane.b32.xlu0 %v6361, 17
        %v6381 = vpop.permute.xlu0 %6380
        %6382 = vrot.lane.b32.xlu0 %v6362, 17
        %v6383 = vpop.permute.xlu0 %6382
        %6384 = vrot.lane.b32.xlu0 %v6363, 17
        %v6385 = vpop.permute.xlu0 %6384
        %6386 = vrot.lane.b32.xlu0 %v6364, 17
        %v6387 = vpop.permute.xlu0 %6386
        %6388 = vrot.lane.b32.xlu0 %v6365, 17
        %v6389 = vpop.permute.xlu0 %6388
        %6390 = vrot.lane.b32.xlu0 %v6366, 17
        %v6391 = vpop.permute.xlu0 %6390
        %6392 = vrot.lane.b32.xlu0 %v6367, 17
        %v6393 = vpop.permute.xlu0 %6392
        %6394 = vrot.lane.b32.xlu0 %v6368, 17
        %v6395 = vpop.permute.xlu0 %6394
        %v6396 = vsel %vm2072, %v6379, %v6381
        %v6397 = vsel %vm2072, %v6381, %v6383
        %v6398 = vsel %vm2072, %v6383, %v6385
        %v6399 = vsel %vm2072, %v6385, %v6387
        %v6400 = vsel %vm2072, %v6387, %v6389
        %v6401 = vsel %vm2072, %v6389, %v6391
        %v6402 = vsel %vm2072, %v6391, %v6393
        %v6403 = vsel %vm2072, %v6393, %v6395
        %6412 = vst [vmem:[#allocation3 + $0x680] sm:$0xff] %v6396
        %6413 = vst [vmem:[#allocation3 + $0x688] sm:$0xff] %v6397
        %6414 = vst [vmem:[#allocation3 + $0x690] sm:$0xff] %v6398
        %6415 = vst [vmem:[#allocation3 + $0x698] sm:$0xff] %v6399
        %6416 = vst [vmem:[#allocation3 + $0x6a0] sm:$0xff] %v6400
        %6417 = vst [vmem:[#allocation3 + $0x6a8] sm:$0xff] %v6401
        %6418 = vst [vmem:[#allocation3 + $0x6b0] sm:$0xff] %v6402
        %6419 = vst [vmem:[#allocation3 + $0x6b8] sm:$0xff] %v6403
        %v6420 = vld [vmem:[%s7] sm:$0xff]
        %v6421 = vld [vmem:[%s7 + $0x8] sm:$0xff]
        %v6422 = vld [vmem:[#allocation3] sm:$0xff]
        %v6423 = vld [vmem:[#allocation3 + $0x8] sm:$0xff]
        %v6424 = vld [vmem:[#allocation3 + $0x10] sm:$0xff]
        %v6425 = vld [vmem:[#allocation3 + $0x18] sm:$0xff]
        %v6426 = vld [vmem:[#allocation3 + $0x20] sm:$0xff]
        %v6427 = vld [vmem:[#allocation3 + $0x28] sm:$0xff]
        %v6428 = vld [vmem:[#allocation3 + $0x30] sm:$0xff]
        %v6429 = vld [vmem:[#allocation3 + $0x38] sm:$0xff]
        %v6430 = vld [vmem:[#allocation3 + $0x40] sm:$0xff]
        %v6431 = vld [vmem:[#allocation3 + $0x48] sm:$0xff]
        %v6432 = vld [vmem:[#allocation3 + $0x50] sm:$0xff]
        %v6433 = vld [vmem:[#allocation3 + $0x58] sm:$0xff]
        %v6434 = vld [vmem:[#allocation3 + $0x60] sm:$0xff]
        %v6435 = vld [vmem:[#allocation3 + $0x68] sm:$0xff]
        %v6436 = vld [vmem:[#allocation3 + $0x70] sm:$0xff]
        %v6437 = vld [vmem:[#allocation3 + $0x78] sm:$0xff]
        %v6438 = vld [vmem:[#allocation3 + $0x80] sm:$0xff]
        %v6439 = vld [vmem:[#allocation3 + $0x88] sm:$0xff]
        %v6440 = vld [vmem:[#allocation3 + $0x90] sm:$0xff]
        %v6441 = vld [vmem:[#allocation3 + $0x98] sm:$0xff]
        %v6442 = vld [vmem:[#allocation3 + $0xa0] sm:$0xff]
        %v6443 = vld [vmem:[#allocation3 + $0xa8] sm:$0xff]
        %v6444 = vld [vmem:[#allocation3 + $0xb0] sm:$0xff]
        %v6445 = vld [vmem:[#allocation3 + $0xb8] sm:$0xff]
        %v6446 = vld [vmem:[#allocation3 + $0xc0] sm:$0xff]
        %v6447 = vld [vmem:[#allocation3 + $0xc8] sm:$0xff]
        %v6448 = vld [vmem:[#allocation3 + $0xd0] sm:$0xff]
        %v6449 = vld [vmem:[#allocation3 + $0xd8] sm:$0xff]
        %v6450 = vld [vmem:[#allocation3 + $0xe0] sm:$0xff]
        %v6451 = vld [vmem:[#allocation3 + $0xe8] sm:$0xff]
        %v6452 = vld [vmem:[#allocation3 + $0xf0] sm:$0xff]
        %v6453 = vld [vmem:[#allocation3 + $0xf8] sm:$0xff]
        %v6454 = vld [vmem:[#allocation3 + $0x100] sm:$0xff]
        %v6455 = vld [vmem:[#allocation3 + $0x108] sm:$0xff]
        %v6456 = vld [vmem:[#allocation3 + $0x110] sm:$0xff]
        %v6457 = vld [vmem:[#allocation3 + $0x118] sm:$0xff]
        %v6458 = vld [vmem:[#allocation3 + $0x120] sm:$0xff]
        %v6459 = vld [vmem:[#allocation3 + $0x128] sm:$0xff]
        %v6460 = vld [vmem:[#allocation3 + $0x130] sm:$0xff]
        %v6461 = vld [vmem:[#allocation3 + $0x138] sm:$0xff]
        %v6462 = vld [vmem:[#allocation3 + $0x140] sm:$0xff]
        %v6463 = vld [vmem:[#allocation3 + $0x148] sm:$0xff]
        %v6464 = vld [vmem:[#allocation3 + $0x150] sm:$0xff]
        %v6465 = vld [vmem:[#allocation3 + $0x158] sm:$0xff]
        %v6466 = vld [vmem:[#allocation3 + $0x160] sm:$0xff]
        %v6467 = vld [vmem:[#allocation3 + $0x168] sm:$0xff]
        %v6468 = vld [vmem:[#allocation3 + $0x170] sm:$0xff]
        %v6469 = vld [vmem:[#allocation3 + $0x178] sm:$0xff]
        %v6470 = vld [vmem:[#allocation3 + $0x180] sm:$0xff]
        %v6471 = vld [vmem:[#allocation3 + $0x188] sm:$0xff]
        %v6472 = vld [vmem:[#allocation3 + $0x190] sm:$0xff]
        %v6473 = vld [vmem:[#allocation3 + $0x198] sm:$0xff]
        %v6474 = vld [vmem:[#allocation3 + $0x1a0] sm:$0xff]
        %v6475 = vld [vmem:[#allocation3 + $0x1a8] sm:$0xff]
        %v6476 = vld [vmem:[#allocation3 + $0x1b0] sm:$0xff]
        %v6477 = vld [vmem:[#allocation3 + $0x1b8] sm:$0xff]
        %v6478 = vld [vmem:[#allocation3 + $0x1c0] sm:$0xff]
        %v6479 = vld [vmem:[#allocation3 + $0x1c8] sm:$0xff]
        %v6480 = vld [vmem:[#allocation3 + $0x1d0] sm:$0xff]
        %v6481 = vld [vmem:[#allocation3 + $0x1d8] sm:$0xff]
        %v6482 = vld [vmem:[#allocation3 + $0x1e0] sm:$0xff]
        %v6483 = vld [vmem:[#allocation3 + $0x1e8] sm:$0xff]
        %v6484 = vld [vmem:[#allocation3 + $0x1f0] sm:$0xff]
        %v6485 = vld [vmem:[#allocation3 + $0x1f8] sm:$0xff]
        %v6486 = vld [vmem:[#allocation3 + $0x200] sm:$0xff]
        %v6487 = vld [vmem:[#allocation3 + $0x208] sm:$0xff]
        %v6488 = vld [vmem:[#allocation3 + $0x210] sm:$0xff]
        %v6489 = vld [vmem:[#allocation3 + $0x218] sm:$0xff]
        %v6490 = vld [vmem:[#allocation3 + $0x220] sm:$0xff]
        %v6491 = vld [vmem:[#allocation3 + $0x228] sm:$0xff]
        %v6492 = vld [vmem:[#allocation3 + $0x230] sm:$0xff]
        %v6493 = vld [vmem:[#allocation3 + $0x238] sm:$0xff]
        %v6494 = vld [vmem:[#allocation3 + $0x240] sm:$0xff]
        %v6495 = vld [vmem:[#allocation3 + $0x248] sm:$0xff]
        %v6496 = vld [vmem:[#allocation3 + $0x250] sm:$0xff]
        %v6497 = vld [vmem:[#allocation3 + $0x258] sm:$0xff]
        %v6498 = vld [vmem:[#allocation3 + $0x260] sm:$0xff]
        %v6499 = vld [vmem:[#allocation3 + $0x268] sm:$0xff]
        %v6500 = vld [vmem:[#allocation3 + $0x270] sm:$0xff]
        %v6501 = vld [vmem:[#allocation3 + $0x278] sm:$0xff]
        %v6502 = vld [vmem:[#allocation3 + $0x280] sm:$0xff]
        %v6503 = vld [vmem:[#allocation3 + $0x288] sm:$0xff]
        %v6504 = vld [vmem:[#allocation3 + $0x290] sm:$0xff]
        %v6505 = vld [vmem:[#allocation3 + $0x298] sm:$0xff]
        %v6506 = vld [vmem:[#allocation3 + $0x2a0] sm:$0xff]
        %v6507 = vld [vmem:[#allocation3 + $0x2a8] sm:$0xff]
        %v6508 = vld [vmem:[#allocation3 + $0x2b0] sm:$0xff]
        %v6509 = vld [vmem:[#allocation3 + $0x2b8] sm:$0xff]
        %v6510 = vld [vmem:[#allocation3 + $0x2c0] sm:$0xff]
        %v6511 = vld [vmem:[#allocation3 + $0x2c8] sm:$0xff]
        %v6512 = vld [vmem:[#allocation3 + $0x2d0] sm:$0xff]
        %v6513 = vld [vmem:[#allocation3 + $0x2d8] sm:$0xff]
        %v6514 = vld [vmem:[#allocation3 + $0x2e0] sm:$0xff]
        %v6515 = vld [vmem:[#allocation3 + $0x2e8] sm:$0xff]
        %v6516 = vld [vmem:[#allocation3 + $0x2f0] sm:$0xff]
        %v6517 = vld [vmem:[#allocation3 + $0x2f8] sm:$0xff]
        %v6518 = vld [vmem:[#allocation3 + $0x300] sm:$0xff]
        %v6519 = vld [vmem:[#allocation3 + $0x308] sm:$0xff]
        %v6520 = vld [vmem:[#allocation3 + $0x310] sm:$0xff]
        %v6521 = vld [vmem:[#allocation3 + $0x318] sm:$0xff]
        %v6522 = vld [vmem:[#allocation3 + $0x320] sm:$0xff]
        %v6523 = vld [vmem:[#allocation3 + $0x328] sm:$0xff]
        %v6524 = vld [vmem:[#allocation3 + $0x330] sm:$0xff]
        %v6525 = vld [vmem:[#allocation3 + $0x338] sm:$0xff]
        %v6526 = vld [vmem:[#allocation3 + $0x340] sm:$0xff]
        %v6527 = vld [vmem:[#allocation3 + $0x348] sm:$0xff]
        %v6528 = vld [vmem:[#allocation3 + $0x350] sm:$0xff]
        %v6529 = vld [vmem:[#allocation3 + $0x358] sm:$0xff]
        %v6530 = vld [vmem:[#allocation3 + $0x360] sm:$0xff]
        %v6531 = vld [vmem:[#allocation3 + $0x368] sm:$0xff]
        %v6532 = vld [vmem:[#allocation3 + $0x370] sm:$0xff]
        %v6533 = vld [vmem:[#allocation3 + $0x378] sm:$0xff]
        %v6534 = vld [vmem:[#allocation3 + $0x380] sm:$0xff]
        %v6535 = vld [vmem:[#allocation3 + $0x388] sm:$0xff]
        %v6536 = vld [vmem:[#allocation3 + $0x390] sm:$0xff]
        %v6537 = vld [vmem:[#allocation3 + $0x398] sm:$0xff]
        %v6538 = vld [vmem:[#allocation3 + $0x3a0] sm:$0xff]
        %v6539 = vld [vmem:[#allocation3 + $0x3a8] sm:$0xff]
        %v6540 = vld [vmem:[#allocation3 + $0x3b0] sm:$0xff]
        %v6541 = vld [vmem:[#allocation3 + $0x3b8] sm:$0xff]
        %v6542 = vld [vmem:[#allocation3 + $0x3c0] sm:$0xff]
        %v6543 = vld [vmem:[#allocation3 + $0x3c8] sm:$0xff]
        %v6544 = vld [vmem:[#allocation3 + $0x3d0] sm:$0xff]
        %v6545 = vld [vmem:[#allocation3 + $0x3d8] sm:$0xff]
        %v6546 = vld [vmem:[#allocation3 + $0x3e0] sm:$0xff]
        %v6547 = vld [vmem:[#allocation3 + $0x3e8] sm:$0xff]
        %v6548 = vld [vmem:[#allocation3 + $0x3f0] sm:$0xff]
        %v6549 = vld [vmem:[#allocation3 + $0x3f8] sm:$0xff]
        %v6550 = vld [vmem:[#allocation3 + $0x400] sm:$0xff]
        %v6551 = vld [vmem:[#allocation3 + $0x408] sm:$0xff]
        %v6552 = vld [vmem:[#allocation3 + $0x410] sm:$0xff]
        %v6553 = vld [vmem:[#allocation3 + $0x418] sm:$0xff]
        %v6554 = vld [vmem:[#allocation3 + $0x420] sm:$0xff]
        %v6555 = vld [vmem:[#allocation3 + $0x428] sm:$0xff]
        %v6556 = vld [vmem:[#allocation3 + $0x430] sm:$0xff]
        %v6557 = vld [vmem:[#allocation3 + $0x438] sm:$0xff]
        %v6558 = vld [vmem:[#allocation3 + $0x440] sm:$0xff]
        %v6559 = vld [vmem:[#allocation3 + $0x448] sm:$0xff]
        %v6560 = vld [vmem:[#allocation3 + $0x450] sm:$0xff]
        %v6561 = vld [vmem:[#allocation3 + $0x458] sm:$0xff]
        %v6562 = vld [vmem:[#allocation3 + $0x460] sm:$0xff]
        %v6563 = vld [vmem:[#allocation3 + $0x468] sm:$0xff]
        %v6564 = vld [vmem:[#allocation3 + $0x470] sm:$0xff]
        %v6565 = vld [vmem:[#allocation3 + $0x478] sm:$0xff]
        %v6566 = vld [vmem:[#allocation3 + $0x480] sm:$0xff]
        %v6567 = vld [vmem:[#allocation3 + $0x488] sm:$0xff]
        %v6568 = vld [vmem:[#allocation3 + $0x490] sm:$0xff]
        %v6569 = vld [vmem:[#allocation3 + $0x498] sm:$0xff]
        %v6570 = vld [vmem:[#allocation3 + $0x4a0] sm:$0xff]
        %v6571 = vld [vmem:[#allocation3 + $0x4a8] sm:$0xff]
        %v6572 = vld [vmem:[#allocation3 + $0x4b0] sm:$0xff]
        %v6573 = vld [vmem:[#allocation3 + $0x4b8] sm:$0xff]
        %v6574 = vld [vmem:[#allocation3 + $0x4c0] sm:$0xff]
        %v6575 = vld [vmem:[#allocation3 + $0x4c8] sm:$0xff]
        %v6576 = vld [vmem:[#allocation3 + $0x4d0] sm:$0xff]
        %v6577 = vld [vmem:[#allocation3 + $0x4d8] sm:$0xff]
        %v6578 = vld [vmem:[#allocation3 + $0x4e0] sm:$0xff]
        %v6579 = vld [vmem:[#allocation3 + $0x4e8] sm:$0xff]
        %v6580 = vld [vmem:[#allocation3 + $0x4f0] sm:$0xff]
        %v6581 = vld [vmem:[#allocation3 + $0x4f8] sm:$0xff]
        %v6582 = vld [vmem:[#allocation3 + $0x500] sm:$0xff]
        %v6583 = vld [vmem:[#allocation3 + $0x508] sm:$0xff]
        %v6584 = vld [vmem:[#allocation3 + $0x510] sm:$0xff]
        %v6585 = vld [vmem:[#allocation3 + $0x518] sm:$0xff]
        %v6586 = vld [vmem:[#allocation3 + $0x520] sm:$0xff]
        %v6587 = vld [vmem:[#allocation3 + $0x528] sm:$0xff]
        %v6588 = vld [vmem:[#allocation3 + $0x530] sm:$0xff]
        %v6589 = vld [vmem:[#allocation3 + $0x538] sm:$0xff]
        %v6590 = vld [vmem:[#allocation3 + $0x540] sm:$0xff]
        %v6591 = vld [vmem:[#allocation3 + $0x548] sm:$0xff]
        %v6592 = vld [vmem:[#allocation3 + $0x550] sm:$0xff]
        %v6593 = vld [vmem:[#allocation3 + $0x558] sm:$0xff]
        %v6594 = vld [vmem:[#allocation3 + $0x560] sm:$0xff]
        %v6595 = vld [vmem:[#allocation3 + $0x568] sm:$0xff]
        %v6596 = vld [vmem:[#allocation3 + $0x570] sm:$0xff]
        %v6597 = vld [vmem:[#allocation3 + $0x578] sm:$0xff]
        %v6598 = vld [vmem:[#allocation3 + $0x580] sm:$0xff]
        %v6599 = vld [vmem:[#allocation3 + $0x588] sm:$0xff]
        %v6600 = vld [vmem:[#allocation3 + $0x590] sm:$0xff]
        %v6601 = vld [vmem:[#allocation3 + $0x598] sm:$0xff]
        %v6602 = vld [vmem:[#allocation3 + $0x5a0] sm:$0xff]
        %v6603 = vld [vmem:[#allocation3 + $0x5a8] sm:$0xff]
        %v6604 = vld [vmem:[#allocation3 + $0x5b0] sm:$0xff]
        %v6605 = vld [vmem:[#allocation3 + $0x5b8] sm:$0xff]
        %v6606 = vld [vmem:[#allocation3 + $0x5c0] sm:$0xff]
        %v6607 = vld [vmem:[#allocation3 + $0x5c8] sm:$0xff]
        %v6608 = vld [vmem:[#allocation3 + $0x5d0] sm:$0xff]
        %v6609 = vld [vmem:[#allocation3 + $0x5d8] sm:$0xff]
        %v6610 = vld [vmem:[#allocation3 + $0x5e0] sm:$0xff]
        %v6611 = vld [vmem:[#allocation3 + $0x5e8] sm:$0xff]
        %v6612 = vld [vmem:[#allocation3 + $0x5f0] sm:$0xff]
        %v6613 = vld [vmem:[#allocation3 + $0x5f8] sm:$0xff]
        %v6614 = vld [vmem:[#allocation3 + $0x600] sm:$0xff]
        %v6615 = vld [vmem:[#allocation3 + $0x608] sm:$0xff]
        %v6616 = vld [vmem:[#allocation3 + $0x610] sm:$0xff]
        %v6617 = vld [vmem:[#allocation3 + $0x618] sm:$0xff]
        %v6618 = vld [vmem:[#allocation3 + $0x620] sm:$0xff]
        %v6619 = vld [vmem:[#allocation3 + $0x628] sm:$0xff]
        %v6620 = vld [vmem:[#allocation3 + $0x630] sm:$0xff]
        %v6621 = vld [vmem:[#allocation3 + $0x638] sm:$0xff]
        %v6622 = vld [vmem:[#allocation3 + $0x640] sm:$0xff]
        %v6623 = vld [vmem:[#allocation3 + $0x648] sm:$0xff]
        %v6624 = vld [vmem:[#allocation3 + $0x650] sm:$0xff]
        %v6625 = vld [vmem:[#allocation3 + $0x658] sm:$0xff]
        %v6626 = vld [vmem:[#allocation3 + $0x660] sm:$0xff]
        %v6627 = vld [vmem:[#allocation3 + $0x668] sm:$0xff]
        %v6628 = vld [vmem:[#allocation3 + $0x670] sm:$0xff]
        %v6629 = vld [vmem:[#allocation3 + $0x678] sm:$0xff]
        %v6630 = vld [vmem:[#allocation3 + $0x680] sm:$0xff]
        %v6631 = vld [vmem:[#allocation3 + $0x688] sm:$0xff]
        %v6632 = vld [vmem:[#allocation3 + $0x690] sm:$0xff]
        %v6633 = vld [vmem:[#allocation3 + $0x698] sm:$0xff]
        %v6634 = vld [vmem:[#allocation3 + $0x6a0] sm:$0xff]
        %v6635 = vld [vmem:[#allocation3 + $0x6a8] sm:$0xff]
        %v6636 = vld [vmem:[#allocation3 + $0x6b0] sm:$0xff]
        %v6637 = vld [vmem:[#allocation3 + $0x6b8] sm:$0xff]
        %v6638 = vld [vmem:[%s8] sm:$0xff]
        %6640 = vset.pattern.permute.xlu0 0
        %6641 = vperm.xlu0 %6640, %v6638
        %v6642 = vpop.permute.xlu0 %6641
        %v6645 = vsel %vm2321, %v6421, 0
        %6647 = vmatpush.msra.mxu0 %v6542
        %6648 = vmatpush.msra.mxu0 %v6534
        %6649 = vmatpush.msra.mxu0 %v6526
        %6650 = vmatpush.msra.mxu0 %v6518
        %6651 = vmatpush.msra.mxu0 %v6510
        %6652 = vmatpush.msra.mxu0 %v6502
        %6653 = vmatpush.msra.mxu0 %v6494
        %6654 = vmatpush.msra.mxu0 %v6486
        %6655 = vmatpush.msra.mxu0 %v6478
        %6656 = vmatpush.msra.mxu0 %v6470
        %6657 = vmatpush.msra.mxu0 %v6462
        %6658 = vmatpush.msra.mxu0 %v6454
        %6659 = vmatpush.msra.mxu0 %v6446
        %6660 = vmatpush.msra.mxu0 %v6438
        %6661 = vmatpush.msra.mxu0 %v6430
        %6662 = vmatpush.msra.mxu0 %v6422
        %6663 = vmatmul.f32.gmra.mxu0 %v6420
        %v6664 = vpop.f32.mrf.mxu0
        %v6665 = vadd.f32 %v6642, %v6664
        %6666 = vdwg.mxu0
        %6667 = vmatpush.msra.mxu0 0.0
        %6668 = vmatpush.msra.mxu0 0.0
        %6669 = vmatpush.msra.mxu0 0.0
        %6670 = vmatpush.msra.mxu0 0.0
        %6671 = vmatpush.msra.mxu0 0.0
        %6672 = vmatpush.msra.mxu0 %v6630
        %6673 = vmatpush.msra.mxu0 %v6622
        %6674 = vmatpush.msra.mxu0 %v6614
        %6675 = vmatpush.msra.mxu0 %v6606
        %6676 = vmatpush.msra.mxu0 %v6598
        %6677 = vmatpush.msra.mxu0 %v6590
        %6678 = vmatpush.msra.mxu0 %v6582
        %6679 = vmatpush.msra.mxu0 %v6574
        %6680 = vmatpush.msra.mxu0 %v6566
        %6681 = vmatpush.msra.mxu0 %v6558
        %6682 = vmatpush.msra.mxu0 %v6550
        %6683 = vmatmul.f32.gmra.mxu0 %v6645
        %v6684 = vpop.f32.mrf.mxu0
        %v6685 = vadd.f32 %v6665, %v6684
        %6686 = vdwg.mxu0
        %6687 = vmatpush.msra.mxu0 %v6543
        %6688 = vmatpush.msra.mxu0 %v6535
        %6689 = vmatpush.msra.mxu0 %v6527
        %6690 = vmatpush.msra.mxu0 %v6519
        %6691 = vmatpush.msra.mxu0 %v6511
        %6692 = vmatpush.msra.mxu0 %v6503
        %6693 = vmatpush.msra.mxu0 %v6495
        %6694 = vmatpush.msra.mxu0 %v6487
        %6695 = vmatpush.msra.mxu0 %v6479
        %6696 = vmatpush.msra.mxu0 %v6471
        %6697 = vmatpush.msra.mxu0 %v6463
        %6698 = vmatpush.msra.mxu0 %v6455
        %6699 = vmatpush.msra.mxu0 %v6447
        %6700 = vmatpush.msra.mxu0 %v6439
        %6701 = vmatpush.msra.mxu0 %v6431
        %6702 = vmatpush.msra.mxu0 %v6423
        %6703 = vmatmul.f32.gmra.mxu0 %v6420
        %v6704 = vpop.f32.mrf.mxu0
        %v6705 = vadd.f32 %v6642, %v6704
        %6706 = vdwg.mxu0
        %6707 = vmatpush.msra.mxu0 0.0
        %6708 = vmatpush.msra.mxu0 0.0
        %6709 = vmatpush.msra.mxu0 0.0
        %6710 = vmatpush.msra.mxu0 0.0
        %6711 = vmatpush.msra.mxu0 0.0
        %6712 = vmatpush.msra.mxu0 %v6631
        %6713 = vmatpush.msra.mxu0 %v6623
        %6714 = vmatpush.msra.mxu0 %v6615
        %6715 = vmatpush.msra.mxu0 %v6607
        %6716 = vmatpush.msra.mxu0 %v6599
        %6717 = vmatpush.msra.mxu0 %v6591
        %6718 = vmatpush.msra.mxu0 %v6583
        %6719 = vmatpush.msra.mxu0 %v6575
        %6720 = vmatpush.msra.mxu0 %v6567
        %6721 = vmatpush.msra.mxu0 %v6559
        %6722 = vmatpush.msra.mxu0 %v6551
        %6723 = vmatmul.f32.gmra.mxu0 %v6645
        %v6724 = vpop.f32.mrf.mxu0
        %v6725 = vadd.f32 %v6705, %v6724
        %6726 = vdwg.mxu0
        %6727 = vmatpush.msra.mxu0 %v6544
        %6728 = vmatpush.msra.mxu0 %v6536
        %6729 = vmatpush.msra.mxu0 %v6528
        %6730 = vmatpush.msra.mxu0 %v6520
        %6731 = vmatpush.msra.mxu0 %v6512
        %6732 = vmatpush.msra.mxu0 %v6504
        %6733 = vmatpush.msra.mxu0 %v6496
        %6734 = vmatpush.msra.mxu0 %v6488
        %6735 = vmatpush.msra.mxu0 %v6480
        %6736 = vmatpush.msra.mxu0 %v6472
        %6737 = vmatpush.msra.mxu0 %v6464
        %6738 = vmatpush.msra.mxu0 %v6456
        %6739 = vmatpush.msra.mxu0 %v6448
        %6740 = vmatpush.msra.mxu0 %v6440
        %6741 = vmatpush.msra.mxu0 %v6432
        %6742 = vmatpush.msra.mxu0 %v6424
        %6743 = vmatmul.f32.gmra.mxu0 %v6420
        %v6744 = vpop.f32.mrf.mxu0
        %v6745 = vadd.f32 %v6642, %v6744
        %6746 = vdwg.mxu0
        %6747 = vmatpush.msra.mxu0 0.0
        %6748 = vmatpush.msra.mxu0 0.0
        %6749 = vmatpush.msra.mxu0 0.0
        %6750 = vmatpush.msra.mxu0 0.0
        %6751 = vmatpush.msra.mxu0 0.0
        %6752 = vmatpush.msra.mxu0 %v6632
        %6753 = vmatpush.msra.mxu0 %v6624
        %6754 = vmatpush.msra.mxu0 %v6616
        %6755 = vmatpush.msra.mxu0 %v6608
        %6756 = vmatpush.msra.mxu0 %v6600
        %6757 = vmatpush.msra.mxu0 %v6592
        %6758 = vmatpush.msra.mxu0 %v6584
        %6759 = vmatpush.msra.mxu0 %v6576
        %6760 = vmatpush.msra.mxu0 %v6568
        %6761 = vmatpush.msra.mxu0 %v6560
        %6762 = vmatpush.msra.mxu0 %v6552
        %6763 = vmatmul.f32.gmra.mxu0 %v6645
        %v6764 = vpop.f32.mrf.mxu0
        %v6765 = vadd.f32 %v6745, %v6764
        %6766 = vdwg.mxu0
        %6767 = vmatpush.msra.mxu0 %v6545
        %6768 = vmatpush.msra.mxu0 %v6537
        %6769 = vmatpush.msra.mxu0 %v6529
        %6770 = vmatpush.msra.mxu0 %v6521
        %6771 = vmatpush.msra.mxu0 %v6513
        %6772 = vmatpush.msra.mxu0 %v6505
        %6773 = vmatpush.msra.mxu0 %v6497
        %6774 = vmatpush.msra.mxu0 %v6489
        %6775 = vmatpush.msra.mxu0 %v6481
        %6776 = vmatpush.msra.mxu0 %v6473
        %6777 = vmatpush.msra.mxu0 %v6465
        %6778 = vmatpush.msra.mxu0 %v6457
        %6779 = vmatpush.msra.mxu0 %v6449
        %6780 = vmatpush.msra.mxu0 %v6441
        %6781 = vmatpush.msra.mxu0 %v6433
        %6782 = vmatpush.msra.mxu0 %v6425
        %6783 = vmatmul.f32.gmra.mxu0 %v6420
        %v6784 = vpop.f32.mrf.mxu0
        %v6785 = vadd.f32 %v6642, %v6784
        %6786 = vdwg.mxu0
        %6787 = vmatpush.msra.mxu0 0.0
        %6788 = vmatpush.msra.mxu0 0.0
        %6789 = vmatpush.msra.mxu0 0.0
        %6790 = vmatpush.msra.mxu0 0.0
        %6791 = vmatpush.msra.mxu0 0.0
        %6792 = vmatpush.msra.mxu0 %v6633
        %6793 = vmatpush.msra.mxu0 %v6625
        %6794 = vmatpush.msra.mxu0 %v6617
        %6795 = vmatpush.msra.mxu0 %v6609
        %6796 = vmatpush.msra.mxu0 %v6601
        %6797 = vmatpush.msra.mxu0 %v6593
        %6798 = vmatpush.msra.mxu0 %v6585
        %6799 = vmatpush.msra.mxu0 %v6577
        %6800 = vmatpush.msra.mxu0 %v6569
        %6801 = vmatpush.msra.mxu0 %v6561
        %6802 = vmatpush.msra.mxu0 %v6553
        %6803 = vmatmul.f32.gmra.mxu0 %v6645
        %v6804 = vpop.f32.mrf.mxu0
        %v6805 = vadd.f32 %v6785, %v6804
        %6806 = vdwg.mxu0
        %6807 = vmatpush.msra.mxu0 %v6546
        %6808 = vmatpush.msra.mxu0 %v6538
        %6809 = vmatpush.msra.mxu0 %v6530
        %6810 = vmatpush.msra.mxu0 %v6522
        %6811 = vmatpush.msra.mxu0 %v6514
        %6812 = vmatpush.msra.mxu0 %v6506
        %6813 = vmatpush.msra.mxu0 %v6498
        %6814 = vmatpush.msra.mxu0 %v6490
        %6815 = vmatpush.msra.mxu0 %v6482
        %6816 = vmatpush.msra.mxu0 %v6474
        %6817 = vmatpush.msra.mxu0 %v6466
        %6818 = vmatpush.msra.mxu0 %v6458
        %6819 = vmatpush.msra.mxu0 %v6450
        %6820 = vmatpush.msra.mxu0 %v6442
        %6821 = vmatpush.msra.mxu0 %v6434
        %6822 = vmatpush.msra.mxu0 %v6426
        %6823 = vmatmul.f32.gmra.mxu0 %v6420
        %v6824 = vpop.f32.mrf.mxu0
        %v6825 = vadd.f32 %v6642, %v6824
        %6826 = vdwg.mxu0
        %6827 = vmatpush.msra.mxu0 0.0
        %6828 = vmatpush.msra.mxu0 0.0
        %6829 = vmatpush.msra.mxu0 0.0
        %6830 = vmatpush.msra.mxu0 0.0
        %6831 = vmatpush.msra.mxu0 0.0
        %6832 = vmatpush.msra.mxu0 %v6634
        %6833 = vmatpush.msra.mxu0 %v6626
        %6834 = vmatpush.msra.mxu0 %v6618
        %6835 = vmatpush.msra.mxu0 %v6610
        %6836 = vmatpush.msra.mxu0 %v6602
        %6837 = vmatpush.msra.mxu0 %v6594
        %6838 = vmatpush.msra.mxu0 %v6586
        %6839 = vmatpush.msra.mxu0 %v6578
        %6840 = vmatpush.msra.mxu0 %v6570
        %6841 = vmatpush.msra.mxu0 %v6562
        %6842 = vmatpush.msra.mxu0 %v6554
        %6843 = vmatmul.f32.gmra.mxu0 %v6645
        %v6844 = vpop.f32.mrf.mxu0
        %v6845 = vadd.f32 %v6825, %v6844
        %6846 = vdwg.mxu0
        %6847 = vmatpush.msra.mxu0 %v6547
        %6848 = vmatpush.msra.mxu0 %v6539
        %6849 = vmatpush.msra.mxu0 %v6531
        %6850 = vmatpush.msra.mxu0 %v6523
        %6851 = vmatpush.msra.mxu0 %v6515
        %6852 = vmatpush.msra.mxu0 %v6507
        %6853 = vmatpush.msra.mxu0 %v6499
        %6854 = vmatpush.msra.mxu0 %v6491
        %6855 = vmatpush.msra.mxu0 %v6483
        %6856 = vmatpush.msra.mxu0 %v6475
        %6857 = vmatpush.msra.mxu0 %v6467
        %6858 = vmatpush.msra.mxu0 %v6459
        %6859 = vmatpush.msra.mxu0 %v6451
        %6860 = vmatpush.msra.mxu0 %v6443
        %6861 = vmatpush.msra.mxu0 %v6435
        %6862 = vmatpush.msra.mxu0 %v6427
        %6863 = vmatmul.f32.gmra.mxu0 %v6420
        %v6864 = vpop.f32.mrf.mxu0
        %v6865 = vadd.f32 %v6642, %v6864
        %6866 = vdwg.mxu0
        %6867 = vmatpush.msra.mxu0 0.0
        %6868 = vmatpush.msra.mxu0 0.0
        %6869 = vmatpush.msra.mxu0 0.0
        %6870 = vmatpush.msra.mxu0 0.0
        %6871 = vmatpush.msra.mxu0 0.0
        %6872 = vmatpush.msra.mxu0 %v6635
        %6873 = vmatpush.msra.mxu0 %v6627
        %6874 = vmatpush.msra.mxu0 %v6619
        %6875 = vmatpush.msra.mxu0 %v6611
        %6876 = vmatpush.msra.mxu0 %v6603
        %6877 = vmatpush.msra.mxu0 %v6595
        %6878 = vmatpush.msra.mxu0 %v6587
        %6879 = vmatpush.msra.mxu0 %v6579
        %6880 = vmatpush.msra.mxu0 %v6571
        %6881 = vmatpush.msra.mxu0 %v6563
        %6882 = vmatpush.msra.mxu0 %v6555
        %6883 = vmatmul.f32.gmra.mxu0 %v6645
        %v6884 = vpop.f32.mrf.mxu0
        %v6885 = vadd.f32 %v6865, %v6884
        %6886 = vdwg.mxu0
        %6887 = vmatpush.msra.mxu0 %v6548
        %6888 = vmatpush.msra.mxu0 %v6540
        %6889 = vmatpush.msra.mxu0 %v6532
        %6890 = vmatpush.msra.mxu0 %v6524
        %6891 = vmatpush.msra.mxu0 %v6516
        %6892 = vmatpush.msra.mxu0 %v6508
        %6893 = vmatpush.msra.mxu0 %v6500
        %6894 = vmatpush.msra.mxu0 %v6492
        %6895 = vmatpush.msra.mxu0 %v6484
        %6896 = vmatpush.msra.mxu0 %v6476
        %6897 = vmatpush.msra.mxu0 %v6468
        %6898 = vmatpush.msra.mxu0 %v6460
        %6899 = vmatpush.msra.mxu0 %v6452
        %6900 = vmatpush.msra.mxu0 %v6444
        %6901 = vmatpush.msra.mxu0 %v6436
        %6902 = vmatpush.msra.mxu0 %v6428
        %6903 = vmatmul.f32.gmra.mxu0 %v6420
        %v6904 = vpop.f32.mrf.mxu0
        %v6905 = vadd.f32 %v6642, %v6904
        %6906 = vdwg.mxu0
        %6907 = vmatpush.msra.mxu0 0.0
        %6908 = vmatpush.msra.mxu0 0.0
        %6909 = vmatpush.msra.mxu0 0.0
        %6910 = vmatpush.msra.mxu0 0.0
        %6911 = vmatpush.msra.mxu0 0.0
        %6912 = vmatpush.msra.mxu0 %v6636
        %6913 = vmatpush.msra.mxu0 %v6628
        %6914 = vmatpush.msra.mxu0 %v6620
        %6915 = vmatpush.msra.mxu0 %v6612
        %6916 = vmatpush.msra.mxu0 %v6604
        %6917 = vmatpush.msra.mxu0 %v6596
        %6918 = vmatpush.msra.mxu0 %v6588
        %6919 = vmatpush.msra.mxu0 %v6580
        %6920 = vmatpush.msra.mxu0 %v6572
        %6921 = vmatpush.msra.mxu0 %v6564
        %6922 = vmatpush.msra.mxu0 %v6556
        %6923 = vmatmul.f32.gmra.mxu0 %v6645
        %v6924 = vpop.f32.mrf.mxu0
        %v6925 = vadd.f32 %v6905, %v6924
        %6926 = vdwg.mxu0
        %6927 = vmatpush.msra.mxu0 %v6549
        %6928 = vmatpush.msra.mxu0 %v6541
        %6929 = vmatpush.msra.mxu0 %v6533
        %6930 = vmatpush.msra.mxu0 %v6525
        %6931 = vmatpush.msra.mxu0 %v6517
        %6932 = vmatpush.msra.mxu0 %v6509
        %6933 = vmatpush.msra.mxu0 %v6501
        %6934 = vmatpush.msra.mxu0 %v6493
        %6935 = vmatpush.msra.mxu0 %v6485
        %6936 = vmatpush.msra.mxu0 %v6477
        %6937 = vmatpush.msra.mxu0 %v6469
        %6938 = vmatpush.msra.mxu0 %v6461
        %6939 = vmatpush.msra.mxu0 %v6453
        %6940 = vmatpush.msra.mxu0 %v6445
        %6941 = vmatpush.msra.mxu0 %v6437
        %6942 = vmatpush.msra.mxu0 %v6429
        %6943 = vmatmul.f32.gmra.mxu0 %v6420
        %v6944 = vpop.f32.mrf.mxu0
        %v6945 = vadd.f32 %v6642, %v6944
        %6946 = vdwg.mxu0
        %6947 = vmatpush.msra.mxu0 0.0
        %6948 = vmatpush.msra.mxu0 0.0
        %6949 = vmatpush.msra.mxu0 0.0
        %6950 = vmatpush.msra.mxu0 0.0
        %6951 = vmatpush.msra.mxu0 0.0
        %6952 = vmatpush.msra.mxu0 %v6637
        %6953 = vmatpush.msra.mxu0 %v6629
        %6954 = vmatpush.msra.mxu0 %v6621
        %6955 = vmatpush.msra.mxu0 %v6613
        %6956 = vmatpush.msra.mxu0 %v6605
        %6957 = vmatpush.msra.mxu0 %v6597
        %6958 = vmatpush.msra.mxu0 %v6589
        %6959 = vmatpush.msra.mxu0 %v6581
        %6960 = vmatpush.msra.mxu0 %v6573
        %6961 = vmatpush.msra.mxu0 %v6565
        %6962 = vmatpush.msra.mxu0 %v6557
        %6963 = vmatmul.f32.gmra.mxu0 %v6645
        %v6964 = vpop.f32.mrf.mxu0
        %v6965 = vadd.f32 %v6945, %v6964
        %6966 = vdwg.mxu0
        %v6975 = vrot.slane %v6725, 6
        %v6976 = vrot.slane %v6765, 4
        %v6977 = vrot.slane %v6805, 2
        %v6978 = vrot.slane %v6885, 6
        %v6979 = vrot.slane %v6925, 4
        %v6980 = vrot.slane %v6965, 2
        %v6981 = vsel %vm469, %v6685, %v6975
        %vm6982 = vcmask 1045508
        %v6983 = vsel %vm6982, %v6976, %v6977
        %v6984 = vsel %vm478, %v6981, %v6983
        %v6985 = vsel %vm469, %v6845, %v6978
        %v6986 = vsel %vm6982, %v6979, %v6980
        %v6987 = vsel %vm478, %v6985, %v6986
        %6990 = vst [vmem:[%s419] sm:$0xff] %v6984
        %6991 = vst [vmem:[%s419 + $0x8] sm:$0xff] %v6987
        %s6992 = sand.u32 %s237, 1
        %s6993 = scalar_lea.sflag [#allocation6], %s6992
        %s6994 = sand.u32 %s237, 1
        %s6995 = smul.addr %s6994, 16
        %s6996 = scalar_lea.vmem [#allocation12], %s6995
        // Predicated region
        $region73: #{tpu_custom_call.1} parent=55 // pred_check
          %p6997 = pneg %p247
        $region74: #{tpu_custom_call.1} parent=55 // pred_check_branch
          %6999 = sbr.rel (%p6997) target = $region76
        $region75: #{tpu_custom_call.1} parent=55 // pred_region
          %7001 = vsyncadd %s6993, 0
          %s7002 = smul.addr %s30, 8
          %s7003 = smul.addr %s7002, 2
          %s7004 = scalar_lea.hbm %s9, %s7003
          %s7006 = sshll.u32 %s6996, 4
          %s7007 = int_to_ptr.vmem [resolvable:$true] %s7006
          %s7008 = sshll.u32 %s7004, 4
          %s7009 = int_to_ptr.hbm [resolvable:$true] %s7008
          %7011 = dma.vmem_to_hbm [thread:$0]  %s7007, 256, %s7009, %s6993
        $region76: #{tpu_custom_call.1} parent=55 // pred_fallthru
          _
      $region56: #{tpu_custom_call.1} parent=5 // pred_fallthru
        _
      %p7012 = scmp.le.s32.totalorder 2, %s25
      // Predicated region
      $region77: #{tpu_custom_call.1} parent=5 // pred_check
        %p7013 = pneg %p7012
      $region78: #{tpu_custom_call.1} parent=5 // pred_check_branch
        %7015 = sbr.rel (%p7013) target = $region80
      $region79: #{tpu_custom_call.1} parent=5 // pred_region
        %s7016 = ssub.s32 %s25, 2
        // Predicated region
        $region81: #{tpu_custom_call.1} parent=79 // pred_check
          %p7017 = pneg %p253
        $region82: #{tpu_custom_call.1} parent=79 // pred_check_branch
          %7019 = sbr.rel (%p7017) target = $region84
        $region83: #{tpu_custom_call.1} parent=79 // pred_region
          %s7020 = sand.u32 %s238, 1
          %s7021 = scalar_lea.sflag [#allocation6], %s7020
          %s7022 = sand.u32 %s238, 1
          %s7023 = smul.addr %s7022, 16
          %s7024 = scalar_lea.vmem [#allocation12], %s7023
          %7026 = dma.done %s7021, 256
        $region84: #{tpu_custom_call.1} parent=79 // pred_fallthru
          _
      $region80: #{tpu_custom_call.1} parent=5 // pred_fallthru
        _
    $region6: #{tpu_custom_call.1} parent=1 // loop_footer
      %s29 = sadd.s32 1, %s25
    $region7: #{tpu_custom_call.1} parent=1 // loop_footer_branch
      %24 = sbr.rel target = $region3
    $region8: #{tpu_custom_call.1} parent=1 // loop_exit
      _
    %7027 = vsyncpa [#allocation5], 1
    %s7028 = scalar_lea.sflag [#allocation5], 1
    %7029 = vsyncpa %s7028, 1
    %7030 = vsyncpa [#allocation8], 1
    %s7031 = scalar_lea.sflag [#allocation8], 1
    %7032 = vsyncpa %s7031, 1
    %7033 = vsyncpa [#allocation11], 1
    %7034 = vsyncpa [#allocation6], 1
    %s7035 = scalar_lea.sflag [#allocation6], 1
    %7036 = vsyncpa %s7035, 1

</llo_original>
